<compile_context>
chip_gen: v7x
topology: tpu7x:2x2x1
jax: 0.10.0
libtpu: 0.0.40
codegen_flags: <defaults>
</compile_context>

<pallas_src>
import functools

import jax
import jax.numpy as jnp
from jax import lax
from jax.experimental import pallas as pl
from jax.experimental.pallas import tpu as pltpu

EPS = 1e-5
LANE = 128


def _round_up(x, m):
    return (x + m - 1) // m * m


# --------------------------------------------------------------------------
# In-kernel helpers
# --------------------------------------------------------------------------
def _conv3x3_taps(a, w_ref, Wp):
    """3x3 'SAME' conv on a zero-padded, row-flattened tile.

    a     : (L, Ci) flattened (rows, Wp) padded tile, L = n_rows * Wp.
    w_ref : (9, Ci, Co) taps, row-major over (ky, kx).
    Returns an f32 (L, Co) accumulator; only interior rows/cols are valid
    (border rows/cols hold wrap-around garbage and are discarded).
    """
    L = a.shape[0]
    acc = None
    for ky in range(3):
        for kx in range(3):
            off = (ky - 1) * Wp + (kx - 1)
            p = jnp.dot(a, w_ref[ky * 3 + kx],
                        preferred_element_type=jnp.float32)
            if off != 0:
                # out[i] = sum_k p_k[i + off_k]  ->  shift the f32 product on
                # the XLU instead of relayout-slicing the input 9 times.
                p = pltpu.roll(p, shift=(-off) % L, axis=0)
            acc = p if acc is None else acc + p
    return acc


def _write_tile_and_stats(acc, THp, Wp, y_ref, st_ref):
    """Write the interior of the padded-grid accumulator + partial BN stats."""
    TH, W = THp - 2, Wp - 2
    Co = y_ref.shape[-1]
    inner = acc.reshape(THp, Wp, Co)[1:TH + 1, 1:W + 1, :]
    y_ref[...] = inner.astype(y_ref.dtype)
    s = jnp.sum(inner, axis=(0, 1)).reshape(1, Co)
    ss = jnp.sum(inner * inner, axis=(0, 1)).reshape(1, Co)
    st_ref[...] = jnp.concatenate([s, ss], axis=0)


# --------------------------------------------------------------------------
# Kernels
# --------------------------------------------------------------------------
def _conv1_kernel(xt_ref, w_ref, y_ref, st_ref):
    # xt_ref: (TH+2, Wp, Ci) haloed, zero-padded input tile
    THp, Wp, Ci = xt_ref.shape
    a = xt_ref[...].reshape(THp * Wp, Ci)
    acc = _conv3x3_taps(a, w_ref, Wp)
    _write_tile_and_stats(acc, THp, Wp, y_ref, st_ref)


def _bn_relu_conv2_kernel(yt_ref, sc_ref, sh_ref, w_ref, y2_ref, st_ref):
    # yt_ref: (TH+2, Wp, C) haloed, zero-padded conv1 output tile
    THp, Wp, C = yt_ref.shape
    TH, W = THp - 2, Wp - 2
    t = pl.program_id(1)
    nt = pl.num_programs(1)

    # fused BN1 (folded scale/shift) + ReLU, in f32
    h = jnp.maximum(yt_ref[...].astype(jnp.float32) * sc_ref[...] + sh_ref[...],
                    0.0)
    # conv2 must see zeros at the spatial padding positions *post*-activation.
    row = lax.broadcasted_iota(jnp.int32, (THp, Wp, 1), 0)
    col = lax.broadcasted_iota(jnp.int32, (THp, Wp, 1), 1)
    keep = ((col >= 1) & (col <= W)
            & ((row >= 1) | (t != 0))
            & ((row <= TH) | (t != nt - 1)))
    h = jnp.where(keep, h, 0.0)

    a = h.astype(yt_ref.dtype).reshape(THp * Wp, C)
    acc = _conv3x3_taps(a, w_ref, Wp)
    _write_tile_and_stats(acc, THp, Wp, y2_ref, st_ref)


def _bn2_skip_add_kernel(y2_ref, x_ref, wsk_ref, sc_ref, sh_ref, bsk_ref, o_ref):
    # out = BN2(y2) + (x @ wsk + bsk)
    TH, W, Ci = x_ref.shape
    Co = o_ref.shape[-1]
    skip = jnp.dot(x_ref[...].reshape(TH * W, Ci), wsk_ref[...],
                   preferred_element_type=jnp.float32).reshape(TH, W, Co)
    o_ref[...] = (y2_ref[...].astype(jnp.float32) * sc_ref[...] + sh_ref[...]
                  + skip + bsk_ref[...]).astype(o_ref.dtype)


# --------------------------------------------------------------------------
# Wrapper glue
# --------------------------------------------------------------------------
def _overlap_row_tiles(xpad, tile_rows):
    """(N, H+2, Wp, C) -> (N, nT, tile_rows+2, Wp, C) overlapping haloed tiles."""
    _, Hp, _, _ = xpad.shape
    nT = (Hp - 2) // tile_rows
    tiles = [lax.slice_in_dim(xpad, t * tile_rows, t * tile_rows + tile_rows + 2,
                              axis=1)
             for t in range(nT)]
    return jnp.stack(tiles, axis=1)


def _pick_tile_rows(H, Wp, cmax, budget_bytes=2 * 1024 * 1024):
    best = 1
    for th in range(1, H + 1):
        if H % th == 0 and (th + 2) * Wp * cmax * 4 <= budget_bytes:
            best = th
    return best


@functools.partial(jax.jit, static_argnames=("tile_rows", "compute_dtype"))
def resnet_block_standard(x_nchw, params, *, tile_rows=None,
                          compute_dtype=jnp.bfloat16):
    """Pallas forward of ResnetBlock_Standard.  Input/output are NCHW."""
    (w1, _b1, g1, be1, w2, _b2, g2, be2, wsk, bsk) = params
    # _b1/_b2 (3x3 conv biases) are exactly cancelled by the training-mode BN
    # mean subtraction -> intentionally dropped.
    N, Cin, H, W = x_nchw.shape
    Cout = w1.shape[-1]                       # w1 is HWIO (3, 3, Cin, Cout)
    Ci, Co = _round_up(Cin, LANE), _round_up(Cout, LANE)
    Wp = W + 2
    if tile_rows is None:
        tile_rows = _pick_tile_rows(H, Wp, max(Ci, Co))
    TH = int(tile_rows)
    assert H % TH == 0, "tile_rows must divide H"
    nT = H // TH
    THp = TH + 2
    M = N * H * W
    L = THp * Wp
    f32 = jnp.float32
    cdt = jnp.dtype(compute_dtype)
    isz = cdt.itemsize

    # ---- layout glue (plain JAX; fused by XLA around the custom calls) ----
    x = jnp.transpose(x_nchw, (0, 2, 3, 1)).astype(cdt)              # NHWC
    x = jnp.pad(x, ((0, 0), (0, 0), (0, 0), (0, Ci - Cin)))          # lane-pad C
    xpad = jnp.pad(x, ((0, 0), (1, 1), (1, 1), (0, 0)))              # spatial pad
    x_tiles = _overlap_row_tiles(xpad, TH)                           # (N,nT,THp,Wp,Ci)

    w1p = jnp.pad(w1, ((0, 0), (0, 0), (0, Ci - Cin), (0, Co - Cout))
                  ).reshape(9, Ci, Co).astype(cdt)
    w2p = jnp.pad(w2, ((0, 0), (0, 0), (0, Co - Cout), (0, Co - Cout))
                  ).reshape(9, Co, Co).astype(cdt)
    wskp = jnp.pad(wsk, ((0, Ci - Cin), (0, Co - Cout))).astype(cdt)
    pad_c = lambda v: jnp.pad(v.astype(f32), (0, Co - Cout))
    g1p, be1p, g2p, be2p, bskp = map(pad_c, (g1, be1, g2, be2, bsk))

    cparams = pltpu.CompilerParams(
        dimension_semantics=("parallel", "parallel"),
        vmem_limit_bytes=48 * 1024 * 1024,
    )

    # --------------- phase 1: conv1 + partial BN1 statistics ---------------
    y1, st1 = pl.pallas_call(
        _conv1_kernel,
        grid=(N, nT),
        in_specs=[
            pl.BlockSpec((None, None, THp, Wp, Ci), lambda n, t: (n, t, 0, 0, 0)),
            pl.BlockSpec((9, Ci, Co), lambda n, t: (0, 0, 0)),
        ],
        out_specs=[
            pl.BlockSpec((None, TH, W, Co), lambda n, t: (n, t, 0, 0)),
            pl.BlockSpec((None, None, 2, Co), lambda n, t: (n, t, 0, 0)),
        ],
        out_shape=[
            jax.ShapeDtypeStruct((N, H, W, Co), cdt),
            jax.ShapeDtypeStruct((N, nT, 2, Co), f32),
        ],
        compiler_params=cparams,
        cost_estimate=pl.CostEstimate(
            flops=2 * 9 * Ci * Co * N * nT * L,
            transcendentals=0,
            bytes_accessed=(N * nT * L * Ci + 9 * Ci * Co + N * H * W * Co) * isz
                           + N * nT * 2 * Co * 4),
    )(x_tiles, w1p)

    s1 = jnp.sum(st1[:, :, 0, :], axis=(0, 1))
    ss1 = jnp.sum(st1[:, :, 1, :], axis=(0, 1))
    mu1 = s1 / M
    var1 = jnp.maximum(ss1 / M - mu1 * mu1, 0.0)
    scale1 = g1p * lax.rsqrt(var1 + EPS)
    shift1 = be1p - mu1 * scale1

    # ------ phase 2: fused BN1+ReLU + conv2 + partial BN2 statistics -------
    y1_tiles = _overlap_row_tiles(jnp.pad(y1, ((0, 0), (1, 1), (1, 1), (0, 0))), TH)
    y2, st2 = pl.pallas_call(
        _bn_relu_conv2_kernel,
        grid=(N, nT),
        in_specs=[
            pl.BlockSpec((None, None, THp, Wp, Co), lambda n, t: (n, t, 0, 0, 0)),
            pl.BlockSpec((1, 1, Co), lambda n, t: (0, 0, 0)),
            pl.BlockSpec((1, 1, Co), lambda n, t: (0, 0, 0)),
            pl.BlockSpec((9, Co, Co), lambda n, t: (0, 0, 0)),
        ],
        out_specs=[
            pl.BlockSpec((None, TH, W, Co), lambda n, t: (n, t, 0, 0)),
            pl.BlockSpec((None, None, 2, Co), lambda n, t: (n, t, 0, 0)),
        ],
        out_shape=[
            jax.ShapeDtypeStruct((N, H, W, Co), cdt),
            jax.ShapeDtypeStruct((N, nT, 2, Co), f32),
        ],
        compiler_params=cparams,
        cost_estimate=pl.CostEstimate(
            flops=2 * 9 * Co * Co * N * nT * L,
            transcendentals=0,
            bytes_accessed=(N * nT * L * Co + 9 * Co * Co + N * H * W * Co) * isz
                           + N * nT * 2 * Co * 4),
    )(y1_tiles, scale1.reshape(1, 1, Co), shift1.reshape(1, 1, Co), w2p)

    s2 = jnp.sum(st2[:, :, 0, :], axis=(0, 1))
    ss2 = jnp.sum(st2[:, :, 1, :], axis=(0, 1))
    mu2 = s2 / M
    var2 = jnp.maximum(ss2 / M - mu2 * mu2, 0.0)
    scale2 = g2p * lax.rsqrt(var2 + EPS)
    shift2 = be2p - mu2 * scale2

    # ------------- phase 3: BN2 affine + 1x1 skip conv + add ---------------
    out = pl.pallas_call(
        _bn2_skip_add_kernel,
        grid=(N, nT),
        in_specs=[
            pl.BlockSpec((None, TH, W, Co), lambda n, t: (n, t, 0, 0)),
            pl.BlockSpec((None, TH, W, Ci), lambda n, t: (n, t, 0, 0)),
            pl.BlockSpec((Ci, Co), lambda n, t: (0, 0)),
            pl.BlockSpec((1, 1, Co), lambda n, t: (0, 0, 0)),
            pl.BlockSpec((1, 1, Co), lambda n, t: (0, 0, 0)),
            pl.BlockSpec((1, 1, Co), lambda n, t: (0, 0, 0)),
        ],
        out_specs=pl.BlockSpec((None, TH, W, Co), lambda n, t: (n, t, 0, 0)),
        out_shape=jax.ShapeDtypeStruct((N, H, W, Co), f32),
        compiler_params=cparams,
        cost_estimate=pl.CostEstimate(
            flops=2 * Ci * Co * M,
            transcendentals=0,
            bytes_accessed=N * H * W * ((Ci + Co) * isz + Co * 4) + Ci * Co * isz),
    )(y2, x, wskp, scale2.reshape(1, 1, Co), shift2.reshape(1, 1, Co),
      bskp.reshape(1, 1, Co))

    return jnp.transpose(out[..., :Cout], (0, 3, 1, 2))              # NCHW


# --------------------------------------------------------------------------
# Pure-JAX reference (PyTorch training-mode semantics) + init + self-check
# --------------------------------------------------------------------------
def _bn_train(y, g, b):
    mu = jnp.mean(y, axis=(0, 1, 2), keepdims=True)
    var = jnp.mean((y - mu) ** 2, axis=(0, 1, 2), keepdims=True)
    return (y - mu) * lax.rsqrt(var + EPS) * g + b


def reference_forward(x_nchw, params):
    (w1, b1, g1, be1, w2, b2, g2, be2, wsk, bsk) = params
    x = jnp.transpose(x_nchw, (0, 2, 3, 1)).astype(jnp.float32)
    dn = ('NHWC', 'HWIO', 'NHWC')
    hi = lax.Precision.HIGHEST
    y = lax.conv_general_dilated(x, w1, (1, 1), 'SAME', dimension_numbers=dn,
                                 precision=hi) + b1
    y = jax.nn.relu(_bn_train(y, g1, be1))
    y = lax.conv_general_dilated(y, w2, (1, 1), 'SAME', dimension_numbers=dn,
                                 precision=hi) + b2
    y = _bn_train(y, g2, be2)
    skip = lax.conv_general_dilated(
        x, wsk.reshape(1, 1, *wsk.shape), (1, 1), 'SAME',
        dimension_numbers=dn, precision=hi) + bsk
    return jnp.transpose(y + skip, (0, 3, 1, 2))


def init_params(key, cin, cout):
    ks = jax.random.split(key, 10)
    w1 = jax.random.normal(ks[0], (3, 3, cin, cout), jnp.float32) * 0.2   # HWIO
    b1 = jax.random.normal(ks[1], (cout,), jnp.float32) * 0.1
    g1 = 1.0 + 0.1 * jax.random.normal(ks[2], (cout,), jnp.float32)
    be1 = 0.1 * jax.random.normal(ks[3], (cout,), jnp.float32)
    w2 = jax.random.normal(ks[4], (3, 3, cout, cout), jnp.float32) * 0.2
    b2 = jax.random.normal(ks[5], (cout,), jnp.float32) * 0.1
    g2 = 1.0 + 0.1 * jax.random.normal(ks[6], (cout,), jnp.float32)
    be2 = 0.1 * jax.random.normal(ks[7], (cout,), jnp.float32)
    wsk = jax.random.normal(ks[8], (cin, cout), jnp.float32) * 0.2        # 1x1 conv
    bsk = jax.random.normal(ks[9], (cout,), jnp.float32) * 0.1
    return (w1, b1, g1, be1, w2, b2, g2, be2, wsk, bsk)


if __name__ == "__main__":
    key = jax.random.PRNGKey(0)
    kx, kp = jax.random.split(key)
    N, Cin, H, W, Cout = 2, 4, 16, 16, 8
    x = jax.random.normal(kx, (N, Cin, H, W), jnp.float32)   # NCHW, like PyTorch
    params = init_params(kp, Cin, Cout)

    ref = jax.block_until_ready(reference_forward(x, params))

    # High-precision path (f32 MXU inputs): tight semantic check.
    out_f32 = jax.block_until_ready(
        resnet_block_standard(x, params, tile_rows=8, compute_dtype=jnp.float32))
    assert out_f32.shape == (N, Cout, H, W), out_f32.shape
    err32 = float(jnp.max(jnp.abs(out_f32 - ref)))
    assert jnp.allclose(out_f32, ref, atol=1e-2, rtol=1e-2), \
        f"f32 path max abs err = {err32}"

    # Default fast path: bf16 MXU inputs, f32 accumulation / BN statistics.
    out_bf = jax.block_until_ready(resnet_block_standard(x, params, tile_rows=8))
    assert out_bf.shape == (N, Cout, H, W), out_bf.shape
    errbf = float(jnp.max(jnp.abs(out_bf - ref)))
    assert jnp.allclose(out_bf, ref, atol=1e-1, rtol=1e-1), \
        f"bf16 path max abs err = {errbf}"

    print("KERNEL_OK")
</pallas_src>

<mosaic_0001>
module attributes {stable_mosaic.version = 11 : i64} {
  func.func @_conv1_kernel(%arg0: i32, %arg1: i32, %arg2: memref<1x1x10x18x128xf32, #tpu.memory_space<vmem>>, %arg3: memref<9x128x128xf32, #tpu.memory_space<vmem>>, %arg4: memref<1x8x16x128xf32, #tpu.memory_space<vmem>>, %arg5: memref<1x1x2x128xf32, #tpu.memory_space<vmem>>) attributes {dimension_semantics = [#tpu.dimension_semantics<parallel>, #tpu.dimension_semantics<parallel>], iteration_bounds = array<i64: 2, 2>, scalar_prefetch = 0 : i64, scratch_operands = 0 : i64, tpu.core_type = #tpu.core_type<tc>, window_params = [{transform_indices = @transform_0, window_bounds = array<i64: 1, 1, 10, 18, 128>}, {pipeline_mode = #tpu.pipeline_mode<synchronous>, transform_indices = @transform_1, window_bounds = array<i64: 9, 128, 128>}, {transform_indices = @transform_2, window_bounds = array<i64: 1, 8, 16, 128>}, {transform_indices = @transform_3, window_bounds = array<i64: 1, 1, 2, 128>}]} {
    %c0 = arith.constant 0 : index
    %c0_0 = arith.constant 0 : index
    %c0_1 = arith.constant 0 : index
    %c0_2 = arith.constant 0 : index
    %c0_3 = arith.constant 0 : index
    %0 = vector.load %arg2[%c0, %c0_0, %c0_1, %c0_2, %c0_3] : memref<1x1x10x18x128xf32, #tpu.memory_space<vmem>>, vector<1x1x10x18x128xf32>
    %1 = vector.shape_cast %0 : vector<1x1x10x18x128xf32> to vector<10x18x128xf32>
    %2 = vector.shape_cast %1 : vector<10x18x128xf32> to vector<180x128xf32>
    %c0_4 = arith.constant 0 : index
    %c0_5 = arith.constant 0 : index
    %c0_6 = arith.constant 0 : index
    %3 = vector.load %arg3[%c0_4, %c0_5, %c0_6] : memref<9x128x128xf32, #tpu.memory_space<vmem>>, vector<1x128x128xf32>
    %4 = vector.shape_cast %3 : vector<1x128x128xf32> to vector<128x128xf32>
    %cst = arith.constant dense<0.000000e+00> : vector<180x128xf32>
    %5 = tpu.matmul %2, %4, %cst {dimension_numbers = #tpu.dot_dimension_numbers<[1], [0], [0], [1], [0, 0, 1, 1], [], []>} : vector<180x128xf32>, vector<128x128xf32>, vector<180x128xf32> -> vector<180x128xf32>
    %c19_i32 = arith.constant 19 : i32
    %6 = tpu.dynamic_rotate %5 by %c19_i32 dim 0 : vector<180x128xf32>, i32 -> vector<180x128xf32>
    %c1 = arith.constant 1 : index
    %c0_7 = arith.constant 0 : index
    %c0_8 = arith.constant 0 : index
    %7 = vector.load %arg3[%c1, %c0_7, %c0_8] : memref<9x128x128xf32, #tpu.memory_space<vmem>>, vector<1x128x128xf32>
    %8 = vector.shape_cast %7 : vector<1x128x128xf32> to vector<128x128xf32>
    %cst_9 = arith.constant dense<0.000000e+00> : vector<180x128xf32>
    %9 = tpu.matmul %2, %8, %cst_9 {dimension_numbers = #tpu.dot_dimension_numbers<[1], [0], [0], [1], [0, 0, 1, 1], [], []>} : vector<180x128xf32>, vector<128x128xf32>, vector<180x128xf32> -> vector<180x128xf32>
    %c18_i32 = arith.constant 18 : i32
    %10 = tpu.dynamic_rotate %9 by %c18_i32 dim 0 : vector<180x128xf32>, i32 -> vector<180x128xf32>
    %11 = arith.addf %6, %10 : vector<180x128xf32>
    %c2 = arith.constant 2 : index
    %c0_10 = arith.constant 0 : index
    %c0_11 = arith.constant 0 : index
    %12 = vector.load %arg3[%c2, %c0_10, %c0_11] : memref<9x128x128xf32, #tpu.memory_space<vmem>>, vector<1x128x128xf32>
    %13 = vector.shape_cast %12 : vector<1x128x128xf32> to vector<128x128xf32>
    %cst_12 = arith.constant dense<0.000000e+00> : vector<180x128xf32>
    %14 = tpu.matmul %2, %13, %cst_12 {dimension_numbers = #tpu.dot_dimension_numbers<[1], [0], [0], [1], [0, 0, 1, 1], [], []>} : vector<180x128xf32>, vector<128x128xf32>, vector<180x128xf32> -> vector<180x128xf32>
    %c17_i32 = arith.constant 17 : i32
    %15 = tpu.dynamic_rotate %14 by %c17_i32 dim 0 : vector<180x128xf32>, i32 -> vector<180x128xf32>
    %16 = arith.addf %11, %15 : vector<180x128xf32>
    %c3 = arith.constant 3 : index
    %c0_13 = arith.constant 0 : index
    %c0_14 = arith.constant 0 : index
    %17 = vector.load %arg3[%c3, %c0_13, %c0_14] : memref<9x128x128xf32, #tpu.memory_space<vmem>>, vector<1x128x128xf32>
    %18 = vector.shape_cast %17 : vector<1x128x128xf32> to vector<128x128xf32>
    %cst_15 = arith.constant dense<0.000000e+00> : vector<180x128xf32>
    %19 = tpu.matmul %2, %18, %cst_15 {dimension_numbers = #tpu.dot_dimension_numbers<[1], [0], [0], [1], [0, 0, 1, 1], [], []>} : vector<180x128xf32>, vector<128x128xf32>, vector<180x128xf32> -> vector<180x128xf32>
    %c1_i32 = arith.constant 1 : i32
    %20 = tpu.dynamic_rotate %19 by %c1_i32 dim 0 : vector<180x128xf32>, i32 -> vector<180x128xf32>
    %21 = arith.addf %16, %20 : vector<180x128xf32>
    %c4 = arith.constant 4 : index
    %c0_16 = arith.constant 0 : index
    %c0_17 = arith.constant 0 : index
    %22 = vector.load %arg3[%c4, %c0_16, %c0_17] : memref<9x128x128xf32, #tpu.memory_space<vmem>>, vector<1x128x128xf32>
    %23 = vector.shape_cast %22 : vector<1x128x128xf32> to vector<128x128xf32>
    %cst_18 = arith.constant dense<0.000000e+00> : vector<180x128xf32>
    %24 = tpu.matmul %2, %23, %cst_18 {dimension_numbers = #tpu.dot_dimension_numbers<[1], [0], [0], [1], [0, 0, 1, 1], [], []>} : vector<180x128xf32>, vector<128x128xf32>, vector<180x128xf32> -> vector<180x128xf32>
    %25 = arith.addf %21, %24 : vector<180x128xf32>
    %c5 = arith.constant 5 : index
    %c0_19 = arith.constant 0 : index
    %c0_20 = arith.constant 0 : index
    %26 = vector.load %arg3[%c5, %c0_19, %c0_20] : memref<9x128x128xf32, #tpu.memory_space<vmem>>, vector<1x128x128xf32>
    %27 = vector.shape_cast %26 : vector<1x128x128xf32> to vector<128x128xf32>
    %cst_21 = arith.constant dense<0.000000e+00> : vector<180x128xf32>
    %28 = tpu.matmul %2, %27, %cst_21 {dimension_numbers = #tpu.dot_dimension_numbers<[1], [0], [0], [1], [0, 0, 1, 1], [], []>} : vector<180x128xf32>, vector<128x128xf32>, vector<180x128xf32> -> vector<180x128xf32>
    %c179_i32 = arith.constant 179 : i32
    %29 = tpu.dynamic_rotate %28 by %c179_i32 dim 0 : vector<180x128xf32>, i32 -> vector<180x128xf32>
    %30 = arith.addf %25, %29 : vector<180x128xf32>
    %c6 = arith.constant 6 : index
    %c0_22 = arith.constant 0 : index
    %c0_23 = arith.constant 0 : index
    %31 = vector.load %arg3[%c6, %c0_22, %c0_23] : memref<9x128x128xf32, #tpu.memory_space<vmem>>, vector<1x128x128xf32>
    %32 = vector.shape_cast %31 : vector<1x128x128xf32> to vector<128x128xf32>
    %cst_24 = arith.constant dense<0.000000e+00> : vector<180x128xf32>
    %33 = tpu.matmul %2, %32, %cst_24 {dimension_numbers = #tpu.dot_dimension_numbers<[1], [0], [0], [1], [0, 0, 1, 1], [], []>} : vector<180x128xf32>, vector<128x128xf32>, vector<180x128xf32> -> vector<180x128xf32>
    %c163_i32 = arith.constant 163 : i32
    %34 = tpu.dynamic_rotate %33 by %c163_i32 dim 0 : vector<180x128xf32>, i32 -> vector<180x128xf32>
    %35 = arith.addf %30, %34 : vector<180x128xf32>
    %c7 = arith.constant 7 : index
    %c0_25 = arith.constant 0 : index
    %c0_26 = arith.constant 0 : index
    %36 = vector.load %arg3[%c7, %c0_25, %c0_26] : memref<9x128x128xf32, #tpu.memory_space<vmem>>, vector<1x128x128xf32>
    %37 = vector.shape_cast %36 : vector<1x128x128xf32> to vector<128x128xf32>
    %cst_27 = arith.constant dense<0.000000e+00> : vector<180x128xf32>
    %38 = tpu.matmul %2, %37, %cst_27 {dimension_numbers = #tpu.dot_dimension_numbers<[1], [0], [0], [1], [0, 0, 1, 1], [], []>} : vector<180x128xf32>, vector<128x128xf32>, vector<180x128xf32> -> vector<180x128xf32>
    %c162_i32 = arith.constant 162 : i32
    %39 = tpu.dynamic_rotate %38 by %c162_i32 dim 0 : vector<180x128xf32>, i32 -> vector<180x128xf32>
    %40 = arith.addf %35, %39 : vector<180x128xf32>
    %c8 = arith.constant 8 : index
    %c0_28 = arith.constant 0 : index
    %c0_29 = arith.constant 0 : index
    %41 = vector.load %arg3[%c8, %c0_28, %c0_29] : memref<9x128x128xf32, #tpu.memory_space<vmem>>, vector<1x128x128xf32>
    %42 = vector.shape_cast %41 : vector<1x128x128xf32> to vector<128x128xf32>
    %cst_30 = arith.constant dense<0.000000e+00> : vector<180x128xf32>
    %43 = tpu.matmul %2, %42, %cst_30 {dimension_numbers = #tpu.dot_dimension_numbers<[1], [0], [0], [1], [0, 0, 1, 1], [], []>} : vector<180x128xf32>, vector<128x128xf32>, vector<180x128xf32> -> vector<180x128xf32>
    %c161_i32 = arith.constant 161 : i32
    %44 = tpu.dynamic_rotate %43 by %c161_i32 dim 0 : vector<180x128xf32>, i32 -> vector<180x128xf32>
    %45 = arith.addf %40, %44 : vector<180x128xf32>
    %46 = vector.shape_cast %45 : vector<180x128xf32> to vector<10x18x128xf32>
    %47 = vector.extract_strided_slice %46 {offsets = [1, 1, 0], sizes = [8, 16, 128], strides = [1, 1, 1]} : vector<10x18x128xf32> to vector<8x16x128xf32>
    %c0_31 = arith.constant 0 : index
    %c0_32 = arith.constant 0 : index
    %c0_33 = arith.constant 0 : index
    %c0_34 = arith.constant 0 : index
    %48 = vector.load %arg4[%c0_31, %c0_32, %c0_33, %c0_34] : memref<1x8x16x128xf32, #tpu.memory_space<vmem>>, vector<1x8x16x128xf32>
    %49 = vector.shape_cast %48 : vector<1x8x16x128xf32> to vector<8x16x128xf32>
    %50 = vector.shape_cast %47 : vector<8x16x128xf32> to vector<1x8x16x128xf32>
    tpu.vector_store %arg4[%c0_31, %c0_32, %c0_33, %c0_34], %50 {strides = array<i32>} : memref<1x8x16x128xf32, #tpu.memory_space<vmem>>, vector<1x8x16x128xf32>,
    %cst_35 = arith.constant dense<0.000000e+00> : vector<128xf32>
    %51 = vector.multi_reduction <add>, %47, %cst_35 [0, 1] : vector<8x16x128xf32> to vector<128xf32>
    %52 = vector.shape_cast %51 : vector<128xf32> to vector<1x128xf32>
    %53 = arith.mulf %47, %47 : vector<8x16x128xf32>
    %cst_36 = arith.constant dense<0.000000e+00> : vector<128xf32>
    %54 = vector.multi_reduction <add>, %53, %cst_36 [0, 1] : vector<8x16x128xf32> to vector<128xf32>
    %55 = vector.shape_cast %54 : vector<128xf32> to vector<1x128xf32>
    %56 = tpu.concatenate %52, %55 in 0 : vector<1x128xf32>, vector<1x128xf32> -> vector<2x128xf32>
    %c0_37 = arith.constant 0 : index
    %c0_38 = arith.constant 0 : index
    %c0_39 = arith.constant 0 : index
    %c0_40 = arith.constant 0 : index
    %57 = vector.load %arg5[%c0_37, %c0_38, %c0_39, %c0_40] : memref<1x1x2x128xf32, #tpu.memory_space<vmem>>, vector<1x1x2x128xf32>
    %58 = vector.shape_cast %57 : vector<1x1x2x128xf32> to vector<2x128xf32>
    %59 = vector.shape_cast %56 : vector<2x128xf32> to vector<1x1x2x128xf32>
    tpu.vector_store %arg5[%c0_37, %c0_38, %c0_39, %c0_40], %59 {strides = array<i32>} : memref<1x1x2x128xf32, #tpu.memory_space<vmem>>, vector<1x1x2x128xf32>,
    return
  }
  func.func @transform_0(%arg0: i32, %arg1: i32) -> (i32, i32, i32, i32, i32) {
    %c0_i32 = arith.constant 0 : i32
    %c0_i32_0 = arith.constant 0 : i32
    %c0_i32_1 = arith.constant 0 : i32
    %c0_i32_2 = arith.constant 0 : i32
    return %arg0, %arg1, %c0_i32, %c0_i32_0, %c0_i32_1 : i32, i32, i32, i32, i32
  }
  func.func @transform_1(%arg0: i32, %arg1: i32) -> (i32, i32, i32) {
    %c0_i32 = arith.constant 0 : i32
    %c0_i32_0 = arith.constant 0 : i32
    %c0_i32_1 = arith.constant 0 : i32
    %c0_i32_2 = arith.constant 0 : i32
    return %c0_i32, %c0_i32_0, %c0_i32_1 : i32, i32, i32
  }
  func.func @transform_2(%arg0: i32, %arg1: i32) -> (i32, i32, i32, i32) {
    %c0_i32 = arith.constant 0 : i32
    %c0_i32_0 = arith.constant 0 : i32
    %c0_i32_1 = arith.constant 0 : i32
    return %arg0, %arg1, %c0_i32, %c0_i32_0 : i32, i32, i32, i32
  }
  func.func @transform_3(%arg0: i32, %arg1: i32) -> (i32, i32, i32, i32) {
    %c0_i32 = arith.constant 0 : i32
    %c0_i32_0 = arith.constant 0 : i32
    %c0_i32_1 = arith.constant 0 : i32
    return %arg0, %arg1, %c0_i32, %c0_i32_0 : i32, i32, i32, i32
  }
}

module attributes {stable_mosaic.version = 11 : i64} {
  func.func @_bn_relu_conv2_kernel(%arg0: i32, %arg1: i32, %arg2: memref<1x1x10x18x128xf32, #tpu.memory_space<vmem>>, %arg3: memref<1x1x128xf32, #tpu.memory_space<vmem>>, %arg4: memref<1x1x128xf32, #tpu.memory_space<vmem>>, %arg5: memref<9x128x128xf32, #tpu.memory_space<vmem>>, %arg6: memref<1x8x16x128xf32, #tpu.memory_space<vmem>>, %arg7: memref<1x1x2x128xf32, #tpu.memory_space<vmem>>) attributes {dimension_semantics = [#tpu.dimension_semantics<parallel>, #tpu.dimension_semantics<parallel>], iteration_bounds = array<i64: 2, 2>, scalar_prefetch = 0 : i64, scratch_operands = 0 : i64, tpu.core_type = #tpu.core_type<tc>, window_params = [{transform_indices = @transform_0, window_bounds = array<i64: 1, 1, 10, 18, 128>}, {pipeline_mode = #tpu.pipeline_mode<synchronous>, transform_indices = @transform_1, window_bounds = array<i64: 1, 1, 128>}, {pipeline_mode = #tpu.pipeline_mode<synchronous>, transform_indices = @transform_2, window_bounds = array<i64: 1, 1, 128>}, {pipeline_mode = #tpu.pipeline_mode<synchronous>, transform_indices = @transform_3, window_bounds = array<i64: 9, 128, 128>}, {transform_indices = @transform_4, window_bounds = array<i64: 1, 8, 16, 128>}, {transform_indices = @transform_5, window_bounds = array<i64: 1, 1, 2, 128>}]} {
    %c0 = arith.constant 0 : index
    %c0_0 = arith.constant 0 : index
    %c0_1 = arith.constant 0 : index
    %c0_2 = arith.constant 0 : index
    %c0_3 = arith.constant 0 : index
    %0 = vector.load %arg2[%c0, %c0_0, %c0_1, %c0_2, %c0_3] : memref<1x1x10x18x128xf32, #tpu.memory_space<vmem>>, vector<1x1x10x18x128xf32>
    %1 = vector.shape_cast %0 : vector<1x1x10x18x128xf32> to vector<10x18x128xf32>
    %c0_4 = arith.constant 0 : index
    %c0_5 = arith.constant 0 : index
    %c0_6 = arith.constant 0 : index
    %2 = vector.load %arg3[%c0_4, %c0_5, %c0_6] : memref<1x1x128xf32, #tpu.memory_space<vmem>>, vector<1x1x128xf32>
    %3 = vector.broadcast %2 : vector<1x1x128xf32> to vector<10x18x128xf32>
    %4 = arith.mulf %1, %3 : vector<10x18x128xf32>
    %c0_7 = arith.constant 0 : index
    %c0_8 = arith.constant 0 : index
    %c0_9 = arith.constant 0 : index
    %5 = vector.load %arg4[%c0_7, %c0_8, %c0_9] : memref<1x1x128xf32, #tpu.memory_space<vmem>>, vector<1x1x128xf32>
    %6 = vector.broadcast %5 : vector<1x1x128xf32> to vector<10x18x128xf32>
    %7 = arith.addf %4, %6 : vector<10x18x128xf32>
    %cst = arith.constant 0.000000e+00 : f32
    %8 = vector.broadcast %cst : f32 to vector<10x18x128xf32>
    %9 = arith.maximumf %7, %8 : vector<10x18x128xf32>
    %10 = tpu.iota {dimensions = array<i32: 0>} : vector<10x18x1xi32>
    %11 = tpu.iota {dimensions = array<i32: 1>} : vector<10x18x1xi32>
    %c1_i32 = arith.constant 1 : i32
    %12 = vector.broadcast %c1_i32 : i32 to vector<10x18x1xi32>
    %13 = arith.cmpi sge, %11, %12 : vector<10x18x1xi32>
    %c16_i32 = arith.constant 16 : i32
    %14 = vector.broadcast %c16_i32 : i32 to vector<10x18x1xi32>
    %15 = arith.cmpi sle, %11, %14 : vector<10x18x1xi32>
    %16 = arith.andi %13, %15 : vector<10x18x1xi1>
    %c1_i32_10 = arith.constant 1 : i32
    %17 = vector.broadcast %c1_i32_10 : i32 to vector<10x18x1xi32>
    %18 = arith.cmpi sge, %10, %17 : vector<10x18x1xi32>
    %c0_i32 = arith.constant 0 : i32
    %19 = arith.cmpi ne, %arg1, %c0_i32 : i32
    %20 = vector.broadcast %19 : i1 to vector<10x18x1xi1>
    %21 = arith.ori %18, %20 : vector<10x18x1xi1>
    %22 = arith.andi %16, %21 : vector<10x18x1xi1>
    %c8_i32 = arith.constant 8 : i32
    %23 = vector.broadcast %c8_i32 : i32 to vector<10x18x1xi32>
    %24 = arith.cmpi sle, %10, %23 : vector<10x18x1xi32>
    %c1_i32_11 = arith.constant 1 : i32
    %25 = arith.cmpi ne, %arg1, %c1_i32_11 : i32
    %26 = vector.broadcast %25 : i1 to vector<10x18x1xi1>
    %27 = arith.ori %24, %26 : vector<10x18x1xi1>
    %28 = arith.andi %22, %27 : vector<10x18x1xi1>
    %cst_12 = arith.constant 0.000000e+00 : f32
    %29 = vector.shape_cast %28 : vector<10x18x1xi1> to vector<10x18x1xi1>
    %30 = vector.broadcast %29 : vector<10x18x1xi1> to vector<10x18x128xi1>
    %31 = vector.broadcast %cst_12 : f32 to vector<10x18x128xf32>
    %32 = arith.select %30, %9, %31 : vector<10x18x128xi1>, vector<10x18x128xf32>
    %33 = vector.shape_cast %32 : vector<10x18x128xf32> to vector<180x128xf32>
    %c0_13 = arith.constant 0 : index
    %c0_14 = arith.constant 0 : index
    %c0_15 = arith.constant 0 : index
    %34 = vector.load %arg5[%c0_13, %c0_14, %c0_15] : memref<9x128x128xf32, #tpu.memory_space<vmem>>, vector<1x128x128xf32>
    %35 = vector.shape_cast %34 : vector<1x128x128xf32> to vector<128x128xf32>
    %cst_16 = arith.constant dense<0.000000e+00> : vector<180x128xf32>
    %36 = tpu.matmul %33, %35, %cst_16 {dimension_numbers = #tpu.dot_dimension_numbers<[1], [0], [0], [1], [0, 0, 1, 1], [], []>} : vector<180x128xf32>, vector<128x128xf32>, vector<180x128xf32> -> vector<180x128xf32>
    %c19_i32 = arith.constant 19 : i32
    %37 = tpu.dynamic_rotate %36 by %c19_i32 dim 0 : vector<180x128xf32>, i32 -> vector<180x128xf32>
    %c1 = arith.constant 1 : index
    %c0_17 = arith.constant 0 : index
    %c0_18 = arith.constant 0 : index
    %38 = vector.load %arg5[%c1, %c0_17, %c0_18] : memref<9x128x128xf32, #tpu.memory_space<vmem>>, vector<1x128x128xf32>
    %39 = vector.shape_cast %38 : vector<1x128x128xf32> to vector<128x128xf32>
    %cst_19 = arith.constant dense<0.000000e+00> : vector<180x128xf32>
    %40 = tpu.matmul %33, %39, %cst_19 {dimension_numbers = #tpu.dot_dimension_numbers<[1], [0], [0], [1], [0, 0, 1, 1], [], []>} : vector<180x128xf32>, vector<128x128xf32>, vector<180x128xf32> -> vector<180x128xf32>
    %c18_i32 = arith.constant 18 : i32
    %41 = tpu.dynamic_rotate %40 by %c18_i32 dim 0 : vector<180x128xf32>, i32 -> vector<180x128xf32>
    %42 = arith.addf %37, %41 : vector<180x128xf32>
    %c2 = arith.constant 2 : index
    %c0_20 = arith.constant 0 : index
    %c0_21 = arith.constant 0 : index
    %43 = vector.load %arg5[%c2, %c0_20, %c0_21] : memref<9x128x128xf32, #tpu.memory_space<vmem>>, vector<1x128x128xf32>
    %44 = vector.shape_cast %43 : vector<1x128x128xf32> to vector<128x128xf32>
    %cst_22 = arith.constant dense<0.000000e+00> : vector<180x128xf32>
    %45 = tpu.matmul %33, %44, %cst_22 {dimension_numbers = #tpu.dot_dimension_numbers<[1], [0], [0], [1], [0, 0, 1, 1], [], []>} : vector<180x128xf32>, vector<128x128xf32>, vector<180x128xf32> -> vector<180x128xf32>
    %c17_i32 = arith.constant 17 : i32
    %46 = tpu.dynamic_rotate %45 by %c17_i32 dim 0 : vector<180x128xf32>, i32 -> vector<180x128xf32>
    %47 = arith.addf %42, %46 : vector<180x128xf32>
    %c3 = arith.constant 3 : index
    %c0_23 = arith.constant 0 : index
    %c0_24 = arith.constant 0 : index
    %48 = vector.load %arg5[%c3, %c0_23, %c0_24] : memref<9x128x128xf32, #tpu.memory_space<vmem>>, vector<1x128x128xf32>
    %49 = vector.shape_cast %48 : vector<1x128x128xf32> to vector<128x128xf32>
    %cst_25 = arith.constant dense<0.000000e+00> : vector<180x128xf32>
    %50 = tpu.matmul %33, %49, %cst_25 {dimension_numbers = #tpu.dot_dimension_numbers<[1], [0], [0], [1], [0, 0, 1, 1], [], []>} : vector<180x128xf32>, vector<128x128xf32>, vector<180x128xf32> -> vector<180x128xf32>
    %c1_i32_26 = arith.constant 1 : i32
    %51 = tpu.dynamic_rotate %50 by %c1_i32_26 dim 0 : vector<180x128xf32>, i32 -> vector<180x128xf32>
    %52 = arith.addf %47, %51 : vector<180x128xf32>
    %c4 = arith.constant 4 : index
    %c0_27 = arith.constant 0 : index
    %c0_28 = arith.constant 0 : index
    %53 = vector.load %arg5[%c4, %c0_27, %c0_28] : memref<9x128x128xf32, #tpu.memory_space<vmem>>, vector<1x128x128xf32>
    %54 = vector.shape_cast %53 : vector<1x128x128xf32> to vector<128x128xf32>
    %cst_29 = arith.constant dense<0.000000e+00> : vector<180x128xf32>
    %55 = tpu.matmul %33, %54, %cst_29 {dimension_numbers = #tpu.dot_dimension_numbers<[1], [0], [0], [1], [0, 0, 1, 1], [], []>} : vector<180x128xf32>, vector<128x128xf32>, vector<180x128xf32> -> vector<180x128xf32>
    %56 = arith.addf %52, %55 : vector<180x128xf32>
    %c5 = arith.constant 5 : index
    %c0_30 = arith.constant 0 : index
    %c0_31 = arith.constant 0 : index
    %57 = vector.load %arg5[%c5, %c0_30, %c0_31] : memref<9x128x128xf32, #tpu.memory_space<vmem>>, vector<1x128x128xf32>
    %58 = vector.shape_cast %57 : vector<1x128x128xf32> to vector<128x128xf32>
    %cst_32 = arith.constant dense<0.000000e+00> : vector<180x128xf32>
    %59 = tpu.matmul %33, %58, %cst_32 {dimension_numbers = #tpu.dot_dimension_numbers<[1], [0], [0], [1], [0, 0, 1, 1], [], []>} : vector<180x128xf32>, vector<128x128xf32>, vector<180x128xf32> -> vector<180x128xf32>
    %c179_i32 = arith.constant 179 : i32
    %60 = tpu.dynamic_rotate %59 by %c179_i32 dim 0 : vector<180x128xf32>, i32 -> vector<180x128xf32>
    %61 = arith.addf %56, %60 : vector<180x128xf32>
    %c6 = arith.constant 6 : index
    %c0_33 = arith.constant 0 : index
    %c0_34 = arith.constant 0 : index
    %62 = vector.load %arg5[%c6, %c0_33, %c0_34] : memref<9x128x128xf32, #tpu.memory_space<vmem>>, vector<1x128x128xf32>
    %63 = vector.shape_cast %62 : vector<1x128x128xf32> to vector<128x128xf32>
    %cst_35 = arith.constant dense<0.000000e+00> : vector<180x128xf32>
    %64 = tpu.matmul %33, %63, %cst_35 {dimension_numbers = #tpu.dot_dimension_numbers<[1], [0], [0], [1], [0, 0, 1, 1], [], []>} : vector<180x128xf32>, vector<128x128xf32>, vector<180x128xf32> -> vector<180x128xf32>
    %c163_i32 = arith.constant 163 : i32
    %65 = tpu.dynamic_rotate %64 by %c163_i32 dim 0 : vector<180x128xf32>, i32 -> vector<180x128xf32>
    %66 = arith.addf %61, %65 : vector<180x128xf32>
    %c7 = arith.constant 7 : index
    %c0_36 = arith.constant 0 : index
    %c0_37 = arith.constant 0 : index
    %67 = vector.load %arg5[%c7, %c0_36, %c0_37] : memref<9x128x128xf32, #tpu.memory_space<vmem>>, vector<1x128x128xf32>
    %68 = vector.shape_cast %67 : vector<1x128x128xf32> to vector<128x128xf32>
    %cst_38 = arith.constant dense<0.000000e+00> : vector<180x128xf32>
    %69 = tpu.matmul %33, %68, %cst_38 {dimension_numbers = #tpu.dot_dimension_numbers<[1], [0], [0], [1], [0, 0, 1, 1], [], []>} : vector<180x128xf32>, vector<128x128xf32>, vector<180x128xf32> -> vector<180x128xf32>
    %c162_i32 = arith.constant 162 : i32
    %70 = tpu.dynamic_rotate %69 by %c162_i32 dim 0 : vector<180x128xf32>, i32 -> vector<180x128xf32>
    %71 = arith.addf %66, %70 : vector<180x128xf32>
    %c8 = arith.constant 8 : index
    %c0_39 = arith.constant 0 : index
    %c0_40 = arith.constant 0 : index
    %72 = vector.load %arg5[%c8, %c0_39, %c0_40] : memref<9x128x128xf32, #tpu.memory_space<vmem>>, vector<1x128x128xf32>
    %73 = vector.shape_cast %72 : vector<1x128x128xf32> to vector<128x128xf32>
    %cst_41 = arith.constant dense<0.000000e+00> : vector<180x128xf32>
    %74 = tpu.matmul %33, %73, %cst_41 {dimension_numbers = #tpu.dot_dimension_numbers<[1], [0], [0], [1], [0, 0, 1, 1], [], []>} : vector<180x128xf32>, vector<128x128xf32>, vector<180x128xf32> -> vector<180x128xf32>
    %c161_i32 = arith.constant 161 : i32
    %75 = tpu.dynamic_rotate %74 by %c161_i32 dim 0 : vector<180x128xf32>, i32 -> vector<180x128xf32>
    %76 = arith.addf %71, %75 : vector<180x128xf32>
    %77 = vector.shape_cast %76 : vector<180x128xf32> to vector<10x18x128xf32>
    %78 = vector.extract_strided_slice %77 {offsets = [1, 1, 0], sizes = [8, 16, 128], strides = [1, 1, 1]} : vector<10x18x128xf32> to vector<8x16x128xf32>
    %c0_42 = arith.constant 0 : index
    %c0_43 = arith.constant 0 : index
    %c0_44 = arith.constant 0 : index
    %c0_45 = arith.constant 0 : index
    %79 = vector.load %arg6[%c0_42, %c0_43, %c0_44, %c0_45] : memref<1x8x16x128xf32, #tpu.memory_space<vmem>>, vector<1x8x16x128xf32>
    %80 = vector.shape_cast %79 : vector<1x8x16x128xf32> to vector<8x16x128xf32>
    %81 = vector.shape_cast %78 : vector<8x16x128xf32> to vector<1x8x16x128xf32>
    tpu.vector_store %arg6[%c0_42, %c0_43, %c0_44, %c0_45], %81 {strides = array<i32>} : memref<1x8x16x128xf32, #tpu.memory_space<vmem>>, vector<1x8x16x128xf32>,
    %cst_46 = arith.constant dense<0.000000e+00> : vector<128xf32>
    %82 = vector.multi_reduction <add>, %78, %cst_46 [0, 1] : vector<8x16x128xf32> to vector<128xf32>
    %83 = vector.shape_cast %82 : vector<128xf32> to vector<1x128xf32>
    %84 = arith.mulf %78, %78 : vector<8x16x128xf32>
    %cst_47 = arith.constant dense<0.000000e+00> : vector<128xf32>
    %85 = vector.multi_reduction <add>, %84, %cst_47 [0, 1] : vector<8x16x128xf32> to vector<128xf32>
    %86 = vector.shape_cast %85 : vector<128xf32> to vector<1x128xf32>
    %87 = tpu.concatenate %83, %86 in 0 : vector<1x128xf32>, vector<1x128xf32> -> vector<2x128xf32>
    %c0_48 = arith.constant 0 : index
    %c0_49 = arith.constant 0 : index
    %c0_50 = arith.constant 0 : index
    %c0_51 = arith.constant 0 : index
    %88 = vector.load %arg7[%c0_48, %c0_49, %c0_50, %c0_51] : memref<1x1x2x128xf32, #tpu.memory_space<vmem>>, vector<1x1x2x128xf32>
    %89 = vector.shape_cast %88 : vector<1x1x2x128xf32> to vector<2x128xf32>
    %90 = vector.shape_cast %87 : vector<2x128xf32> to vector<1x1x2x128xf32>
    tpu.vector_store %arg7[%c0_48, %c0_49, %c0_50, %c0_51], %90 {strides = array<i32>} : memref<1x1x2x128xf32, #tpu.memory_space<vmem>>, vector<1x1x2x128xf32>,
    return
  }
  func.func @transform_0(%arg0: i32, %arg1: i32) -> (i32, i32, i32, i32, i32) {
    %c0_i32 = arith.constant 0 : i32
    %c0_i32_0 = arith.constant 0 : i32
    %c0_i32_1 = arith.constant 0 : i32
    %c0_i32_2 = arith.constant 0 : i32
    return %arg0, %arg1, %c0_i32, %c0_i32_0, %c0_i32_1 : i32, i32, i32, i32, i32
  }
  func.func @transform_1(%arg0: i32, %arg1: i32) -> (i32, i32, i32) {
    %c0_i32 = arith.constant 0 : i32
    %c0_i32_0 = arith.constant 0 : i32
    %c0_i32_1 = arith.constant 0 : i32
    %c0_i32_2 = arith.constant 0 : i32
    return %c0_i32, %c0_i32_0, %c0_i32_1 : i32, i32, i32
  }
  func.func @transform_2(%arg0: i32, %arg1: i32) -> (i32, i32, i32) {
    %c0_i32 = arith.constant 0 : i32
    %c0_i32_0 = arith.constant 0 : i32
    %c0_i32_1 = arith.constant 0 : i32
    %c0_i32_2 = arith.constant 0 : i32
    return %c0_i32, %c0_i32_0, %c0_i32_1 : i32, i32, i32
  }
  func.func @transform_3(%arg0: i32, %arg1: i32) -> (i32, i32, i32) {
    %c0_i32 = arith.constant 0 : i32
    %c0_i32_0 = arith.constant 0 : i32
    %c0_i32_1 = arith.constant 0 : i32
    %c0_i32_2 = arith.constant 0 : i32
    return %c0_i32, %c0_i32_0, %c0_i32_1 : i32, i32, i32
  }
  func.func @transform_4(%arg0: i32, %arg1: i32) -> (i32, i32, i32, i32) {
    %c0_i32 = arith.constant 0 : i32
    %c0_i32_0 = arith.constant 0 : i32
    %c0_i32_1 = arith.constant 0 : i32
    return %arg0, %arg1, %c0_i32, %c0_i32_0 : i32, i32, i32, i32
  }
  func.func @transform_5(%arg0: i32, %arg1: i32) -> (i32, i32, i32, i32) {
    %c0_i32 = arith.constant 0 : i32
    %c0_i32_0 = arith.constant 0 : i32
    %c0_i32_1 = arith.constant 0 : i32
    return %arg0, %arg1, %c0_i32, %c0_i32_0 : i32, i32, i32, i32
  }
}

module attributes {stable_mosaic.version = 11 : i64} {
  func.func @_bn2_skip_add_kernel(%arg0: i32, %arg1: i32, %arg2: memref<1x8x16x128xf32, #tpu.memory_space<vmem>>, %arg3: memref<1x8x16x128xf32, #tpu.memory_space<vmem>>, %arg4: memref<128x128xf32, #tpu.memory_space<vmem>>, %arg5: memref<1x1x128xf32, #tpu.memory_space<vmem>>, %arg6: memref<1x1x128xf32, #tpu.memory_space<vmem>>, %arg7: memref<1x1x128xf32, #tpu.memory_space<vmem>>, %arg8: memref<1x8x16x128xf32, #tpu.memory_space<vmem>>) attributes {dimension_semantics = [#tpu.dimension_semantics<parallel>, #tpu.dimension_semantics<parallel>], iteration_bounds = array<i64: 2, 2>, scalar_prefetch = 0 : i64, scratch_operands = 0 : i64, tpu.core_type = #tpu.core_type<tc>, window_params = [{transform_indices = @transform_0, window_bounds = array<i64: 1, 8, 16, 128>}, {transform_indices = @transform_1, window_bounds = array<i64: 1, 8, 16, 128>}, {pipeline_mode = #tpu.pipeline_mode<synchronous>, transform_indices = @transform_2, window_bounds = array<i64: 128, 128>}, {pipeline_mode = #tpu.pipeline_mode<synchronous>, transform_indices = @transform_3, window_bounds = array<i64: 1, 1, 128>}, {pipeline_mode = #tpu.pipeline_mode<synchronous>, transform_indices = @transform_4, window_bounds = array<i64: 1, 1, 128>}, {pipeline_mode = #tpu.pipeline_mode<synchronous>, transform_indices = @transform_5, window_bounds = array<i64: 1, 1, 128>}, {transform_indices = @transform_6, window_bounds = array<i64: 1, 8, 16, 128>}]} {
    %c0 = arith.constant 0 : index
    %c0_0 = arith.constant 0 : index
    %c0_1 = arith.constant 0 : index
    %c0_2 = arith.constant 0 : index
    %0 = vector.load %arg3[%c0, %c0_0, %c0_1, %c0_2] : memref<1x8x16x128xf32, #tpu.memory_space<vmem>>, vector<1x8x16x128xf32>
    %1 = vector.shape_cast %0 : vector<1x8x16x128xf32> to vector<8x16x128xf32>
    %2 = vector.shape_cast %1 : vector<8x16x128xf32> to vector<128x128xf32>
    %c0_3 = arith.constant 0 : index
    %c0_4 = arith.constant 0 : index
    %3 = vector.load %arg4[%c0_3, %c0_4] : memref<128x128xf32, #tpu.memory_space<vmem>>, vector<128x128xf32>
    %cst = arith.constant dense<0.000000e+00> : vector<128x128xf32>
    %4 = tpu.matmul %2, %3, %cst {dimension_numbers = #tpu.dot_dimension_numbers<[1], [0], [0], [1], [0, 0, 1, 1], [], []>} : vector<128x128xf32>, vector<128x128xf32>, vector<128x128xf32> -> vector<128x128xf32>
    %5 = vector.shape_cast %4 : vector<128x128xf32> to vector<8x16x128xf32>
    %c0_5 = arith.constant 0 : index
    %c0_6 = arith.constant 0 : index
    %c0_7 = arith.constant 0 : index
    %c0_8 = arith.constant 0 : index
    %6 = vector.load %arg2[%c0_5, %c0_6, %c0_7, %c0_8] : memref<1x8x16x128xf32, #tpu.memory_space<vmem>>, vector<1x8x16x128xf32>
    %7 = vector.shape_cast %6 : vector<1x8x16x128xf32> to vector<8x16x128xf32>
    %c0_9 = arith.constant 0 : index
    %c0_10 = arith.constant 0 : index
    %c0_11 = arith.constant 0 : index
    %8 = vector.load %arg5[%c0_9, %c0_10, %c0_11] : memref<1x1x128xf32, #tpu.memory_space<vmem>>, vector<1x1x128xf32>
    %9 = vector.broadcast %8 : vector<1x1x128xf32> to vector<8x16x128xf32>
    %10 = arith.mulf %7, %9 : vector<8x16x128xf32>
    %c0_12 = arith.constant 0 : index
    %c0_13 = arith.constant 0 : index
    %c0_14 = arith.constant 0 : index
    %11 = vector.load %arg6[%c0_12, %c0_13, %c0_14] : memref<1x1x128xf32, #tpu.memory_space<vmem>>, vector<1x1x128xf32>
    %12 = vector.broadcast %11 : vector<1x1x128xf32> to vector<8x16x128xf32>
    %13 = arith.addf %10, %12 : vector<8x16x128xf32>
    %14 = arith.addf %13, %5 : vector<8x16x128xf32>
    %c0_15 = arith.constant 0 : index
    %c0_16 = arith.constant 0 : index
    %c0_17 = arith.constant 0 : index
    %15 = vector.load %arg7[%c0_15, %c0_16, %c0_17] : memref<1x1x128xf32, #tpu.memory_space<vmem>>, vector<1x1x128xf32>
    %16 = vector.broadcast %15 : vector<1x1x128xf32> to vector<8x16x128xf32>
    %17 = arith.addf %14, %16 : vector<8x16x128xf32>
    %c0_18 = arith.constant 0 : index
    %c0_19 = arith.constant 0 : index
    %c0_20 = arith.constant 0 : index
    %c0_21 = arith.constant 0 : index
    %18 = vector.load %arg8[%c0_18, %c0_19, %c0_20, %c0_21] : memref<1x8x16x128xf32, #tpu.memory_space<vmem>>, vector<1x8x16x128xf32>
    %19 = vector.shape_cast %18 : vector<1x8x16x128xf32> to vector<8x16x128xf32>
    %20 = vector.shape_cast %17 : vector<8x16x128xf32> to vector<1x8x16x128xf32>
    tpu.vector_store %arg8[%c0_18, %c0_19, %c0_20, %c0_21], %20 {strides = array<i32>} : memref<1x8x16x128xf32, #tpu.memory_space<vmem>>, vector<1x8x16x128xf32>,
    return
  }
  func.func @transform_0(%arg0: i32, %arg1: i32) -> (i32, i32, i32, i32) {
    %c0_i32 = arith.constant 0 : i32
    %c0_i32_0 = arith.constant 0 : i32
    %c0_i32_1 = arith.constant 0 : i32
    return %arg0, %arg1, %c0_i32, %c0_i32_0 : i32, i32, i32, i32
  }
  func.func @transform_1(%arg0: i32, %arg1: i32) -> (i32, i32, i32, i32) {
    %c0_i32 = arith.constant 0 : i32
    %c0_i32_0 = arith.constant 0 : i32
    %c0_i32_1 = arith.constant 0 : i32
    return %arg0, %arg1, %c0_i32, %c0_i32_0 : i32, i32, i32, i32
  }
  func.func @transform_2(%arg0: i32, %arg1: i32) -> (i32, i32) {
    %c0_i32 = arith.constant 0 : i32
    %c0_i32_0 = arith.constant 0 : i32
    %c0_i32_1 = arith.constant 0 : i32
    return %c0_i32, %c0_i32_0 : i32, i32
  }
  func.func @transform_3(%arg0: i32, %arg1: i32) -> (i32, i32, i32) {
    %c0_i32 = arith.constant 0 : i32
    %c0_i32_0 = arith.constant 0 : i32
    %c0_i32_1 = arith.constant 0 : i32
    %c0_i32_2 = arith.constant 0 : i32
    return %c0_i32, %c0_i32_0, %c0_i32_1 : i32, i32, i32
  }
  func.func @transform_4(%arg0: i32, %arg1: i32) -> (i32, i32, i32) {
    %c0_i32 = arith.constant 0 : i32
    %c0_i32_0 = arith.constant 0 : i32
    %c0_i32_1 = arith.constant 0 : i32
    %c0_i32_2 = arith.constant 0 : i32
    return %c0_i32, %c0_i32_0, %c0_i32_1 : i32, i32, i32
  }
  func.func @transform_5(%arg0: i32, %arg1: i32) -> (i32, i32, i32) {
    %c0_i32 = arith.constant 0 : i32
    %c0_i32_0 = arith.constant 0 : i32
    %c0_i32_1 = arith.constant 0 : i32
    %c0_i32_2 = arith.constant 0 : i32
    return %c0_i32, %c0_i32_0, %c0_i32_1 : i32, i32, i32
  }
  func.func @transform_6(%arg0: i32, %arg1: i32) -> (i32, i32, i32, i32) {
    %c0_i32 = arith.constant 0 : i32
    %c0_i32_0 = arith.constant 0 : i32
    %c0_i32_1 = arith.constant 0 : i32
    return %arg0, %arg1, %c0_i32, %c0_i32_0 : i32, i32, i32, i32
  }
}

</mosaic_0001>

<llo_original>
// kernel: resnet_block_standard.5
$region0: #{resnet_block_standard.5}
  #allocation0 [shape = 'u32[]', space=smem, size = 0x4, offset = 0x4, fixed_abs, tag = 'smem constant byte address 0x4 - core index']
  #allocation1 [shape = 'u32[144,128]{1,0:T(1,128)}', space=vmem, size = 0x12000, scoped, tag = 'internal scratch']
  %s0 = inlined_call_operand.vmem [shape: f32[2,16,16,128], index: 0, kind: input, shape index: {}]
  %s1 = inlined_call_operand.vmem [shape: f32[2,16,16,128], index: 1, kind: input, shape index: {}]
  %s2 = inlined_call_operand.vmem [shape: f32[128,128], index: 2, kind: input, shape index: {}]
  %s3 = inlined_call_operand.vmem [shape: f32[1,1,128], index: 3, kind: input, shape index: {}]
  %s4 = inlined_call_operand.vmem [shape: f32[1,1,128], index: 4, kind: input, shape index: {}]
  %s5 = inlined_call_operand.vmem [shape: f32[1,1,128], index: 5, kind: input, shape index: {}]
  %s6 = inlined_call_operand.vmem [shape: f32[2,16,16,128], index: 6, kind: output, shape index: {}]
  %s7 = sld [smem:[#allocation0]]
  $region57: #{resnet_block_standard.5} parent=0
    _
  %s9 = ssub.s32 1, %s7
  %s10 = scalar_select 0, %s9, %s7
  loop: start=0, step=1, limit=6
  $region2: #{resnet_block_standard.5} parent=0 // loop_pre_header
    _
  $region3: #{resnet_block_standard.5} parent=0 // loop_header
    %s12 = sphi 0, %s16
    %p13 = scmp.ge.s32.totalorder %s12, 6
    %s19 = sphi 0, %s31
    %s20 = sphi 0, %s27
    %s21 = sphi 0, %s19
    %s22 = sphi 0, %s20
    %s23 = sphi 0, %s21
    %s24 = sphi 0, %s22
    %s36 = sphi 0, %s38
    %s39 = sphi 0, %s36
    %s40 = sphi 0, %s39
    %s56 = sphi 0, %s40
    %s64 = sphi 0, %s66
    %s67 = sphi 0, %s64
    %s68 = sphi 0, %s67
    %s84 = sphi 0, %s68
    %s88 = sphi 0, %s88
    %s90 = sphi 0, %s88
    %s91 = sphi 0, %s90
    %s105 = sphi 0, %s91
    %s109 = sphi 0, %s109
    %s111 = sphi 0, %s109
    %s112 = sphi 0, %s111
    %s126 = sphi 0, %s112
    %s130 = sphi 0, %s130
    %s132 = sphi 0, %s130
    %s133 = sphi 0, %s132
    %s147 = sphi 0, %s133
    %s151 = sphi 0, %s151
    %s153 = sphi 0, %s151
    %s154 = sphi 0, %s153
    %s168 = sphi 0, %s154
    %s176 = sphi 0, %s178
    %s179 = sphi 0, %s176
    %s180 = sphi 0, %s179
    %s196 = sphi 0, %s180
  $region4: #{resnet_block_standard.5} parent=0 // loop_header_branch
    %15 = sbr.rel (%p13) target = $region8
  $region5: #{resnet_block_standard.5} parent=0 // loop_body
    %s17 = ssub.s32 %s12, 1
    %s18 = ssub.s32 %s12, 2
    %s25 = sadd.s32 1, %s20
    %p26 = scmp.ge.s32.totalorder %s25, 2
    %s27 = scalar_select %p26, 0, %s25
    %s28 = sadd.s32 1, %s19
    %s29 = scalar_select %p26, %s28, %s19
    %p30 = scmp.ge.s32.totalorder %s29, 2
    %s31 = scalar_select %p30, 0, %s29
    %s32 = ssub.s32 %s19, %s31
    %s33 = ssub.s32 %s20, %s27
    %s34 = sor.u32 %s32, %s33
    %p35 = scmp.eq.s32.totalorder %s34, 0
    %s37 = sadd.s32 %s36, 1
    %s38 = scalar_select %p35, %s36, %s37
    %p41 = pneg %p35
    %p42 = scmp.eq.s32.totalorder %s12, 3
    %p43 = por %p41, %p42
    %p44 = scmp.ne.s32.totalorder %s36, %s39
    %p45 = scmp.eq.s32.totalorder %s12, 0
    %p46 = por %p44, %p45
    %p47 = scmp.ne.s32.totalorder %s36, %s39
    %p48 = scmp.eq.s32.totalorder %s17, 3
    %p49 = por %p47, %p48
    %p50 = scmp.ne.s32.totalorder %s39, %s40
    %p51 = scmp.eq.s32.totalorder %s17, 0
    %p52 = por %p50, %p51
    %p53 = scmp.ne.s32.totalorder %s39, %s40
    %p54 = scmp.eq.s32.totalorder %s18, 3
    %p55 = por %p53, %p54
    %p57 = scmp.ne.s32.totalorder %s40, %s56
    %p58 = scmp.eq.s32.totalorder %s18, 0
    %p59 = por %p57, %p58
    %s60 = ssub.s32 %s19, %s31
    %s61 = ssub.s32 %s20, %s27
    %s62 = sor.u32 %s60, %s61
    %p63 = scmp.eq.s32.totalorder %s62, 0
    %s65 = sadd.s32 %s64, 1
    %s66 = scalar_select %p63, %s64, %s65
    %p69 = pneg %p63
    %p70 = scmp.eq.s32.totalorder %s12, 3
    %p71 = por %p69, %p70
    %p72 = scmp.ne.s32.totalorder %s64, %s67
    %p73 = scmp.eq.s32.totalorder %s12, 0
    %p74 = por %p72, %p73
    %p75 = scmp.ne.s32.totalorder %s64, %s67
    %p76 = scmp.eq.s32.totalorder %s17, 3
    %p77 = por %p75, %p76
    %p78 = scmp.ne.s32.totalorder %s67, %s68
    %p79 = scmp.eq.s32.totalorder %s17, 0
    %p80 = por %p78, %p79
    %p81 = scmp.ne.s32.totalorder %s67, %s68
    %p82 = scmp.eq.s32.totalorder %s18, 3
    %p83 = por %p81, %p82
    %p85 = scmp.ne.s32.totalorder %s68, %s84
    %p86 = scmp.eq.s32.totalorder %s18, 0
    %p87 = por %p85, %p86
    %s89 = sadd.s32 %s88, 1
    %p92 = scmp.eq.s32.totalorder %s12, 3
    %p93 = scmp.ne.s32.totalorder %s88, %s90
    %p94 = scmp.eq.s32.totalorder %s12, 0
    %p95 = por %p93, %p94
    %p96 = scmp.ne.s32.totalorder %s88, %s90
    %p97 = scmp.eq.s32.totalorder %s17, 3
    %p98 = por %p96, %p97
    %p99 = scmp.ne.s32.totalorder %s90, %s91
    %p100 = scmp.eq.s32.totalorder %s17, 0
    %p101 = por %p99, %p100
    %p102 = scmp.ne.s32.totalorder %s90, %s91
    %p103 = scmp.eq.s32.totalorder %s18, 3
    %p104 = por %p102, %p103
    %p106 = scmp.ne.s32.totalorder %s91, %s105
    %p107 = scmp.eq.s32.totalorder %s18, 0
    %p108 = por %p106, %p107
    %s110 = sadd.s32 %s109, 1
    %p113 = scmp.eq.s32.totalorder %s12, 3
    %p114 = scmp.ne.s32.totalorder %s109, %s111
    %p115 = scmp.eq.s32.totalorder %s12, 0
    %p116 = por %p114, %p115
    %p117 = scmp.ne.s32.totalorder %s109, %s111
    %p118 = scmp.eq.s32.totalorder %s17, 3
    %p119 = por %p117, %p118
    %p120 = scmp.ne.s32.totalorder %s111, %s112
    %p121 = scmp.eq.s32.totalorder %s17, 0
    %p122 = por %p120, %p121
    %p123 = scmp.ne.s32.totalorder %s111, %s112
    %p124 = scmp.eq.s32.totalorder %s18, 3
    %p125 = por %p123, %p124
    %p127 = scmp.ne.s32.totalorder %s112, %s126
    %p128 = scmp.eq.s32.totalorder %s18, 0
    %p129 = por %p127, %p128
    %s131 = sadd.s32 %s130, 1
    %p134 = scmp.eq.s32.totalorder %s12, 3
    %p135 = scmp.ne.s32.totalorder %s130, %s132
    %p136 = scmp.eq.s32.totalorder %s12, 0
    %p137 = por %p135, %p136
    %p138 = scmp.ne.s32.totalorder %s130, %s132
    %p139 = scmp.eq.s32.totalorder %s17, 3
    %p140 = por %p138, %p139
    %p141 = scmp.ne.s32.totalorder %s132, %s133
    %p142 = scmp.eq.s32.totalorder %s17, 0
    %p143 = por %p141, %p142
    %p144 = scmp.ne.s32.totalorder %s132, %s133
    %p145 = scmp.eq.s32.totalorder %s18, 3
    %p146 = por %p144, %p145
    %p148 = scmp.ne.s32.totalorder %s133, %s147
    %p149 = scmp.eq.s32.totalorder %s18, 0
    %p150 = por %p148, %p149
    %s152 = sadd.s32 %s151, 1
    %p155 = scmp.eq.s32.totalorder %s12, 3
    %p156 = scmp.ne.s32.totalorder %s151, %s153
    %p157 = scmp.eq.s32.totalorder %s12, 0
    %p158 = por %p156, %p157
    %p159 = scmp.ne.s32.totalorder %s151, %s153
    %p160 = scmp.eq.s32.totalorder %s17, 3
    %p161 = por %p159, %p160
    %p162 = scmp.ne.s32.totalorder %s153, %s154
    %p163 = scmp.eq.s32.totalorder %s17, 0
    %p164 = por %p162, %p163
    %p165 = scmp.ne.s32.totalorder %s153, %s154
    %p166 = scmp.eq.s32.totalorder %s18, 3
    %p167 = por %p165, %p166
    %p169 = scmp.ne.s32.totalorder %s154, %s168
    %p170 = scmp.eq.s32.totalorder %s18, 0
    %p171 = por %p169, %p170
    %s172 = ssub.s32 %s19, %s31
    %s173 = ssub.s32 %s20, %s27
    %s174 = sor.u32 %s172, %s173
    %p175 = scmp.eq.s32.totalorder %s174, 0
    %s177 = sadd.s32 %s176, 1
    %s178 = scalar_select %p175, %s176, %s177
    %p181 = pneg %p175
    %p182 = scmp.eq.s32.totalorder %s12, 3
    %p183 = por %p181, %p182
    %p184 = scmp.ne.s32.totalorder %s176, %s179
    %p185 = scmp.eq.s32.totalorder %s12, 0
    %p186 = por %p184, %p185
    %p187 = scmp.ne.s32.totalorder %s176, %s179
    %p188 = scmp.eq.s32.totalorder %s17, 3
    %p189 = por %p187, %p188
    %p190 = scmp.ne.s32.totalorder %s179, %s180
    %p191 = scmp.eq.s32.totalorder %s17, 0
    %p192 = por %p190, %p191
    %p193 = scmp.ne.s32.totalorder %s179, %s180
    %p194 = scmp.eq.s32.totalorder %s18, 3
    %p195 = por %p193, %p194
    %p197 = scmp.ne.s32.totalorder %s180, %s196
    %p198 = scmp.eq.s32.totalorder %s18, 0
    %p199 = por %p197, %p198
    %p200 = scmp.le.s32.totalorder 1, %s12
    %p201 = scmp.lt.s32.totalorder %s12, 5
    %p202 = pnand %p200, %p201
    %p203 = pneg %p202
    // Predicated region
    $region9: #{resnet_block_standard.5} parent=5 // pred_check
      _
    $region10: #{resnet_block_standard.5} parent=5 // pred_check_branch
      %205 = sbr.rel (%p202) target = $region12
    $region11: #{resnet_block_standard.5} parent=5 // pred_region
      %s206 = ssub.s32 %s12, 1
      // Predicated region
      $region13: #{resnet_block_standard.5} parent=11 // pred_check
        %p207 = pneg %p101
      $region14: #{resnet_block_standard.5} parent=11 // pred_check_branch
        %209 = sbr.rel (%p207) target = $region16
      $region15: #{resnet_block_standard.5} parent=11 // pred_region
        _
      $region16: #{resnet_block_standard.5} parent=11 // pred_fallthru
        _
      // Predicated region
      $region17: #{resnet_block_standard.5} parent=11 // pred_check
        %p210 = pneg %p122
      $region18: #{resnet_block_standard.5} parent=11 // pred_check_branch
        %212 = sbr.rel (%p210) target = $region20
      $region19: #{resnet_block_standard.5} parent=11 // pred_region
        _
      $region20: #{resnet_block_standard.5} parent=11 // pred_fallthru
        _
      // Predicated region
      $region21: #{resnet_block_standard.5} parent=11 // pred_check
        %p213 = pneg %p143
      $region22: #{resnet_block_standard.5} parent=11 // pred_check_branch
        %215 = sbr.rel (%p213) target = $region24
      $region23: #{resnet_block_standard.5} parent=11 // pred_region
        _
      $region24: #{resnet_block_standard.5} parent=11 // pred_fallthru
        _
      // Predicated region
      $region25: #{resnet_block_standard.5} parent=11 // pred_check
        %p216 = pneg %p164
      $region26: #{resnet_block_standard.5} parent=11 // pred_check_branch
        %218 = sbr.rel (%p216) target = $region28
      $region27: #{resnet_block_standard.5} parent=11 // pred_region
        _
      $region28: #{resnet_block_standard.5} parent=11 // pred_fallthru
        _
    $region12: #{resnet_block_standard.5} parent=5 // pred_fallthru
      _
    %p219 = scmp.lt.s32.totalorder %s12, 4
    // Predicated region
    $region29: #{resnet_block_standard.5} parent=5 // pred_check
      %p220 = pneg %p219
    $region30: #{resnet_block_standard.5} parent=5 // pred_check_branch
      %222 = sbr.rel (%p220) target = $region32
    $region31: #{resnet_block_standard.5} parent=5 // pred_region
      // Predicated region
      $region33: #{resnet_block_standard.5} parent=31 // pred_check
        %p223 = pneg %p46
      $region34: #{resnet_block_standard.5} parent=31 // pred_check_branch
        %225 = sbr.rel (%p223) target = $region36
      $region35: #{resnet_block_standard.5} parent=31 // pred_region
        %s226 = smul.u32 8, %s20
        %p227 = scmp.lt.s32.totalorder %s19, 1
        %s228 = scalar_select %p227, %s19, 1
        %p229 = scmp.lt.s32.totalorder %s226, 15
        %s230 = scalar_select %p229, %s226, 15
        %s231 = smul.addr %s230, 2
        %s232 = smul.addr %s228, 32
        %s233 = sadd.s32 %s231, %s232
        %s234 = smul.addr %s233, 8
        %s235 = scalar_lea.vmem %s0, %s234
        %s236 = smul.u32 8, %s20
      $region36: #{resnet_block_standard.5} parent=31 // pred_fallthru
        _
      // Predicated region
      $region37: #{resnet_block_standard.5} parent=31 // pred_check
        %p237 = pneg %p74
      $region38: #{resnet_block_standard.5} parent=31 // pred_check_branch
        %239 = sbr.rel (%p237) target = $region40
      $region39: #{resnet_block_standard.5} parent=31 // pred_region
        %s240 = smul.u32 8, %s20
        %p241 = scmp.lt.s32.totalorder %s19, 1
        %s242 = scalar_select %p241, %s19, 1
        %p243 = scmp.lt.s32.totalorder %s240, 15
        %s244 = scalar_select %p243, %s240, 15
        %s245 = smul.addr %s244, 2
        %s246 = smul.addr %s242, 32
        %s247 = sadd.s32 %s245, %s246
        %s248 = smul.addr %s247, 8
        %s249 = scalar_lea.vmem %s1, %s248
        %s250 = smul.u32 8, %s20
      $region40: #{resnet_block_standard.5} parent=31 // pred_fallthru
        _
    $region32: #{resnet_block_standard.5} parent=5 // pred_fallthru
      _
    %p251 = scmp.le.s32.totalorder 1, %s12
    %p252 = scmp.lt.s32.totalorder %s12, 5
    %p253 = pnand %p251, %p252
    %p254 = pneg %p253
    // Predicated region
    $region41: #{resnet_block_standard.5} parent=5 // pred_check
      _
    $region42: #{resnet_block_standard.5} parent=5 // pred_check_branch
      %256 = sbr.rel (%p253) target = $region44
    $region43: #{resnet_block_standard.5} parent=5 // pred_region
      %s257 = ssub.s32 %s12, 1
      %s258 = smul.u32 8, %s22
      %p259 = scmp.lt.s32.totalorder %s21, 1
      %s260 = scalar_select %p259, %s21, 1
      %p261 = scmp.lt.s32.totalorder %s258, 15
      %s262 = scalar_select %p261, %s258, 15
      %s263 = smul.addr %s262, 2
      %s264 = smul.addr %s260, 32
      %s265 = sadd.s32 %s263, %s264
      %s266 = smul.addr %s265, 8
      %s267 = scalar_lea.vmem %s0, %s266
      %p268 = pneg %p52
      %p269 = pneg %p49
      %s270 = smul.u32 8, %s22
      %p271 = scmp.lt.s32.totalorder %s21, 1
      %s272 = scalar_select %p271, %s21, 1
      %p273 = scmp.lt.s32.totalorder %s270, 15
      %s274 = scalar_select %p273, %s270, 15
      %s275 = smul.addr %s274, 2
      %s276 = smul.addr %s272, 32
      %s277 = sadd.s32 %s275, %s276
      %s278 = smul.addr %s277, 8
      %s279 = scalar_lea.vmem %s1, %s278
      %p280 = pneg %p80
      %p281 = pneg %p77
      %p282 = pneg %p101
      %p283 = pneg %p98
      %p284 = pneg %p122
      %p285 = pneg %p119
      %p286 = pneg %p143
      %p287 = pneg %p140
      %p288 = pneg %p164
      %p289 = pneg %p161
      %p290 = pneg %p192
      %p291 = pneg %p189
      %s292 = smul.u32 8, %s22
      %p293 = scmp.lt.s32.totalorder %s21, 1
      %s294 = scalar_select %p293, %s21, 1
      %p295 = scmp.lt.s32.totalorder %s292, 15
      %s296 = scalar_select %p295, %s292, 15
      %s297 = smul.addr %s296, 2
      %s298 = smul.addr %s294, 32
      %s299 = sadd.s32 %s297, %s298
      %s300 = smul.addr %s299, 8
      %s301 = scalar_lea.vmem %s6, %s300
      %s302 = smul.u32 8, %s22
      %p303 = scmp.lt.s32.totalorder %s21, 1
      %s304 = scalar_select %p303, %s21, 1
      %p305 = scmp.lt.s32.totalorder %s302, 15
      %s306 = scalar_select %p305, %s302, 15
      %s307 = smul.addr %s306, 2
      %s308 = smul.addr %s304, 32
      %s309 = sadd.s32 %s307, %s308
      %s310 = smul.addr %s309, 8
      %s311 = scalar_lea.vmem %s0, %s310
      %s312 = smul.u32 8, %s22
      %s313 = smul.u32 8, %s22
      %p314 = scmp.lt.s32.totalorder %s21, 1
      %s315 = scalar_select %p314, %s21, 1
      %p316 = scmp.lt.s32.totalorder %s313, 15
      %s317 = scalar_select %p316, %s313, 15
      %s318 = smul.addr %s317, 2
      %s319 = smul.addr %s315, 32
      %s320 = sadd.s32 %s318, %s319
      %s321 = smul.addr %s320, 8
      %s322 = scalar_lea.vmem %s1, %s321
      %s323 = smul.u32 8, %s22
      %s324 = smul.u32 8, %s22
      %p325 = scmp.lt.s32.totalorder %s21, 1
      %s326 = scalar_select %p325, %s21, 1
      %p327 = scmp.lt.s32.totalorder %s324, 15
      %s328 = scalar_select %p327, %s324, 15
      %s329 = smul.addr %s328, 2
      %s330 = smul.addr %s326, 32
      %s331 = sadd.s32 %s329, %s330
      %s332 = smul.addr %s331, 8
      %s333 = scalar_lea.vmem %s6, %s332
      %s334 = smul.u32 8, %s22
      %v335 = vld [vmem:[%s322] sm:$0xff]
      %v336 = vld [vmem:[%s322 + $0x8] sm:$0xff]
      %v337 = vld [vmem:[%s322 + $0x10] sm:$0xff]
      %v338 = vld [vmem:[%s322 + $0x18] sm:$0xff]
      %v339 = vld [vmem:[%s322 + $0x20] sm:$0xff]
      %v340 = vld [vmem:[%s322 + $0x28] sm:$0xff]
      %v341 = vld [vmem:[%s322 + $0x30] sm:$0xff]
      %v342 = vld [vmem:[%s322 + $0x38] sm:$0xff]
      %v343 = vld [vmem:[%s322 + $0x40] sm:$0xff]
      %v344 = vld [vmem:[%s322 + $0x48] sm:$0xff]
      %v345 = vld [vmem:[%s322 + $0x50] sm:$0xff]
      %v346 = vld [vmem:[%s322 + $0x58] sm:$0xff]
      %v347 = vld [vmem:[%s322 + $0x60] sm:$0xff]
      %v348 = vld [vmem:[%s322 + $0x68] sm:$0xff]
      %v349 = vld [vmem:[%s322 + $0x70] sm:$0xff]
      %v350 = vld [vmem:[%s322 + $0x78] sm:$0xff]
      %v351 = vld [vmem:[%s2] sm:$0xff]
      %v352 = vld [vmem:[%s2 + $0x8] sm:$0xff]
      %v353 = vld [vmem:[%s2 + $0x10] sm:$0xff]
      %v354 = vld [vmem:[%s2 + $0x18] sm:$0xff]
      %v355 = vld [vmem:[%s2 + $0x20] sm:$0xff]
      %v356 = vld [vmem:[%s2 + $0x28] sm:$0xff]
      %v357 = vld [vmem:[%s2 + $0x30] sm:$0xff]
      %v358 = vld [vmem:[%s2 + $0x38] sm:$0xff]
      %v359 = vld [vmem:[%s2 + $0x40] sm:$0xff]
      %v360 = vld [vmem:[%s2 + $0x48] sm:$0xff]
      %v361 = vld [vmem:[%s2 + $0x50] sm:$0xff]
      %v362 = vld [vmem:[%s2 + $0x58] sm:$0xff]
      %v363 = vld [vmem:[%s2 + $0x60] sm:$0xff]
      %v364 = vld [vmem:[%s2 + $0x68] sm:$0xff]
      %v365 = vld [vmem:[%s2 + $0x70] sm:$0xff]
      %v366 = vld [vmem:[%s2 + $0x78] sm:$0xff]
      %367 = vmatprep.subr.mxu0 0.0
      %368 = vmatpush1.msra.mxu0 %v351
      %369 = vmatprep.subr.mxu0 0.0
      %370 = vmatpush1.msra.mxu0 %v352
      %371 = vmatprep.subr.mxu0 0.0
      %372 = vmatpush1.msra.mxu0 %v353
      %373 = vmatprep.subr.mxu0 0.0
      %374 = vmatpush1.msra.mxu0 %v354
      %375 = vmatprep.subr.mxu0 0.0
      %376 = vmatpush1.msra.mxu0 %v355
      %377 = vmatprep.subr.mxu0 0.0
      %378 = vmatpush1.msra.mxu0 %v356
      %379 = vmatprep.subr.mxu0 0.0
      %380 = vmatpush1.msra.mxu0 %v357
      %381 = vmatprep.subr.mxu0 0.0
      %382 = vmatpush1.msra.mxu0 %v358
      %383 = vmatprep.subr.mxu0 0.0
      %384 = vmatpush1.msra.mxu0 %v359
      %385 = vmatprep.subr.mxu0 0.0
      %386 = vmatpush1.msra.mxu0 %v360
      %387 = vmatprep.subr.mxu0 0.0
      %388 = vmatpush1.msra.mxu0 %v361
      %389 = vmatprep.subr.mxu0 0.0
      %390 = vmatpush1.msra.mxu0 %v362
      %391 = vmatprep.subr.mxu0 0.0
      %392 = vmatpush1.msra.mxu0 %v363
      %393 = vmatprep.subr.mxu0 0.0
      %394 = vmatpush1.msra.mxu0 %v364
      %395 = vmatprep.subr.mxu0 0.0
      %396 = vmatpush1.msra.mxu0 %v365
      %397 = vmatprep.subr.mxu0 0.0
      %398 = vmatpush1.msra.mxu0 %v366
      %399 = vmatprep.subr.mxu0 0.0
      %400 = vmatpush1.msra.mxu0 0.0
      %401 = vmatprep.subr.mxu0 0.0
      %402 = vmatpush1.msra.mxu0 0.0
      %403 = vmatprep.subr.mxu0 0.0
      %404 = vmatpush1.msra.mxu0 0.0
      %405 = vmatprep.subr.mxu0 0.0
      %406 = vmatpush1.msra.mxu0 0.0
      %407 = vmatprep.subr.mxu0 0.0
      %408 = vmatpush1.msra.mxu0 0.0
      %409 = vmatprep.subr.mxu0 0.0
      %410 = vmatpush1.msra.mxu0 0.0
      %411 = vmatprep.subr.mxu0 0.0
      %412 = vmatpush1.msra.mxu0 0.0
      %413 = vmatprep.subr.mxu0 0.0
      %414 = vmatpush1.msra.mxu0 0.0
      %415 = vmatprep.subr.mxu0 0.0
      %416 = vmatpush1.msra.mxu0 0.0
      %417 = vmatprep.subr.mxu0 0.0
      %418 = vmatpush1.msra.mxu0 0.0
      %419 = vmatprep.subr.mxu0 0.0
      %420 = vmatpush1.msra.mxu0 0.0
      %421 = vmatprep.subr.mxu0 0.0
      %422 = vmatpush1.msra.mxu0 0.0
      %423 = vmatprep.subr.mxu0 0.0
      %424 = vmatpush1.msra.mxu0 0.0
      %425 = vmatprep.subr.mxu0 0.0
      %426 = vmatpush1.msra.mxu0 0.0
      %427 = vmatprep.subr.mxu0 0.0
      %428 = vmatpush1.msra.mxu0 0.0
      %429 = vmatprep.subr.mxu0 0.0
      %430 = vmatpush1.msra.mxu0 0.0
      %431 = vmatprep.mubr.f32.mxu0 0.0
      %432 = vmatmul.mubr.f32.gmra.mrb[0].mxu0 %v335
      %v433 = vpop.f32.mrb[0].mxu0
      %v434 = vadd.f32 0.0, %v433
      %v435 = vpop.f32.mrb[0].mxu0
      %436 = vmatprep.mubr.f32.mxu0 0.0
      %437 = vmatmul.mubr.f32.gmra.mrb[0].mxu0 %v336
      %v438 = vpop.f32.mrb[0].mxu0
      %v439 = vadd.f32 0.0, %v438
      %v440 = vpop.f32.mrb[0].mxu0
      %441 = vmatprep.mubr.f32.mxu0 0.0
      %442 = vmatmul.mubr.f32.gmra.mrb[0].mxu0 %v337
      %v443 = vpop.f32.mrb[0].mxu0
      %v444 = vadd.f32 0.0, %v443
      %v445 = vpop.f32.mrb[0].mxu0
      %446 = vmatprep.mubr.f32.mxu0 0.0
      %447 = vmatmul.mubr.f32.gmra.mrb[0].mxu0 %v338
      %v448 = vpop.f32.mrb[0].mxu0
      %v449 = vadd.f32 0.0, %v448
      %v450 = vpop.f32.mrb[0].mxu0
      %451 = vmatprep.mubr.f32.mxu0 0.0
      %452 = vmatmul.mubr.f32.gmra.mrb[0].mxu0 %v339
      %v453 = vpop.f32.mrb[0].mxu0
      %v454 = vadd.f32 0.0, %v453
      %v455 = vpop.f32.mrb[0].mxu0
      %456 = vmatprep.mubr.f32.mxu0 0.0
      %457 = vmatmul.mubr.f32.gmra.mrb[0].mxu0 %v340
      %v458 = vpop.f32.mrb[0].mxu0
      %v459 = vadd.f32 0.0, %v458
      %v460 = vpop.f32.mrb[0].mxu0
      %461 = vmatprep.mubr.f32.mxu0 0.0
      %462 = vmatmul.mubr.f32.gmra.mrb[0].mxu0 %v341
      %v463 = vpop.f32.mrb[0].mxu0
      %v464 = vadd.f32 0.0, %v463
      %v465 = vpop.f32.mrb[0].mxu0
      %466 = vmatprep.mubr.f32.mxu0 0.0
      %467 = vmatmul.mubr.f32.gmra.mrb[0].mxu0 %v342
      %v468 = vpop.f32.mrb[0].mxu0
      %v469 = vadd.f32 0.0, %v468
      %v470 = vpop.f32.mrb[0].mxu0
      %471 = vmatprep.mubr.f32.mxu0 0.0
      %472 = vmatmul.mubr.f32.gmra.mrb[0].mxu0 %v343
      %v473 = vpop.f32.mrb[0].mxu0
      %v474 = vadd.f32 0.0, %v473
      %v475 = vpop.f32.mrb[0].mxu0
      %476 = vmatprep.mubr.f32.mxu0 0.0
      %477 = vmatmul.mubr.f32.gmra.mrb[0].mxu0 %v344
      %v478 = vpop.f32.mrb[0].mxu0
      %v479 = vadd.f32 0.0, %v478
      %v480 = vpop.f32.mrb[0].mxu0
      %481 = vmatprep.mubr.f32.mxu0 0.0
      %482 = vmatmul.mubr.f32.gmra.mrb[0].mxu0 %v345
      %v483 = vpop.f32.mrb[0].mxu0
      %v484 = vadd.f32 0.0, %v483
      %v485 = vpop.f32.mrb[0].mxu0
      %486 = vmatprep.mubr.f32.mxu0 0.0
      %487 = vmatmul.mubr.f32.gmra.mrb[0].mxu0 %v346
      %v488 = vpop.f32.mrb[0].mxu0
      %v489 = vadd.f32 0.0, %v488
      %v490 = vpop.f32.mrb[0].mxu0
      %491 = vmatprep.mubr.f32.mxu0 0.0
      %492 = vmatmul.mubr.f32.gmra.mrb[0].mxu0 %v347
      %v493 = vpop.f32.mrb[0].mxu0
      %v494 = vadd.f32 0.0, %v493
      %v495 = vpop.f32.mrb[0].mxu0
      %496 = vmatprep.mubr.f32.mxu0 0.0
      %497 = vmatmul.mubr.f32.gmra.mrb[0].mxu0 %v348
      %v498 = vpop.f32.mrb[0].mxu0
      %v499 = vadd.f32 0.0, %v498
      %v500 = vpop.f32.mrb[0].mxu0
      %501 = vmatprep.mubr.f32.mxu0 0.0
      %502 = vmatmul.mubr.f32.gmra.mrb[0].mxu0 %v349
      %v503 = vpop.f32.mrb[0].mxu0
      %v504 = vadd.f32 0.0, %v503
      %v505 = vpop.f32.mrb[0].mxu0
      %506 = vmatprep.mubr.f32.mxu0 0.0
      %507 = vmatmul.mubr.f32.gmra.mrb[0].mxu0 %v350
      %v508 = vpop.f32.mrb[0].mxu0
      %v509 = vadd.f32 0.0, %v508
      %v510 = vpop.f32.mrb[0].mxu0
      %511 = vdwg.mxu0
      %v512 = vld [vmem:[%s311] sm:$0xff]
      %v513 = vld [vmem:[%s311 + $0x8] sm:$0xff]
      %v514 = vld [vmem:[%s311 + $0x10] sm:$0xff]
      %v515 = vld [vmem:[%s311 + $0x18] sm:$0xff]
      %v516 = vld [vmem:[%s311 + $0x20] sm:$0xff]
      %v517 = vld [vmem:[%s311 + $0x28] sm:$0xff]
      %v518 = vld [vmem:[%s311 + $0x30] sm:$0xff]
      %v519 = vld [vmem:[%s311 + $0x38] sm:$0xff]
      %v520 = vld [vmem:[%s311 + $0x40] sm:$0xff]
      %v521 = vld [vmem:[%s311 + $0x48] sm:$0xff]
      %v522 = vld [vmem:[%s311 + $0x50] sm:$0xff]
      %v523 = vld [vmem:[%s311 + $0x58] sm:$0xff]
      %v524 = vld [vmem:[%s311 + $0x60] sm:$0xff]
      %v525 = vld [vmem:[%s311 + $0x68] sm:$0xff]
      %v526 = vld [vmem:[%s311 + $0x70] sm:$0xff]
      %v527 = vld [vmem:[%s311 + $0x78] sm:$0xff]
      %v528 = vld [vmem:[%s3] sm:$0x1]
      %v530 = vlaneseq
      %v531 = vshrl.u32 %v530, 7
      %v532 = vsub.s32 0, %v531
      %v533 = vrot.slane %v528, %v532
      %v535 = vmul.f32 %v512, %v533
      %v536 = vmul.f32 %v513, %v533
      %v537 = vmul.f32 %v514, %v533
      %v538 = vmul.f32 %v515, %v533
      %v539 = vmul.f32 %v516, %v533
      %v540 = vmul.f32 %v517, %v533
      %v541 = vmul.f32 %v518, %v533
      %v542 = vmul.f32 %v519, %v533
      %v543 = vmul.f32 %v520, %v533
      %v544 = vmul.f32 %v521, %v533
      %v545 = vmul.f32 %v522, %v533
      %v546 = vmul.f32 %v523, %v533
      %v547 = vmul.f32 %v524, %v533
      %v548 = vmul.f32 %v525, %v533
      %v549 = vmul.f32 %v526, %v533
      %v550 = vmul.f32 %v527, %v533
      %v551 = vld [vmem:[%s4] sm:$0x1]
      %v553 = vlaneseq
      %v554 = vshrl.u32 %v553, 7
      %v555 = vsub.s32 0, %v554
      %v556 = vrot.slane %v551, %v555
      %v558 = vadd.f32 %v535, %v556
      %v559 = vadd.f32 %v536, %v556
      %v560 = vadd.f32 %v537, %v556
      %v561 = vadd.f32 %v538, %v556
      %v562 = vadd.f32 %v539, %v556
      %v563 = vadd.f32 %v540, %v556
      %v564 = vadd.f32 %v541, %v556
      %v565 = vadd.f32 %v542, %v556
      %v566 = vadd.f32 %v543, %v556
      %v567 = vadd.f32 %v544, %v556
      %v568 = vadd.f32 %v545, %v556
      %v569 = vadd.f32 %v546, %v556
      %v570 = vadd.f32 %v547, %v556
      %v571 = vadd.f32 %v548, %v556
      %v572 = vadd.f32 %v549, %v556
      %v573 = vadd.f32 %v550, %v556
      %v574 = vadd.f32 %v558, %v434
      %v575 = vadd.f32 %v559, %v439
      %v576 = vadd.f32 %v560, %v444
      %v577 = vadd.f32 %v561, %v449
      %v578 = vadd.f32 %v562, %v454
      %v579 = vadd.f32 %v563, %v459
      %v580 = vadd.f32 %v564, %v464
      %v581 = vadd.f32 %v565, %v469
      %v582 = vadd.f32 %v566, %v474
      %v583 = vadd.f32 %v567, %v479
      %v584 = vadd.f32 %v568, %v484
      %v585 = vadd.f32 %v569, %v489
      %v586 = vadd.f32 %v570, %v494
      %v587 = vadd.f32 %v571, %v499
      %v588 = vadd.f32 %v572, %v504
      %v589 = vadd.f32 %v573, %v509
      %v590 = vld [vmem:[%s5] sm:$0x1]
      %v592 = vlaneseq
      %v593 = vshrl.u32 %v592, 7
      %v594 = vsub.s32 0, %v593
      %v595 = vrot.slane %v590, %v594
      %v597 = vadd.f32 %v574, %v595
      %v598 = vadd.f32 %v575, %v595
      %v599 = vadd.f32 %v576, %v595
      %v600 = vadd.f32 %v577, %v595
      %v601 = vadd.f32 %v578, %v595
      %v602 = vadd.f32 %v579, %v595
      %v603 = vadd.f32 %v580, %v595
      %v604 = vadd.f32 %v581, %v595
      %v605 = vadd.f32 %v582, %v595
      %v606 = vadd.f32 %v583, %v595
      %v607 = vadd.f32 %v584, %v595
      %v608 = vadd.f32 %v585, %v595
      %v609 = vadd.f32 %v586, %v595
      %v610 = vadd.f32 %v587, %v595
      %v611 = vadd.f32 %v588, %v595
      %v612 = vadd.f32 %v589, %v595
      %613 = vst [vmem:[%s333] sm:$0xff] %v597
      %614 = vst [vmem:[%s333 + $0x8] sm:$0xff] %v598
      %615 = vst [vmem:[%s333 + $0x10] sm:$0xff] %v599
      %616 = vst [vmem:[%s333 + $0x18] sm:$0xff] %v600
      %617 = vst [vmem:[%s333 + $0x20] sm:$0xff] %v601
      %618 = vst [vmem:[%s333 + $0x28] sm:$0xff] %v602
      %619 = vst [vmem:[%s333 + $0x30] sm:$0xff] %v603
      %620 = vst [vmem:[%s333 + $0x38] sm:$0xff] %v604
      %621 = vst [vmem:[%s333 + $0x40] sm:$0xff] %v605
      %622 = vst [vmem:[%s333 + $0x48] sm:$0xff] %v606
      %623 = vst [vmem:[%s333 + $0x50] sm:$0xff] %v607
      %624 = vst [vmem:[%s333 + $0x58] sm:$0xff] %v608
      %625 = vst [vmem:[%s333 + $0x60] sm:$0xff] %v609
      %626 = vst [vmem:[%s333 + $0x68] sm:$0xff] %v610
      %627 = vst [vmem:[%s333 + $0x70] sm:$0xff] %v611
      %628 = vst [vmem:[%s333 + $0x78] sm:$0xff] %v612
      %s629 = smul.u32 8, %s22
      %p630 = scmp.lt.s32.totalorder %s21, 1
      %s631 = scalar_select %p630, %s21, 1
      %p632 = scmp.lt.s32.totalorder %s629, 15
      %s633 = scalar_select %p632, %s629, 15
      %s634 = smul.addr %s633, 2
      %s635 = smul.addr %s631, 32
      %s636 = sadd.s32 %s634, %s635
      %s637 = smul.addr %s636, 8
      %s638 = scalar_lea.vmem %s6, %s637
      // Predicated region
      $region45: #{resnet_block_standard.5} parent=43 // pred_check
        %p639 = pneg %p189
      $region46: #{resnet_block_standard.5} parent=43 // pred_check_branch
        %641 = sbr.rel (%p639) target = $region48
      $region47: #{resnet_block_standard.5} parent=43 // pred_region
        %s642 = smul.u32 8, %s22
      $region48: #{resnet_block_standard.5} parent=43 // pred_fallthru
        _
    $region44: #{resnet_block_standard.5} parent=5 // pred_fallthru
      _
    %p643 = scmp.le.s32.totalorder 2, %s12
    // Predicated region
    $region49: #{resnet_block_standard.5} parent=5 // pred_check
      %p644 = pneg %p643
    $region50: #{resnet_block_standard.5} parent=5 // pred_check_branch
      %646 = sbr.rel (%p644) target = $region52
    $region51: #{resnet_block_standard.5} parent=5 // pred_region
      %s647 = ssub.s32 %s12, 2
      // Predicated region
      $region53: #{resnet_block_standard.5} parent=51 // pred_check
        %p648 = pneg %p195
      $region54: #{resnet_block_standard.5} parent=51 // pred_check_branch
        %650 = sbr.rel (%p648) target = $region56
      $region55: #{resnet_block_standard.5} parent=51 // pred_region
        %s651 = smul.u32 8, %s24
        %p652 = scmp.lt.s32.totalorder %s23, 1
        %s653 = scalar_select %p652, %s23, 1
        %p654 = scmp.lt.s32.totalorder %s651, 15
        %s655 = scalar_select %p654, %s651, 15
        %s656 = smul.addr %s655, 2
        %s657 = smul.addr %s653, 32
        %s658 = sadd.s32 %s656, %s657
        %s659 = smul.addr %s658, 8
        %s660 = scalar_lea.vmem %s6, %s659
      $region56: #{resnet_block_standard.5} parent=51 // pred_fallthru
        _
    $region52: #{resnet_block_standard.5} parent=5 // pred_fallthru
      _
  $region6: #{resnet_block_standard.5} parent=0 // loop_footer
    %s16 = sadd.s32 1, %s12
  $region7: #{resnet_block_standard.5} parent=0 // loop_footer_branch
    %11 = sbr.rel target = $region3
  $region8: #{resnet_block_standard.5} parent=0 // loop_exit
    _

// kernel: resnet_block_standard.3
$region0: #{resnet_block_standard.3}
  #allocation0 [shape = 'u32[]', space=smem, size = 0x4, offset = 0x4, fixed_abs, tag = 'smem constant byte address 0x4 - core index']
  #allocation1 [shape = 'u32[144,128]{1,0:T(1,128)}', space=vmem, size = 0x12000, scoped, tag = 'internal scratch']
  %s0 = inlined_call_operand.vmem [shape: f32[2,2,10,18,128], index: 0, kind: input, shape index: {}]
  %s1 = inlined_call_operand.vmem [shape: f32[9,128,128], index: 1, kind: input, shape index: {}]
  %s2 = inlined_call_operand.vmem [shape: f32[2,16,16,128], index: 2, kind: output, shape index: {0}]
  %s3 = inlined_call_operand.vmem [shape: f32[2,2,2,128], index: 3, kind: output, shape index: {1}]
  %4 = xla_tuple %s2, %s3
  %s5 = sld [smem:[#allocation0]]
  $region49: #{resnet_block_standard.3} parent=0
    _
  %s7 = ssub.s32 1, %s5
  %s8 = scalar_select 0, %s7, %s5
  loop: start=0, step=1, limit=6
  $region2: #{resnet_block_standard.3} parent=0 // loop_pre_header
    _
  $region3: #{resnet_block_standard.3} parent=0 // loop_header
    %s10 = sphi 0, %s14
    %p11 = scmp.ge.s32.totalorder %s10, 6
    %s17 = sphi 0, %s29
    %s18 = sphi 0, %s25
    %s19 = sphi 0, %s17
    %s20 = sphi 0, %s18
    %s21 = sphi 0, %s19
    %s22 = sphi 0, %s20
    %s34 = sphi 0, %s36
    %s37 = sphi 0, %s34
    %s38 = sphi 0, %s37
    %s54 = sphi 0, %s38
    %s58 = sphi 0, %s58
    %s60 = sphi 0, %s58
    %s61 = sphi 0, %s60
    %s75 = sphi 0, %s61
    %s83 = sphi 0, %s85
    %s86 = sphi 0, %s83
    %s87 = sphi 0, %s86
    %s103 = sphi 0, %s87
    %s111 = sphi 0, %s113
    %s114 = sphi 0, %s111
    %s115 = sphi 0, %s114
    %s131 = sphi 0, %s115
  $region4: #{resnet_block_standard.3} parent=0 // loop_header_branch
    %13 = sbr.rel (%p11) target = $region8
  $region5: #{resnet_block_standard.3} parent=0 // loop_body
    %s15 = ssub.s32 %s10, 1
    %s16 = ssub.s32 %s10, 2
    %s23 = sadd.s32 1, %s18
    %p24 = scmp.ge.s32.totalorder %s23, 2
    %s25 = scalar_select %p24, 0, %s23
    %s26 = sadd.s32 1, %s17
    %s27 = scalar_select %p24, %s26, %s17
    %p28 = scmp.ge.s32.totalorder %s27, 2
    %s29 = scalar_select %p28, 0, %s27
    %s30 = ssub.s32 %s17, %s29
    %s31 = ssub.s32 %s18, %s25
    %s32 = sor.u32 %s30, %s31
    %p33 = scmp.eq.s32.totalorder %s32, 0
    %s35 = sadd.s32 %s34, 1
    %s36 = scalar_select %p33, %s34, %s35
    %p39 = pneg %p33
    %p40 = scmp.eq.s32.totalorder %s10, 3
    %p41 = por %p39, %p40
    %p42 = scmp.ne.s32.totalorder %s34, %s37
    %p43 = scmp.eq.s32.totalorder %s10, 0
    %p44 = por %p42, %p43
    %p45 = scmp.ne.s32.totalorder %s34, %s37
    %p46 = scmp.eq.s32.totalorder %s15, 3
    %p47 = por %p45, %p46
    %p48 = scmp.ne.s32.totalorder %s37, %s38
    %p49 = scmp.eq.s32.totalorder %s15, 0
    %p50 = por %p48, %p49
    %p51 = scmp.ne.s32.totalorder %s37, %s38
    %p52 = scmp.eq.s32.totalorder %s16, 3
    %p53 = por %p51, %p52
    %p55 = scmp.ne.s32.totalorder %s38, %s54
    %p56 = scmp.eq.s32.totalorder %s16, 0
    %p57 = por %p55, %p56
    %s59 = sadd.s32 %s58, 1
    %p62 = scmp.eq.s32.totalorder %s10, 3
    %p63 = scmp.ne.s32.totalorder %s58, %s60
    %p64 = scmp.eq.s32.totalorder %s10, 0
    %p65 = por %p63, %p64
    %p66 = scmp.ne.s32.totalorder %s58, %s60
    %p67 = scmp.eq.s32.totalorder %s15, 3
    %p68 = por %p66, %p67
    %p69 = scmp.ne.s32.totalorder %s60, %s61
    %p70 = scmp.eq.s32.totalorder %s15, 0
    %p71 = por %p69, %p70
    %p72 = scmp.ne.s32.totalorder %s60, %s61
    %p73 = scmp.eq.s32.totalorder %s16, 3
    %p74 = por %p72, %p73
    %p76 = scmp.ne.s32.totalorder %s61, %s75
    %p77 = scmp.eq.s32.totalorder %s16, 0
    %p78 = por %p76, %p77
    %s79 = ssub.s32 %s17, %s29
    %s80 = ssub.s32 %s18, %s25
    %s81 = sor.u32 %s79, %s80
    %p82 = scmp.eq.s32.totalorder %s81, 0
    %s84 = sadd.s32 %s83, 1
    %s85 = scalar_select %p82, %s83, %s84
    %p88 = pneg %p82
    %p89 = scmp.eq.s32.totalorder %s10, 3
    %p90 = por %p88, %p89
    %p91 = scmp.ne.s32.totalorder %s83, %s86
    %p92 = scmp.eq.s32.totalorder %s10, 0
    %p93 = por %p91, %p92
    %p94 = scmp.ne.s32.totalorder %s83, %s86
    %p95 = scmp.eq.s32.totalorder %s15, 3
    %p96 = por %p94, %p95
    %p97 = scmp.ne.s32.totalorder %s86, %s87
    %p98 = scmp.eq.s32.totalorder %s15, 0
    %p99 = por %p97, %p98
    %p100 = scmp.ne.s32.totalorder %s86, %s87
    %p101 = scmp.eq.s32.totalorder %s16, 3
    %p102 = por %p100, %p101
    %p104 = scmp.ne.s32.totalorder %s87, %s103
    %p105 = scmp.eq.s32.totalorder %s16, 0
    %p106 = por %p104, %p105
    %s107 = ssub.s32 %s17, %s29
    %s108 = ssub.s32 %s18, %s25
    %s109 = sor.u32 %s107, %s108
    %p110 = scmp.eq.s32.totalorder %s109, 0
    %s112 = sadd.s32 %s111, 1
    %s113 = scalar_select %p110, %s111, %s112
    %p116 = pneg %p110
    %p117 = scmp.eq.s32.totalorder %s10, 3
    %p118 = por %p116, %p117
    %p119 = scmp.ne.s32.totalorder %s111, %s114
    %p120 = scmp.eq.s32.totalorder %s10, 0
    %p121 = por %p119, %p120
    %p122 = scmp.ne.s32.totalorder %s111, %s114
    %p123 = scmp.eq.s32.totalorder %s15, 3
    %p124 = por %p122, %p123
    %p125 = scmp.ne.s32.totalorder %s114, %s115
    %p126 = scmp.eq.s32.totalorder %s15, 0
    %p127 = por %p125, %p126
    %p128 = scmp.ne.s32.totalorder %s114, %s115
    %p129 = scmp.eq.s32.totalorder %s16, 3
    %p130 = por %p128, %p129
    %p132 = scmp.ne.s32.totalorder %s115, %s131
    %p133 = scmp.eq.s32.totalorder %s16, 0
    %p134 = por %p132, %p133
    %p135 = scmp.le.s32.totalorder 1, %s10
    %p136 = scmp.lt.s32.totalorder %s10, 5
    %p137 = pnand %p135, %p136
    %p138 = pneg %p137
    // Predicated region
    $region9: #{resnet_block_standard.3} parent=5 // pred_check
      _
    $region10: #{resnet_block_standard.3} parent=5 // pred_check_branch
      %140 = sbr.rel (%p137) target = $region12
    $region11: #{resnet_block_standard.3} parent=5 // pred_region
      %s141 = ssub.s32 %s10, 1
      // Predicated region
      $region13: #{resnet_block_standard.3} parent=11 // pred_check
        %p142 = pneg %p71
      $region14: #{resnet_block_standard.3} parent=11 // pred_check_branch
        %144 = sbr.rel (%p142) target = $region16
      $region15: #{resnet_block_standard.3} parent=11 // pred_region
        _
      $region16: #{resnet_block_standard.3} parent=11 // pred_fallthru
        _
    $region12: #{resnet_block_standard.3} parent=5 // pred_fallthru
      _
    %p145 = scmp.lt.s32.totalorder %s10, 4
    // Predicated region
    $region17: #{resnet_block_standard.3} parent=5 // pred_check
      %p146 = pneg %p145
    $region18: #{resnet_block_standard.3} parent=5 // pred_check_branch
      %148 = sbr.rel (%p146) target = $region20
    $region19: #{resnet_block_standard.3} parent=5 // pred_region
      // Predicated region
      $region21: #{resnet_block_standard.3} parent=19 // pred_check
        %p149 = pneg %p44
      $region22: #{resnet_block_standard.3} parent=19 // pred_check_branch
        %151 = sbr.rel (%p149) target = $region24
      $region23: #{resnet_block_standard.3} parent=19 // pred_region
        %p152 = scmp.lt.s32.totalorder %s17, 1
        %s153 = scalar_select %p152, %s17, 1
        %p154 = scmp.lt.s32.totalorder %s18, 1
        %s155 = scalar_select %p154, %s18, 1
        %s156 = smul.addr %s155, 30
        %s157 = smul.addr %s153, 60
        %s158 = sadd.s32 %s156, %s157
        %s159 = smul.addr %s158, 8
        %s160 = scalar_lea.vmem %s0, %s159
      $region24: #{resnet_block_standard.3} parent=19 // pred_fallthru
        _
    $region20: #{resnet_block_standard.3} parent=5 // pred_fallthru
      _
    %p161 = scmp.le.s32.totalorder 1, %s10
    %p162 = scmp.lt.s32.totalorder %s10, 5
    %p163 = pnand %p161, %p162
    %p164 = pneg %p163
    // Predicated region
    $region25: #{resnet_block_standard.3} parent=5 // pred_check
      _
    $region26: #{resnet_block_standard.3} parent=5 // pred_check_branch
      %166 = sbr.rel (%p163) target = $region28
    $region27: #{resnet_block_standard.3} parent=5 // pred_region
      %s167 = ssub.s32 %s10, 1
      %p168 = scmp.lt.s32.totalorder %s19, 1
      %s169 = scalar_select %p168, %s19, 1
      %p170 = scmp.lt.s32.totalorder %s20, 1
      %s171 = scalar_select %p170, %s20, 1
      %s172 = smul.addr %s171, 30
      %s173 = smul.addr %s169, 60
      %s174 = sadd.s32 %s172, %s173
      %s175 = smul.addr %s174, 8
      %s176 = scalar_lea.vmem %s0, %s175
      %p177 = pneg %p50
      %p178 = pneg %p47
      %p179 = pneg %p71
      %p180 = pneg %p68
      %p181 = pneg %p99
      %p182 = pneg %p96
      %s183 = smul.u32 8, %s20
      %p184 = scmp.lt.s32.totalorder %s19, 1
      %s185 = scalar_select %p184, %s19, 1
      %p186 = scmp.lt.s32.totalorder %s183, 15
      %s187 = scalar_select %p186, %s183, 15
      %s188 = smul.addr %s187, 2
      %s189 = smul.addr %s185, 32
      %s190 = sadd.s32 %s188, %s189
      %s191 = smul.addr %s190, 8
      %s192 = scalar_lea.vmem %s2, %s191
      %p193 = pneg %p127
      %p194 = pneg %p124
      %p195 = scmp.lt.s32.totalorder %s19, 1
      %s196 = scalar_select %p195, %s19, 1
      %p197 = scmp.lt.s32.totalorder %s20, 1
      %s198 = scalar_select %p197, %s20, 1
      %s199 = smul.addr %s196, 2
      %s200 = sadd.s32 %s198, %s199
      %s201 = smul.addr %s200, 2
      %s202 = scalar_lea.vmem %s3, %s201
      %p203 = scmp.lt.s32.totalorder %s19, 1
      %s204 = scalar_select %p203, %s19, 1
      %p205 = scmp.lt.s32.totalorder %s20, 1
      %s206 = scalar_select %p205, %s20, 1
      %s207 = smul.addr %s206, 30
      %s208 = smul.addr %s204, 60
      %s209 = sadd.s32 %s207, %s208
      %s210 = smul.addr %s209, 8
      %s211 = scalar_lea.vmem %s0, %s210
      %s212 = smul.u32 8, %s20
      %p213 = scmp.lt.s32.totalorder %s19, 1
      %s214 = scalar_select %p213, %s19, 1
      %p215 = scmp.lt.s32.totalorder %s212, 15
      %s216 = scalar_select %p215, %s212, 15
      %s217 = smul.addr %s216, 2
      %s218 = smul.addr %s214, 32
      %s219 = sadd.s32 %s217, %s218
      %s220 = smul.addr %s219, 8
      %s221 = scalar_lea.vmem %s2, %s220
      %s222 = smul.u32 8, %s20
      %p223 = scmp.lt.s32.totalorder %s19, 1
      %s224 = scalar_select %p223, %s19, 1
      %p225 = scmp.lt.s32.totalorder %s20, 1
      %s226 = scalar_select %p225, %s20, 1
      %s227 = smul.addr %s224, 2
      %s228 = sadd.s32 %s226, %s227
      %s229 = smul.addr %s228, 2
      %s230 = scalar_lea.vmem %s3, %s229
      %v231 = vld [vmem:[%s211] sm:$0xff]
      %v232 = vld [vmem:[%s211 + $0x8] sm:$0xff]
      %v233 = vld [vmem:[%s211 + $0x10] sm:$0x3]
      %v234 = vld [vmem:[%s211 + $0x18] sm:$0xff]
      %v235 = vld [vmem:[%s211 + $0x20] sm:$0xff]
      %v236 = vld [vmem:[%s211 + $0x28] sm:$0x3]
      %v237 = vld [vmem:[%s211 + $0x30] sm:$0xff]
      %v238 = vld [vmem:[%s211 + $0x38] sm:$0xff]
      %v239 = vld [vmem:[%s211 + $0x40] sm:$0x3]
      %v240 = vld [vmem:[%s211 + $0x48] sm:$0xff]
      %v241 = vld [vmem:[%s211 + $0x50] sm:$0xff]
      %v242 = vld [vmem:[%s211 + $0x58] sm:$0x3]
      %v243 = vld [vmem:[%s211 + $0x60] sm:$0xff]
      %v244 = vld [vmem:[%s211 + $0x68] sm:$0xff]
      %v245 = vld [vmem:[%s211 + $0x70] sm:$0x3]
      %v246 = vld [vmem:[%s211 + $0x78] sm:$0xff]
      %v247 = vld [vmem:[%s211 + $0x80] sm:$0xff]
      %v248 = vld [vmem:[%s211 + $0x88] sm:$0x3]
      %v249 = vld [vmem:[%s211 + $0x90] sm:$0xff]
      %v250 = vld [vmem:[%s211 + $0x98] sm:$0xff]
      %v251 = vld [vmem:[%s211 + $0xa0] sm:$0x3]
      %v252 = vld [vmem:[%s211 + $0xa8] sm:$0xff]
      %v253 = vld [vmem:[%s211 + $0xb0] sm:$0xff]
      %v254 = vld [vmem:[%s211 + $0xb8] sm:$0x3]
      %v255 = vld [vmem:[%s211 + $0xc0] sm:$0xff]
      %v256 = vld [vmem:[%s211 + $0xc8] sm:$0xff]
      %v257 = vld [vmem:[%s211 + $0xd0] sm:$0x3]
      %v258 = vld [vmem:[%s211 + $0xd8] sm:$0xff]
      %v259 = vld [vmem:[%s211 + $0xe0] sm:$0xff]
      %v260 = vld [vmem:[%s211 + $0xe8] sm:$0x3]
      %v291 = vcombine.high %v231, %v231
      %v293 = vunpack.c.l.s4 1983009808
      %v294 = vunpack.c.0.s8 %v293
      %v295 = vlaneseq
      %v296 = vshrl.u32 %v295, 7
      %v297 = vsub.s32 %v294, %v296
      %v298 = vrot.slane %v231, %v297
      %v300 = vunpack.c.l.s4 1983009808
      %v301 = vunpack.c.0.s8 %v300
      %v302 = vlaneseq
      %v303 = vshrl.u32 %v302, 7
      %v304 = vsub.s32 %v301, %v303
      %v305 = vrot.slane %v291, %v304
      %v306 = vcombine.high %v298, %v298
      %v307 = vcombine.high %v305, %v305
      %v308 = vcombine.high %v232, %v232
      %v310 = vunpack.c.l.s4 1983009808
      %v311 = vunpack.c.0.s8 %v310
      %v312 = vlaneseq
      %v313 = vshrl.u32 %v312, 7
      %v314 = vsub.s32 %v311, %v313
      %v315 = vrot.slane %v232, %v314
      %v317 = vunpack.c.l.s4 1983009808
      %v318 = vunpack.c.0.s8 %v317
      %v319 = vlaneseq
      %v320 = vshrl.u32 %v319, 7
      %v321 = vsub.s32 %v318, %v320
      %v322 = vrot.slane %v308, %v321
      %v323 = vcombine.high %v315, %v315
      %v324 = vcombine.high %v322, %v322
      %v326 = vunpack.c.l.s4 1983009808
      %v327 = vunpack.c.0.s8 %v326
      %v328 = vlaneseq
      %v329 = vshrl.u32 %v328, 7
      %v330 = vsub.s32 %v327, %v329
      %v331 = vrot.slane %v233, %v330
      %v332 = vcombine.high %v234, %v234
      %v334 = vunpack.c.l.s4 1983009808
      %v335 = vunpack.c.0.s8 %v334
      %v336 = vlaneseq
      %v337 = vshrl.u32 %v336, 7
      %v338 = vsub.s32 %v335, %v337
      %v339 = vrot.slane %v234, %v338
      %v341 = vunpack.c.l.s4 1983009808
      %v342 = vunpack.c.0.s8 %v341
      %v343 = vlaneseq
      %v344 = vshrl.u32 %v343, 7
      %v345 = vsub.s32 %v342, %v344
      %v346 = vrot.slane %v332, %v345
      %v347 = vcombine.high %v339, %v339
      %v348 = vcombine.high %v346, %v346
      %v349 = vcombine.high %v235, %v235
      %v351 = vunpack.c.l.s4 1983009808
      %v352 = vunpack.c.0.s8 %v351
      %v353 = vlaneseq
      %v354 = vshrl.u32 %v353, 7
      %v355 = vsub.s32 %v352, %v354
      %v356 = vrot.slane %v235, %v355
      %v358 = vunpack.c.l.s4 1983009808
      %v359 = vunpack.c.0.s8 %v358
      %v360 = vlaneseq
      %v361 = vshrl.u32 %v360, 7
      %v362 = vsub.s32 %v359, %v361
      %v363 = vrot.slane %v349, %v362
      %v364 = vcombine.high %v356, %v356
      %v365 = vcombine.high %v363, %v363
      %v367 = vunpack.c.l.s4 1983009808
      %v368 = vunpack.c.0.s8 %v367
      %v369 = vlaneseq
      %v370 = vshrl.u32 %v369, 7
      %v371 = vsub.s32 %v368, %v370
      %v372 = vrot.slane %v236, %v371
      %v373 = vcombine.high %v237, %v237
      %v375 = vunpack.c.l.s4 1983009808
      %v376 = vunpack.c.0.s8 %v375
      %v377 = vlaneseq
      %v378 = vshrl.u32 %v377, 7
      %v379 = vsub.s32 %v376, %v378
      %v380 = vrot.slane %v237, %v379
      %v382 = vunpack.c.l.s4 1983009808
      %v383 = vunpack.c.0.s8 %v382
      %v384 = vlaneseq
      %v385 = vshrl.u32 %v384, 7
      %v386 = vsub.s32 %v383, %v385
      %v387 = vrot.slane %v373, %v386
      %v388 = vcombine.high %v380, %v380
      %v389 = vcombine.high %v387, %v387
      %v390 = vcombine.high %v238, %v238
      %v392 = vunpack.c.l.s4 1983009808
      %v393 = vunpack.c.0.s8 %v392
      %v394 = vlaneseq
      %v395 = vshrl.u32 %v394, 7
      %v396 = vsub.s32 %v393, %v395
      %v397 = vrot.slane %v238, %v396
      %v399 = vunpack.c.l.s4 1983009808
      %v400 = vunpack.c.0.s8 %v399
      %v401 = vlaneseq
      %v402 = vshrl.u32 %v401, 7
      %v403 = vsub.s32 %v400, %v402
      %v404 = vrot.slane %v390, %v403
      %v405 = vcombine.high %v397, %v397
      %v406 = vcombine.high %v404, %v404
      %v408 = vunpack.c.l.s4 1983009808
      %v409 = vunpack.c.0.s8 %v408
      %v410 = vlaneseq
      %v411 = vshrl.u32 %v410, 7
      %v412 = vsub.s32 %v409, %v411
      %v413 = vrot.slane %v239, %v412
      %v414 = vcombine.high %v240, %v240
      %v416 = vunpack.c.l.s4 1983009808
      %v417 = vunpack.c.0.s8 %v416
      %v418 = vlaneseq
      %v419 = vshrl.u32 %v418, 7
      %v420 = vsub.s32 %v417, %v419
      %v421 = vrot.slane %v240, %v420
      %v423 = vunpack.c.l.s4 1983009808
      %v424 = vunpack.c.0.s8 %v423
      %v425 = vlaneseq
      %v426 = vshrl.u32 %v425, 7
      %v427 = vsub.s32 %v424, %v426
      %v428 = vrot.slane %v414, %v427
      %v429 = vcombine.high %v421, %v421
      %v430 = vcombine.high %v428, %v428
      %v431 = vcombine.high %v241, %v241
      %v433 = vunpack.c.l.s4 1983009808
      %v434 = vunpack.c.0.s8 %v433
      %v435 = vlaneseq
      %v436 = vshrl.u32 %v435, 7
      %v437 = vsub.s32 %v434, %v436
      %v438 = vrot.slane %v241, %v437
      %v440 = vunpack.c.l.s4 1983009808
      %v441 = vunpack.c.0.s8 %v440
      %v442 = vlaneseq
      %v443 = vshrl.u32 %v442, 7
      %v444 = vsub.s32 %v441, %v443
      %v445 = vrot.slane %v431, %v444
      %v446 = vcombine.high %v438, %v438
      %v447 = vcombine.high %v445, %v445
      %v449 = vunpack.c.l.s4 1983009808
      %v450 = vunpack.c.0.s8 %v449
      %v451 = vlaneseq
      %v452 = vshrl.u32 %v451, 7
      %v453 = vsub.s32 %v450, %v452
      %v454 = vrot.slane %v242, %v453
      %v455 = vcombine.high %v243, %v243
      %v457 = vunpack.c.l.s4 1983009808
      %v458 = vunpack.c.0.s8 %v457
      %v459 = vlaneseq
      %v460 = vshrl.u32 %v459, 7
      %v461 = vsub.s32 %v458, %v460
      %v462 = vrot.slane %v243, %v461
      %v464 = vunpack.c.l.s4 1983009808
      %v465 = vunpack.c.0.s8 %v464
      %v466 = vlaneseq
      %v467 = vshrl.u32 %v466, 7
      %v468 = vsub.s32 %v465, %v467
      %v469 = vrot.slane %v455, %v468
      %v470 = vcombine.high %v462, %v462
      %v471 = vcombine.high %v469, %v469
      %v472 = vcombine.high %v244, %v244
      %v474 = vunpack.c.l.s4 1983009808
      %v475 = vunpack.c.0.s8 %v474
      %v476 = vlaneseq
      %v477 = vshrl.u32 %v476, 7
      %v478 = vsub.s32 %v475, %v477
      %v479 = vrot.slane %v244, %v478
      %v481 = vunpack.c.l.s4 1983009808
      %v482 = vunpack.c.0.s8 %v481
      %v483 = vlaneseq
      %v484 = vshrl.u32 %v483, 7
      %v485 = vsub.s32 %v482, %v484
      %v486 = vrot.slane %v472, %v485
      %v487 = vcombine.high %v479, %v479
      %v488 = vcombine.high %v486, %v486
      %v490 = vunpack.c.l.s4 1983009808
      %v491 = vunpack.c.0.s8 %v490
      %v492 = vlaneseq
      %v493 = vshrl.u32 %v492, 7
      %v494 = vsub.s32 %v491, %v493
      %v495 = vrot.slane %v245, %v494
      %v496 = vcombine.high %v246, %v246
      %v498 = vunpack.c.l.s4 1983009808
      %v499 = vunpack.c.0.s8 %v498
      %v500 = vlaneseq
      %v501 = vshrl.u32 %v500, 7
      %v502 = vsub.s32 %v499, %v501
      %v503 = vrot.slane %v246, %v502
      %v505 = vunpack.c.l.s4 1983009808
      %v506 = vunpack.c.0.s8 %v505
      %v507 = vlaneseq
      %v508 = vshrl.u32 %v507, 7
      %v509 = vsub.s32 %v506, %v508
      %v510 = vrot.slane %v496, %v509
      %v511 = vcombine.high %v503, %v503
      %v512 = vcombine.high %v510, %v510
      %v513 = vcombine.high %v247, %v247
      %v515 = vunpack.c.l.s4 1983009808
      %v516 = vunpack.c.0.s8 %v515
      %v517 = vlaneseq
      %v518 = vshrl.u32 %v517, 7
      %v519 = vsub.s32 %v516, %v518
      %v520 = vrot.slane %v247, %v519
      %v522 = vunpack.c.l.s4 1983009808
      %v523 = vunpack.c.0.s8 %v522
      %v524 = vlaneseq
      %v525 = vshrl.u32 %v524, 7
      %v526 = vsub.s32 %v523, %v525
      %v527 = vrot.slane %v513, %v526
      %v528 = vcombine.high %v520, %v520
      %v529 = vcombine.high %v527, %v527
      %v531 = vunpack.c.l.s4 1983009808
      %v532 = vunpack.c.0.s8 %v531
      %v533 = vlaneseq
      %v534 = vshrl.u32 %v533, 7
      %v535 = vsub.s32 %v532, %v534
      %v536 = vrot.slane %v248, %v535
      %v537 = vcombine.high %v249, %v249
      %v539 = vunpack.c.l.s4 1983009808
      %v540 = vunpack.c.0.s8 %v539
      %v541 = vlaneseq
      %v542 = vshrl.u32 %v541, 7
      %v543 = vsub.s32 %v540, %v542
      %v544 = vrot.slane %v249, %v543
      %v546 = vunpack.c.l.s4 1983009808
      %v547 = vunpack.c.0.s8 %v546
      %v548 = vlaneseq
      %v549 = vshrl.u32 %v548, 7
      %v550 = vsub.s32 %v547, %v549
      %v551 = vrot.slane %v537, %v550
      %v552 = vcombine.high %v544, %v544
      %v553 = vcombine.high %v551, %v551
      %v554 = vcombine.high %v250, %v250
      %v556 = vunpack.c.l.s4 1983009808
      %v557 = vunpack.c.0.s8 %v556
      %v558 = vlaneseq
      %v559 = vshrl.u32 %v558, 7
      %v560 = vsub.s32 %v557, %v559
      %v561 = vrot.slane %v250, %v560
      %v563 = vunpack.c.l.s4 1983009808
      %v564 = vunpack.c.0.s8 %v563
      %v565 = vlaneseq
      %v566 = vshrl.u32 %v565, 7
      %v567 = vsub.s32 %v564, %v566
      %v568 = vrot.slane %v554, %v567
      %v569 = vcombine.high %v561, %v561
      %v570 = vcombine.high %v568, %v568
      %v572 = vunpack.c.l.s4 1983009808
      %v573 = vunpack.c.0.s8 %v572
      %v574 = vlaneseq
      %v575 = vshrl.u32 %v574, 7
      %v576 = vsub.s32 %v573, %v575
      %v577 = vrot.slane %v251, %v576
      %v578 = vcombine.high %v252, %v252
      %v580 = vunpack.c.l.s4 1983009808
      %v581 = vunpack.c.0.s8 %v580
      %v582 = vlaneseq
      %v583 = vshrl.u32 %v582, 7
      %v584 = vsub.s32 %v581, %v583
      %v585 = vrot.slane %v252, %v584
      %v587 = vunpack.c.l.s4 1983009808
      %v588 = vunpack.c.0.s8 %v587
      %v589 = vlaneseq
      %v590 = vshrl.u32 %v589, 7
      %v591 = vsub.s32 %v588, %v590
      %v592 = vrot.slane %v578, %v591
      %v593 = vcombine.high %v585, %v585
      %v594 = vcombine.high %v592, %v592
      %v595 = vcombine.high %v253, %v253
      %v597 = vunpack.c.l.s4 1983009808
      %v598 = vunpack.c.0.s8 %v597
      %v599 = vlaneseq
      %v600 = vshrl.u32 %v599, 7
      %v601 = vsub.s32 %v598, %v600
      %v602 = vrot.slane %v253, %v601
      %v604 = vunpack.c.l.s4 1983009808
      %v605 = vunpack.c.0.s8 %v604
      %v606 = vlaneseq
      %v607 = vshrl.u32 %v606, 7
      %v608 = vsub.s32 %v605, %v607
      %v609 = vrot.slane %v595, %v608
      %v610 = vcombine.high %v602, %v602
      %v611 = vcombine.high %v609, %v609
      %v613 = vunpack.c.l.s4 1983009808
      %v614 = vunpack.c.0.s8 %v613
      %v615 = vlaneseq
      %v616 = vshrl.u32 %v615, 7
      %v617 = vsub.s32 %v614, %v616
      %v618 = vrot.slane %v254, %v617
      %v619 = vcombine.high %v255, %v255
      %v621 = vunpack.c.l.s4 1983009808
      %v622 = vunpack.c.0.s8 %v621
      %v623 = vlaneseq
      %v624 = vshrl.u32 %v623, 7
      %v625 = vsub.s32 %v622, %v624
      %v626 = vrot.slane %v255, %v625
      %v628 = vunpack.c.l.s4 1983009808
      %v629 = vunpack.c.0.s8 %v628
      %v630 = vlaneseq
      %v631 = vshrl.u32 %v630, 7
      %v632 = vsub.s32 %v629, %v631
      %v633 = vrot.slane %v619, %v632
      %v634 = vcombine.high %v626, %v626
      %v635 = vcombine.high %v633, %v633
      %v636 = vcombine.high %v256, %v256
      %v638 = vunpack.c.l.s4 1983009808
      %v639 = vunpack.c.0.s8 %v638
      %v640 = vlaneseq
      %v641 = vshrl.u32 %v640, 7
      %v642 = vsub.s32 %v639, %v641
      %v643 = vrot.slane %v256, %v642
      %v645 = vunpack.c.l.s4 1983009808
      %v646 = vunpack.c.0.s8 %v645
      %v647 = vlaneseq
      %v648 = vshrl.u32 %v647, 7
      %v649 = vsub.s32 %v646, %v648
      %v650 = vrot.slane %v636, %v649
      %v651 = vcombine.high %v643, %v643
      %v652 = vcombine.high %v650, %v650
      %v654 = vunpack.c.l.s4 1983009808
      %v655 = vunpack.c.0.s8 %v654
      %v656 = vlaneseq
      %v657 = vshrl.u32 %v656, 7
      %v658 = vsub.s32 %v655, %v657
      %v659 = vrot.slane %v257, %v658
      %v660 = vcombine.high %v258, %v258
      %v662 = vunpack.c.l.s4 1983009808
      %v663 = vunpack.c.0.s8 %v662
      %v664 = vlaneseq
      %v665 = vshrl.u32 %v664, 7
      %v666 = vsub.s32 %v663, %v665
      %v667 = vrot.slane %v258, %v666
      %v669 = vunpack.c.l.s4 1983009808
      %v670 = vunpack.c.0.s8 %v669
      %v671 = vlaneseq
      %v672 = vshrl.u32 %v671, 7
      %v673 = vsub.s32 %v670, %v672
      %v674 = vrot.slane %v660, %v673
      %v675 = vcombine.high %v667, %v667
      %v676 = vcombine.high %v674, %v674
      %v677 = vcombine.high %v259, %v259
      %v679 = vunpack.c.l.s4 1983009808
      %v680 = vunpack.c.0.s8 %v679
      %v681 = vlaneseq
      %v682 = vshrl.u32 %v681, 7
      %v683 = vsub.s32 %v680, %v682
      %v684 = vrot.slane %v259, %v683
      %v686 = vunpack.c.l.s4 1983009808
      %v687 = vunpack.c.0.s8 %v686
      %v688 = vlaneseq
      %v689 = vshrl.u32 %v688, 7
      %v690 = vsub.s32 %v687, %v689
      %v691 = vrot.slane %v677, %v690
      %v692 = vcombine.high %v684, %v684
      %v693 = vcombine.high %v691, %v691
      %v695 = vunpack.c.l.s4 1983009808
      %v696 = vunpack.c.0.s8 %v695
      %v697 = vlaneseq
      %v698 = vshrl.u32 %v697, 7
      %v699 = vsub.s32 %v696, %v698
      %v700 = vrot.slane %v260, %v699
      %v701 = vld [vmem:[%s1] sm:$0xff]
      %v702 = vld [vmem:[%s1 + $0x8] sm:$0xff]
      %v703 = vld [vmem:[%s1 + $0x10] sm:$0xff]
      %v704 = vld [vmem:[%s1 + $0x18] sm:$0xff]
      %v705 = vld [vmem:[%s1 + $0x20] sm:$0xff]
      %v706 = vld [vmem:[%s1 + $0x28] sm:$0xff]
      %v707 = vld [vmem:[%s1 + $0x30] sm:$0xff]
      %v708 = vld [vmem:[%s1 + $0x38] sm:$0xff]
      %v709 = vld [vmem:[%s1 + $0x40] sm:$0xff]
      %v710 = vld [vmem:[%s1 + $0x48] sm:$0xff]
      %v711 = vld [vmem:[%s1 + $0x50] sm:$0xff]
      %v712 = vld [vmem:[%s1 + $0x58] sm:$0xff]
      %v713 = vld [vmem:[%s1 + $0x60] sm:$0xff]
      %v714 = vld [vmem:[%s1 + $0x68] sm:$0xff]
      %v715 = vld [vmem:[%s1 + $0x70] sm:$0xff]
      %v716 = vld [vmem:[%s1 + $0x78] sm:$0xff]
      %v717 = vcombine.low %v298, %v306
      %v718 = vcombine.low %v305, %v307
      %v720 = vunpack.c.l.s4 1983009808
      %v721 = vunpack.c.0.s8 %v720
      %v722 = vlaneseq
      %v723 = vshrl.u32 %v722, 7
      %v724 = vsub.s32 %v721, %v723
      %v725 = vrot.slane %v717, %v724
      %v727 = vunpack.c.l.s4 1983009808
      %v728 = vunpack.c.0.s8 %v727
      %v729 = vlaneseq
      %v730 = vshrl.u32 %v729, 7
      %v731 = vsub.s32 %v728, %v730
      %v732 = vrot.slane %v718, %v731
      %v733 = vcombine.low %v725, %v732
      %v734 = vcombine.low %v315, %v323
      %v735 = vcombine.low %v322, %v324
      %v737 = vunpack.c.l.s4 1983009808
      %v738 = vunpack.c.0.s8 %v737
      %v739 = vlaneseq
      %v740 = vshrl.u32 %v739, 7
      %v741 = vsub.s32 %v738, %v740
      %v742 = vrot.slane %v734, %v741
      %v744 = vunpack.c.l.s4 1983009808
      %v745 = vunpack.c.0.s8 %v744
      %v746 = vlaneseq
      %v747 = vshrl.u32 %v746, 7
      %v748 = vsub.s32 %v745, %v747
      %v749 = vrot.slane %v735, %v748
      %v750 = vcombine.low %v742, %v749
      %v751 = vcombine.low %v331, %v339
      %v752 = vcombine.low %v347, %v346
      %v754 = vunpack.c.l.s4 1983009808
      %v755 = vunpack.c.0.s8 %v754
      %v756 = vlaneseq
      %v757 = vshrl.u32 %v756, 7
      %v758 = vsub.s32 %v755, %v757
      %v759 = vrot.slane %v751, %v758
      %v761 = vunpack.c.l.s4 1983009808
      %v762 = vunpack.c.0.s8 %v761
      %v763 = vlaneseq
      %v764 = vshrl.u32 %v763, 7
      %v765 = vsub.s32 %v762, %v764
      %v766 = vrot.slane %v752, %v765
      %v767 = vcombine.low %v759, %v766
      %v768 = vcombine.low %v348, %v356
      %v769 = vcombine.low %v364, %v363
      %v771 = vunpack.c.l.s4 1983009808
      %v772 = vunpack.c.0.s8 %v771
      %v773 = vlaneseq
      %v774 = vshrl.u32 %v773, 7
      %v775 = vsub.s32 %v772, %v774
      %v776 = vrot.slane %v768, %v775
      %v778 = vunpack.c.l.s4 1983009808
      %v779 = vunpack.c.0.s8 %v778
      %v780 = vlaneseq
      %v781 = vshrl.u32 %v780, 7
      %v782 = vsub.s32 %v779, %v781
      %v783 = vrot.slane %v769, %v782
      %v784 = vcombine.low %v776, %v783
      %v785 = vcombine.low %v365, %v372
      %v786 = vcombine.low %v380, %v388
      %v788 = vunpack.c.l.s4 1983009808
      %v789 = vunpack.c.0.s8 %v788
      %v790 = vlaneseq
      %v791 = vshrl.u32 %v790, 7
      %v792 = vsub.s32 %v789, %v791
      %v793 = vrot.slane %v785, %v792
      %v795 = vunpack.c.l.s4 1983009808
      %v796 = vunpack.c.0.s8 %v795
      %v797 = vlaneseq
      %v798 = vshrl.u32 %v797, 7
      %v799 = vsub.s32 %v796, %v798
      %v800 = vrot.slane %v786, %v799
      %v801 = vcombine.low %v793, %v800
      %v802 = vcombine.low %v387, %v389
      %v803 = vcombine.low %v397, %v405
      %v805 = vunpack.c.l.s4 1983009808
      %v806 = vunpack.c.0.s8 %v805
      %v807 = vlaneseq
      %v808 = vshrl.u32 %v807, 7
      %v809 = vsub.s32 %v806, %v808
      %v810 = vrot.slane %v802, %v809
      %v812 = vunpack.c.l.s4 1983009808
      %v813 = vunpack.c.0.s8 %v812
      %v814 = vlaneseq
      %v815 = vshrl.u32 %v814, 7
      %v816 = vsub.s32 %v813, %v815
      %v817 = vrot.slane %v803, %v816
      %v818 = vcombine.low %v810, %v817
      %v819 = vcombine.low %v404, %v406
      %v820 = vcombine.low %v413, %v421
      %v822 = vunpack.c.l.s4 1983009808
      %v823 = vunpack.c.0.s8 %v822
      %v824 = vlaneseq
      %v825 = vshrl.u32 %v824, 7
      %v826 = vsub.s32 %v823, %v825
      %v827 = vrot.slane %v819, %v826
      %v829 = vunpack.c.l.s4 1983009808
      %v830 = vunpack.c.0.s8 %v829
      %v831 = vlaneseq
      %v832 = vshrl.u32 %v831, 7
      %v833 = vsub.s32 %v830, %v832
      %v834 = vrot.slane %v820, %v833
      %v835 = vcombine.low %v827, %v834
      %v836 = vcombine.low %v429, %v428
      %v837 = vcombine.low %v430, %v438
      %v839 = vunpack.c.l.s4 1983009808
      %v840 = vunpack.c.0.s8 %v839
      %v841 = vlaneseq
      %v842 = vshrl.u32 %v841, 7
      %v843 = vsub.s32 %v840, %v842
      %v844 = vrot.slane %v836, %v843
      %v846 = vunpack.c.l.s4 1983009808
      %v847 = vunpack.c.0.s8 %v846
      %v848 = vlaneseq
      %v849 = vshrl.u32 %v848, 7
      %v850 = vsub.s32 %v847, %v849
      %v851 = vrot.slane %v837, %v850
      %v852 = vcombine.low %v844, %v851
      %v853 = vcombine.low %v446, %v445
      %v854 = vcombine.low %v447, %v454
      %v856 = vunpack.c.l.s4 1983009808
      %v857 = vunpack.c.0.s8 %v856
      %v858 = vlaneseq
      %v859 = vshrl.u32 %v858, 7
      %v860 = vsub.s32 %v857, %v859
      %v861 = vrot.slane %v853, %v860
      %v863 = vunpack.c.l.s4 1983009808
      %v864 = vunpack.c.0.s8 %v863
      %v865 = vlaneseq
      %v866 = vshrl.u32 %v865, 7
      %v867 = vsub.s32 %v864, %v866
      %v868 = vrot.slane %v854, %v867
      %v869 = vcombine.low %v861, %v868
      %v870 = vcombine.low %v462, %v470
      %v871 = vcombine.low %v469, %v471
      %v873 = vunpack.c.l.s4 1983009808
      %v874 = vunpack.c.0.s8 %v873
      %v875 = vlaneseq
      %v876 = vshrl.u32 %v875, 7
      %v877 = vsub.s32 %v874, %v876
      %v878 = vrot.slane %v870, %v877
      %v880 = vunpack.c.l.s4 1983009808
      %v881 = vunpack.c.0.s8 %v880
      %v882 = vlaneseq
      %v883 = vshrl.u32 %v882, 7
      %v884 = vsub.s32 %v881, %v883
      %v885 = vrot.slane %v871, %v884
      %v886 = vcombine.low %v878, %v885
      %v887 = vcombine.low %v479, %v487
      %v888 = vcombine.low %v486, %v488
      %v890 = vunpack.c.l.s4 1983009808
      %v891 = vunpack.c.0.s8 %v890
      %v892 = vlaneseq
      %v893 = vshrl.u32 %v892, 7
      %v894 = vsub.s32 %v891, %v893
      %v895 = vrot.slane %v887, %v894
      %v897 = vunpack.c.l.s4 1983009808
      %v898 = vunpack.c.0.s8 %v897
      %v899 = vlaneseq
      %v900 = vshrl.u32 %v899, 7
      %v901 = vsub.s32 %v898, %v900
      %v902 = vrot.slane %v888, %v901
      %v903 = vcombine.low %v895, %v902
      %v904 = vcombine.low %v495, %v503
      %v905 = vcombine.low %v511, %v510
      %v907 = vunpack.c.l.s4 1983009808
      %v908 = vunpack.c.0.s8 %v907
      %v909 = vlaneseq
      %v910 = vshrl.u32 %v909, 7
      %v911 = vsub.s32 %v908, %v910
      %v912 = vrot.slane %v904, %v911
      %v914 = vunpack.c.l.s4 1983009808
      %v915 = vunpack.c.0.s8 %v914
      %v916 = vlaneseq
      %v917 = vshrl.u32 %v916, 7
      %v918 = vsub.s32 %v915, %v917
      %v919 = vrot.slane %v905, %v918
      %v920 = vcombine.low %v912, %v919
      %v921 = vcombine.low %v512, %v520
      %v922 = vcombine.low %v528, %v527
      %v924 = vunpack.c.l.s4 1983009808
      %v925 = vunpack.c.0.s8 %v924
      %v926 = vlaneseq
      %v927 = vshrl.u32 %v926, 7
      %v928 = vsub.s32 %v925, %v927
      %v929 = vrot.slane %v921, %v928
      %v931 = vunpack.c.l.s4 1983009808
      %v932 = vunpack.c.0.s8 %v931
      %v933 = vlaneseq
      %v934 = vshrl.u32 %v933, 7
      %v935 = vsub.s32 %v932, %v934
      %v936 = vrot.slane %v922, %v935
      %v937 = vcombine.low %v929, %v936
      %v938 = vcombine.low %v529, %v536
      %v939 = vcombine.low %v544, %v552
      %v941 = vunpack.c.l.s4 1983009808
      %v942 = vunpack.c.0.s8 %v941
      %v943 = vlaneseq
      %v944 = vshrl.u32 %v943, 7
      %v945 = vsub.s32 %v942, %v944
      %v946 = vrot.slane %v938, %v945
      %v948 = vunpack.c.l.s4 1983009808
      %v949 = vunpack.c.0.s8 %v948
      %v950 = vlaneseq
      %v951 = vshrl.u32 %v950, 7
      %v952 = vsub.s32 %v949, %v951
      %v953 = vrot.slane %v939, %v952
      %v954 = vcombine.low %v946, %v953
      %v955 = vcombine.low %v551, %v553
      %v956 = vcombine.low %v561, %v569
      %v958 = vunpack.c.l.s4 1983009808
      %v959 = vunpack.c.0.s8 %v958
      %v960 = vlaneseq
      %v961 = vshrl.u32 %v960, 7
      %v962 = vsub.s32 %v959, %v961
      %v963 = vrot.slane %v955, %v962
      %v965 = vunpack.c.l.s4 1983009808
      %v966 = vunpack.c.0.s8 %v965
      %v967 = vlaneseq
      %v968 = vshrl.u32 %v967, 7
      %v969 = vsub.s32 %v966, %v968
      %v970 = vrot.slane %v956, %v969
      %v971 = vcombine.low %v963, %v970
      %v972 = vcombine.low %v568, %v570
      %v973 = vcombine.low %v577, %v585
      %v975 = vunpack.c.l.s4 1983009808
      %v976 = vunpack.c.0.s8 %v975
      %v977 = vlaneseq
      %v978 = vshrl.u32 %v977, 7
      %v979 = vsub.s32 %v976, %v978
      %v980 = vrot.slane %v972, %v979
      %v982 = vunpack.c.l.s4 1983009808
      %v983 = vunpack.c.0.s8 %v982
      %v984 = vlaneseq
      %v985 = vshrl.u32 %v984, 7
      %v986 = vsub.s32 %v983, %v985
      %v987 = vrot.slane %v973, %v986
      %v988 = vcombine.low %v980, %v987
      %v989 = vcombine.low %v593, %v592
      %v990 = vcombine.low %v594, %v602
      %v992 = vunpack.c.l.s4 1983009808
      %v993 = vunpack.c.0.s8 %v992
      %v994 = vlaneseq
      %v995 = vshrl.u32 %v994, 7
      %v996 = vsub.s32 %v993, %v995
      %v997 = vrot.slane %v989, %v996
      %v999 = vunpack.c.l.s4 1983009808
      %v1000 = vunpack.c.0.s8 %v999
      %v1001 = vlaneseq
      %v1002 = vshrl.u32 %v1001, 7
      %v1003 = vsub.s32 %v1000, %v1002
      %v1004 = vrot.slane %v990, %v1003
      %v1005 = vcombine.low %v997, %v1004
      %v1006 = vcombine.low %v610, %v609
      %v1007 = vcombine.low %v611, %v618
      %v1009 = vunpack.c.l.s4 1983009808
      %v1010 = vunpack.c.0.s8 %v1009
      %v1011 = vlaneseq
      %v1012 = vshrl.u32 %v1011, 7
      %v1013 = vsub.s32 %v1010, %v1012
      %v1014 = vrot.slane %v1006, %v1013
      %v1016 = vunpack.c.l.s4 1983009808
      %v1017 = vunpack.c.0.s8 %v1016
      %v1018 = vlaneseq
      %v1019 = vshrl.u32 %v1018, 7
      %v1020 = vsub.s32 %v1017, %v1019
      %v1021 = vrot.slane %v1007, %v1020
      %v1022 = vcombine.low %v1014, %v1021
      %v1023 = vcombine.low %v626, %v634
      %v1024 = vcombine.low %v633, %v635
      %v1026 = vunpack.c.l.s4 1983009808
      %v1027 = vunpack.c.0.s8 %v1026
      %v1028 = vlaneseq
      %v1029 = vshrl.u32 %v1028, 7
      %v1030 = vsub.s32 %v1027, %v1029
      %v1031 = vrot.slane %v1023, %v1030
      %v1033 = vunpack.c.l.s4 1983009808
      %v1034 = vunpack.c.0.s8 %v1033
      %v1035 = vlaneseq
      %v1036 = vshrl.u32 %v1035, 7
      %v1037 = vsub.s32 %v1034, %v1036
      %v1038 = vrot.slane %v1024, %v1037
      %v1039 = vcombine.low %v1031, %v1038
      %v1040 = vcombine.low %v643, %v651
      %v1041 = vcombine.low %v650, %v652
      %v1043 = vunpack.c.l.s4 1983009808
      %v1044 = vunpack.c.0.s8 %v1043
      %v1045 = vlaneseq
      %v1046 = vshrl.u32 %v1045, 7
      %v1047 = vsub.s32 %v1044, %v1046
      %v1048 = vrot.slane %v1040, %v1047
      %v1050 = vunpack.c.l.s4 1983009808
      %v1051 = vunpack.c.0.s8 %v1050
      %v1052 = vlaneseq
      %v1053 = vshrl.u32 %v1052, 7
      %v1054 = vsub.s32 %v1051, %v1053
      %v1055 = vrot.slane %v1041, %v1054
      %v1056 = vcombine.low %v1048, %v1055
      %v1057 = vcombine.low %v659, %v667
      %v1058 = vcombine.low %v675, %v674
      %v1060 = vunpack.c.l.s4 1983009808
      %v1061 = vunpack.c.0.s8 %v1060
      %v1062 = vlaneseq
      %v1063 = vshrl.u32 %v1062, 7
      %v1064 = vsub.s32 %v1061, %v1063
      %v1065 = vrot.slane %v1057, %v1064
      %v1067 = vunpack.c.l.s4 1983009808
      %v1068 = vunpack.c.0.s8 %v1067
      %v1069 = vlaneseq
      %v1070 = vshrl.u32 %v1069, 7
      %v1071 = vsub.s32 %v1068, %v1070
      %v1072 = vrot.slane %v1058, %v1071
      %v1073 = vcombine.low %v1065, %v1072
      %v1074 = vcombine.low %v676, %v684
      %v1075 = vcombine.low %v692, %v691
      %v1077 = vunpack.c.l.s4 1983009808
      %v1078 = vunpack.c.0.s8 %v1077
      %v1079 = vlaneseq
      %v1080 = vshrl.u32 %v1079, 7
      %v1081 = vsub.s32 %v1078, %v1080
      %v1082 = vrot.slane %v1074, %v1081
      %v1084 = vunpack.c.l.s4 1983009808
      %v1085 = vunpack.c.0.s8 %v1084
      %v1086 = vlaneseq
      %v1087 = vshrl.u32 %v1086, 7
      %v1088 = vsub.s32 %v1085, %v1087
      %v1089 = vrot.slane %v1075, %v1088
      %v1090 = vcombine.low %v1082, %v1089
      %v1091 = vcombine.low %v693, %v700
      %v1093 = vunpack.c.l.s4 1983009808
      %v1094 = vunpack.c.0.s8 %v1093
      %v1095 = vlaneseq
      %v1096 = vshrl.u32 %v1095, 7
      %v1097 = vsub.s32 %v1094, %v1096
      %v1098 = vrot.slane %v1091, %v1097
      %1122 = vmatprep.subr.mxu0 0.0
      %1123 = vmatpush1.msra.mxu0 %v701
      %1124 = vmatprep.subr.mxu0 0.0
      %1125 = vmatpush1.msra.mxu0 %v702
      %1126 = vmatprep.subr.mxu0 0.0
      %1127 = vmatpush1.msra.mxu0 %v703
      %1128 = vmatprep.subr.mxu0 0.0
      %1129 = vmatpush1.msra.mxu0 %v704
      %1130 = vmatprep.subr.mxu0 0.0
      %1131 = vmatpush1.msra.mxu0 %v705
      %1132 = vmatprep.subr.mxu0 0.0
      %1133 = vmatpush1.msra.mxu0 %v706
      %1134 = vmatprep.subr.mxu0 0.0
      %1135 = vmatpush1.msra.mxu0 %v707
      %1136 = vmatprep.subr.mxu0 0.0
      %1137 = vmatpush1.msra.mxu0 %v708
      %1138 = vmatprep.subr.mxu0 0.0
      %1139 = vmatpush1.msra.mxu0 %v709
      %1140 = vmatprep.subr.mxu0 0.0
      %1141 = vmatpush1.msra.mxu0 %v710
      %1142 = vmatprep.subr.mxu0 0.0
      %1143 = vmatpush1.msra.mxu0 %v711
      %1144 = vmatprep.subr.mxu0 0.0
      %1145 = vmatpush1.msra.mxu0 %v712
      %1146 = vmatprep.subr.mxu0 0.0
      %1147 = vmatpush1.msra.mxu0 %v713
      %1148 = vmatprep.subr.mxu0 0.0
      %1149 = vmatpush1.msra.mxu0 %v714
      %1150 = vmatprep.subr.mxu0 0.0
      %1151 = vmatpush1.msra.mxu0 %v715
      %1152 = vmatprep.subr.mxu0 0.0
      %1153 = vmatpush1.msra.mxu0 %v716
      %1154 = vmatprep.subr.mxu0 0.0
      %1155 = vmatpush1.msra.mxu0 0.0
      %1156 = vmatprep.subr.mxu0 0.0
      %1157 = vmatpush1.msra.mxu0 0.0
      %1158 = vmatprep.subr.mxu0 0.0
      %1159 = vmatpush1.msra.mxu0 0.0
      %1160 = vmatprep.subr.mxu0 0.0
      %1161 = vmatpush1.msra.mxu0 0.0
      %1162 = vmatprep.subr.mxu0 0.0
      %1163 = vmatpush1.msra.mxu0 0.0
      %1164 = vmatprep.subr.mxu0 0.0
      %1165 = vmatpush1.msra.mxu0 0.0
      %1166 = vmatprep.subr.mxu0 0.0
      %1167 = vmatpush1.msra.mxu0 0.0
      %1168 = vmatprep.subr.mxu0 0.0
      %1169 = vmatpush1.msra.mxu0 0.0
      %1170 = vmatprep.subr.mxu0 0.0
      %1171 = vmatpush1.msra.mxu0 0.0
      %1172 = vmatprep.subr.mxu0 0.0
      %1173 = vmatpush1.msra.mxu0 0.0
      %1174 = vmatprep.subr.mxu0 0.0
      %1175 = vmatpush1.msra.mxu0 0.0
      %1176 = vmatprep.subr.mxu0 0.0
      %1177 = vmatpush1.msra.mxu0 0.0
      %1178 = vmatprep.subr.mxu0 0.0
      %1179 = vmatpush1.msra.mxu0 0.0
      %1180 = vmatprep.subr.mxu0 0.0
      %1181 = vmatpush1.msra.mxu0 0.0
      %1182 = vmatprep.subr.mxu0 0.0
      %1183 = vmatpush1.msra.mxu0 0.0
      %1184 = vmatprep.subr.mxu0 0.0
      %1185 = vmatpush1.msra.mxu0 0.0
      %1186 = vmatprep.mubr.f32.mxu0 0.0
      %1187 = vmatmul.mubr.f32.gmra.mrb[0].mxu0 %v733
      %v1188 = vpop.f32.mrb[0].mxu0
      %v1189 = vadd.f32 0.0, %v1188
      %v1190 = vpop.f32.mrb[0].mxu0
      %1191 = vmatprep.mubr.f32.mxu0 0.0
      %1192 = vmatmul.mubr.f32.gmra.mrb[0].mxu0 %v750
      %v1193 = vpop.f32.mrb[0].mxu0
      %v1194 = vadd.f32 0.0, %v1193
      %v1195 = vpop.f32.mrb[0].mxu0
      %1196 = vmatprep.mubr.f32.mxu0 0.0
      %1197 = vmatmul.mubr.f32.gmra.mrb[0].mxu0 %v767
      %v1198 = vpop.f32.mrb[0].mxu0
      %v1199 = vadd.f32 0.0, %v1198
      %v1200 = vpop.f32.mrb[0].mxu0
      %1201 = vmatprep.mubr.f32.mxu0 0.0
      %1202 = vmatmul.mubr.f32.gmra.mrb[0].mxu0 %v784
      %v1203 = vpop.f32.mrb[0].mxu0
      %v1204 = vadd.f32 0.0, %v1203
      %v1205 = vpop.f32.mrb[0].mxu0
      %1206 = vmatprep.mubr.f32.mxu0 0.0
      %1207 = vmatmul.mubr.f32.gmra.mrb[0].mxu0 %v801
      %v1208 = vpop.f32.mrb[0].mxu0
      %v1209 = vadd.f32 0.0, %v1208
      %v1210 = vpop.f32.mrb[0].mxu0
      %1211 = vmatprep.mubr.f32.mxu0 0.0
      %1212 = vmatmul.mubr.f32.gmra.mrb[0].mxu0 %v818
      %v1213 = vpop.f32.mrb[0].mxu0
      %v1214 = vadd.f32 0.0, %v1213
      %v1215 = vpop.f32.mrb[0].mxu0
      %1216 = vmatprep.mubr.f32.mxu0 0.0
      %1217 = vmatmul.mubr.f32.gmra.mrb[0].mxu0 %v835
      %v1218 = vpop.f32.mrb[0].mxu0
      %v1219 = vadd.f32 0.0, %v1218
      %v1220 = vpop.f32.mrb[0].mxu0
      %1221 = vmatprep.mubr.f32.mxu0 0.0
      %1222 = vmatmul.mubr.f32.gmra.mrb[0].mxu0 %v852
      %v1223 = vpop.f32.mrb[0].mxu0
      %v1224 = vadd.f32 0.0, %v1223
      %v1225 = vpop.f32.mrb[0].mxu0
      %1226 = vmatprep.mubr.f32.mxu0 0.0
      %1227 = vmatmul.mubr.f32.gmra.mrb[0].mxu0 %v869
      %v1228 = vpop.f32.mrb[0].mxu0
      %v1229 = vadd.f32 0.0, %v1228
      %v1230 = vpop.f32.mrb[0].mxu0
      %1231 = vmatprep.mubr.f32.mxu0 0.0
      %1232 = vmatmul.mubr.f32.gmra.mrb[0].mxu0 %v886
      %v1233 = vpop.f32.mrb[0].mxu0
      %v1234 = vadd.f32 0.0, %v1233
      %v1235 = vpop.f32.mrb[0].mxu0
      %1236 = vmatprep.mubr.f32.mxu0 0.0
      %1237 = vmatmul.mubr.f32.gmra.mrb[0].mxu0 %v903
      %v1238 = vpop.f32.mrb[0].mxu0
      %v1239 = vadd.f32 0.0, %v1238
      %v1240 = vpop.f32.mrb[0].mxu0
      %1241 = vmatprep.mubr.f32.mxu0 0.0
      %1242 = vmatmul.mubr.f32.gmra.mrb[0].mxu0 %v920
      %v1243 = vpop.f32.mrb[0].mxu0
      %v1244 = vadd.f32 0.0, %v1243
      %v1245 = vpop.f32.mrb[0].mxu0
      %1246 = vmatprep.mubr.f32.mxu0 0.0
      %1247 = vmatmul.mubr.f32.gmra.mrb[0].mxu0 %v937
      %v1248 = vpop.f32.mrb[0].mxu0
      %v1249 = vadd.f32 0.0, %v1248
      %v1250 = vpop.f32.mrb[0].mxu0
      %1251 = vmatprep.mubr.f32.mxu0 0.0
      %1252 = vmatmul.mubr.f32.gmra.mrb[0].mxu0 %v954
      %v1253 = vpop.f32.mrb[0].mxu0
      %v1254 = vadd.f32 0.0, %v1253
      %v1255 = vpop.f32.mrb[0].mxu0
      %1256 = vmatprep.mubr.f32.mxu0 0.0
      %1257 = vmatmul.mubr.f32.gmra.mrb[0].mxu0 %v971
      %v1258 = vpop.f32.mrb[0].mxu0
      %v1259 = vadd.f32 0.0, %v1258
      %v1260 = vpop.f32.mrb[0].mxu0
      %1261 = vmatprep.mubr.f32.mxu0 0.0
      %1262 = vmatmul.mubr.f32.gmra.mrb[0].mxu0 %v988
      %v1263 = vpop.f32.mrb[0].mxu0
      %v1264 = vadd.f32 0.0, %v1263
      %v1265 = vpop.f32.mrb[0].mxu0
      %1266 = vmatprep.mubr.f32.mxu0 0.0
      %1267 = vmatmul.mubr.f32.gmra.mrb[0].mxu0 %v1005
      %v1268 = vpop.f32.mrb[0].mxu0
      %v1269 = vadd.f32 0.0, %v1268
      %v1270 = vpop.f32.mrb[0].mxu0
      %1271 = vmatprep.mubr.f32.mxu0 0.0
      %1272 = vmatmul.mubr.f32.gmra.mrb[0].mxu0 %v1022
      %v1273 = vpop.f32.mrb[0].mxu0
      %v1274 = vadd.f32 0.0, %v1273
      %v1275 = vpop.f32.mrb[0].mxu0
      %1276 = vmatprep.mubr.f32.mxu0 0.0
      %1277 = vmatmul.mubr.f32.gmra.mrb[0].mxu0 %v1039
      %v1278 = vpop.f32.mrb[0].mxu0
      %v1279 = vadd.f32 0.0, %v1278
      %v1280 = vpop.f32.mrb[0].mxu0
      %1281 = vmatprep.mubr.f32.mxu0 0.0
      %1282 = vmatmul.mubr.f32.gmra.mrb[0].mxu0 %v1056
      %v1283 = vpop.f32.mrb[0].mxu0
      %v1284 = vpop.f32.mrb[0].mxu0
      %1285 = vmatprep.mubr.f32.mxu0 0.0
      %1286 = vmatmul.mubr.f32.gmra.mrb[0].mxu0 %v1073
      %v1287 = vpop.f32.mrb[0].mxu0
      %v1288 = vpop.f32.mrb[0].mxu0
      %1289 = vmatprep.mubr.f32.mxu0 0.0
      %1290 = vmatmul.mubr.f32.gmra.mrb[0].mxu0 %v1090
      %v1291 = vpop.f32.mrb[0].mxu0
      %v1292 = vpop.f32.mrb[0].mxu0
      %1293 = vmatprep.mubr.f32.mxu0 0.0
      %1294 = vmatmul.mubr.f32.gmra.mrb[0].mxu0 %v1098
      %v1295 = vpop.f32.mrb[0].mxu0
      %v1296 = vadd.f32 0.0, %v1295
      %v1297 = vpop.f32.mrb[0].mxu0
      %1298 = vdwg.mxu0
      %vm1299 = vcmask 1047556
      %v1300 = vrot.slane %v1189, 4
      %v1301 = vrot.slane %v1194, 4
      %v1302 = vrot.slane %v1199, 4
      %v1303 = vrot.slane %v1204, 4
      %v1304 = vrot.slane %v1209, 4
      %v1305 = vrot.slane %v1214, 4
      %v1306 = vrot.slane %v1219, 4
      %v1307 = vrot.slane %v1224, 4
      %v1308 = vrot.slane %v1229, 4
      %v1309 = vrot.slane %v1234, 4
      %v1310 = vrot.slane %v1239, 4
      %v1311 = vrot.slane %v1244, 4
      %v1312 = vrot.slane %v1249, 4
      %v1313 = vrot.slane %v1254, 4
      %v1314 = vrot.slane %v1259, 4
      %v1315 = vrot.slane %v1264, 4
      %v1316 = vrot.slane %v1269, 4
      %v1317 = vrot.slane %v1274, 4
      %v1318 = vrot.slane %v1279, 4
      %v1319 = vsel %vm1299, %v1300, %v1296
      %v1320 = vsel %vm1299, %v1301, %v1300
      %v1321 = vsel %vm1299, %v1302, %v1301
      %v1322 = vsel %vm1299, %v1303, %v1302
      %v1323 = vsel %vm1299, %v1304, %v1303
      %v1324 = vsel %vm1299, %v1305, %v1304
      %v1325 = vsel %vm1299, %v1306, %v1305
      %v1326 = vsel %vm1299, %v1307, %v1306
      %v1327 = vsel %vm1299, %v1308, %v1307
      %v1328 = vsel %vm1299, %v1309, %v1308
      %v1329 = vsel %vm1299, %v1310, %v1309
      %v1330 = vsel %vm1299, %v1311, %v1310
      %v1331 = vsel %vm1299, %v1312, %v1311
      %v1332 = vsel %vm1299, %v1313, %v1312
      %v1333 = vsel %vm1299, %v1314, %v1313
      %v1334 = vsel %vm1299, %v1315, %v1314
      %v1335 = vsel %vm1299, %v1316, %v1315
      %v1336 = vsel %vm1299, %v1317, %v1316
      %v1337 = vsel %vm1299, %v1318, %v1317
      %s1338 = scalar_lea.vmem %s1, 128
      %v1339 = vld [vmem:[%s1338] sm:$0xff]
      %v1340 = vld [vmem:[%s1338 + $0x8] sm:$0xff]
      %v1341 = vld [vmem:[%s1338 + $0x10] sm:$0xff]
      %v1342 = vld [vmem:[%s1338 + $0x18] sm:$0xff]
      %v1343 = vld [vmem:[%s1338 + $0x20] sm:$0xff]
      %v1344 = vld [vmem:[%s1338 + $0x28] sm:$0xff]
      %v1345 = vld [vmem:[%s1338 + $0x30] sm:$0xff]
      %v1346 = vld [vmem:[%s1338 + $0x38] sm:$0xff]
      %v1347 = vld [vmem:[%s1338 + $0x40] sm:$0xff]
      %v1348 = vld [vmem:[%s1338 + $0x48] sm:$0xff]
      %v1349 = vld [vmem:[%s1338 + $0x50] sm:$0xff]
      %v1350 = vld [vmem:[%s1338 + $0x58] sm:$0xff]
      %v1351 = vld [vmem:[%s1338 + $0x60] sm:$0xff]
      %v1352 = vld [vmem:[%s1338 + $0x68] sm:$0xff]
      %v1353 = vld [vmem:[%s1338 + $0x70] sm:$0xff]
      %v1354 = vld [vmem:[%s1338 + $0x78] sm:$0xff]
      %1355 = vmatprep.subr.mxu0 0.0
      %1356 = vmatpush1.msra.mxu0 %v1339
      %1357 = vmatprep.subr.mxu0 0.0
      %1358 = vmatpush1.msra.mxu0 %v1340
      %1359 = vmatprep.subr.mxu0 0.0
      %1360 = vmatpush1.msra.mxu0 %v1341
      %1361 = vmatprep.subr.mxu0 0.0
      %1362 = vmatpush1.msra.mxu0 %v1342
      %1363 = vmatprep.subr.mxu0 0.0
      %1364 = vmatpush1.msra.mxu0 %v1343
      %1365 = vmatprep.subr.mxu0 0.0
      %1366 = vmatpush1.msra.mxu0 %v1344
      %1367 = vmatprep.subr.mxu0 0.0
      %1368 = vmatpush1.msra.mxu0 %v1345
      %1369 = vmatprep.subr.mxu0 0.0
      %1370 = vmatpush1.msra.mxu0 %v1346
      %1371 = vmatprep.subr.mxu0 0.0
      %1372 = vmatpush1.msra.mxu0 %v1347
      %1373 = vmatprep.subr.mxu0 0.0
      %1374 = vmatpush1.msra.mxu0 %v1348
      %1375 = vmatprep.subr.mxu0 0.0
      %1376 = vmatpush1.msra.mxu0 %v1349
      %1377 = vmatprep.subr.mxu0 0.0
      %1378 = vmatpush1.msra.mxu0 %v1350
      %1379 = vmatprep.subr.mxu0 0.0
      %1380 = vmatpush1.msra.mxu0 %v1351
      %1381 = vmatprep.subr.mxu0 0.0
      %1382 = vmatpush1.msra.mxu0 %v1352
      %1383 = vmatprep.subr.mxu0 0.0
      %1384 = vmatpush1.msra.mxu0 %v1353
      %1385 = vmatprep.subr.mxu0 0.0
      %1386 = vmatpush1.msra.mxu0 %v1354
      %1387 = vmatprep.subr.mxu0 0.0
      %1388 = vmatpush1.msra.mxu0 0.0
      %1389 = vmatprep.subr.mxu0 0.0
      %1390 = vmatpush1.msra.mxu0 0.0
      %1391 = vmatprep.subr.mxu0 0.0
      %1392 = vmatpush1.msra.mxu0 0.0
      %1393 = vmatprep.subr.mxu0 0.0
      %1394 = vmatpush1.msra.mxu0 0.0
      %1395 = vmatprep.subr.mxu0 0.0
      %1396 = vmatpush1.msra.mxu0 0.0
      %1397 = vmatprep.subr.mxu0 0.0
      %1398 = vmatpush1.msra.mxu0 0.0
      %1399 = vmatprep.subr.mxu0 0.0
      %1400 = vmatpush1.msra.mxu0 0.0
      %1401 = vmatprep.subr.mxu0 0.0
      %1402 = vmatpush1.msra.mxu0 0.0
      %1403 = vmatprep.subr.mxu0 0.0
      %1404 = vmatpush1.msra.mxu0 0.0
      %1405 = vmatprep.subr.mxu0 0.0
      %1406 = vmatpush1.msra.mxu0 0.0
      %1407 = vmatprep.subr.mxu0 0.0
      %1408 = vmatpush1.msra.mxu0 0.0
      %1409 = vmatprep.subr.mxu0 0.0
      %1410 = vmatpush1.msra.mxu0 0.0
      %1411 = vmatprep.subr.mxu0 0.0
      %1412 = vmatpush1.msra.mxu0 0.0
      %1413 = vmatprep.subr.mxu0 0.0
      %1414 = vmatpush1.msra.mxu0 0.0
      %1415 = vmatprep.subr.mxu0 0.0
      %1416 = vmatpush1.msra.mxu0 0.0
      %1417 = vmatprep.subr.mxu0 0.0
      %1418 = vmatpush1.msra.mxu0 0.0
      %1419 = vmatprep.mubr.f32.mxu0 0.0
      %1420 = vmatmul.mubr.f32.gmra.mrb[0].mxu0 %v733
      %v1421 = vpop.f32.mrb[0].mxu0
      %v1422 = vadd.f32 0.0, %v1421
      %v1423 = vpop.f32.mrb[0].mxu0
      %1424 = vmatprep.mubr.f32.mxu0 0.0
      %1425 = vmatmul.mubr.f32.gmra.mrb[0].mxu0 %v750
      %v1426 = vpop.f32.mrb[0].mxu0
      %v1427 = vadd.f32 0.0, %v1426
      %v1428 = vpop.f32.mrb[0].mxu0
      %1429 = vmatprep.mubr.f32.mxu0 0.0
      %1430 = vmatmul.mubr.f32.gmra.mrb[0].mxu0 %v767
      %v1431 = vpop.f32.mrb[0].mxu0
      %v1432 = vadd.f32 0.0, %v1431
      %v1433 = vpop.f32.mrb[0].mxu0
      %1434 = vmatprep.mubr.f32.mxu0 0.0
      %1435 = vmatmul.mubr.f32.gmra.mrb[0].mxu0 %v784
      %v1436 = vpop.f32.mrb[0].mxu0
      %v1437 = vadd.f32 0.0, %v1436
      %v1438 = vpop.f32.mrb[0].mxu0
      %1439 = vmatprep.mubr.f32.mxu0 0.0
      %1440 = vmatmul.mubr.f32.gmra.mrb[0].mxu0 %v801
      %v1441 = vpop.f32.mrb[0].mxu0
      %v1442 = vadd.f32 0.0, %v1441
      %v1443 = vpop.f32.mrb[0].mxu0
      %1444 = vmatprep.mubr.f32.mxu0 0.0
      %1445 = vmatmul.mubr.f32.gmra.mrb[0].mxu0 %v818
      %v1446 = vpop.f32.mrb[0].mxu0
      %v1447 = vadd.f32 0.0, %v1446
      %v1448 = vpop.f32.mrb[0].mxu0
      %1449 = vmatprep.mubr.f32.mxu0 0.0
      %1450 = vmatmul.mubr.f32.gmra.mrb[0].mxu0 %v835
      %v1451 = vpop.f32.mrb[0].mxu0
      %v1452 = vadd.f32 0.0, %v1451
      %v1453 = vpop.f32.mrb[0].mxu0
      %1454 = vmatprep.mubr.f32.mxu0 0.0
      %1455 = vmatmul.mubr.f32.gmra.mrb[0].mxu0 %v852
      %v1456 = vpop.f32.mrb[0].mxu0
      %v1457 = vadd.f32 0.0, %v1456
      %v1458 = vpop.f32.mrb[0].mxu0
      %1459 = vmatprep.mubr.f32.mxu0 0.0
      %1460 = vmatmul.mubr.f32.gmra.mrb[0].mxu0 %v869
      %v1461 = vpop.f32.mrb[0].mxu0
      %v1462 = vadd.f32 0.0, %v1461
      %v1463 = vpop.f32.mrb[0].mxu0
      %1464 = vmatprep.mubr.f32.mxu0 0.0
      %1465 = vmatmul.mubr.f32.gmra.mrb[0].mxu0 %v886
      %v1466 = vpop.f32.mrb[0].mxu0
      %v1467 = vadd.f32 0.0, %v1466
      %v1468 = vpop.f32.mrb[0].mxu0
      %1469 = vmatprep.mubr.f32.mxu0 0.0
      %1470 = vmatmul.mubr.f32.gmra.mrb[0].mxu0 %v903
      %v1471 = vpop.f32.mrb[0].mxu0
      %v1472 = vadd.f32 0.0, %v1471
      %v1473 = vpop.f32.mrb[0].mxu0
      %1474 = vmatprep.mubr.f32.mxu0 0.0
      %1475 = vmatmul.mubr.f32.gmra.mrb[0].mxu0 %v920
      %v1476 = vpop.f32.mrb[0].mxu0
      %v1477 = vadd.f32 0.0, %v1476
      %v1478 = vpop.f32.mrb[0].mxu0
      %1479 = vmatprep.mubr.f32.mxu0 0.0
      %1480 = vmatmul.mubr.f32.gmra.mrb[0].mxu0 %v937
      %v1481 = vpop.f32.mrb[0].mxu0
      %v1482 = vadd.f32 0.0, %v1481
      %v1483 = vpop.f32.mrb[0].mxu0
      %1484 = vmatprep.mubr.f32.mxu0 0.0
      %1485 = vmatmul.mubr.f32.gmra.mrb[0].mxu0 %v954
      %v1486 = vpop.f32.mrb[0].mxu0
      %v1487 = vadd.f32 0.0, %v1486
      %v1488 = vpop.f32.mrb[0].mxu0
      %1489 = vmatprep.mubr.f32.mxu0 0.0
      %1490 = vmatmul.mubr.f32.gmra.mrb[0].mxu0 %v971
      %v1491 = vpop.f32.mrb[0].mxu0
      %v1492 = vadd.f32 0.0, %v1491
      %v1493 = vpop.f32.mrb[0].mxu0
      %1494 = vmatprep.mubr.f32.mxu0 0.0
      %1495 = vmatmul.mubr.f32.gmra.mrb[0].mxu0 %v988
      %v1496 = vpop.f32.mrb[0].mxu0
      %v1497 = vadd.f32 0.0, %v1496
      %v1498 = vpop.f32.mrb[0].mxu0
      %1499 = vmatprep.mubr.f32.mxu0 0.0
      %1500 = vmatmul.mubr.f32.gmra.mrb[0].mxu0 %v1005
      %v1501 = vpop.f32.mrb[0].mxu0
      %v1502 = vadd.f32 0.0, %v1501
      %v1503 = vpop.f32.mrb[0].mxu0
      %1504 = vmatprep.mubr.f32.mxu0 0.0
      %1505 = vmatmul.mubr.f32.gmra.mrb[0].mxu0 %v1022
      %v1506 = vpop.f32.mrb[0].mxu0
      %v1507 = vadd.f32 0.0, %v1506
      %v1508 = vpop.f32.mrb[0].mxu0
      %1509 = vmatprep.mubr.f32.mxu0 0.0
      %1510 = vmatmul.mubr.f32.gmra.mrb[0].mxu0 %v1039
      %v1511 = vpop.f32.mrb[0].mxu0
      %v1512 = vadd.f32 0.0, %v1511
      %v1513 = vpop.f32.mrb[0].mxu0
      %1514 = vmatprep.mubr.f32.mxu0 0.0
      %1515 = vmatmul.mubr.f32.gmra.mrb[0].mxu0 %v1056
      %v1516 = vpop.f32.mrb[0].mxu0
      %v1517 = vadd.f32 0.0, %v1516
      %v1518 = vpop.f32.mrb[0].mxu0
      %1519 = vmatprep.mubr.f32.mxu0 0.0
      %1520 = vmatmul.mubr.f32.gmra.mrb[0].mxu0 %v1073
      %v1521 = vpop.f32.mrb[0].mxu0
      %v1522 = vpop.f32.mrb[0].mxu0
      %1523 = vmatprep.mubr.f32.mxu0 0.0
      %1524 = vmatmul.mubr.f32.gmra.mrb[0].mxu0 %v1090
      %v1525 = vpop.f32.mrb[0].mxu0
      %v1526 = vpop.f32.mrb[0].mxu0
      %1527 = vmatprep.mubr.f32.mxu0 0.0
      %1528 = vmatmul.mubr.f32.gmra.mrb[0].mxu0 %v1098
      %v1529 = vpop.f32.mrb[0].mxu0
      %v1530 = vadd.f32 0.0, %v1529
      %v1531 = vpop.f32.mrb[0].mxu0
      %1532 = vdwg.mxu0
      %v1533 = vrot.slane %v1422, 4
      %v1534 = vrot.slane %v1427, 4
      %v1535 = vrot.slane %v1432, 4
      %v1536 = vrot.slane %v1437, 4
      %v1537 = vrot.slane %v1442, 4
      %v1538 = vrot.slane %v1447, 4
      %v1539 = vrot.slane %v1452, 4
      %v1540 = vrot.slane %v1457, 4
      %v1541 = vrot.slane %v1462, 4
      %v1542 = vrot.slane %v1467, 4
      %v1543 = vrot.slane %v1472, 4
      %v1544 = vrot.slane %v1477, 4
      %v1545 = vrot.slane %v1482, 4
      %v1546 = vrot.slane %v1487, 4
      %v1547 = vrot.slane %v1492, 4
      %v1548 = vrot.slane %v1497, 4
      %v1549 = vrot.slane %v1502, 4
      %v1550 = vrot.slane %v1507, 4
      %v1551 = vrot.slane %v1512, 4
      %v1552 = vrot.slane %v1517, 4
      %v1553 = vsel %vm1299, %v1533, %v1530
      %v1554 = vsel %vm1299, %v1534, %v1533
      %v1555 = vsel %vm1299, %v1535, %v1534
      %v1556 = vsel %vm1299, %v1536, %v1535
      %v1557 = vsel %vm1299, %v1537, %v1536
      %v1558 = vsel %vm1299, %v1538, %v1537
      %v1559 = vsel %vm1299, %v1539, %v1538
      %v1560 = vsel %vm1299, %v1540, %v1539
      %v1561 = vsel %vm1299, %v1541, %v1540
      %v1562 = vsel %vm1299, %v1542, %v1541
      %v1563 = vsel %vm1299, %v1543, %v1542
      %v1564 = vsel %vm1299, %v1544, %v1543
      %v1565 = vsel %vm1299, %v1545, %v1544
      %v1566 = vsel %vm1299, %v1546, %v1545
      %v1567 = vsel %vm1299, %v1547, %v1546
      %v1568 = vsel %vm1299, %v1548, %v1547
      %v1569 = vsel %vm1299, %v1549, %v1548
      %v1570 = vsel %vm1299, %v1550, %v1549
      %v1571 = vsel %vm1299, %v1551, %v1550
      %v1572 = vsel %vm1299, %v1552, %v1551
      %vm1593 = vcmask 1046528
      %v1594 = vrot.slane %v1553, 1
      %v1595 = vrot.slane %v1554, 1
      %v1596 = vsel %vm1593, %v1594, %v1595
      %v1597 = vrot.slane %v1555, 1
      %v1598 = vsel %vm1593, %v1595, %v1597
      %v1599 = vrot.slane %v1556, 1
      %v1600 = vsel %vm1593, %v1597, %v1599
      %v1601 = vrot.slane %v1557, 1
      %v1602 = vsel %vm1593, %v1599, %v1601
      %v1603 = vrot.slane %v1558, 1
      %v1604 = vsel %vm1593, %v1601, %v1603
      %v1605 = vrot.slane %v1559, 1
      %v1606 = vsel %vm1593, %v1603, %v1605
      %v1607 = vrot.slane %v1560, 1
      %v1608 = vsel %vm1593, %v1605, %v1607
      %v1609 = vrot.slane %v1561, 1
      %v1610 = vsel %vm1593, %v1607, %v1609
      %v1611 = vrot.slane %v1562, 1
      %v1612 = vsel %vm1593, %v1609, %v1611
      %v1613 = vrot.slane %v1563, 1
      %v1614 = vsel %vm1593, %v1611, %v1613
      %v1615 = vrot.slane %v1564, 1
      %v1616 = vsel %vm1593, %v1613, %v1615
      %v1617 = vrot.slane %v1565, 1
      %v1618 = vsel %vm1593, %v1615, %v1617
      %v1619 = vrot.slane %v1566, 1
      %v1620 = vsel %vm1593, %v1617, %v1619
      %v1621 = vrot.slane %v1567, 1
      %v1622 = vsel %vm1593, %v1619, %v1621
      %v1623 = vrot.slane %v1568, 1
      %v1624 = vsel %vm1593, %v1621, %v1623
      %v1625 = vrot.slane %v1569, 1
      %v1626 = vsel %vm1593, %v1623, %v1625
      %v1627 = vrot.slane %v1570, 1
      %v1628 = vsel %vm1593, %v1625, %v1627
      %v1629 = vrot.slane %v1571, 1
      %v1630 = vsel %vm1593, %v1627, %v1629
      %v1631 = vrot.slane %v1572, 1
      %v1632 = vsel %vm1593, %v1629, %v1631
      %v1652 = vadd.f32 %v1319, %v1596
      %v1653 = vadd.f32 %v1320, %v1598
      %v1654 = vadd.f32 %v1321, %v1600
      %v1655 = vadd.f32 %v1322, %v1602
      %v1656 = vadd.f32 %v1323, %v1604
      %v1657 = vadd.f32 %v1324, %v1606
      %v1658 = vadd.f32 %v1325, %v1608
      %v1659 = vadd.f32 %v1326, %v1610
      %v1660 = vadd.f32 %v1327, %v1612
      %v1661 = vadd.f32 %v1328, %v1614
      %v1662 = vadd.f32 %v1329, %v1616
      %v1663 = vadd.f32 %v1330, %v1618
      %v1664 = vadd.f32 %v1331, %v1620
      %v1665 = vadd.f32 %v1332, %v1622
      %v1666 = vadd.f32 %v1333, %v1624
      %v1667 = vadd.f32 %v1334, %v1626
      %v1668 = vadd.f32 %v1335, %v1628
      %v1669 = vadd.f32 %v1336, %v1630
      %v1670 = vadd.f32 %v1337, %v1632
      %s1671 = scalar_lea.vmem %s1, 256
      %v1672 = vld [vmem:[%s1671] sm:$0xff]
      %v1673 = vld [vmem:[%s1671 + $0x8] sm:$0xff]
      %v1674 = vld [vmem:[%s1671 + $0x10] sm:$0xff]
      %v1675 = vld [vmem:[%s1671 + $0x18] sm:$0xff]
      %v1676 = vld [vmem:[%s1671 + $0x20] sm:$0xff]
      %v1677 = vld [vmem:[%s1671 + $0x28] sm:$0xff]
      %v1678 = vld [vmem:[%s1671 + $0x30] sm:$0xff]
      %v1679 = vld [vmem:[%s1671 + $0x38] sm:$0xff]
      %v1680 = vld [vmem:[%s1671 + $0x40] sm:$0xff]
      %v1681 = vld [vmem:[%s1671 + $0x48] sm:$0xff]
      %v1682 = vld [vmem:[%s1671 + $0x50] sm:$0xff]
      %v1683 = vld [vmem:[%s1671 + $0x58] sm:$0xff]
      %v1684 = vld [vmem:[%s1671 + $0x60] sm:$0xff]
      %v1685 = vld [vmem:[%s1671 + $0x68] sm:$0xff]
      %v1686 = vld [vmem:[%s1671 + $0x70] sm:$0xff]
      %v1687 = vld [vmem:[%s1671 + $0x78] sm:$0xff]
      %1688 = vmatprep.subr.mxu0 0.0
      %1689 = vmatpush1.msra.mxu0 %v1672
      %1690 = vmatprep.subr.mxu0 0.0
      %1691 = vmatpush1.msra.mxu0 %v1673
      %1692 = vmatprep.subr.mxu0 0.0
      %1693 = vmatpush1.msra.mxu0 %v1674
      %1694 = vmatprep.subr.mxu0 0.0
      %1695 = vmatpush1.msra.mxu0 %v1675
      %1696 = vmatprep.subr.mxu0 0.0
      %1697 = vmatpush1.msra.mxu0 %v1676
      %1698 = vmatprep.subr.mxu0 0.0
      %1699 = vmatpush1.msra.mxu0 %v1677
      %1700 = vmatprep.subr.mxu0 0.0
      %1701 = vmatpush1.msra.mxu0 %v1678
      %1702 = vmatprep.subr.mxu0 0.0
      %1703 = vmatpush1.msra.mxu0 %v1679
      %1704 = vmatprep.subr.mxu0 0.0
      %1705 = vmatpush1.msra.mxu0 %v1680
      %1706 = vmatprep.subr.mxu0 0.0
      %1707 = vmatpush1.msra.mxu0 %v1681
      %1708 = vmatprep.subr.mxu0 0.0
      %1709 = vmatpush1.msra.mxu0 %v1682
      %1710 = vmatprep.subr.mxu0 0.0
      %1711 = vmatpush1.msra.mxu0 %v1683
      %1712 = vmatprep.subr.mxu0 0.0
      %1713 = vmatpush1.msra.mxu0 %v1684
      %1714 = vmatprep.subr.mxu0 0.0
      %1715 = vmatpush1.msra.mxu0 %v1685
      %1716 = vmatprep.subr.mxu0 0.0
      %1717 = vmatpush1.msra.mxu0 %v1686
      %1718 = vmatprep.subr.mxu0 0.0
      %1719 = vmatpush1.msra.mxu0 %v1687
      %1720 = vmatprep.subr.mxu0 0.0
      %1721 = vmatpush1.msra.mxu0 0.0
      %1722 = vmatprep.subr.mxu0 0.0
      %1723 = vmatpush1.msra.mxu0 0.0
      %1724 = vmatprep.subr.mxu0 0.0
      %1725 = vmatpush1.msra.mxu0 0.0
      %1726 = vmatprep.subr.mxu0 0.0
      %1727 = vmatpush1.msra.mxu0 0.0
      %1728 = vmatprep.subr.mxu0 0.0
      %1729 = vmatpush1.msra.mxu0 0.0
      %1730 = vmatprep.subr.mxu0 0.0
      %1731 = vmatpush1.msra.mxu0 0.0
      %1732 = vmatprep.subr.mxu0 0.0
      %1733 = vmatpush1.msra.mxu0 0.0
      %1734 = vmatprep.subr.mxu0 0.0
      %1735 = vmatpush1.msra.mxu0 0.0
      %1736 = vmatprep.subr.mxu0 0.0
      %1737 = vmatpush1.msra.mxu0 0.0
      %1738 = vmatprep.subr.mxu0 0.0
      %1739 = vmatpush1.msra.mxu0 0.0
      %1740 = vmatprep.subr.mxu0 0.0
      %1741 = vmatpush1.msra.mxu0 0.0
      %1742 = vmatprep.subr.mxu0 0.0
      %1743 = vmatpush1.msra.mxu0 0.0
      %1744 = vmatprep.subr.mxu0 0.0
      %1745 = vmatpush1.msra.mxu0 0.0
      %1746 = vmatprep.subr.mxu0 0.0
      %1747 = vmatpush1.msra.mxu0 0.0
      %1748 = vmatprep.subr.mxu0 0.0
      %1749 = vmatpush1.msra.mxu0 0.0
      %1750 = vmatprep.subr.mxu0 0.0
      %1751 = vmatpush1.msra.mxu0 0.0
      %1752 = vmatprep.mubr.f32.mxu0 0.0
      %1753 = vmatmul.mubr.f32.gmra.mrb[0].mxu0 %v733
      %v1754 = vpop.f32.mrb[0].mxu0
      %v1755 = vadd.f32 0.0, %v1754
      %v1756 = vpop.f32.mrb[0].mxu0
      %1757 = vmatprep.mubr.f32.mxu0 0.0
      %1758 = vmatmul.mubr.f32.gmra.mrb[0].mxu0 %v750
      %v1759 = vpop.f32.mrb[0].mxu0
      %v1760 = vadd.f32 0.0, %v1759
      %v1761 = vpop.f32.mrb[0].mxu0
      %1762 = vmatprep.mubr.f32.mxu0 0.0
      %1763 = vmatmul.mubr.f32.gmra.mrb[0].mxu0 %v767
      %v1764 = vpop.f32.mrb[0].mxu0
      %v1765 = vadd.f32 0.0, %v1764
      %v1766 = vpop.f32.mrb[0].mxu0
      %1767 = vmatprep.mubr.f32.mxu0 0.0
      %1768 = vmatmul.mubr.f32.gmra.mrb[0].mxu0 %v784
      %v1769 = vpop.f32.mrb[0].mxu0
      %v1770 = vadd.f32 0.0, %v1769
      %v1771 = vpop.f32.mrb[0].mxu0
      %1772 = vmatprep.mubr.f32.mxu0 0.0
      %1773 = vmatmul.mubr.f32.gmra.mrb[0].mxu0 %v801
      %v1774 = vpop.f32.mrb[0].mxu0
      %v1775 = vadd.f32 0.0, %v1774
      %v1776 = vpop.f32.mrb[0].mxu0
      %1777 = vmatprep.mubr.f32.mxu0 0.0
      %1778 = vmatmul.mubr.f32.gmra.mrb[0].mxu0 %v818
      %v1779 = vpop.f32.mrb[0].mxu0
      %v1780 = vadd.f32 0.0, %v1779
      %v1781 = vpop.f32.mrb[0].mxu0
      %1782 = vmatprep.mubr.f32.mxu0 0.0
      %1783 = vmatmul.mubr.f32.gmra.mrb[0].mxu0 %v835
      %v1784 = vpop.f32.mrb[0].mxu0
      %v1785 = vadd.f32 0.0, %v1784
      %v1786 = vpop.f32.mrb[0].mxu0
      %1787 = vmatprep.mubr.f32.mxu0 0.0
      %1788 = vmatmul.mubr.f32.gmra.mrb[0].mxu0 %v852
      %v1789 = vpop.f32.mrb[0].mxu0
      %v1790 = vadd.f32 0.0, %v1789
      %v1791 = vpop.f32.mrb[0].mxu0
      %1792 = vmatprep.mubr.f32.mxu0 0.0
      %1793 = vmatmul.mubr.f32.gmra.mrb[0].mxu0 %v869
      %v1794 = vpop.f32.mrb[0].mxu0
      %v1795 = vadd.f32 0.0, %v1794
      %v1796 = vpop.f32.mrb[0].mxu0
      %1797 = vmatprep.mubr.f32.mxu0 0.0
      %1798 = vmatmul.mubr.f32.gmra.mrb[0].mxu0 %v886
      %v1799 = vpop.f32.mrb[0].mxu0
      %v1800 = vadd.f32 0.0, %v1799
      %v1801 = vpop.f32.mrb[0].mxu0
      %1802 = vmatprep.mubr.f32.mxu0 0.0
      %1803 = vmatmul.mubr.f32.gmra.mrb[0].mxu0 %v903
      %v1804 = vpop.f32.mrb[0].mxu0
      %v1805 = vadd.f32 0.0, %v1804
      %v1806 = vpop.f32.mrb[0].mxu0
      %1807 = vmatprep.mubr.f32.mxu0 0.0
      %1808 = vmatmul.mubr.f32.gmra.mrb[0].mxu0 %v920
      %v1809 = vpop.f32.mrb[0].mxu0
      %v1810 = vadd.f32 0.0, %v1809
      %v1811 = vpop.f32.mrb[0].mxu0
      %1812 = vmatprep.mubr.f32.mxu0 0.0
      %1813 = vmatmul.mubr.f32.gmra.mrb[0].mxu0 %v937
      %v1814 = vpop.f32.mrb[0].mxu0
      %v1815 = vadd.f32 0.0, %v1814
      %v1816 = vpop.f32.mrb[0].mxu0
      %1817 = vmatprep.mubr.f32.mxu0 0.0
      %1818 = vmatmul.mubr.f32.gmra.mrb[0].mxu0 %v954
      %v1819 = vpop.f32.mrb[0].mxu0
      %v1820 = vadd.f32 0.0, %v1819
      %v1821 = vpop.f32.mrb[0].mxu0
      %1822 = vmatprep.mubr.f32.mxu0 0.0
      %1823 = vmatmul.mubr.f32.gmra.mrb[0].mxu0 %v971
      %v1824 = vpop.f32.mrb[0].mxu0
      %v1825 = vadd.f32 0.0, %v1824
      %v1826 = vpop.f32.mrb[0].mxu0
      %1827 = vmatprep.mubr.f32.mxu0 0.0
      %1828 = vmatmul.mubr.f32.gmra.mrb[0].mxu0 %v988
      %v1829 = vpop.f32.mrb[0].mxu0
      %v1830 = vadd.f32 0.0, %v1829
      %v1831 = vpop.f32.mrb[0].mxu0
      %1832 = vmatprep.mubr.f32.mxu0 0.0
      %1833 = vmatmul.mubr.f32.gmra.mrb[0].mxu0 %v1005
      %v1834 = vpop.f32.mrb[0].mxu0
      %v1835 = vadd.f32 0.0, %v1834
      %v1836 = vpop.f32.mrb[0].mxu0
      %1837 = vmatprep.mubr.f32.mxu0 0.0
      %1838 = vmatmul.mubr.f32.gmra.mrb[0].mxu0 %v1022
      %v1839 = vpop.f32.mrb[0].mxu0
      %v1840 = vadd.f32 0.0, %v1839
      %v1841 = vpop.f32.mrb[0].mxu0
      %1842 = vmatprep.mubr.f32.mxu0 0.0
      %1843 = vmatmul.mubr.f32.gmra.mrb[0].mxu0 %v1039
      %v1844 = vpop.f32.mrb[0].mxu0
      %v1845 = vadd.f32 0.0, %v1844
      %v1846 = vpop.f32.mrb[0].mxu0
      %1847 = vmatprep.mubr.f32.mxu0 0.0
      %1848 = vmatmul.mubr.f32.gmra.mrb[0].mxu0 %v1056
      %v1849 = vpop.f32.mrb[0].mxu0
      %v1850 = vadd.f32 0.0, %v1849
      %v1851 = vpop.f32.mrb[0].mxu0
      %1852 = vmatprep.mubr.f32.mxu0 0.0
      %1853 = vmatmul.mubr.f32.gmra.mrb[0].mxu0 %v1073
      %v1854 = vpop.f32.mrb[0].mxu0
      %v1855 = vpop.f32.mrb[0].mxu0
      %1856 = vmatprep.mubr.f32.mxu0 0.0
      %1857 = vmatmul.mubr.f32.gmra.mrb[0].mxu0 %v1090
      %v1858 = vpop.f32.mrb[0].mxu0
      %v1859 = vpop.f32.mrb[0].mxu0
      %1860 = vmatprep.mubr.f32.mxu0 0.0
      %1861 = vmatmul.mubr.f32.gmra.mrb[0].mxu0 %v1098
      %v1862 = vpop.f32.mrb[0].mxu0
      %v1863 = vadd.f32 0.0, %v1862
      %v1864 = vpop.f32.mrb[0].mxu0
      %1865 = vdwg.mxu0
      %v1866 = vrot.slane %v1755, 4
      %v1867 = vrot.slane %v1760, 4
      %v1868 = vrot.slane %v1765, 4
      %v1869 = vrot.slane %v1770, 4
      %v1870 = vrot.slane %v1775, 4
      %v1871 = vrot.slane %v1780, 4
      %v1872 = vrot.slane %v1785, 4
      %v1873 = vrot.slane %v1790, 4
      %v1874 = vrot.slane %v1795, 4
      %v1875 = vrot.slane %v1800, 4
      %v1876 = vrot.slane %v1805, 4
      %v1877 = vrot.slane %v1810, 4
      %v1878 = vrot.slane %v1815, 4
      %v1879 = vrot.slane %v1820, 4
      %v1880 = vrot.slane %v1825, 4
      %v1881 = vrot.slane %v1830, 4
      %v1882 = vrot.slane %v1835, 4
      %v1883 = vrot.slane %v1840, 4
      %v1884 = vrot.slane %v1845, 4
      %v1885 = vrot.slane %v1850, 4
      %v1886 = vsel %vm1299, %v1866, %v1863
      %v1887 = vsel %vm1299, %v1867, %v1866
      %v1888 = vsel %vm1299, %v1868, %v1867
      %v1889 = vsel %vm1299, %v1869, %v1868
      %v1890 = vsel %vm1299, %v1870, %v1869
      %v1891 = vsel %vm1299, %v1871, %v1870
      %v1892 = vsel %vm1299, %v1872, %v1871
      %v1893 = vsel %vm1299, %v1873, %v1872
      %v1894 = vsel %vm1299, %v1874, %v1873
      %v1895 = vsel %vm1299, %v1875, %v1874
      %v1896 = vsel %vm1299, %v1876, %v1875
      %v1897 = vsel %vm1299, %v1877, %v1876
      %v1898 = vsel %vm1299, %v1878, %v1877
      %v1899 = vsel %vm1299, %v1879, %v1878
      %v1900 = vsel %vm1299, %v1880, %v1879
      %v1901 = vsel %vm1299, %v1881, %v1880
      %v1902 = vsel %vm1299, %v1882, %v1881
      %v1903 = vsel %vm1299, %v1883, %v1882
      %v1904 = vsel %vm1299, %v1884, %v1883
      %v1905 = vsel %vm1299, %v1885, %v1884
      %vm1926 = vcmask 1045504
      %v1927 = vrot.slane %v1886, 2
      %v1928 = vrot.slane %v1887, 2
      %v1929 = vsel %vm1926, %v1927, %v1928
      %v1930 = vrot.slane %v1888, 2
      %v1931 = vsel %vm1926, %v1928, %v1930
      %v1932 = vrot.slane %v1889, 2
      %v1933 = vsel %vm1926, %v1930, %v1932
      %v1934 = vrot.slane %v1890, 2
      %v1935 = vsel %vm1926, %v1932, %v1934
      %v1936 = vrot.slane %v1891, 2
      %v1937 = vsel %vm1926, %v1934, %v1936
      %v1938 = vrot.slane %v1892, 2
      %v1939 = vsel %vm1926, %v1936, %v1938
      %v1940 = vrot.slane %v1893, 2
      %v1941 = vsel %vm1926, %v1938, %v1940
      %v1942 = vrot.slane %v1894, 2
      %v1943 = vsel %vm1926, %v1940, %v1942
      %v1944 = vrot.slane %v1895, 2
      %v1945 = vsel %vm1926, %v1942, %v1944
      %v1946 = vrot.slane %v1896, 2
      %v1947 = vsel %vm1926, %v1944, %v1946
      %v1948 = vrot.slane %v1897, 2
      %v1949 = vsel %vm1926, %v1946, %v1948
      %v1950 = vrot.slane %v1898, 2
      %v1951 = vsel %vm1926, %v1948, %v1950
      %v1952 = vrot.slane %v1899, 2
      %v1953 = vsel %vm1926, %v1950, %v1952
      %v1954 = vrot.slane %v1900, 2
      %v1955 = vsel %vm1926, %v1952, %v1954
      %v1956 = vrot.slane %v1901, 2
      %v1957 = vsel %vm1926, %v1954, %v1956
      %v1958 = vrot.slane %v1902, 2
      %v1959 = vsel %vm1926, %v1956, %v1958
      %v1960 = vrot.slane %v1903, 2
      %v1961 = vsel %vm1926, %v1958, %v1960
      %v1962 = vrot.slane %v1904, 2
      %v1963 = vsel %vm1926, %v1960, %v1962
      %v1964 = vrot.slane %v1905, 2
      %v1965 = vsel %vm1926, %v1962, %v1964
      %v1985 = vadd.f32 %v1652, %v1929
      %v1986 = vadd.f32 %v1653, %v1931
      %v1987 = vadd.f32 %v1654, %v1933
      %v1988 = vadd.f32 %v1655, %v1935
      %v1989 = vadd.f32 %v1656, %v1937
      %v1990 = vadd.f32 %v1657, %v1939
      %v1991 = vadd.f32 %v1658, %v1941
      %v1992 = vadd.f32 %v1659, %v1943
      %v1993 = vadd.f32 %v1660, %v1945
      %v1994 = vadd.f32 %v1661, %v1947
      %v1995 = vadd.f32 %v1662, %v1949
      %v1996 = vadd.f32 %v1663, %v1951
      %v1997 = vadd.f32 %v1664, %v1953
      %v1998 = vadd.f32 %v1665, %v1955
      %v1999 = vadd.f32 %v1666, %v1957
      %v2000 = vadd.f32 %v1667, %v1959
      %v2001 = vadd.f32 %v1668, %v1961
      %v2002 = vadd.f32 %v1669, %v1963
      %v2003 = vadd.f32 %v1670, %v1965
      %s2004 = scalar_lea.vmem %s1, 384
      %v2005 = vld [vmem:[%s2004] sm:$0xff]
      %v2006 = vld [vmem:[%s2004 + $0x8] sm:$0xff]
      %v2007 = vld [vmem:[%s2004 + $0x10] sm:$0xff]
      %v2008 = vld [vmem:[%s2004 + $0x18] sm:$0xff]
      %v2009 = vld [vmem:[%s2004 + $0x20] sm:$0xff]
      %v2010 = vld [vmem:[%s2004 + $0x28] sm:$0xff]
      %v2011 = vld [vmem:[%s2004 + $0x30] sm:$0xff]
      %v2012 = vld [vmem:[%s2004 + $0x38] sm:$0xff]
      %v2013 = vld [vmem:[%s2004 + $0x40] sm:$0xff]
      %v2014 = vld [vmem:[%s2004 + $0x48] sm:$0xff]
      %v2015 = vld [vmem:[%s2004 + $0x50] sm:$0xff]
      %v2016 = vld [vmem:[%s2004 + $0x58] sm:$0xff]
      %v2017 = vld [vmem:[%s2004 + $0x60] sm:$0xff]
      %v2018 = vld [vmem:[%s2004 + $0x68] sm:$0xff]
      %v2019 = vld [vmem:[%s2004 + $0x70] sm:$0xff]
      %v2020 = vld [vmem:[%s2004 + $0x78] sm:$0xff]
      %2021 = vmatprep.subr.mxu0 0.0
      %2022 = vmatpush1.msra.mxu0 %v2005
      %2023 = vmatprep.subr.mxu0 0.0
      %2024 = vmatpush1.msra.mxu0 %v2006
      %2025 = vmatprep.subr.mxu0 0.0
      %2026 = vmatpush1.msra.mxu0 %v2007
      %2027 = vmatprep.subr.mxu0 0.0
      %2028 = vmatpush1.msra.mxu0 %v2008
      %2029 = vmatprep.subr.mxu0 0.0
      %2030 = vmatpush1.msra.mxu0 %v2009
      %2031 = vmatprep.subr.mxu0 0.0
      %2032 = vmatpush1.msra.mxu0 %v2010
      %2033 = vmatprep.subr.mxu0 0.0
      %2034 = vmatpush1.msra.mxu0 %v2011
      %2035 = vmatprep.subr.mxu0 0.0
      %2036 = vmatpush1.msra.mxu0 %v2012
      %2037 = vmatprep.subr.mxu0 0.0
      %2038 = vmatpush1.msra.mxu0 %v2013
      %2039 = vmatprep.subr.mxu0 0.0
      %2040 = vmatpush1.msra.mxu0 %v2014
      %2041 = vmatprep.subr.mxu0 0.0
      %2042 = vmatpush1.msra.mxu0 %v2015
      %2043 = vmatprep.subr.mxu0 0.0
      %2044 = vmatpush1.msra.mxu0 %v2016
      %2045 = vmatprep.subr.mxu0 0.0
      %2046 = vmatpush1.msra.mxu0 %v2017
      %2047 = vmatprep.subr.mxu0 0.0
      %2048 = vmatpush1.msra.mxu0 %v2018
      %2049 = vmatprep.subr.mxu0 0.0
      %2050 = vmatpush1.msra.mxu0 %v2019
      %2051 = vmatprep.subr.mxu0 0.0
      %2052 = vmatpush1.msra.mxu0 %v2020
      %2053 = vmatprep.subr.mxu0 0.0
      %2054 = vmatpush1.msra.mxu0 0.0
      %2055 = vmatprep.subr.mxu0 0.0
      %2056 = vmatpush1.msra.mxu0 0.0
      %2057 = vmatprep.subr.mxu0 0.0
      %2058 = vmatpush1.msra.mxu0 0.0
      %2059 = vmatprep.subr.mxu0 0.0
      %2060 = vmatpush1.msra.mxu0 0.0
      %2061 = vmatprep.subr.mxu0 0.0
      %2062 = vmatpush1.msra.mxu0 0.0
      %2063 = vmatprep.subr.mxu0 0.0
      %2064 = vmatpush1.msra.mxu0 0.0
      %2065 = vmatprep.subr.mxu0 0.0
      %2066 = vmatpush1.msra.mxu0 0.0
      %2067 = vmatprep.subr.mxu0 0.0
      %2068 = vmatpush1.msra.mxu0 0.0
      %2069 = vmatprep.subr.mxu0 0.0
      %2070 = vmatpush1.msra.mxu0 0.0
      %2071 = vmatprep.subr.mxu0 0.0
      %2072 = vmatpush1.msra.mxu0 0.0
      %2073 = vmatprep.subr.mxu0 0.0
      %2074 = vmatpush1.msra.mxu0 0.0
      %2075 = vmatprep.subr.mxu0 0.0
      %2076 = vmatpush1.msra.mxu0 0.0
      %2077 = vmatprep.subr.mxu0 0.0
      %2078 = vmatpush1.msra.mxu0 0.0
      %2079 = vmatprep.subr.mxu0 0.0
      %2080 = vmatpush1.msra.mxu0 0.0
      %2081 = vmatprep.subr.mxu0 0.0
      %2082 = vmatpush1.msra.mxu0 0.0
      %2083 = vmatprep.subr.mxu0 0.0
      %2084 = vmatpush1.msra.mxu0 0.0
      %2085 = vmatprep.mubr.f32.mxu0 0.0
      %2086 = vmatmul.mubr.f32.gmra.mrb[0].mxu0 %v733
      %v2087 = vpop.f32.mrb[0].mxu0
      %v2088 = vpop.f32.mrb[0].mxu0
      %2089 = vmatprep.mubr.f32.mxu0 0.0
      %2090 = vmatmul.mubr.f32.gmra.mrb[0].mxu0 %v750
      %v2091 = vpop.f32.mrb[0].mxu0
      %v2092 = vadd.f32 0.0, %v2091
      %v2093 = vpop.f32.mrb[0].mxu0
      %2094 = vmatprep.mubr.f32.mxu0 0.0
      %2095 = vmatmul.mubr.f32.gmra.mrb[0].mxu0 %v767
      %v2096 = vpop.f32.mrb[0].mxu0
      %v2097 = vadd.f32 0.0, %v2096
      %v2098 = vpop.f32.mrb[0].mxu0
      %2099 = vmatprep.mubr.f32.mxu0 0.0
      %2100 = vmatmul.mubr.f32.gmra.mrb[0].mxu0 %v784
      %v2101 = vpop.f32.mrb[0].mxu0
      %v2102 = vadd.f32 0.0, %v2101
      %v2103 = vpop.f32.mrb[0].mxu0
      %2104 = vmatprep.mubr.f32.mxu0 0.0
      %2105 = vmatmul.mubr.f32.gmra.mrb[0].mxu0 %v801
      %v2106 = vpop.f32.mrb[0].mxu0
      %v2107 = vadd.f32 0.0, %v2106
      %v2108 = vpop.f32.mrb[0].mxu0
      %2109 = vmatprep.mubr.f32.mxu0 0.0
      %2110 = vmatmul.mubr.f32.gmra.mrb[0].mxu0 %v818
      %v2111 = vpop.f32.mrb[0].mxu0
      %v2112 = vadd.f32 0.0, %v2111
      %v2113 = vpop.f32.mrb[0].mxu0
      %2114 = vmatprep.mubr.f32.mxu0 0.0
      %2115 = vmatmul.mubr.f32.gmra.mrb[0].mxu0 %v835
      %v2116 = vpop.f32.mrb[0].mxu0
      %v2117 = vadd.f32 0.0, %v2116
      %v2118 = vpop.f32.mrb[0].mxu0
      %2119 = vmatprep.mubr.f32.mxu0 0.0
      %2120 = vmatmul.mubr.f32.gmra.mrb[0].mxu0 %v852
      %v2121 = vpop.f32.mrb[0].mxu0
      %v2122 = vadd.f32 0.0, %v2121
      %v2123 = vpop.f32.mrb[0].mxu0
      %2124 = vmatprep.mubr.f32.mxu0 0.0
      %2125 = vmatmul.mubr.f32.gmra.mrb[0].mxu0 %v869
      %v2126 = vpop.f32.mrb[0].mxu0
      %v2127 = vadd.f32 0.0, %v2126
      %v2128 = vpop.f32.mrb[0].mxu0
      %2129 = vmatprep.mubr.f32.mxu0 0.0
      %2130 = vmatmul.mubr.f32.gmra.mrb[0].mxu0 %v886
      %v2131 = vpop.f32.mrb[0].mxu0
      %v2132 = vadd.f32 0.0, %v2131
      %v2133 = vpop.f32.mrb[0].mxu0
      %2134 = vmatprep.mubr.f32.mxu0 0.0
      %2135 = vmatmul.mubr.f32.gmra.mrb[0].mxu0 %v903
      %v2136 = vpop.f32.mrb[0].mxu0
      %v2137 = vadd.f32 0.0, %v2136
      %v2138 = vpop.f32.mrb[0].mxu0
      %2139 = vmatprep.mubr.f32.mxu0 0.0
      %2140 = vmatmul.mubr.f32.gmra.mrb[0].mxu0 %v920
      %v2141 = vpop.f32.mrb[0].mxu0
      %v2142 = vadd.f32 0.0, %v2141
      %v2143 = vpop.f32.mrb[0].mxu0
      %2144 = vmatprep.mubr.f32.mxu0 0.0
      %2145 = vmatmul.mubr.f32.gmra.mrb[0].mxu0 %v937
      %v2146 = vpop.f32.mrb[0].mxu0
      %v2147 = vadd.f32 0.0, %v2146
      %v2148 = vpop.f32.mrb[0].mxu0
      %2149 = vmatprep.mubr.f32.mxu0 0.0
      %2150 = vmatmul.mubr.f32.gmra.mrb[0].mxu0 %v954
      %v2151 = vpop.f32.mrb[0].mxu0
      %v2152 = vadd.f32 0.0, %v2151
      %v2153 = vpop.f32.mrb[0].mxu0
      %2154 = vmatprep.mubr.f32.mxu0 0.0
      %2155 = vmatmul.mubr.f32.gmra.mrb[0].mxu0 %v971
      %v2156 = vpop.f32.mrb[0].mxu0
      %v2157 = vadd.f32 0.0, %v2156
      %v2158 = vpop.f32.mrb[0].mxu0
      %2159 = vmatprep.mubr.f32.mxu0 0.0
      %2160 = vmatmul.mubr.f32.gmra.mrb[0].mxu0 %v988
      %v2161 = vpop.f32.mrb[0].mxu0
      %v2162 = vadd.f32 0.0, %v2161
      %v2163 = vpop.f32.mrb[0].mxu0
      %2164 = vmatprep.mubr.f32.mxu0 0.0
      %2165 = vmatmul.mubr.f32.gmra.mrb[0].mxu0 %v1005
      %v2166 = vpop.f32.mrb[0].mxu0
      %v2167 = vadd.f32 0.0, %v2166
      %v2168 = vpop.f32.mrb[0].mxu0
      %2169 = vmatprep.mubr.f32.mxu0 0.0
      %2170 = vmatmul.mubr.f32.gmra.mrb[0].mxu0 %v1022
      %v2171 = vpop.f32.mrb[0].mxu0
      %v2172 = vadd.f32 0.0, %v2171
      %v2173 = vpop.f32.mrb[0].mxu0
      %2174 = vmatprep.mubr.f32.mxu0 0.0
      %2175 = vmatmul.mubr.f32.gmra.mrb[0].mxu0 %v1039
      %v2176 = vpop.f32.mrb[0].mxu0
      %v2177 = vadd.f32 0.0, %v2176
      %v2178 = vpop.f32.mrb[0].mxu0
      %2179 = vmatprep.mubr.f32.mxu0 0.0
      %2180 = vmatmul.mubr.f32.gmra.mrb[0].mxu0 %v1056
      %v2181 = vpop.f32.mrb[0].mxu0
      %v2182 = vadd.f32 0.0, %v2181
      %v2183 = vpop.f32.mrb[0].mxu0
      %2184 = vmatprep.mubr.f32.mxu0 0.0
      %2185 = vmatmul.mubr.f32.gmra.mrb[0].mxu0 %v1073
      %v2186 = vpop.f32.mrb[0].mxu0
      %v2187 = vadd.f32 0.0, %v2186
      %v2188 = vpop.f32.mrb[0].mxu0
      %2189 = vmatprep.mubr.f32.mxu0 0.0
      %2190 = vmatmul.mubr.f32.gmra.mrb[0].mxu0 %v1090
      %v2191 = vpop.f32.mrb[0].mxu0
      %v2192 = vadd.f32 0.0, %v2191
      %v2193 = vpop.f32.mrb[0].mxu0
      %2194 = vmatprep.mubr.f32.mxu0 0.0
      %2195 = vmatmul.mubr.f32.gmra.mrb[0].mxu0 %v1098
      %v2196 = vpop.f32.mrb[0].mxu0
      %v2197 = vpop.f32.mrb[0].mxu0
      %2198 = vdwg.mxu0
      %v2199 = vrot.slane %v2092, 4
      %v2200 = vrot.slane %v2097, 4
      %v2201 = vrot.slane %v2102, 4
      %v2202 = vrot.slane %v2107, 4
      %v2203 = vrot.slane %v2112, 4
      %v2204 = vrot.slane %v2117, 4
      %v2205 = vrot.slane %v2122, 4
      %v2206 = vrot.slane %v2127, 4
      %v2207 = vrot.slane %v2132, 4
      %v2208 = vrot.slane %v2137, 4
      %v2209 = vrot.slane %v2142, 4
      %v2210 = vrot.slane %v2147, 4
      %v2211 = vrot.slane %v2152, 4
      %v2212 = vrot.slane %v2157, 4
      %v2213 = vrot.slane %v2162, 4
      %v2214 = vrot.slane %v2167, 4
      %v2215 = vrot.slane %v2172, 4
      %v2216 = vrot.slane %v2177, 4
      %v2217 = vrot.slane %v2182, 4
      %v2218 = vrot.slane %v2187, 4
      %v2219 = vrot.slane %v2192, 4
      %v2220 = vsel %vm1299, %v2200, %v2199
      %v2221 = vsel %vm1299, %v2201, %v2200
      %v2222 = vsel %vm1299, %v2202, %v2201
      %v2223 = vsel %vm1299, %v2203, %v2202
      %v2224 = vsel %vm1299, %v2204, %v2203
      %v2225 = vsel %vm1299, %v2205, %v2204
      %v2226 = vsel %vm1299, %v2206, %v2205
      %v2227 = vsel %vm1299, %v2207, %v2206
      %v2228 = vsel %vm1299, %v2208, %v2207
      %v2229 = vsel %vm1299, %v2209, %v2208
      %v2230 = vsel %vm1299, %v2210, %v2209
      %v2231 = vsel %vm1299, %v2211, %v2210
      %v2232 = vsel %vm1299, %v2212, %v2211
      %v2233 = vsel %vm1299, %v2213, %v2212
      %v2234 = vsel %vm1299, %v2214, %v2213
      %v2235 = vsel %vm1299, %v2215, %v2214
      %v2236 = vsel %vm1299, %v2216, %v2215
      %v2237 = vsel %vm1299, %v2217, %v2216
      %v2238 = vsel %vm1299, %v2218, %v2217
      %v2239 = vsel %vm1299, %v2219, %v2218
      %v2260 = vrot.slane %v2220, 2
      %v2261 = vrot.slane %v2221, 2
      %v2262 = vsel %vm1926, %v2260, %v2261
      %v2263 = vrot.slane %v2222, 2
      %v2264 = vsel %vm1926, %v2261, %v2263
      %v2265 = vrot.slane %v2223, 2
      %v2266 = vsel %vm1926, %v2263, %v2265
      %v2267 = vrot.slane %v2224, 2
      %v2268 = vsel %vm1926, %v2265, %v2267
      %v2269 = vrot.slane %v2225, 2
      %v2270 = vsel %vm1926, %v2267, %v2269
      %v2271 = vrot.slane %v2226, 2
      %v2272 = vsel %vm1926, %v2269, %v2271
      %v2273 = vrot.slane %v2227, 2
      %v2274 = vsel %vm1926, %v2271, %v2273
      %v2275 = vrot.slane %v2228, 2
      %v2276 = vsel %vm1926, %v2273, %v2275
      %v2277 = vrot.slane %v2229, 2
      %v2278 = vsel %vm1926, %v2275, %v2277
      %v2279 = vrot.slane %v2230, 2
      %v2280 = vsel %vm1926, %v2277, %v2279
      %v2281 = vrot.slane %v2231, 2
      %v2282 = vsel %vm1926, %v2279, %v2281
      %v2283 = vrot.slane %v2232, 2
      %v2284 = vsel %vm1926, %v2281, %v2283
      %v2285 = vrot.slane %v2233, 2
      %v2286 = vsel %vm1926, %v2283, %v2285
      %v2287 = vrot.slane %v2234, 2
      %v2288 = vsel %vm1926, %v2285, %v2287
      %v2289 = vrot.slane %v2235, 2
      %v2290 = vsel %vm1926, %v2287, %v2289
      %v2291 = vrot.slane %v2236, 2
      %v2292 = vsel %vm1926, %v2289, %v2291
      %v2293 = vrot.slane %v2237, 2
      %v2294 = vsel %vm1926, %v2291, %v2293
      %v2295 = vrot.slane %v2238, 2
      %v2296 = vsel %vm1926, %v2293, %v2295
      %v2297 = vrot.slane %v2239, 2
      %v2298 = vsel %vm1926, %v2295, %v2297
      %v2318 = vadd.f32 %v1985, %v2262
      %v2319 = vadd.f32 %v1986, %v2264
      %v2320 = vadd.f32 %v1987, %v2266
      %v2321 = vadd.f32 %v1988, %v2268
      %v2322 = vadd.f32 %v1989, %v2270
      %v2323 = vadd.f32 %v1990, %v2272
      %v2324 = vadd.f32 %v1991, %v2274
      %v2325 = vadd.f32 %v1992, %v2276
      %v2326 = vadd.f32 %v1993, %v2278
      %v2327 = vadd.f32 %v1994, %v2280
      %v2328 = vadd.f32 %v1995, %v2282
      %v2329 = vadd.f32 %v1996, %v2284
      %v2330 = vadd.f32 %v1997, %v2286
      %v2331 = vadd.f32 %v1998, %v2288
      %v2332 = vadd.f32 %v1999, %v2290
      %v2333 = vadd.f32 %v2000, %v2292
      %v2334 = vadd.f32 %v2001, %v2294
      %v2335 = vadd.f32 %v2002, %v2296
      %v2336 = vadd.f32 %v2003, %v2298
      %s2337 = scalar_lea.vmem %s1, 512
      %v2338 = vld [vmem:[%s2337] sm:$0xff]
      %v2339 = vld [vmem:[%s2337 + $0x8] sm:$0xff]
      %v2340 = vld [vmem:[%s2337 + $0x10] sm:$0xff]
      %v2341 = vld [vmem:[%s2337 + $0x18] sm:$0xff]
      %v2342 = vld [vmem:[%s2337 + $0x20] sm:$0xff]
      %v2343 = vld [vmem:[%s2337 + $0x28] sm:$0xff]
      %v2344 = vld [vmem:[%s2337 + $0x30] sm:$0xff]
      %v2345 = vld [vmem:[%s2337 + $0x38] sm:$0xff]
      %v2346 = vld [vmem:[%s2337 + $0x40] sm:$0xff]
      %v2347 = vld [vmem:[%s2337 + $0x48] sm:$0xff]
      %v2348 = vld [vmem:[%s2337 + $0x50] sm:$0xff]
      %v2349 = vld [vmem:[%s2337 + $0x58] sm:$0xff]
      %v2350 = vld [vmem:[%s2337 + $0x60] sm:$0xff]
      %v2351 = vld [vmem:[%s2337 + $0x68] sm:$0xff]
      %v2352 = vld [vmem:[%s2337 + $0x70] sm:$0xff]
      %v2353 = vld [vmem:[%s2337 + $0x78] sm:$0xff]
      %2354 = vmatprep.subr.mxu0 0.0
      %2355 = vmatpush1.msra.mxu0 %v2338
      %2356 = vmatprep.subr.mxu0 0.0
      %2357 = vmatpush1.msra.mxu0 %v2339
      %2358 = vmatprep.subr.mxu0 0.0
      %2359 = vmatpush1.msra.mxu0 %v2340
      %2360 = vmatprep.subr.mxu0 0.0
      %2361 = vmatpush1.msra.mxu0 %v2341
      %2362 = vmatprep.subr.mxu0 0.0
      %2363 = vmatpush1.msra.mxu0 %v2342
      %2364 = vmatprep.subr.mxu0 0.0
      %2365 = vmatpush1.msra.mxu0 %v2343
      %2366 = vmatprep.subr.mxu0 0.0
      %2367 = vmatpush1.msra.mxu0 %v2344
      %2368 = vmatprep.subr.mxu0 0.0
      %2369 = vmatpush1.msra.mxu0 %v2345
      %2370 = vmatprep.subr.mxu0 0.0
      %2371 = vmatpush1.msra.mxu0 %v2346
      %2372 = vmatprep.subr.mxu0 0.0
      %2373 = vmatpush1.msra.mxu0 %v2347
      %2374 = vmatprep.subr.mxu0 0.0
      %2375 = vmatpush1.msra.mxu0 %v2348
      %2376 = vmatprep.subr.mxu0 0.0
      %2377 = vmatpush1.msra.mxu0 %v2349
      %2378 = vmatprep.subr.mxu0 0.0
      %2379 = vmatpush1.msra.mxu0 %v2350
      %2380 = vmatprep.subr.mxu0 0.0
      %2381 = vmatpush1.msra.mxu0 %v2351
      %2382 = vmatprep.subr.mxu0 0.0
      %2383 = vmatpush1.msra.mxu0 %v2352
      %2384 = vmatprep.subr.mxu0 0.0
      %2385 = vmatpush1.msra.mxu0 %v2353
      %2386 = vmatprep.subr.mxu0 0.0
      %2387 = vmatpush1.msra.mxu0 0.0
      %2388 = vmatprep.subr.mxu0 0.0
      %2389 = vmatpush1.msra.mxu0 0.0
      %2390 = vmatprep.subr.mxu0 0.0
      %2391 = vmatpush1.msra.mxu0 0.0
      %2392 = vmatprep.subr.mxu0 0.0
      %2393 = vmatpush1.msra.mxu0 0.0
      %2394 = vmatprep.subr.mxu0 0.0
      %2395 = vmatpush1.msra.mxu0 0.0
      %2396 = vmatprep.subr.mxu0 0.0
      %2397 = vmatpush1.msra.mxu0 0.0
      %2398 = vmatprep.subr.mxu0 0.0
      %2399 = vmatpush1.msra.mxu0 0.0
      %2400 = vmatprep.subr.mxu0 0.0
      %2401 = vmatpush1.msra.mxu0 0.0
      %2402 = vmatprep.subr.mxu0 0.0
      %2403 = vmatpush1.msra.mxu0 0.0
      %2404 = vmatprep.subr.mxu0 0.0
      %2405 = vmatpush1.msra.mxu0 0.0
      %2406 = vmatprep.subr.mxu0 0.0
      %2407 = vmatpush1.msra.mxu0 0.0
      %2408 = vmatprep.subr.mxu0 0.0
      %2409 = vmatpush1.msra.mxu0 0.0
      %2410 = vmatprep.subr.mxu0 0.0
      %2411 = vmatpush1.msra.mxu0 0.0
      %2412 = vmatprep.subr.mxu0 0.0
      %2413 = vmatpush1.msra.mxu0 0.0
      %2414 = vmatprep.subr.mxu0 0.0
      %2415 = vmatpush1.msra.mxu0 0.0
      %2416 = vmatprep.subr.mxu0 0.0
      %2417 = vmatpush1.msra.mxu0 0.0
      %2418 = vmatprep.mubr.f32.mxu0 0.0
      %2419 = vmatmul.mubr.f32.gmra.mrb[0].mxu0 %v733
      %v2420 = vpop.f32.mrb[0].mxu0
      %v2421 = vpop.f32.mrb[0].mxu0
      %2422 = vmatprep.mubr.f32.mxu0 0.0
      %2423 = vmatmul.mubr.f32.gmra.mrb[0].mxu0 %v750
      %v2424 = vpop.f32.mrb[0].mxu0
      %v2425 = vadd.f32 0.0, %v2424
      %v2426 = vpop.f32.mrb[0].mxu0
      %2427 = vmatprep.mubr.f32.mxu0 0.0
      %2428 = vmatmul.mubr.f32.gmra.mrb[0].mxu0 %v767
      %v2429 = vpop.f32.mrb[0].mxu0
      %v2430 = vadd.f32 0.0, %v2429
      %v2431 = vpop.f32.mrb[0].mxu0
      %2432 = vmatprep.mubr.f32.mxu0 0.0
      %2433 = vmatmul.mubr.f32.gmra.mrb[0].mxu0 %v784
      %v2434 = vpop.f32.mrb[0].mxu0
      %v2435 = vadd.f32 0.0, %v2434
      %v2436 = vpop.f32.mrb[0].mxu0
      %2437 = vmatprep.mubr.f32.mxu0 0.0
      %2438 = vmatmul.mubr.f32.gmra.mrb[0].mxu0 %v801
      %v2439 = vpop.f32.mrb[0].mxu0
      %v2440 = vadd.f32 0.0, %v2439
      %v2441 = vpop.f32.mrb[0].mxu0
      %2442 = vmatprep.mubr.f32.mxu0 0.0
      %2443 = vmatmul.mubr.f32.gmra.mrb[0].mxu0 %v818
      %v2444 = vpop.f32.mrb[0].mxu0
      %v2445 = vadd.f32 0.0, %v2444
      %v2446 = vpop.f32.mrb[0].mxu0
      %2447 = vmatprep.mubr.f32.mxu0 0.0
      %2448 = vmatmul.mubr.f32.gmra.mrb[0].mxu0 %v835
      %v2449 = vpop.f32.mrb[0].mxu0
      %v2450 = vadd.f32 0.0, %v2449
      %v2451 = vpop.f32.mrb[0].mxu0
      %2452 = vmatprep.mubr.f32.mxu0 0.0
      %2453 = vmatmul.mubr.f32.gmra.mrb[0].mxu0 %v852
      %v2454 = vpop.f32.mrb[0].mxu0
      %v2455 = vadd.f32 0.0, %v2454
      %v2456 = vpop.f32.mrb[0].mxu0
      %2457 = vmatprep.mubr.f32.mxu0 0.0
      %2458 = vmatmul.mubr.f32.gmra.mrb[0].mxu0 %v869
      %v2459 = vpop.f32.mrb[0].mxu0
      %v2460 = vadd.f32 0.0, %v2459
      %v2461 = vpop.f32.mrb[0].mxu0
      %2462 = vmatprep.mubr.f32.mxu0 0.0
      %2463 = vmatmul.mubr.f32.gmra.mrb[0].mxu0 %v886
      %v2464 = vpop.f32.mrb[0].mxu0
      %v2465 = vadd.f32 0.0, %v2464
      %v2466 = vpop.f32.mrb[0].mxu0
      %2467 = vmatprep.mubr.f32.mxu0 0.0
      %2468 = vmatmul.mubr.f32.gmra.mrb[0].mxu0 %v903
      %v2469 = vpop.f32.mrb[0].mxu0
      %v2470 = vadd.f32 0.0, %v2469
      %v2471 = vpop.f32.mrb[0].mxu0
      %2472 = vmatprep.mubr.f32.mxu0 0.0
      %2473 = vmatmul.mubr.f32.gmra.mrb[0].mxu0 %v920
      %v2474 = vpop.f32.mrb[0].mxu0
      %v2475 = vadd.f32 0.0, %v2474
      %v2476 = vpop.f32.mrb[0].mxu0
      %2477 = vmatprep.mubr.f32.mxu0 0.0
      %2478 = vmatmul.mubr.f32.gmra.mrb[0].mxu0 %v937
      %v2479 = vpop.f32.mrb[0].mxu0
      %v2480 = vadd.f32 0.0, %v2479
      %v2481 = vpop.f32.mrb[0].mxu0
      %2482 = vmatprep.mubr.f32.mxu0 0.0
      %2483 = vmatmul.mubr.f32.gmra.mrb[0].mxu0 %v954
      %v2484 = vpop.f32.mrb[0].mxu0
      %v2485 = vadd.f32 0.0, %v2484
      %v2486 = vpop.f32.mrb[0].mxu0
      %2487 = vmatprep.mubr.f32.mxu0 0.0
      %2488 = vmatmul.mubr.f32.gmra.mrb[0].mxu0 %v971
      %v2489 = vpop.f32.mrb[0].mxu0
      %v2490 = vadd.f32 0.0, %v2489
      %v2491 = vpop.f32.mrb[0].mxu0
      %2492 = vmatprep.mubr.f32.mxu0 0.0
      %2493 = vmatmul.mubr.f32.gmra.mrb[0].mxu0 %v988
      %v2494 = vpop.f32.mrb[0].mxu0
      %v2495 = vadd.f32 0.0, %v2494
      %v2496 = vpop.f32.mrb[0].mxu0
      %2497 = vmatprep.mubr.f32.mxu0 0.0
      %2498 = vmatmul.mubr.f32.gmra.mrb[0].mxu0 %v1005
      %v2499 = vpop.f32.mrb[0].mxu0
      %v2500 = vadd.f32 0.0, %v2499
      %v2501 = vpop.f32.mrb[0].mxu0
      %2502 = vmatprep.mubr.f32.mxu0 0.0
      %2503 = vmatmul.mubr.f32.gmra.mrb[0].mxu0 %v1022
      %v2504 = vpop.f32.mrb[0].mxu0
      %v2505 = vadd.f32 0.0, %v2504
      %v2506 = vpop.f32.mrb[0].mxu0
      %2507 = vmatprep.mubr.f32.mxu0 0.0
      %2508 = vmatmul.mubr.f32.gmra.mrb[0].mxu0 %v1039
      %v2509 = vpop.f32.mrb[0].mxu0
      %v2510 = vadd.f32 0.0, %v2509
      %v2511 = vpop.f32.mrb[0].mxu0
      %2512 = vmatprep.mubr.f32.mxu0 0.0
      %2513 = vmatmul.mubr.f32.gmra.mrb[0].mxu0 %v1056
      %v2514 = vpop.f32.mrb[0].mxu0
      %v2515 = vadd.f32 0.0, %v2514
      %v2516 = vpop.f32.mrb[0].mxu0
      %2517 = vmatprep.mubr.f32.mxu0 0.0
      %2518 = vmatmul.mubr.f32.gmra.mrb[0].mxu0 %v1073
      %v2519 = vpop.f32.mrb[0].mxu0
      %v2520 = vadd.f32 0.0, %v2519
      %v2521 = vpop.f32.mrb[0].mxu0
      %2522 = vmatprep.mubr.f32.mxu0 0.0
      %2523 = vmatmul.mubr.f32.gmra.mrb[0].mxu0 %v1090
      %v2524 = vpop.f32.mrb[0].mxu0
      %v2525 = vpop.f32.mrb[0].mxu0
      %2526 = vmatprep.mubr.f32.mxu0 0.0
      %2527 = vmatmul.mubr.f32.gmra.mrb[0].mxu0 %v1098
      %v2528 = vpop.f32.mrb[0].mxu0
      %v2529 = vpop.f32.mrb[0].mxu0
      %2530 = vdwg.mxu0
      %vm2551 = vcmask 1040384
      %v2552 = vrot.slane %v2425, 7
      %v2553 = vrot.slane %v2430, 7
      %v2554 = vsel %vm2551, %v2552, %v2553
      %v2555 = vrot.slane %v2435, 7
      %v2556 = vsel %vm2551, %v2553, %v2555
      %v2557 = vrot.slane %v2440, 7
      %v2558 = vsel %vm2551, %v2555, %v2557
      %v2559 = vrot.slane %v2445, 7
      %v2560 = vsel %vm2551, %v2557, %v2559
      %v2561 = vrot.slane %v2450, 7
      %v2562 = vsel %vm2551, %v2559, %v2561
      %v2563 = vrot.slane %v2455, 7
      %v2564 = vsel %vm2551, %v2561, %v2563
      %v2565 = vrot.slane %v2460, 7
      %v2566 = vsel %vm2551, %v2563, %v2565
      %v2567 = vrot.slane %v2465, 7
      %v2568 = vsel %vm2551, %v2565, %v2567
      %v2569 = vrot.slane %v2470, 7
      %v2570 = vsel %vm2551, %v2567, %v2569
      %v2571 = vrot.slane %v2475, 7
      %v2572 = vsel %vm2551, %v2569, %v2571
      %v2573 = vrot.slane %v2480, 7
      %v2574 = vsel %vm2551, %v2571, %v2573
      %v2575 = vrot.slane %v2485, 7
      %v2576 = vsel %vm2551, %v2573, %v2575
      %v2577 = vrot.slane %v2490, 7
      %v2578 = vsel %vm2551, %v2575, %v2577
      %v2579 = vrot.slane %v2495, 7
      %v2580 = vsel %vm2551, %v2577, %v2579
      %v2581 = vrot.slane %v2500, 7
      %v2582 = vsel %vm2551, %v2579, %v2581
      %v2583 = vrot.slane %v2505, 7
      %v2584 = vsel %vm2551, %v2581, %v2583
      %v2585 = vrot.slane %v2510, 7
      %v2586 = vsel %vm2551, %v2583, %v2585
      %v2587 = vrot.slane %v2515, 7
      %v2588 = vsel %vm2551, %v2585, %v2587
      %v2589 = vrot.slane %v2520, 7
      %v2590 = vsel %vm2551, %v2587, %v2589
      %v2610 = vadd.f32 %v2318, %v2554
      %v2611 = vadd.f32 %v2319, %v2556
      %v2612 = vadd.f32 %v2320, %v2558
      %v2613 = vadd.f32 %v2321, %v2560
      %v2614 = vadd.f32 %v2322, %v2562
      %v2615 = vadd.f32 %v2323, %v2564
      %v2616 = vadd.f32 %v2324, %v2566
      %v2617 = vadd.f32 %v2325, %v2568
      %v2618 = vadd.f32 %v2326, %v2570
      %v2619 = vadd.f32 %v2327, %v2572
      %v2620 = vadd.f32 %v2328, %v2574
      %v2621 = vadd.f32 %v2329, %v2576
      %v2622 = vadd.f32 %v2330, %v2578
      %v2623 = vadd.f32 %v2331, %v2580
      %v2624 = vadd.f32 %v2332, %v2582
      %v2625 = vadd.f32 %v2333, %v2584
      %v2626 = vadd.f32 %v2334, %v2586
      %v2627 = vadd.f32 %v2335, %v2588
      %v2628 = vadd.f32 %v2336, %v2590
      %s2629 = scalar_lea.vmem %s1, 640
      %v2630 = vld [vmem:[%s2629] sm:$0xff]
      %v2631 = vld [vmem:[%s2629 + $0x8] sm:$0xff]
      %v2632 = vld [vmem:[%s2629 + $0x10] sm:$0xff]
      %v2633 = vld [vmem:[%s2629 + $0x18] sm:$0xff]
      %v2634 = vld [vmem:[%s2629 + $0x20] sm:$0xff]
      %v2635 = vld [vmem:[%s2629 + $0x28] sm:$0xff]
      %v2636 = vld [vmem:[%s2629 + $0x30] sm:$0xff]
      %v2637 = vld [vmem:[%s2629 + $0x38] sm:$0xff]
      %v2638 = vld [vmem:[%s2629 + $0x40] sm:$0xff]
      %v2639 = vld [vmem:[%s2629 + $0x48] sm:$0xff]
      %v2640 = vld [vmem:[%s2629 + $0x50] sm:$0xff]
      %v2641 = vld [vmem:[%s2629 + $0x58] sm:$0xff]
      %v2642 = vld [vmem:[%s2629 + $0x60] sm:$0xff]
      %v2643 = vld [vmem:[%s2629 + $0x68] sm:$0xff]
      %v2644 = vld [vmem:[%s2629 + $0x70] sm:$0xff]
      %v2645 = vld [vmem:[%s2629 + $0x78] sm:$0xff]
      %2646 = vmatprep.subr.mxu0 0.0
      %2647 = vmatpush1.msra.mxu0 %v2630
      %2648 = vmatprep.subr.mxu0 0.0
      %2649 = vmatpush1.msra.mxu0 %v2631
      %2650 = vmatprep.subr.mxu0 0.0
      %2651 = vmatpush1.msra.mxu0 %v2632
      %2652 = vmatprep.subr.mxu0 0.0
      %2653 = vmatpush1.msra.mxu0 %v2633
      %2654 = vmatprep.subr.mxu0 0.0
      %2655 = vmatpush1.msra.mxu0 %v2634
      %2656 = vmatprep.subr.mxu0 0.0
      %2657 = vmatpush1.msra.mxu0 %v2635
      %2658 = vmatprep.subr.mxu0 0.0
      %2659 = vmatpush1.msra.mxu0 %v2636
      %2660 = vmatprep.subr.mxu0 0.0
      %2661 = vmatpush1.msra.mxu0 %v2637
      %2662 = vmatprep.subr.mxu0 0.0
      %2663 = vmatpush1.msra.mxu0 %v2638
      %2664 = vmatprep.subr.mxu0 0.0
      %2665 = vmatpush1.msra.mxu0 %v2639
      %2666 = vmatprep.subr.mxu0 0.0
      %2667 = vmatpush1.msra.mxu0 %v2640
      %2668 = vmatprep.subr.mxu0 0.0
      %2669 = vmatpush1.msra.mxu0 %v2641
      %2670 = vmatprep.subr.mxu0 0.0
      %2671 = vmatpush1.msra.mxu0 %v2642
      %2672 = vmatprep.subr.mxu0 0.0
      %2673 = vmatpush1.msra.mxu0 %v2643
      %2674 = vmatprep.subr.mxu0 0.0
      %2675 = vmatpush1.msra.mxu0 %v2644
      %2676 = vmatprep.subr.mxu0 0.0
      %2677 = vmatpush1.msra.mxu0 %v2645
      %2678 = vmatprep.subr.mxu0 0.0
      %2679 = vmatpush1.msra.mxu0 0.0
      %2680 = vmatprep.subr.mxu0 0.0
      %2681 = vmatpush1.msra.mxu0 0.0
      %2682 = vmatprep.subr.mxu0 0.0
      %2683 = vmatpush1.msra.mxu0 0.0
      %2684 = vmatprep.subr.mxu0 0.0
      %2685 = vmatpush1.msra.mxu0 0.0
      %2686 = vmatprep.subr.mxu0 0.0
      %2687 = vmatpush1.msra.mxu0 0.0
      %2688 = vmatprep.subr.mxu0 0.0
      %2689 = vmatpush1.msra.mxu0 0.0
      %2690 = vmatprep.subr.mxu0 0.0
      %2691 = vmatpush1.msra.mxu0 0.0
      %2692 = vmatprep.subr.mxu0 0.0
      %2693 = vmatpush1.msra.mxu0 0.0
      %2694 = vmatprep.subr.mxu0 0.0
      %2695 = vmatpush1.msra.mxu0 0.0
      %2696 = vmatprep.subr.mxu0 0.0
      %2697 = vmatpush1.msra.mxu0 0.0
      %2698 = vmatprep.subr.mxu0 0.0
      %2699 = vmatpush1.msra.mxu0 0.0
      %2700 = vmatprep.subr.mxu0 0.0
      %2701 = vmatpush1.msra.mxu0 0.0
      %2702 = vmatprep.subr.mxu0 0.0
      %2703 = vmatpush1.msra.mxu0 0.0
      %2704 = vmatprep.subr.mxu0 0.0
      %2705 = vmatpush1.msra.mxu0 0.0
      %2706 = vmatprep.subr.mxu0 0.0
      %2707 = vmatpush1.msra.mxu0 0.0
      %2708 = vmatprep.subr.mxu0 0.0
      %2709 = vmatpush1.msra.mxu0 0.0
      %2710 = vmatprep.mubr.f32.mxu0 0.0
      %2711 = vmatmul.mubr.f32.gmra.mrb[0].mxu0 %v733
      %v2712 = vpop.f32.mrb[0].mxu0
      %v2713 = vpop.f32.mrb[0].mxu0
      %2714 = vmatprep.mubr.f32.mxu0 0.0
      %2715 = vmatmul.mubr.f32.gmra.mrb[0].mxu0 %v750
      %v2716 = vpop.f32.mrb[0].mxu0
      %v2717 = vpop.f32.mrb[0].mxu0
      %2718 = vmatprep.mubr.f32.mxu0 0.0
      %2719 = vmatmul.mubr.f32.gmra.mrb[0].mxu0 %v767
      %v2720 = vpop.f32.mrb[0].mxu0
      %v2721 = vadd.f32 0.0, %v2720
      %v2722 = vpop.f32.mrb[0].mxu0
      %2723 = vmatprep.mubr.f32.mxu0 0.0
      %2724 = vmatmul.mubr.f32.gmra.mrb[0].mxu0 %v784
      %v2725 = vpop.f32.mrb[0].mxu0
      %v2726 = vadd.f32 0.0, %v2725
      %v2727 = vpop.f32.mrb[0].mxu0
      %2728 = vmatprep.mubr.f32.mxu0 0.0
      %2729 = vmatmul.mubr.f32.gmra.mrb[0].mxu0 %v801
      %v2730 = vpop.f32.mrb[0].mxu0
      %v2731 = vadd.f32 0.0, %v2730
      %v2732 = vpop.f32.mrb[0].mxu0
      %2733 = vmatprep.mubr.f32.mxu0 0.0
      %2734 = vmatmul.mubr.f32.gmra.mrb[0].mxu0 %v818
      %v2735 = vpop.f32.mrb[0].mxu0
      %v2736 = vadd.f32 0.0, %v2735
      %v2737 = vpop.f32.mrb[0].mxu0
      %2738 = vmatprep.mubr.f32.mxu0 0.0
      %2739 = vmatmul.mubr.f32.gmra.mrb[0].mxu0 %v835
      %v2740 = vpop.f32.mrb[0].mxu0
      %v2741 = vadd.f32 0.0, %v2740
      %v2742 = vpop.f32.mrb[0].mxu0
      %2743 = vmatprep.mubr.f32.mxu0 0.0
      %2744 = vmatmul.mubr.f32.gmra.mrb[0].mxu0 %v852
      %v2745 = vpop.f32.mrb[0].mxu0
      %v2746 = vadd.f32 0.0, %v2745
      %v2747 = vpop.f32.mrb[0].mxu0
      %2748 = vmatprep.mubr.f32.mxu0 0.0
      %2749 = vmatmul.mubr.f32.gmra.mrb[0].mxu0 %v869
      %v2750 = vpop.f32.mrb[0].mxu0
      %v2751 = vadd.f32 0.0, %v2750
      %v2752 = vpop.f32.mrb[0].mxu0
      %2753 = vmatprep.mubr.f32.mxu0 0.0
      %2754 = vmatmul.mubr.f32.gmra.mrb[0].mxu0 %v886
      %v2755 = vpop.f32.mrb[0].mxu0
      %v2756 = vadd.f32 0.0, %v2755
      %v2757 = vpop.f32.mrb[0].mxu0
      %2758 = vmatprep.mubr.f32.mxu0 0.0
      %2759 = vmatmul.mubr.f32.gmra.mrb[0].mxu0 %v903
      %v2760 = vpop.f32.mrb[0].mxu0
      %v2761 = vadd.f32 0.0, %v2760
      %v2762 = vpop.f32.mrb[0].mxu0
      %2763 = vmatprep.mubr.f32.mxu0 0.0
      %2764 = vmatmul.mubr.f32.gmra.mrb[0].mxu0 %v920
      %v2765 = vpop.f32.mrb[0].mxu0
      %v2766 = vadd.f32 0.0, %v2765
      %v2767 = vpop.f32.mrb[0].mxu0
      %2768 = vmatprep.mubr.f32.mxu0 0.0
      %2769 = vmatmul.mubr.f32.gmra.mrb[0].mxu0 %v937
      %v2770 = vpop.f32.mrb[0].mxu0
      %v2771 = vadd.f32 0.0, %v2770
      %v2772 = vpop.f32.mrb[0].mxu0
      %2773 = vmatprep.mubr.f32.mxu0 0.0
      %2774 = vmatmul.mubr.f32.gmra.mrb[0].mxu0 %v954
      %v2775 = vpop.f32.mrb[0].mxu0
      %v2776 = vadd.f32 0.0, %v2775
      %v2777 = vpop.f32.mrb[0].mxu0
      %2778 = vmatprep.mubr.f32.mxu0 0.0
      %2779 = vmatmul.mubr.f32.gmra.mrb[0].mxu0 %v971
      %v2780 = vpop.f32.mrb[0].mxu0
      %v2781 = vadd.f32 0.0, %v2780
      %v2782 = vpop.f32.mrb[0].mxu0
      %2783 = vmatprep.mubr.f32.mxu0 0.0
      %2784 = vmatmul.mubr.f32.gmra.mrb[0].mxu0 %v988
      %v2785 = vpop.f32.mrb[0].mxu0
      %v2786 = vadd.f32 0.0, %v2785
      %v2787 = vpop.f32.mrb[0].mxu0
      %2788 = vmatprep.mubr.f32.mxu0 0.0
      %2789 = vmatmul.mubr.f32.gmra.mrb[0].mxu0 %v1005
      %v2790 = vpop.f32.mrb[0].mxu0
      %v2791 = vadd.f32 0.0, %v2790
      %v2792 = vpop.f32.mrb[0].mxu0
      %2793 = vmatprep.mubr.f32.mxu0 0.0
      %2794 = vmatmul.mubr.f32.gmra.mrb[0].mxu0 %v1022
      %v2795 = vpop.f32.mrb[0].mxu0
      %v2796 = vadd.f32 0.0, %v2795
      %v2797 = vpop.f32.mrb[0].mxu0
      %2798 = vmatprep.mubr.f32.mxu0 0.0
      %2799 = vmatmul.mubr.f32.gmra.mrb[0].mxu0 %v1039
      %v2800 = vpop.f32.mrb[0].mxu0
      %v2801 = vadd.f32 0.0, %v2800
      %v2802 = vpop.f32.mrb[0].mxu0
      %2803 = vmatprep.mubr.f32.mxu0 0.0
      %2804 = vmatmul.mubr.f32.gmra.mrb[0].mxu0 %v1056
      %v2805 = vpop.f32.mrb[0].mxu0
      %v2806 = vadd.f32 0.0, %v2805
      %v2807 = vpop.f32.mrb[0].mxu0
      %2808 = vmatprep.mubr.f32.mxu0 0.0
      %2809 = vmatmul.mubr.f32.gmra.mrb[0].mxu0 %v1073
      %v2810 = vpop.f32.mrb[0].mxu0
      %v2811 = vadd.f32 0.0, %v2810
      %v2812 = vpop.f32.mrb[0].mxu0
      %2813 = vmatprep.mubr.f32.mxu0 0.0
      %2814 = vmatmul.mubr.f32.gmra.mrb[0].mxu0 %v1090
      %v2815 = vpop.f32.mrb[0].mxu0
      %v2816 = vpop.f32.mrb[0].mxu0
      %2817 = vmatprep.mubr.f32.mxu0 0.0
      %2818 = vmatmul.mubr.f32.gmra.mrb[0].mxu0 %v1098
      %v2819 = vpop.f32.mrb[0].mxu0
      %v2820 = vpop.f32.mrb[0].mxu0
      %2821 = vdwg.mxu0
      %v2822 = vadd.f32 %v2610, %v2721
      %v2823 = vadd.f32 %v2611, %v2726
      %v2824 = vadd.f32 %v2612, %v2731
      %v2825 = vadd.f32 %v2613, %v2736
      %v2826 = vadd.f32 %v2614, %v2741
      %v2827 = vadd.f32 %v2615, %v2746
      %v2828 = vadd.f32 %v2616, %v2751
      %v2829 = vadd.f32 %v2617, %v2756
      %v2830 = vadd.f32 %v2618, %v2761
      %v2831 = vadd.f32 %v2619, %v2766
      %v2832 = vadd.f32 %v2620, %v2771
      %v2833 = vadd.f32 %v2621, %v2776
      %v2834 = vadd.f32 %v2622, %v2781
      %v2835 = vadd.f32 %v2623, %v2786
      %v2836 = vadd.f32 %v2624, %v2791
      %v2837 = vadd.f32 %v2625, %v2796
      %v2838 = vadd.f32 %v2626, %v2801
      %v2839 = vadd.f32 %v2627, %v2806
      %v2840 = vadd.f32 %v2628, %v2811
      %s2841 = scalar_lea.vmem %s1, 768
      %v2842 = vld [vmem:[%s2841] sm:$0xff]
      %v2843 = vld [vmem:[%s2841 + $0x8] sm:$0xff]
      %v2844 = vld [vmem:[%s2841 + $0x10] sm:$0xff]
      %v2845 = vld [vmem:[%s2841 + $0x18] sm:$0xff]
      %v2846 = vld [vmem:[%s2841 + $0x20] sm:$0xff]
      %v2847 = vld [vmem:[%s2841 + $0x28] sm:$0xff]
      %v2848 = vld [vmem:[%s2841 + $0x30] sm:$0xff]
      %v2849 = vld [vmem:[%s2841 + $0x38] sm:$0xff]
      %v2850 = vld [vmem:[%s2841 + $0x40] sm:$0xff]
      %v2851 = vld [vmem:[%s2841 + $0x48] sm:$0xff]
      %v2852 = vld [vmem:[%s2841 + $0x50] sm:$0xff]
      %v2853 = vld [vmem:[%s2841 + $0x58] sm:$0xff]
      %v2854 = vld [vmem:[%s2841 + $0x60] sm:$0xff]
      %v2855 = vld [vmem:[%s2841 + $0x68] sm:$0xff]
      %v2856 = vld [vmem:[%s2841 + $0x70] sm:$0xff]
      %v2857 = vld [vmem:[%s2841 + $0x78] sm:$0xff]
      %2858 = vmatprep.subr.mxu0 0.0
      %2859 = vmatpush1.msra.mxu0 %v2842
      %2860 = vmatprep.subr.mxu0 0.0
      %2861 = vmatpush1.msra.mxu0 %v2843
      %2862 = vmatprep.subr.mxu0 0.0
      %2863 = vmatpush1.msra.mxu0 %v2844
      %2864 = vmatprep.subr.mxu0 0.0
      %2865 = vmatpush1.msra.mxu0 %v2845
      %2866 = vmatprep.subr.mxu0 0.0
      %2867 = vmatpush1.msra.mxu0 %v2846
      %2868 = vmatprep.subr.mxu0 0.0
      %2869 = vmatpush1.msra.mxu0 %v2847
      %2870 = vmatprep.subr.mxu0 0.0
      %2871 = vmatpush1.msra.mxu0 %v2848
      %2872 = vmatprep.subr.mxu0 0.0
      %2873 = vmatpush1.msra.mxu0 %v2849
      %2874 = vmatprep.subr.mxu0 0.0
      %2875 = vmatpush1.msra.mxu0 %v2850
      %2876 = vmatprep.subr.mxu0 0.0
      %2877 = vmatpush1.msra.mxu0 %v2851
      %2878 = vmatprep.subr.mxu0 0.0
      %2879 = vmatpush1.msra.mxu0 %v2852
      %2880 = vmatprep.subr.mxu0 0.0
      %2881 = vmatpush1.msra.mxu0 %v2853
      %2882 = vmatprep.subr.mxu0 0.0
      %2883 = vmatpush1.msra.mxu0 %v2854
      %2884 = vmatprep.subr.mxu0 0.0
      %2885 = vmatpush1.msra.mxu0 %v2855
      %2886 = vmatprep.subr.mxu0 0.0
      %2887 = vmatpush1.msra.mxu0 %v2856
      %2888 = vmatprep.subr.mxu0 0.0
      %2889 = vmatpush1.msra.mxu0 %v2857
      %2890 = vmatprep.subr.mxu0 0.0
      %2891 = vmatpush1.msra.mxu0 0.0
      %2892 = vmatprep.subr.mxu0 0.0
      %2893 = vmatpush1.msra.mxu0 0.0
      %2894 = vmatprep.subr.mxu0 0.0
      %2895 = vmatpush1.msra.mxu0 0.0
      %2896 = vmatprep.subr.mxu0 0.0
      %2897 = vmatpush1.msra.mxu0 0.0
      %2898 = vmatprep.subr.mxu0 0.0
      %2899 = vmatpush1.msra.mxu0 0.0
      %2900 = vmatprep.subr.mxu0 0.0
      %2901 = vmatpush1.msra.mxu0 0.0
      %2902 = vmatprep.subr.mxu0 0.0
      %2903 = vmatpush1.msra.mxu0 0.0
      %2904 = vmatprep.subr.mxu0 0.0
      %2905 = vmatpush1.msra.mxu0 0.0
      %2906 = vmatprep.subr.mxu0 0.0
      %2907 = vmatpush1.msra.mxu0 0.0
      %2908 = vmatprep.subr.mxu0 0.0
      %2909 = vmatpush1.msra.mxu0 0.0
      %2910 = vmatprep.subr.mxu0 0.0
      %2911 = vmatpush1.msra.mxu0 0.0
      %2912 = vmatprep.subr.mxu0 0.0
      %2913 = vmatpush1.msra.mxu0 0.0
      %2914 = vmatprep.subr.mxu0 0.0
      %2915 = vmatpush1.msra.mxu0 0.0
      %2916 = vmatprep.subr.mxu0 0.0
      %2917 = vmatpush1.msra.mxu0 0.0
      %2918 = vmatprep.subr.mxu0 0.0
      %2919 = vmatpush1.msra.mxu0 0.0
      %2920 = vmatprep.subr.mxu0 0.0
      %2921 = vmatpush1.msra.mxu0 0.0
      %2922 = vmatprep.mubr.f32.mxu0 0.0
      %2923 = vmatmul.mubr.f32.gmra.mrb[0].mxu0 %v733
      %v2924 = vpop.f32.mrb[0].mxu0
      %v2925 = vadd.f32 0.0, %v2924
      %v2926 = vpop.f32.mrb[0].mxu0
      %2927 = vmatprep.mubr.f32.mxu0 0.0
      %2928 = vmatmul.mubr.f32.gmra.mrb[0].mxu0 %v750
      %v2929 = vpop.f32.mrb[0].mxu0
      %v2930 = vpop.f32.mrb[0].mxu0
      %2931 = vmatprep.mubr.f32.mxu0 0.0
      %2932 = vmatmul.mubr.f32.gmra.mrb[0].mxu0 %v767
      %v2933 = vpop.f32.mrb[0].mxu0
      %v2934 = vpop.f32.mrb[0].mxu0
      %2935 = vmatprep.mubr.f32.mxu0 0.0
      %2936 = vmatmul.mubr.f32.gmra.mrb[0].mxu0 %v784
      %v2937 = vpop.f32.mrb[0].mxu0
      %v2938 = vpop.f32.mrb[0].mxu0
      %2939 = vmatprep.mubr.f32.mxu0 0.0
      %2940 = vmatmul.mubr.f32.gmra.mrb[0].mxu0 %v801
      %v2941 = vpop.f32.mrb[0].mxu0
      %v2942 = vadd.f32 0.0, %v2941
      %v2943 = vpop.f32.mrb[0].mxu0
      %2944 = vmatprep.mubr.f32.mxu0 0.0
      %2945 = vmatmul.mubr.f32.gmra.mrb[0].mxu0 %v818
      %v2946 = vpop.f32.mrb[0].mxu0
      %v2947 = vadd.f32 0.0, %v2946
      %v2948 = vpop.f32.mrb[0].mxu0
      %2949 = vmatprep.mubr.f32.mxu0 0.0
      %2950 = vmatmul.mubr.f32.gmra.mrb[0].mxu0 %v835
      %v2951 = vpop.f32.mrb[0].mxu0
      %v2952 = vadd.f32 0.0, %v2951
      %v2953 = vpop.f32.mrb[0].mxu0
      %2954 = vmatprep.mubr.f32.mxu0 0.0
      %2955 = vmatmul.mubr.f32.gmra.mrb[0].mxu0 %v852
      %v2956 = vpop.f32.mrb[0].mxu0
      %v2957 = vadd.f32 0.0, %v2956
      %v2958 = vpop.f32.mrb[0].mxu0
      %2959 = vmatprep.mubr.f32.mxu0 0.0
      %2960 = vmatmul.mubr.f32.gmra.mrb[0].mxu0 %v869
      %v2961 = vpop.f32.mrb[0].mxu0
      %v2962 = vadd.f32 0.0, %v2961
      %v2963 = vpop.f32.mrb[0].mxu0
      %2964 = vmatprep.mubr.f32.mxu0 0.0
      %2965 = vmatmul.mubr.f32.gmra.mrb[0].mxu0 %v886
      %v2966 = vpop.f32.mrb[0].mxu0
      %v2967 = vadd.f32 0.0, %v2966
      %v2968 = vpop.f32.mrb[0].mxu0
      %2969 = vmatprep.mubr.f32.mxu0 0.0
      %2970 = vmatmul.mubr.f32.gmra.mrb[0].mxu0 %v903
      %v2971 = vpop.f32.mrb[0].mxu0
      %v2972 = vadd.f32 0.0, %v2971
      %v2973 = vpop.f32.mrb[0].mxu0
      %2974 = vmatprep.mubr.f32.mxu0 0.0
      %2975 = vmatmul.mubr.f32.gmra.mrb[0].mxu0 %v920
      %v2976 = vpop.f32.mrb[0].mxu0
      %v2977 = vadd.f32 0.0, %v2976
      %v2978 = vpop.f32.mrb[0].mxu0
      %2979 = vmatprep.mubr.f32.mxu0 0.0
      %2980 = vmatmul.mubr.f32.gmra.mrb[0].mxu0 %v937
      %v2981 = vpop.f32.mrb[0].mxu0
      %v2982 = vadd.f32 0.0, %v2981
      %v2983 = vpop.f32.mrb[0].mxu0
      %2984 = vmatprep.mubr.f32.mxu0 0.0
      %2985 = vmatmul.mubr.f32.gmra.mrb[0].mxu0 %v954
      %v2986 = vpop.f32.mrb[0].mxu0
      %v2987 = vadd.f32 0.0, %v2986
      %v2988 = vpop.f32.mrb[0].mxu0
      %2989 = vmatprep.mubr.f32.mxu0 0.0
      %2990 = vmatmul.mubr.f32.gmra.mrb[0].mxu0 %v971
      %v2991 = vpop.f32.mrb[0].mxu0
      %v2992 = vadd.f32 0.0, %v2991
      %v2993 = vpop.f32.mrb[0].mxu0
      %2994 = vmatprep.mubr.f32.mxu0 0.0
      %2995 = vmatmul.mubr.f32.gmra.mrb[0].mxu0 %v988
      %v2996 = vpop.f32.mrb[0].mxu0
      %v2997 = vadd.f32 0.0, %v2996
      %v2998 = vpop.f32.mrb[0].mxu0
      %2999 = vmatprep.mubr.f32.mxu0 0.0
      %3000 = vmatmul.mubr.f32.gmra.mrb[0].mxu0 %v1005
      %v3001 = vpop.f32.mrb[0].mxu0
      %v3002 = vadd.f32 0.0, %v3001
      %v3003 = vpop.f32.mrb[0].mxu0
      %3004 = vmatprep.mubr.f32.mxu0 0.0
      %3005 = vmatmul.mubr.f32.gmra.mrb[0].mxu0 %v1022
      %v3006 = vpop.f32.mrb[0].mxu0
      %v3007 = vadd.f32 0.0, %v3006
      %v3008 = vpop.f32.mrb[0].mxu0
      %3009 = vmatprep.mubr.f32.mxu0 0.0
      %3010 = vmatmul.mubr.f32.gmra.mrb[0].mxu0 %v1039
      %v3011 = vpop.f32.mrb[0].mxu0
      %v3012 = vadd.f32 0.0, %v3011
      %v3013 = vpop.f32.mrb[0].mxu0
      %3014 = vmatprep.mubr.f32.mxu0 0.0
      %3015 = vmatmul.mubr.f32.gmra.mrb[0].mxu0 %v1056
      %v3016 = vpop.f32.mrb[0].mxu0
      %v3017 = vadd.f32 0.0, %v3016
      %v3018 = vpop.f32.mrb[0].mxu0
      %3019 = vmatprep.mubr.f32.mxu0 0.0
      %3020 = vmatmul.mubr.f32.gmra.mrb[0].mxu0 %v1073
      %v3021 = vpop.f32.mrb[0].mxu0
      %v3022 = vadd.f32 0.0, %v3021
      %v3023 = vpop.f32.mrb[0].mxu0
      %3024 = vmatprep.mubr.f32.mxu0 0.0
      %3025 = vmatmul.mubr.f32.gmra.mrb[0].mxu0 %v1090
      %v3026 = vpop.f32.mrb[0].mxu0
      %v3027 = vadd.f32 0.0, %v3026
      %v3028 = vpop.f32.mrb[0].mxu0
      %3029 = vmatprep.mubr.f32.mxu0 0.0
      %3030 = vmatmul.mubr.f32.gmra.mrb[0].mxu0 %v1098
      %v3031 = vpop.f32.mrb[0].mxu0
      %v3032 = vadd.f32 0.0, %v3031
      %v3033 = vpop.f32.mrb[0].mxu0
      %3034 = vdwg.mxu0
      %v3035 = vrot.slane %v2925, 4
      %v3036 = vsel %vm1299, %v3035, %v3032
      %v3037 = vadd.f32 %v2822, %v2942
      %v3038 = vadd.f32 %v2823, %v2947
      %v3039 = vadd.f32 %v2824, %v2952
      %v3040 = vadd.f32 %v2825, %v2957
      %v3041 = vadd.f32 %v2826, %v2962
      %v3042 = vadd.f32 %v2827, %v2967
      %v3043 = vadd.f32 %v2828, %v2972
      %v3044 = vadd.f32 %v2829, %v2977
      %v3045 = vadd.f32 %v2830, %v2982
      %v3046 = vadd.f32 %v2831, %v2987
      %v3047 = vadd.f32 %v2832, %v2992
      %v3048 = vadd.f32 %v2833, %v2997
      %v3049 = vadd.f32 %v2834, %v3002
      %v3050 = vadd.f32 %v2835, %v3007
      %v3051 = vadd.f32 %v2836, %v3012
      %v3052 = vadd.f32 %v2837, %v3017
      %v3053 = vadd.f32 %v2838, %v3022
      %v3054 = vadd.f32 %v2839, %v3027
      %v3055 = vadd.f32 %v2840, %v3036
      %s3056 = scalar_lea.vmem %s1, 896
      %v3057 = vld [vmem:[%s3056] sm:$0xff]
      %v3058 = vld [vmem:[%s3056 + $0x8] sm:$0xff]
      %v3059 = vld [vmem:[%s3056 + $0x10] sm:$0xff]
      %v3060 = vld [vmem:[%s3056 + $0x18] sm:$0xff]
      %v3061 = vld [vmem:[%s3056 + $0x20] sm:$0xff]
      %v3062 = vld [vmem:[%s3056 + $0x28] sm:$0xff]
      %v3063 = vld [vmem:[%s3056 + $0x30] sm:$0xff]
      %v3064 = vld [vmem:[%s3056 + $0x38] sm:$0xff]
      %v3065 = vld [vmem:[%s3056 + $0x40] sm:$0xff]
      %v3066 = vld [vmem:[%s3056 + $0x48] sm:$0xff]
      %v3067 = vld [vmem:[%s3056 + $0x50] sm:$0xff]
      %v3068 = vld [vmem:[%s3056 + $0x58] sm:$0xff]
      %v3069 = vld [vmem:[%s3056 + $0x60] sm:$0xff]
      %v3070 = vld [vmem:[%s3056 + $0x68] sm:$0xff]
      %v3071 = vld [vmem:[%s3056 + $0x70] sm:$0xff]
      %v3072 = vld [vmem:[%s3056 + $0x78] sm:$0xff]
      %3073 = vmatprep.subr.mxu0 0.0
      %3074 = vmatpush1.msra.mxu0 %v3057
      %3075 = vmatprep.subr.mxu0 0.0
      %3076 = vmatpush1.msra.mxu0 %v3058
      %3077 = vmatprep.subr.mxu0 0.0
      %3078 = vmatpush1.msra.mxu0 %v3059
      %3079 = vmatprep.subr.mxu0 0.0
      %3080 = vmatpush1.msra.mxu0 %v3060
      %3081 = vmatprep.subr.mxu0 0.0
      %3082 = vmatpush1.msra.mxu0 %v3061
      %3083 = vmatprep.subr.mxu0 0.0
      %3084 = vmatpush1.msra.mxu0 %v3062
      %3085 = vmatprep.subr.mxu0 0.0
      %3086 = vmatpush1.msra.mxu0 %v3063
      %3087 = vmatprep.subr.mxu0 0.0
      %3088 = vmatpush1.msra.mxu0 %v3064
      %3089 = vmatprep.subr.mxu0 0.0
      %3090 = vmatpush1.msra.mxu0 %v3065
      %3091 = vmatprep.subr.mxu0 0.0
      %3092 = vmatpush1.msra.mxu0 %v3066
      %3093 = vmatprep.subr.mxu0 0.0
      %3094 = vmatpush1.msra.mxu0 %v3067
      %3095 = vmatprep.subr.mxu0 0.0
      %3096 = vmatpush1.msra.mxu0 %v3068
      %3097 = vmatprep.subr.mxu0 0.0
      %3098 = vmatpush1.msra.mxu0 %v3069
      %3099 = vmatprep.subr.mxu0 0.0
      %3100 = vmatpush1.msra.mxu0 %v3070
      %3101 = vmatprep.subr.mxu0 0.0
      %3102 = vmatpush1.msra.mxu0 %v3071
      %3103 = vmatprep.subr.mxu0 0.0
      %3104 = vmatpush1.msra.mxu0 %v3072
      %3105 = vmatprep.subr.mxu0 0.0
      %3106 = vmatpush1.msra.mxu0 0.0
      %3107 = vmatprep.subr.mxu0 0.0
      %3108 = vmatpush1.msra.mxu0 0.0
      %3109 = vmatprep.subr.mxu0 0.0
      %3110 = vmatpush1.msra.mxu0 0.0
      %3111 = vmatprep.subr.mxu0 0.0
      %3112 = vmatpush1.msra.mxu0 0.0
      %3113 = vmatprep.subr.mxu0 0.0
      %3114 = vmatpush1.msra.mxu0 0.0
      %3115 = vmatprep.subr.mxu0 0.0
      %3116 = vmatpush1.msra.mxu0 0.0
      %3117 = vmatprep.subr.mxu0 0.0
      %3118 = vmatpush1.msra.mxu0 0.0
      %3119 = vmatprep.subr.mxu0 0.0
      %3120 = vmatpush1.msra.mxu0 0.0
      %3121 = vmatprep.subr.mxu0 0.0
      %3122 = vmatpush1.msra.mxu0 0.0
      %3123 = vmatprep.subr.mxu0 0.0
      %3124 = vmatpush1.msra.mxu0 0.0
      %3125 = vmatprep.subr.mxu0 0.0
      %3126 = vmatpush1.msra.mxu0 0.0
      %3127 = vmatprep.subr.mxu0 0.0
      %3128 = vmatpush1.msra.mxu0 0.0
      %3129 = vmatprep.subr.mxu0 0.0
      %3130 = vmatpush1.msra.mxu0 0.0
      %3131 = vmatprep.subr.mxu0 0.0
      %3132 = vmatpush1.msra.mxu0 0.0
      %3133 = vmatprep.subr.mxu0 0.0
      %3134 = vmatpush1.msra.mxu0 0.0
      %3135 = vmatprep.subr.mxu0 0.0
      %3136 = vmatpush1.msra.mxu0 0.0
      %3137 = vmatprep.mubr.f32.mxu0 0.0
      %3138 = vmatmul.mubr.f32.gmra.mrb[0].mxu0 %v733
      %v3139 = vpop.f32.mrb[0].mxu0
      %v3140 = vadd.f32 0.0, %v3139
      %v3141 = vpop.f32.mrb[0].mxu0
      %3142 = vmatprep.mubr.f32.mxu0 0.0
      %3143 = vmatmul.mubr.f32.gmra.mrb[0].mxu0 %v750
      %v3144 = vpop.f32.mrb[0].mxu0
      %v3145 = vadd.f32 0.0, %v3144
      %v3146 = vpop.f32.mrb[0].mxu0
      %3147 = vmatprep.mubr.f32.mxu0 0.0
      %3148 = vmatmul.mubr.f32.gmra.mrb[0].mxu0 %v767
      %v3149 = vpop.f32.mrb[0].mxu0
      %v3150 = vpop.f32.mrb[0].mxu0
      %3151 = vmatprep.mubr.f32.mxu0 0.0
      %3152 = vmatmul.mubr.f32.gmra.mrb[0].mxu0 %v784
      %v3153 = vpop.f32.mrb[0].mxu0
      %v3154 = vpop.f32.mrb[0].mxu0
      %3155 = vmatprep.mubr.f32.mxu0 0.0
      %3156 = vmatmul.mubr.f32.gmra.mrb[0].mxu0 %v801
      %v3157 = vpop.f32.mrb[0].mxu0
      %v3158 = vadd.f32 0.0, %v3157
      %v3159 = vpop.f32.mrb[0].mxu0
      %3160 = vmatprep.mubr.f32.mxu0 0.0
      %3161 = vmatmul.mubr.f32.gmra.mrb[0].mxu0 %v818
      %v3162 = vpop.f32.mrb[0].mxu0
      %v3163 = vadd.f32 0.0, %v3162
      %v3164 = vpop.f32.mrb[0].mxu0
      %3165 = vmatprep.mubr.f32.mxu0 0.0
      %3166 = vmatmul.mubr.f32.gmra.mrb[0].mxu0 %v835
      %v3167 = vpop.f32.mrb[0].mxu0
      %v3168 = vadd.f32 0.0, %v3167
      %v3169 = vpop.f32.mrb[0].mxu0
      %3170 = vmatprep.mubr.f32.mxu0 0.0
      %3171 = vmatmul.mubr.f32.gmra.mrb[0].mxu0 %v852
      %v3172 = vpop.f32.mrb[0].mxu0
      %v3173 = vadd.f32 0.0, %v3172
      %v3174 = vpop.f32.mrb[0].mxu0
      %3175 = vmatprep.mubr.f32.mxu0 0.0
      %3176 = vmatmul.mubr.f32.gmra.mrb[0].mxu0 %v869
      %v3177 = vpop.f32.mrb[0].mxu0
      %v3178 = vadd.f32 0.0, %v3177
      %v3179 = vpop.f32.mrb[0].mxu0
      %3180 = vmatprep.mubr.f32.mxu0 0.0
      %3181 = vmatmul.mubr.f32.gmra.mrb[0].mxu0 %v886
      %v3182 = vpop.f32.mrb[0].mxu0
      %v3183 = vadd.f32 0.0, %v3182
      %v3184 = vpop.f32.mrb[0].mxu0
      %3185 = vmatprep.mubr.f32.mxu0 0.0
      %3186 = vmatmul.mubr.f32.gmra.mrb[0].mxu0 %v903
      %v3187 = vpop.f32.mrb[0].mxu0
      %v3188 = vadd.f32 0.0, %v3187
      %v3189 = vpop.f32.mrb[0].mxu0
      %3190 = vmatprep.mubr.f32.mxu0 0.0
      %3191 = vmatmul.mubr.f32.gmra.mrb[0].mxu0 %v920
      %v3192 = vpop.f32.mrb[0].mxu0
      %v3193 = vadd.f32 0.0, %v3192
      %v3194 = vpop.f32.mrb[0].mxu0
      %3195 = vmatprep.mubr.f32.mxu0 0.0
      %3196 = vmatmul.mubr.f32.gmra.mrb[0].mxu0 %v937
      %v3197 = vpop.f32.mrb[0].mxu0
      %v3198 = vadd.f32 0.0, %v3197
      %v3199 = vpop.f32.mrb[0].mxu0
      %3200 = vmatprep.mubr.f32.mxu0 0.0
      %3201 = vmatmul.mubr.f32.gmra.mrb[0].mxu0 %v954
      %v3202 = vpop.f32.mrb[0].mxu0
      %v3203 = vadd.f32 0.0, %v3202
      %v3204 = vpop.f32.mrb[0].mxu0
      %3205 = vmatprep.mubr.f32.mxu0 0.0
      %3206 = vmatmul.mubr.f32.gmra.mrb[0].mxu0 %v971
      %v3207 = vpop.f32.mrb[0].mxu0
      %v3208 = vadd.f32 0.0, %v3207
      %v3209 = vpop.f32.mrb[0].mxu0
      %3210 = vmatprep.mubr.f32.mxu0 0.0
      %3211 = vmatmul.mubr.f32.gmra.mrb[0].mxu0 %v988
      %v3212 = vpop.f32.mrb[0].mxu0
      %v3213 = vadd.f32 0.0, %v3212
      %v3214 = vpop.f32.mrb[0].mxu0
      %3215 = vmatprep.mubr.f32.mxu0 0.0
      %3216 = vmatmul.mubr.f32.gmra.mrb[0].mxu0 %v1005
      %v3217 = vpop.f32.mrb[0].mxu0
      %v3218 = vadd.f32 0.0, %v3217
      %v3219 = vpop.f32.mrb[0].mxu0
      %3220 = vmatprep.mubr.f32.mxu0 0.0
      %3221 = vmatmul.mubr.f32.gmra.mrb[0].mxu0 %v1022
      %v3222 = vpop.f32.mrb[0].mxu0
      %v3223 = vadd.f32 0.0, %v3222
      %v3224 = vpop.f32.mrb[0].mxu0
      %3225 = vmatprep.mubr.f32.mxu0 0.0
      %3226 = vmatmul.mubr.f32.gmra.mrb[0].mxu0 %v1039
      %v3227 = vpop.f32.mrb[0].mxu0
      %v3228 = vadd.f32 0.0, %v3227
      %v3229 = vpop.f32.mrb[0].mxu0
      %3230 = vmatprep.mubr.f32.mxu0 0.0
      %3231 = vmatmul.mubr.f32.gmra.mrb[0].mxu0 %v1056
      %v3232 = vpop.f32.mrb[0].mxu0
      %v3233 = vadd.f32 0.0, %v3232
      %v3234 = vpop.f32.mrb[0].mxu0
      %3235 = vmatprep.mubr.f32.mxu0 0.0
      %3236 = vmatmul.mubr.f32.gmra.mrb[0].mxu0 %v1073
      %v3237 = vpop.f32.mrb[0].mxu0
      %v3238 = vadd.f32 0.0, %v3237
      %v3239 = vpop.f32.mrb[0].mxu0
      %3240 = vmatprep.mubr.f32.mxu0 0.0
      %3241 = vmatmul.mubr.f32.gmra.mrb[0].mxu0 %v1090
      %v3242 = vpop.f32.mrb[0].mxu0
      %v3243 = vadd.f32 0.0, %v3242
      %v3244 = vpop.f32.mrb[0].mxu0
      %3245 = vmatprep.mubr.f32.mxu0 0.0
      %3246 = vmatmul.mubr.f32.gmra.mrb[0].mxu0 %v1098
      %v3247 = vpop.f32.mrb[0].mxu0
      %v3248 = vadd.f32 0.0, %v3247
      %v3249 = vpop.f32.mrb[0].mxu0
      %3250 = vdwg.mxu0
      %v3251 = vrot.slane %v3140, 4
      %v3252 = vrot.slane %v3145, 4
      %v3253 = vsel %vm1299, %v3251, %v3248
      %v3254 = vsel %vm1299, %v3252, %v3251
      %v3275 = vrot.slane %v3158, 1
      %v3276 = vrot.slane %v3163, 1
      %v3277 = vsel %vm1593, %v3275, %v3276
      %v3278 = vrot.slane %v3168, 1
      %v3279 = vsel %vm1593, %v3276, %v3278
      %v3280 = vrot.slane %v3173, 1
      %v3281 = vsel %vm1593, %v3278, %v3280
      %v3282 = vrot.slane %v3178, 1
      %v3283 = vsel %vm1593, %v3280, %v3282
      %v3284 = vrot.slane %v3183, 1
      %v3285 = vsel %vm1593, %v3282, %v3284
      %v3286 = vrot.slane %v3188, 1
      %v3287 = vsel %vm1593, %v3284, %v3286
      %v3288 = vrot.slane %v3193, 1
      %v3289 = vsel %vm1593, %v3286, %v3288
      %v3290 = vrot.slane %v3198, 1
      %v3291 = vsel %vm1593, %v3288, %v3290
      %v3292 = vrot.slane %v3203, 1
      %v3293 = vsel %vm1593, %v3290, %v3292
      %v3294 = vrot.slane %v3208, 1
      %v3295 = vsel %vm1593, %v3292, %v3294
      %v3296 = vrot.slane %v3213, 1
      %v3297 = vsel %vm1593, %v3294, %v3296
      %v3298 = vrot.slane %v3218, 1
      %v3299 = vsel %vm1593, %v3296, %v3298
      %v3300 = vrot.slane %v3223, 1
      %v3301 = vsel %vm1593, %v3298, %v3300
      %v3302 = vrot.slane %v3228, 1
      %v3303 = vsel %vm1593, %v3300, %v3302
      %v3304 = vrot.slane %v3233, 1
      %v3305 = vsel %vm1593, %v3302, %v3304
      %v3306 = vrot.slane %v3238, 1
      %v3307 = vsel %vm1593, %v3304, %v3306
      %v3308 = vrot.slane %v3243, 1
      %v3309 = vsel %vm1593, %v3306, %v3308
      %v3310 = vrot.slane %v3253, 1
      %v3311 = vsel %vm1593, %v3308, %v3310
      %v3312 = vrot.slane %v3254, 1
      %v3313 = vsel %vm1593, %v3310, %v3312
      %v3333 = vadd.f32 %v3037, %v3277
      %v3334 = vadd.f32 %v3038, %v3279
      %v3335 = vadd.f32 %v3039, %v3281
      %v3336 = vadd.f32 %v3040, %v3283
      %v3337 = vadd.f32 %v3041, %v3285
      %v3338 = vadd.f32 %v3042, %v3287
      %v3339 = vadd.f32 %v3043, %v3289
      %v3340 = vadd.f32 %v3044, %v3291
      %v3341 = vadd.f32 %v3045, %v3293
      %v3342 = vadd.f32 %v3046, %v3295
      %v3343 = vadd.f32 %v3047, %v3297
      %v3344 = vadd.f32 %v3048, %v3299
      %v3345 = vadd.f32 %v3049, %v3301
      %v3346 = vadd.f32 %v3050, %v3303
      %v3347 = vadd.f32 %v3051, %v3305
      %v3348 = vadd.f32 %v3052, %v3307
      %v3349 = vadd.f32 %v3053, %v3309
      %v3350 = vadd.f32 %v3054, %v3311
      %v3351 = vadd.f32 %v3055, %v3313
      %s3352 = scalar_lea.vmem %s1, 1024
      %v3353 = vld [vmem:[%s3352] sm:$0xff]
      %v3354 = vld [vmem:[%s3352 + $0x8] sm:$0xff]
      %v3355 = vld [vmem:[%s3352 + $0x10] sm:$0xff]
      %v3356 = vld [vmem:[%s3352 + $0x18] sm:$0xff]
      %v3357 = vld [vmem:[%s3352 + $0x20] sm:$0xff]
      %v3358 = vld [vmem:[%s3352 + $0x28] sm:$0xff]
      %v3359 = vld [vmem:[%s3352 + $0x30] sm:$0xff]
      %v3360 = vld [vmem:[%s3352 + $0x38] sm:$0xff]
      %v3361 = vld [vmem:[%s3352 + $0x40] sm:$0xff]
      %v3362 = vld [vmem:[%s3352 + $0x48] sm:$0xff]
      %v3363 = vld [vmem:[%s3352 + $0x50] sm:$0xff]
      %v3364 = vld [vmem:[%s3352 + $0x58] sm:$0xff]
      %v3365 = vld [vmem:[%s3352 + $0x60] sm:$0xff]
      %v3366 = vld [vmem:[%s3352 + $0x68] sm:$0xff]
      %v3367 = vld [vmem:[%s3352 + $0x70] sm:$0xff]
      %v3368 = vld [vmem:[%s3352 + $0x78] sm:$0xff]
      %3369 = vmatprep.subr.mxu0 0.0
      %3370 = vmatpush1.msra.mxu0 %v3353
      %3371 = vmatprep.subr.mxu0 0.0
      %3372 = vmatpush1.msra.mxu0 %v3354
      %3373 = vmatprep.subr.mxu0 0.0
      %3374 = vmatpush1.msra.mxu0 %v3355
      %3375 = vmatprep.subr.mxu0 0.0
      %3376 = vmatpush1.msra.mxu0 %v3356
      %3377 = vmatprep.subr.mxu0 0.0
      %3378 = vmatpush1.msra.mxu0 %v3357
      %3379 = vmatprep.subr.mxu0 0.0
      %3380 = vmatpush1.msra.mxu0 %v3358
      %3381 = vmatprep.subr.mxu0 0.0
      %3382 = vmatpush1.msra.mxu0 %v3359
      %3383 = vmatprep.subr.mxu0 0.0
      %3384 = vmatpush1.msra.mxu0 %v3360
      %3385 = vmatprep.subr.mxu0 0.0
      %3386 = vmatpush1.msra.mxu0 %v3361
      %3387 = vmatprep.subr.mxu0 0.0
      %3388 = vmatpush1.msra.mxu0 %v3362
      %3389 = vmatprep.subr.mxu0 0.0
      %3390 = vmatpush1.msra.mxu0 %v3363
      %3391 = vmatprep.subr.mxu0 0.0
      %3392 = vmatpush1.msra.mxu0 %v3364
      %3393 = vmatprep.subr.mxu0 0.0
      %3394 = vmatpush1.msra.mxu0 %v3365
      %3395 = vmatprep.subr.mxu0 0.0
      %3396 = vmatpush1.msra.mxu0 %v3366
      %3397 = vmatprep.subr.mxu0 0.0
      %3398 = vmatpush1.msra.mxu0 %v3367
      %3399 = vmatprep.subr.mxu0 0.0
      %3400 = vmatpush1.msra.mxu0 %v3368
      %3401 = vmatprep.subr.mxu0 0.0
      %3402 = vmatpush1.msra.mxu0 0.0
      %3403 = vmatprep.subr.mxu0 0.0
      %3404 = vmatpush1.msra.mxu0 0.0
      %3405 = vmatprep.subr.mxu0 0.0
      %3406 = vmatpush1.msra.mxu0 0.0
      %3407 = vmatprep.subr.mxu0 0.0
      %3408 = vmatpush1.msra.mxu0 0.0
      %3409 = vmatprep.subr.mxu0 0.0
      %3410 = vmatpush1.msra.mxu0 0.0
      %3411 = vmatprep.subr.mxu0 0.0
      %3412 = vmatpush1.msra.mxu0 0.0
      %3413 = vmatprep.subr.mxu0 0.0
      %3414 = vmatpush1.msra.mxu0 0.0
      %3415 = vmatprep.subr.mxu0 0.0
      %3416 = vmatpush1.msra.mxu0 0.0
      %3417 = vmatprep.subr.mxu0 0.0
      %3418 = vmatpush1.msra.mxu0 0.0
      %3419 = vmatprep.subr.mxu0 0.0
      %3420 = vmatpush1.msra.mxu0 0.0
      %3421 = vmatprep.subr.mxu0 0.0
      %3422 = vmatpush1.msra.mxu0 0.0
      %3423 = vmatprep.subr.mxu0 0.0
      %3424 = vmatpush1.msra.mxu0 0.0
      %3425 = vmatprep.subr.mxu0 0.0
      %3426 = vmatpush1.msra.mxu0 0.0
      %3427 = vmatprep.subr.mxu0 0.0
      %3428 = vmatpush1.msra.mxu0 0.0
      %3429 = vmatprep.subr.mxu0 0.0
      %3430 = vmatpush1.msra.mxu0 0.0
      %3431 = vmatprep.subr.mxu0 0.0
      %3432 = vmatpush1.msra.mxu0 0.0
      %3433 = vmatprep.mubr.f32.mxu0 0.0
      %3434 = vmatmul.mubr.f32.gmra.mrb[0].mxu0 %v733
      %v3435 = vpop.f32.mrb[0].mxu0
      %v3436 = vadd.f32 0.0, %v3435
      %v3437 = vpop.f32.mrb[0].mxu0
      %3438 = vmatprep.mubr.f32.mxu0 0.0
      %3439 = vmatmul.mubr.f32.gmra.mrb[0].mxu0 %v750
      %v3440 = vpop.f32.mrb[0].mxu0
      %v3441 = vadd.f32 0.0, %v3440
      %v3442 = vpop.f32.mrb[0].mxu0
      %3443 = vmatprep.mubr.f32.mxu0 0.0
      %3444 = vmatmul.mubr.f32.gmra.mrb[0].mxu0 %v767
      %v3445 = vpop.f32.mrb[0].mxu0
      %v3446 = vpop.f32.mrb[0].mxu0
      %3447 = vmatprep.mubr.f32.mxu0 0.0
      %3448 = vmatmul.mubr.f32.gmra.mrb[0].mxu0 %v784
      %v3449 = vpop.f32.mrb[0].mxu0
      %v3450 = vpop.f32.mrb[0].mxu0
      %3451 = vmatprep.mubr.f32.mxu0 0.0
      %3452 = vmatmul.mubr.f32.gmra.mrb[0].mxu0 %v801
      %v3453 = vpop.f32.mrb[0].mxu0
      %v3454 = vadd.f32 0.0, %v3453
      %v3455 = vpop.f32.mrb[0].mxu0
      %3456 = vmatprep.mubr.f32.mxu0 0.0
      %3457 = vmatmul.mubr.f32.gmra.mrb[0].mxu0 %v818
      %v3458 = vpop.f32.mrb[0].mxu0
      %v3459 = vadd.f32 0.0, %v3458
      %v3460 = vpop.f32.mrb[0].mxu0
      %3461 = vmatprep.mubr.f32.mxu0 0.0
      %3462 = vmatmul.mubr.f32.gmra.mrb[0].mxu0 %v835
      %v3463 = vpop.f32.mrb[0].mxu0
      %v3464 = vadd.f32 0.0, %v3463
      %v3465 = vpop.f32.mrb[0].mxu0
      %3466 = vmatprep.mubr.f32.mxu0 0.0
      %3467 = vmatmul.mubr.f32.gmra.mrb[0].mxu0 %v852
      %v3468 = vpop.f32.mrb[0].mxu0
      %v3469 = vadd.f32 0.0, %v3468
      %v3470 = vpop.f32.mrb[0].mxu0
      %3471 = vmatprep.mubr.f32.mxu0 0.0
      %3472 = vmatmul.mubr.f32.gmra.mrb[0].mxu0 %v869
      %v3473 = vpop.f32.mrb[0].mxu0
      %v3474 = vadd.f32 0.0, %v3473
      %v3475 = vpop.f32.mrb[0].mxu0
      %3476 = vmatprep.mubr.f32.mxu0 0.0
      %3477 = vmatmul.mubr.f32.gmra.mrb[0].mxu0 %v886
      %v3478 = vpop.f32.mrb[0].mxu0
      %v3479 = vadd.f32 0.0, %v3478
      %v3480 = vpop.f32.mrb[0].mxu0
      %3481 = vmatprep.mubr.f32.mxu0 0.0
      %3482 = vmatmul.mubr.f32.gmra.mrb[0].mxu0 %v903
      %v3483 = vpop.f32.mrb[0].mxu0
      %v3484 = vadd.f32 0.0, %v3483
      %v3485 = vpop.f32.mrb[0].mxu0
      %3486 = vmatprep.mubr.f32.mxu0 0.0
      %3487 = vmatmul.mubr.f32.gmra.mrb[0].mxu0 %v920
      %v3488 = vpop.f32.mrb[0].mxu0
      %v3489 = vadd.f32 0.0, %v3488
      %v3490 = vpop.f32.mrb[0].mxu0
      %3491 = vmatprep.mubr.f32.mxu0 0.0
      %3492 = vmatmul.mubr.f32.gmra.mrb[0].mxu0 %v937
      %v3493 = vpop.f32.mrb[0].mxu0
      %v3494 = vadd.f32 0.0, %v3493
      %v3495 = vpop.f32.mrb[0].mxu0
      %3496 = vmatprep.mubr.f32.mxu0 0.0
      %3497 = vmatmul.mubr.f32.gmra.mrb[0].mxu0 %v954
      %v3498 = vpop.f32.mrb[0].mxu0
      %v3499 = vadd.f32 0.0, %v3498
      %v3500 = vpop.f32.mrb[0].mxu0
      %3501 = vmatprep.mubr.f32.mxu0 0.0
      %3502 = vmatmul.mubr.f32.gmra.mrb[0].mxu0 %v971
      %v3503 = vpop.f32.mrb[0].mxu0
      %v3504 = vadd.f32 0.0, %v3503
      %v3505 = vpop.f32.mrb[0].mxu0
      %3506 = vmatprep.mubr.f32.mxu0 0.0
      %3507 = vmatmul.mubr.f32.gmra.mrb[0].mxu0 %v988
      %v3508 = vpop.f32.mrb[0].mxu0
      %v3509 = vadd.f32 0.0, %v3508
      %v3510 = vpop.f32.mrb[0].mxu0
      %3511 = vmatprep.mubr.f32.mxu0 0.0
      %3512 = vmatmul.mubr.f32.gmra.mrb[0].mxu0 %v1005
      %v3513 = vpop.f32.mrb[0].mxu0
      %v3514 = vadd.f32 0.0, %v3513
      %v3515 = vpop.f32.mrb[0].mxu0
      %3516 = vmatprep.mubr.f32.mxu0 0.0
      %3517 = vmatmul.mubr.f32.gmra.mrb[0].mxu0 %v1022
      %v3518 = vpop.f32.mrb[0].mxu0
      %v3519 = vadd.f32 0.0, %v3518
      %v3520 = vpop.f32.mrb[0].mxu0
      %3521 = vmatprep.mubr.f32.mxu0 0.0
      %3522 = vmatmul.mubr.f32.gmra.mrb[0].mxu0 %v1039
      %v3523 = vpop.f32.mrb[0].mxu0
      %v3524 = vadd.f32 0.0, %v3523
      %v3525 = vpop.f32.mrb[0].mxu0
      %3526 = vmatprep.mubr.f32.mxu0 0.0
      %3527 = vmatmul.mubr.f32.gmra.mrb[0].mxu0 %v1056
      %v3528 = vpop.f32.mrb[0].mxu0
      %v3529 = vadd.f32 0.0, %v3528
      %v3530 = vpop.f32.mrb[0].mxu0
      %3531 = vmatprep.mubr.f32.mxu0 0.0
      %3532 = vmatmul.mubr.f32.gmra.mrb[0].mxu0 %v1073
      %v3533 = vpop.f32.mrb[0].mxu0
      %v3534 = vadd.f32 0.0, %v3533
      %v3535 = vpop.f32.mrb[0].mxu0
      %3536 = vmatprep.mubr.f32.mxu0 0.0
      %3537 = vmatmul.mubr.f32.gmra.mrb[0].mxu0 %v1090
      %v3538 = vpop.f32.mrb[0].mxu0
      %v3539 = vadd.f32 0.0, %v3538
      %v3540 = vpop.f32.mrb[0].mxu0
      %3541 = vmatprep.mubr.f32.mxu0 0.0
      %3542 = vmatmul.mubr.f32.gmra.mrb[0].mxu0 %v1098
      %v3543 = vpop.f32.mrb[0].mxu0
      %v3544 = vadd.f32 0.0, %v3543
      %v3545 = vpop.f32.mrb[0].mxu0
      %3546 = vdwg.mxu0
      %v3547 = vrot.slane %v3436, 4
      %v3548 = vrot.slane %v3441, 4
      %v3549 = vsel %vm1299, %v3547, %v3544
      %v3550 = vsel %vm1299, %v3548, %v3547
      %v3571 = vrot.slane %v3454, 2
      %v3572 = vrot.slane %v3459, 2
      %v3573 = vsel %vm1926, %v3571, %v3572
      %v3574 = vrot.slane %v3464, 2
      %v3575 = vsel %vm1926, %v3572, %v3574
      %v3576 = vrot.slane %v3469, 2
      %v3577 = vsel %vm1926, %v3574, %v3576
      %v3578 = vrot.slane %v3474, 2
      %v3579 = vsel %vm1926, %v3576, %v3578
      %v3580 = vrot.slane %v3479, 2
      %v3581 = vsel %vm1926, %v3578, %v3580
      %v3582 = vrot.slane %v3484, 2
      %v3583 = vsel %vm1926, %v3580, %v3582
      %v3584 = vrot.slane %v3489, 2
      %v3585 = vsel %vm1926, %v3582, %v3584
      %v3586 = vrot.slane %v3494, 2
      %v3587 = vsel %vm1926, %v3584, %v3586
      %v3588 = vrot.slane %v3499, 2
      %v3589 = vsel %vm1926, %v3586, %v3588
      %v3590 = vrot.slane %v3504, 2
      %v3591 = vsel %vm1926, %v3588, %v3590
      %v3592 = vrot.slane %v3509, 2
      %v3593 = vsel %vm1926, %v3590, %v3592
      %v3594 = vrot.slane %v3514, 2
      %v3595 = vsel %vm1926, %v3592, %v3594
      %v3596 = vrot.slane %v3519, 2
      %v3597 = vsel %vm1926, %v3594, %v3596
      %v3598 = vrot.slane %v3524, 2
      %v3599 = vsel %vm1926, %v3596, %v3598
      %v3600 = vrot.slane %v3529, 2
      %v3601 = vsel %vm1926, %v3598, %v3600
      %v3602 = vrot.slane %v3534, 2
      %v3603 = vsel %vm1926, %v3600, %v3602
      %v3604 = vrot.slane %v3539, 2
      %v3605 = vsel %vm1926, %v3602, %v3604
      %v3606 = vrot.slane %v3549, 2
      %v3607 = vsel %vm1926, %v3604, %v3606
      %v3608 = vrot.slane %v3550, 2
      %v3609 = vsel %vm1926, %v3606, %v3608
      %v3629 = vadd.f32 %v3333, %v3573
      %v3630 = vadd.f32 %v3334, %v3575
      %v3631 = vadd.f32 %v3335, %v3577
      %v3632 = vadd.f32 %v3336, %v3579
      %v3633 = vadd.f32 %v3337, %v3581
      %v3634 = vadd.f32 %v3338, %v3583
      %v3635 = vadd.f32 %v3339, %v3585
      %v3636 = vadd.f32 %v3340, %v3587
      %v3637 = vadd.f32 %v3341, %v3589
      %v3638 = vadd.f32 %v3342, %v3591
      %v3639 = vadd.f32 %v3343, %v3593
      %v3640 = vadd.f32 %v3344, %v3595
      %v3641 = vadd.f32 %v3345, %v3597
      %v3642 = vadd.f32 %v3346, %v3599
      %v3643 = vadd.f32 %v3347, %v3601
      %v3644 = vadd.f32 %v3348, %v3603
      %v3645 = vadd.f32 %v3349, %v3605
      %v3646 = vadd.f32 %v3350, %v3607
      %v3647 = vadd.f32 %v3351, %v3609
      %v3667 = vcombine.high %v3629, %v3629
      %v3669 = vunpack.c.l.s4 1983009808
      %v3670 = vunpack.c.0.s8 %v3669
      %v3671 = vlaneseq
      %v3672 = vshrl.u32 %v3671, 7
      %v3673 = vsub.s32 %v3670, %v3672
      %v3674 = vrot.slane %v3629, %v3673
      %v3676 = vunpack.c.l.s4 1983009808
      %v3677 = vunpack.c.0.s8 %v3676
      %v3678 = vlaneseq
      %v3679 = vshrl.u32 %v3678, 7
      %v3680 = vsub.s32 %v3677, %v3679
      %v3681 = vrot.slane %v3667, %v3680
      %v3682 = vcombine.high %v3674, %v3674
      %v3683 = vcombine.high %v3681, %v3681
      %v3684 = vcombine.high %v3630, %v3630
      %v3686 = vunpack.c.l.s4 1983009808
      %v3687 = vunpack.c.0.s8 %v3686
      %v3688 = vlaneseq
      %v3689 = vshrl.u32 %v3688, 7
      %v3690 = vsub.s32 %v3687, %v3689
      %v3691 = vrot.slane %v3630, %v3690
      %v3693 = vunpack.c.l.s4 1983009808
      %v3694 = vunpack.c.0.s8 %v3693
      %v3695 = vlaneseq
      %v3696 = vshrl.u32 %v3695, 7
      %v3697 = vsub.s32 %v3694, %v3696
      %v3698 = vrot.slane %v3684, %v3697
      %v3699 = vcombine.high %v3691, %v3691
      %v3700 = vcombine.high %v3698, %v3698
      %v3701 = vcombine.high %v3631, %v3631
      %v3703 = vunpack.c.l.s4 1983009808
      %v3704 = vunpack.c.0.s8 %v3703
      %v3705 = vlaneseq
      %v3706 = vshrl.u32 %v3705, 7
      %v3707 = vsub.s32 %v3704, %v3706
      %v3708 = vrot.slane %v3631, %v3707
      %v3710 = vunpack.c.l.s4 1983009808
      %v3711 = vunpack.c.0.s8 %v3710
      %v3712 = vlaneseq
      %v3713 = vshrl.u32 %v3712, 7
      %v3714 = vsub.s32 %v3711, %v3713
      %v3715 = vrot.slane %v3701, %v3714
      %v3716 = vcombine.high %v3708, %v3708
      %v3717 = vcombine.high %v3715, %v3715
      %v3718 = vcombine.high %v3632, %v3632
      %v3720 = vunpack.c.l.s4 1983009808
      %v3721 = vunpack.c.0.s8 %v3720
      %v3722 = vlaneseq
      %v3723 = vshrl.u32 %v3722, 7
      %v3724 = vsub.s32 %v3721, %v3723
      %v3725 = vrot.slane %v3632, %v3724
      %v3727 = vunpack.c.l.s4 1983009808
      %v3728 = vunpack.c.0.s8 %v3727
      %v3729 = vlaneseq
      %v3730 = vshrl.u32 %v3729, 7
      %v3731 = vsub.s32 %v3728, %v3730
      %v3732 = vrot.slane %v3718, %v3731
      %v3733 = vcombine.high %v3725, %v3725
      %v3734 = vcombine.high %v3732, %v3732
      %v3735 = vcombine.high %v3633, %v3633
      %v3737 = vunpack.c.l.s4 1983009808
      %v3738 = vunpack.c.0.s8 %v3737
      %v3739 = vlaneseq
      %v3740 = vshrl.u32 %v3739, 7
      %v3741 = vsub.s32 %v3738, %v3740
      %v3742 = vrot.slane %v3633, %v3741
      %v3744 = vunpack.c.l.s4 1983009808
      %v3745 = vunpack.c.0.s8 %v3744
      %v3746 = vlaneseq
      %v3747 = vshrl.u32 %v3746, 7
      %v3748 = vsub.s32 %v3745, %v3747
      %v3749 = vrot.slane %v3735, %v3748
      %v3750 = vcombine.high %v3742, %v3742
      %v3751 = vcombine.high %v3749, %v3749
      %v3752 = vcombine.high %v3634, %v3634
      %v3754 = vunpack.c.l.s4 1983009808
      %v3755 = vunpack.c.0.s8 %v3754
      %v3756 = vlaneseq
      %v3757 = vshrl.u32 %v3756, 7
      %v3758 = vsub.s32 %v3755, %v3757
      %v3759 = vrot.slane %v3634, %v3758
      %v3761 = vunpack.c.l.s4 1983009808
      %v3762 = vunpack.c.0.s8 %v3761
      %v3763 = vlaneseq
      %v3764 = vshrl.u32 %v3763, 7
      %v3765 = vsub.s32 %v3762, %v3764
      %v3766 = vrot.slane %v3752, %v3765
      %v3767 = vcombine.high %v3759, %v3759
      %v3768 = vcombine.high %v3766, %v3766
      %v3769 = vcombine.high %v3635, %v3635
      %v3771 = vunpack.c.l.s4 1983009808
      %v3772 = vunpack.c.0.s8 %v3771
      %v3773 = vlaneseq
      %v3774 = vshrl.u32 %v3773, 7
      %v3775 = vsub.s32 %v3772, %v3774
      %v3776 = vrot.slane %v3635, %v3775
      %v3778 = vunpack.c.l.s4 1983009808
      %v3779 = vunpack.c.0.s8 %v3778
      %v3780 = vlaneseq
      %v3781 = vshrl.u32 %v3780, 7
      %v3782 = vsub.s32 %v3779, %v3781
      %v3783 = vrot.slane %v3769, %v3782
      %v3784 = vcombine.high %v3776, %v3776
      %v3785 = vcombine.high %v3783, %v3783
      %v3786 = vcombine.high %v3636, %v3636
      %v3788 = vunpack.c.l.s4 1983009808
      %v3789 = vunpack.c.0.s8 %v3788
      %v3790 = vlaneseq
      %v3791 = vshrl.u32 %v3790, 7
      %v3792 = vsub.s32 %v3789, %v3791
      %v3793 = vrot.slane %v3636, %v3792
      %v3795 = vunpack.c.l.s4 1983009808
      %v3796 = vunpack.c.0.s8 %v3795
      %v3797 = vlaneseq
      %v3798 = vshrl.u32 %v3797, 7
      %v3799 = vsub.s32 %v3796, %v3798
      %v3800 = vrot.slane %v3786, %v3799
      %v3801 = vcombine.high %v3793, %v3793
      %v3802 = vcombine.high %v3800, %v3800
      %v3803 = vcombine.high %v3637, %v3637
      %v3805 = vunpack.c.l.s4 1983009808
      %v3806 = vunpack.c.0.s8 %v3805
      %v3807 = vlaneseq
      %v3808 = vshrl.u32 %v3807, 7
      %v3809 = vsub.s32 %v3806, %v3808
      %v3810 = vrot.slane %v3637, %v3809
      %v3812 = vunpack.c.l.s4 1983009808
      %v3813 = vunpack.c.0.s8 %v3812
      %v3814 = vlaneseq
      %v3815 = vshrl.u32 %v3814, 7
      %v3816 = vsub.s32 %v3813, %v3815
      %v3817 = vrot.slane %v3803, %v3816
      %v3818 = vcombine.high %v3810, %v3810
      %v3819 = vcombine.high %v3817, %v3817
      %v3820 = vcombine.high %v3638, %v3638
      %v3822 = vunpack.c.l.s4 1983009808
      %v3823 = vunpack.c.0.s8 %v3822
      %v3824 = vlaneseq
      %v3825 = vshrl.u32 %v3824, 7
      %v3826 = vsub.s32 %v3823, %v3825
      %v3827 = vrot.slane %v3638, %v3826
      %v3829 = vunpack.c.l.s4 1983009808
      %v3830 = vunpack.c.0.s8 %v3829
      %v3831 = vlaneseq
      %v3832 = vshrl.u32 %v3831, 7
      %v3833 = vsub.s32 %v3830, %v3832
      %v3834 = vrot.slane %v3820, %v3833
      %v3835 = vcombine.high %v3827, %v3827
      %v3836 = vcombine.high %v3834, %v3834
      %v3837 = vcombine.high %v3639, %v3639
      %v3839 = vunpack.c.l.s4 1983009808
      %v3840 = vunpack.c.0.s8 %v3839
      %v3841 = vlaneseq
      %v3842 = vshrl.u32 %v3841, 7
      %v3843 = vsub.s32 %v3840, %v3842
      %v3844 = vrot.slane %v3639, %v3843
      %v3846 = vunpack.c.l.s4 1983009808
      %v3847 = vunpack.c.0.s8 %v3846
      %v3848 = vlaneseq
      %v3849 = vshrl.u32 %v3848, 7
      %v3850 = vsub.s32 %v3847, %v3849
      %v3851 = vrot.slane %v3837, %v3850
      %v3852 = vcombine.high %v3844, %v3844
      %v3853 = vcombine.high %v3851, %v3851
      %v3854 = vcombine.high %v3640, %v3640
      %v3856 = vunpack.c.l.s4 1983009808
      %v3857 = vunpack.c.0.s8 %v3856
      %v3858 = vlaneseq
      %v3859 = vshrl.u32 %v3858, 7
      %v3860 = vsub.s32 %v3857, %v3859
      %v3861 = vrot.slane %v3640, %v3860
      %v3863 = vunpack.c.l.s4 1983009808
      %v3864 = vunpack.c.0.s8 %v3863
      %v3865 = vlaneseq
      %v3866 = vshrl.u32 %v3865, 7
      %v3867 = vsub.s32 %v3864, %v3866
      %v3868 = vrot.slane %v3854, %v3867
      %v3869 = vcombine.high %v3861, %v3861
      %v3870 = vcombine.high %v3868, %v3868
      %v3871 = vcombine.high %v3641, %v3641
      %v3873 = vunpack.c.l.s4 1983009808
      %v3874 = vunpack.c.0.s8 %v3873
      %v3875 = vlaneseq
      %v3876 = vshrl.u32 %v3875, 7
      %v3877 = vsub.s32 %v3874, %v3876
      %v3878 = vrot.slane %v3641, %v3877
      %v3880 = vunpack.c.l.s4 1983009808
      %v3881 = vunpack.c.0.s8 %v3880
      %v3882 = vlaneseq
      %v3883 = vshrl.u32 %v3882, 7
      %v3884 = vsub.s32 %v3881, %v3883
      %v3885 = vrot.slane %v3871, %v3884
      %v3886 = vcombine.high %v3878, %v3878
      %v3887 = vcombine.high %v3885, %v3885
      %v3888 = vcombine.high %v3642, %v3642
      %v3890 = vunpack.c.l.s4 1983009808
      %v3891 = vunpack.c.0.s8 %v3890
      %v3892 = vlaneseq
      %v3893 = vshrl.u32 %v3892, 7
      %v3894 = vsub.s32 %v3891, %v3893
      %v3895 = vrot.slane %v3642, %v3894
      %v3897 = vunpack.c.l.s4 1983009808
      %v3898 = vunpack.c.0.s8 %v3897
      %v3899 = vlaneseq
      %v3900 = vshrl.u32 %v3899, 7
      %v3901 = vsub.s32 %v3898, %v3900
      %v3902 = vrot.slane %v3888, %v3901
      %v3903 = vcombine.high %v3895, %v3895
      %v3904 = vcombine.high %v3902, %v3902
      %v3905 = vcombine.high %v3643, %v3643
      %v3907 = vunpack.c.l.s4 1983009808
      %v3908 = vunpack.c.0.s8 %v3907
      %v3909 = vlaneseq
      %v3910 = vshrl.u32 %v3909, 7
      %v3911 = vsub.s32 %v3908, %v3910
      %v3912 = vrot.slane %v3643, %v3911
      %v3914 = vunpack.c.l.s4 1983009808
      %v3915 = vunpack.c.0.s8 %v3914
      %v3916 = vlaneseq
      %v3917 = vshrl.u32 %v3916, 7
      %v3918 = vsub.s32 %v3915, %v3917
      %v3919 = vrot.slane %v3905, %v3918
      %v3920 = vcombine.high %v3912, %v3912
      %v3921 = vcombine.high %v3919, %v3919
      %v3922 = vcombine.high %v3644, %v3644
      %v3924 = vunpack.c.l.s4 1983009808
      %v3925 = vunpack.c.0.s8 %v3924
      %v3926 = vlaneseq
      %v3927 = vshrl.u32 %v3926, 7
      %v3928 = vsub.s32 %v3925, %v3927
      %v3929 = vrot.slane %v3644, %v3928
      %v3931 = vunpack.c.l.s4 1983009808
      %v3932 = vunpack.c.0.s8 %v3931
      %v3933 = vlaneseq
      %v3934 = vshrl.u32 %v3933, 7
      %v3935 = vsub.s32 %v3932, %v3934
      %v3936 = vrot.slane %v3922, %v3935
      %v3937 = vcombine.high %v3929, %v3929
      %v3938 = vcombine.high %v3936, %v3936
      %v3939 = vcombine.high %v3645, %v3645
      %v3941 = vunpack.c.l.s4 1983009808
      %v3942 = vunpack.c.0.s8 %v3941
      %v3943 = vlaneseq
      %v3944 = vshrl.u32 %v3943, 7
      %v3945 = vsub.s32 %v3942, %v3944
      %v3946 = vrot.slane %v3645, %v3945
      %v3948 = vunpack.c.l.s4 1983009808
      %v3949 = vunpack.c.0.s8 %v3948
      %v3950 = vlaneseq
      %v3951 = vshrl.u32 %v3950, 7
      %v3952 = vsub.s32 %v3949, %v3951
      %v3953 = vrot.slane %v3939, %v3952
      %v3954 = vcombine.high %v3946, %v3946
      %v3955 = vcombine.high %v3953, %v3953
      %v3956 = vcombine.high %v3646, %v3646
      %v3958 = vunpack.c.l.s4 1983009808
      %v3959 = vunpack.c.0.s8 %v3958
      %v3960 = vlaneseq
      %v3961 = vshrl.u32 %v3960, 7
      %v3962 = vsub.s32 %v3959, %v3961
      %v3963 = vrot.slane %v3646, %v3962
      %v3965 = vunpack.c.l.s4 1983009808
      %v3966 = vunpack.c.0.s8 %v3965
      %v3967 = vlaneseq
      %v3968 = vshrl.u32 %v3967, 7
      %v3969 = vsub.s32 %v3966, %v3968
      %v3970 = vrot.slane %v3956, %v3969
      %v3971 = vcombine.high %v3963, %v3963
      %v3972 = vcombine.high %v3970, %v3970
      %v3974 = vunpack.c.l.s4 1983009808
      %v3975 = vunpack.c.0.s8 %v3974
      %v3976 = vlaneseq
      %v3977 = vshrl.u32 %v3976, 7
      %v3978 = vsub.s32 %v3975, %v3977
      %v3979 = vrot.slane %v3647, %v3978
      %v3980 = vcombine.high %v3979, %v3979
      %vm3981 = vcmask 1042434
      %vm3982 = vmor %vm2551, %vm3981
      %vm3983 = vcmask 1044484
      %vm3984 = vmor %vm3982, %vm3983
      %vm3985 = vcmask 1046534
      %vm3986 = vmor %vm3984, %vm3985
      %v3987 = vrot.slane %v3682, 7
      %v3988 = vrot.slane %v3987, 2
      %v3989 = vrot.slane %v3681, 7
      %v3990 = vsel %vm3986, %v3988, %v3989
      %v3991 = vrot.slane %v3989, 2
      %v3992 = vrot.slane %v3683, 7
      %v3993 = vsel %vm3986, %v3991, %v3992
      %v3994 = vrot.slane %v3992, 2
      %v3995 = vrot.slane %v3691, 7
      %v3996 = vsel %vm3986, %v3994, %v3995
      %v3997 = vrot.slane %v3995, 2
      %v3998 = vrot.slane %v3699, 7
      %v3999 = vsel %vm3986, %v3997, %v3998
      %v4000 = vrot.slane %v3998, 2
      %v4001 = vrot.slane %v3698, 7
      %v4002 = vsel %vm3986, %v4000, %v4001
      %v4003 = vrot.slane %v4001, 2
      %v4004 = vrot.slane %v3700, 7
      %v4005 = vsel %vm3986, %v4003, %v4004
      %v4006 = vrot.slane %v4004, 2
      %v4007 = vrot.slane %v3708, 7
      %v4008 = vsel %vm3986, %v4006, %v4007
      %v4009 = vrot.slane %v4007, 2
      %v4010 = vrot.slane %v3716, 7
      %v4011 = vsel %vm3986, %v4009, %v4010
      %v4012 = vrot.slane %v4010, 2
      %v4013 = vrot.slane %v3715, 7
      %v4014 = vsel %vm3986, %v4012, %v4013
      %v4015 = vrot.slane %v4013, 2
      %v4016 = vrot.slane %v3717, 7
      %v4017 = vsel %vm3986, %v4015, %v4016
      %v4018 = vrot.slane %v4016, 2
      %v4019 = vrot.slane %v3725, 7
      %v4020 = vsel %vm3986, %v4018, %v4019
      %v4021 = vrot.slane %v4019, 2
      %v4022 = vrot.slane %v3733, 7
      %v4023 = vsel %vm3986, %v4021, %v4022
      %v4024 = vrot.slane %v4022, 2
      %v4025 = vrot.slane %v3732, 7
      %v4026 = vsel %vm3986, %v4024, %v4025
      %v4027 = vrot.slane %v4025, 2
      %v4028 = vrot.slane %v3734, 7
      %v4029 = vsel %vm3986, %v4027, %v4028
      %v4030 = vrot.slane %v4028, 2
      %v4031 = vrot.slane %v3742, 7
      %v4032 = vsel %vm3986, %v4030, %v4031
      %v4033 = vrot.slane %v4031, 2
      %v4034 = vrot.slane %v3750, 7
      %v4035 = vsel %vm3986, %v4033, %v4034
      %v4036 = vrot.slane %v4034, 2
      %v4037 = vrot.slane %v3749, 7
      %v4038 = vsel %vm3986, %v4036, %v4037
      %v4039 = vrot.slane %v4037, 2
      %v4040 = vrot.slane %v3751, 7
      %v4041 = vsel %vm3986, %v4039, %v4040
      %v4042 = vrot.slane %v4040, 2
      %v4043 = vrot.slane %v3759, 7
      %v4044 = vsel %vm3986, %v4042, %v4043
      %v4045 = vrot.slane %v4043, 2
      %v4046 = vrot.slane %v3767, 7
      %v4047 = vsel %vm3986, %v4045, %v4046
      %v4048 = vrot.slane %v4046, 2
      %v4049 = vrot.slane %v3766, 7
      %v4050 = vsel %vm3986, %v4048, %v4049
      %v4051 = vrot.slane %v4049, 2
      %v4052 = vrot.slane %v3768, 7
      %v4053 = vsel %vm3986, %v4051, %v4052
      %v4054 = vrot.slane %v4052, 2
      %v4055 = vrot.slane %v3776, 7
      %v4056 = vsel %vm3986, %v4054, %v4055
      %v4057 = vrot.slane %v4055, 2
      %v4058 = vrot.slane %v3784, 7
      %v4059 = vsel %vm3986, %v4057, %v4058
      %v4060 = vrot.slane %v4058, 2
      %v4061 = vrot.slane %v3783, 7
      %v4062 = vsel %vm3986, %v4060, %v4061
      %v4063 = vrot.slane %v4061, 2
      %v4064 = vrot.slane %v3785, 7
      %v4065 = vsel %vm3986, %v4063, %v4064
      %v4066 = vrot.slane %v4064, 2
      %v4067 = vrot.slane %v3793, 7
      %v4068 = vsel %vm3986, %v4066, %v4067
      %v4069 = vrot.slane %v4067, 2
      %v4070 = vrot.slane %v3801, 7
      %v4071 = vsel %vm3986, %v4069, %v4070
      %v4072 = vrot.slane %v4070, 2
      %v4073 = vrot.slane %v3800, 7
      %v4074 = vsel %vm3986, %v4072, %v4073
      %v4075 = vrot.slane %v4073, 2
      %v4076 = vrot.slane %v3802, 7
      %v4077 = vsel %vm3986, %v4075, %v4076
      %v4078 = vrot.slane %v4076, 2
      %v4079 = vrot.slane %v3810, 7
      %v4080 = vsel %vm3986, %v4078, %v4079
      %v4081 = vrot.slane %v4079, 2
      %v4082 = vrot.slane %v3818, 7
      %v4083 = vsel %vm3986, %v4081, %v4082
      %v4084 = vrot.slane %v4082, 2
      %v4085 = vrot.slane %v3817, 7
      %v4086 = vsel %vm3986, %v4084, %v4085
      %v4087 = vrot.slane %v4085, 2
      %v4088 = vrot.slane %v3819, 7
      %v4089 = vsel %vm3986, %v4087, %v4088
      %v4090 = vrot.slane %v4088, 2
      %v4091 = vrot.slane %v3827, 7
      %v4092 = vsel %vm3986, %v4090, %v4091
      %v4093 = vrot.slane %v4091, 2
      %v4094 = vrot.slane %v3835, 7
      %v4095 = vsel %vm3986, %v4093, %v4094
      %v4096 = vrot.slane %v4094, 2
      %v4097 = vrot.slane %v3834, 7
      %v4098 = vsel %vm3986, %v4096, %v4097
      %v4099 = vrot.slane %v4097, 2
      %v4100 = vrot.slane %v3836, 7
      %v4101 = vsel %vm3986, %v4099, %v4100
      %v4102 = vrot.slane %v4100, 2
      %v4103 = vrot.slane %v3844, 7
      %v4104 = vsel %vm3986, %v4102, %v4103
      %v4105 = vrot.slane %v4103, 2
      %v4106 = vrot.slane %v3852, 7
      %v4107 = vsel %vm3986, %v4105, %v4106
      %v4108 = vrot.slane %v4106, 2
      %v4109 = vrot.slane %v3851, 7
      %v4110 = vsel %vm3986, %v4108, %v4109
      %v4111 = vrot.slane %v4109, 2
      %v4112 = vrot.slane %v3853, 7
      %v4113 = vsel %vm3986, %v4111, %v4112
      %v4114 = vrot.slane %v4112, 2
      %v4115 = vrot.slane %v3861, 7
      %v4116 = vsel %vm3986, %v4114, %v4115
      %v4117 = vrot.slane %v4115, 2
      %v4118 = vrot.slane %v3869, 7
      %v4119 = vsel %vm3986, %v4117, %v4118
      %v4120 = vrot.slane %v4118, 2
      %v4121 = vrot.slane %v3868, 7
      %v4122 = vsel %vm3986, %v4120, %v4121
      %v4123 = vrot.slane %v4121, 2
      %v4124 = vrot.slane %v3870, 7
      %v4125 = vsel %vm3986, %v4123, %v4124
      %v4126 = vrot.slane %v4124, 2
      %v4127 = vrot.slane %v3878, 7
      %v4128 = vsel %vm3986, %v4126, %v4127
      %v4129 = vrot.slane %v4127, 2
      %v4130 = vrot.slane %v3886, 7
      %v4131 = vsel %vm3986, %v4129, %v4130
      %v4132 = vrot.slane %v4130, 2
      %v4133 = vrot.slane %v3885, 7
      %v4134 = vsel %vm3986, %v4132, %v4133
      %v4135 = vrot.slane %v4133, 2
      %v4136 = vrot.slane %v3887, 7
      %v4137 = vsel %vm3986, %v4135, %v4136
      %v4138 = vrot.slane %v4136, 2
      %v4139 = vrot.slane %v3895, 7
      %v4140 = vsel %vm3986, %v4138, %v4139
      %v4141 = vrot.slane %v4139, 2
      %v4142 = vrot.slane %v3903, 7
      %v4143 = vsel %vm3986, %v4141, %v4142
      %v4144 = vrot.slane %v4142, 2
      %v4145 = vrot.slane %v3902, 7
      %v4146 = vsel %vm3986, %v4144, %v4145
      %v4147 = vrot.slane %v4145, 2
      %v4148 = vrot.slane %v3904, 7
      %v4149 = vsel %vm3986, %v4147, %v4148
      %v4150 = vrot.slane %v4148, 2
      %v4151 = vrot.slane %v3912, 7
      %v4152 = vsel %vm3986, %v4150, %v4151
      %v4153 = vrot.slane %v4151, 2
      %v4154 = vrot.slane %v3920, 7
      %v4155 = vsel %vm3986, %v4153, %v4154
      %v4156 = vrot.slane %v4154, 2
      %v4157 = vrot.slane %v3919, 7
      %v4158 = vsel %vm3986, %v4156, %v4157
      %v4159 = vrot.slane %v4157, 2
      %v4160 = vrot.slane %v3921, 7
      %v4161 = vsel %vm3986, %v4159, %v4160
      %v4162 = vrot.slane %v4160, 2
      %v4163 = vrot.slane %v3929, 7
      %v4164 = vsel %vm3986, %v4162, %v4163
      %v4165 = vrot.slane %v4163, 2
      %v4166 = vrot.slane %v3937, 7
      %v4167 = vsel %vm3986, %v4165, %v4166
      %v4168 = vrot.slane %v4166, 2
      %v4169 = vrot.slane %v3936, 7
      %v4170 = vsel %vm3986, %v4168, %v4169
      %v4171 = vrot.slane %v4169, 2
      %v4172 = vrot.slane %v3938, 7
      %v4173 = vsel %vm3986, %v4171, %v4172
      %v4174 = vrot.slane %v4172, 2
      %v4175 = vrot.slane %v3946, 7
      %v4176 = vsel %vm3986, %v4174, %v4175
      %v4177 = vrot.slane %v4175, 2
      %v4178 = vrot.slane %v3954, 7
      %v4179 = vsel %vm3986, %v4177, %v4178
      %v4180 = vrot.slane %v4178, 2
      %v4181 = vrot.slane %v3953, 7
      %v4182 = vsel %vm3986, %v4180, %v4181
      %v4183 = vrot.slane %v4181, 2
      %v4184 = vrot.slane %v3955, 7
      %v4185 = vsel %vm3986, %v4183, %v4184
      %v4186 = vrot.slane %v4184, 2
      %v4187 = vrot.slane %v3963, 7
      %v4188 = vsel %vm3986, %v4186, %v4187
      %v4189 = vrot.slane %v4187, 2
      %v4190 = vrot.slane %v3971, 7
      %v4191 = vsel %vm3986, %v4189, %v4190
      %v4192 = vrot.slane %v4190, 2
      %v4193 = vrot.slane %v3970, 7
      %v4194 = vsel %vm3986, %v4192, %v4193
      %v4195 = vrot.slane %v4193, 2
      %v4196 = vrot.slane %v3972, 7
      %v4197 = vsel %vm3986, %v4195, %v4196
      %v4198 = vrot.slane %v4196, 2
      %v4199 = vrot.slane %v3979, 7
      %v4200 = vsel %vm3986, %v4198, %v4199
      %v4201 = vrot.slane %v4199, 2
      %v4202 = vrot.slane %v3980, 7
      %v4203 = vsel %vm3986, %v4201, %v4202
      %v4276 = vcombine.low %v3990, %v3993
      %v4277 = vcombine.low %v3996, %v3999
      %v4279 = vunpack.c.l.s4 1983009808
      %v4280 = vunpack.c.0.s8 %v4279
      %v4281 = vlaneseq
      %v4282 = vshrl.u32 %v4281, 7
      %v4283 = vsub.s32 %v4280, %v4282
      %v4284 = vrot.slane %v4276, %v4283
      %v4286 = vunpack.c.l.s4 1983009808
      %v4287 = vunpack.c.0.s8 %v4286
      %v4288 = vlaneseq
      %v4289 = vshrl.u32 %v4288, 7
      %v4290 = vsub.s32 %v4287, %v4289
      %v4291 = vrot.slane %v4277, %v4290
      %v4292 = vcombine.low %v4284, %v4291
      %v4293 = vcombine.low %v4002, %v4005
      %v4294 = vcombine.low %v4008, %v4011
      %v4296 = vunpack.c.l.s4 1983009808
      %v4297 = vunpack.c.0.s8 %v4296
      %v4298 = vlaneseq
      %v4299 = vshrl.u32 %v4298, 7
      %v4300 = vsub.s32 %v4297, %v4299
      %v4301 = vrot.slane %v4293, %v4300
      %v4303 = vunpack.c.l.s4 1983009808
      %v4304 = vunpack.c.0.s8 %v4303
      %v4305 = vlaneseq
      %v4306 = vshrl.u32 %v4305, 7
      %v4307 = vsub.s32 %v4304, %v4306
      %v4308 = vrot.slane %v4294, %v4307
      %v4309 = vcombine.low %v4301, %v4308
      %v4311 = vunpack.c.l.s4 1983009808
      %v4312 = vunpack.c.0.s8 %v4311
      %v4313 = vlaneseq
      %v4314 = vshrl.u32 %v4313, 7
      %v4315 = vsub.s32 %v4312, %v4314
      %v4316 = vrot.slane %v4014, %v4315
      %v4317 = vcombine.low %v4017, %v4020
      %v4318 = vcombine.low %v4023, %v4026
      %v4320 = vunpack.c.l.s4 1983009808
      %v4321 = vunpack.c.0.s8 %v4320
      %v4322 = vlaneseq
      %v4323 = vshrl.u32 %v4322, 7
      %v4324 = vsub.s32 %v4321, %v4323
      %v4325 = vrot.slane %v4317, %v4324
      %v4327 = vunpack.c.l.s4 1983009808
      %v4328 = vunpack.c.0.s8 %v4327
      %v4329 = vlaneseq
      %v4330 = vshrl.u32 %v4329, 7
      %v4331 = vsub.s32 %v4328, %v4330
      %v4332 = vrot.slane %v4318, %v4331
      %v4333 = vcombine.low %v4325, %v4332
      %v4334 = vcombine.low %v4029, %v4032
      %v4335 = vcombine.low %v4035, %v4038
      %v4337 = vunpack.c.l.s4 1983009808
      %v4338 = vunpack.c.0.s8 %v4337
      %v4339 = vlaneseq
      %v4340 = vshrl.u32 %v4339, 7
      %v4341 = vsub.s32 %v4338, %v4340
      %v4342 = vrot.slane %v4334, %v4341
      %v4344 = vunpack.c.l.s4 1983009808
      %v4345 = vunpack.c.0.s8 %v4344
      %v4346 = vlaneseq
      %v4347 = vshrl.u32 %v4346, 7
      %v4348 = vsub.s32 %v4345, %v4347
      %v4349 = vrot.slane %v4335, %v4348
      %v4350 = vcombine.low %v4342, %v4349
      %v4352 = vunpack.c.l.s4 1983009808
      %v4353 = vunpack.c.0.s8 %v4352
      %v4354 = vlaneseq
      %v4355 = vshrl.u32 %v4354, 7
      %v4356 = vsub.s32 %v4353, %v4355
      %v4357 = vrot.slane %v4041, %v4356
      %v4358 = vcombine.low %v4044, %v4047
      %v4359 = vcombine.low %v4050, %v4053
      %v4361 = vunpack.c.l.s4 1983009808
      %v4362 = vunpack.c.0.s8 %v4361
      %v4363 = vlaneseq
      %v4364 = vshrl.u32 %v4363, 7
      %v4365 = vsub.s32 %v4362, %v4364
      %v4366 = vrot.slane %v4358, %v4365
      %v4368 = vunpack.c.l.s4 1983009808
      %v4369 = vunpack.c.0.s8 %v4368
      %v4370 = vlaneseq
      %v4371 = vshrl.u32 %v4370, 7
      %v4372 = vsub.s32 %v4369, %v4371
      %v4373 = vrot.slane %v4359, %v4372
      %v4374 = vcombine.low %v4366, %v4373
      %v4375 = vcombine.low %v4056, %v4059
      %v4376 = vcombine.low %v4062, %v4065
      %v4378 = vunpack.c.l.s4 1983009808
      %v4379 = vunpack.c.0.s8 %v4378
      %v4380 = vlaneseq
      %v4381 = vshrl.u32 %v4380, 7
      %v4382 = vsub.s32 %v4379, %v4381
      %v4383 = vrot.slane %v4375, %v4382
      %v4385 = vunpack.c.l.s4 1983009808
      %v4386 = vunpack.c.0.s8 %v4385
      %v4387 = vlaneseq
      %v4388 = vshrl.u32 %v4387, 7
      %v4389 = vsub.s32 %v4386, %v4388
      %v4390 = vrot.slane %v4376, %v4389
      %v4391 = vcombine.low %v4383, %v4390
      %v4393 = vunpack.c.l.s4 1983009808
      %v4394 = vunpack.c.0.s8 %v4393
      %v4395 = vlaneseq
      %v4396 = vshrl.u32 %v4395, 7
      %v4397 = vsub.s32 %v4394, %v4396
      %v4398 = vrot.slane %v4068, %v4397
      %v4399 = vcombine.low %v4071, %v4074
      %v4400 = vcombine.low %v4077, %v4080
      %v4402 = vunpack.c.l.s4 1983009808
      %v4403 = vunpack.c.0.s8 %v4402
      %v4404 = vlaneseq
      %v4405 = vshrl.u32 %v4404, 7
      %v4406 = vsub.s32 %v4403, %v4405
      %v4407 = vrot.slane %v4399, %v4406
      %v4409 = vunpack.c.l.s4 1983009808
      %v4410 = vunpack.c.0.s8 %v4409
      %v4411 = vlaneseq
      %v4412 = vshrl.u32 %v4411, 7
      %v4413 = vsub.s32 %v4410, %v4412
      %v4414 = vrot.slane %v4400, %v4413
      %v4415 = vcombine.low %v4407, %v4414
      %v4416 = vcombine.low %v4083, %v4086
      %v4417 = vcombine.low %v4089, %v4092
      %v4419 = vunpack.c.l.s4 1983009808
      %v4420 = vunpack.c.0.s8 %v4419
      %v4421 = vlaneseq
      %v4422 = vshrl.u32 %v4421, 7
      %v4423 = vsub.s32 %v4420, %v4422
      %v4424 = vrot.slane %v4416, %v4423
      %v4426 = vunpack.c.l.s4 1983009808
      %v4427 = vunpack.c.0.s8 %v4426
      %v4428 = vlaneseq
      %v4429 = vshrl.u32 %v4428, 7
      %v4430 = vsub.s32 %v4427, %v4429
      %v4431 = vrot.slane %v4417, %v4430
      %v4432 = vcombine.low %v4424, %v4431
      %v4434 = vunpack.c.l.s4 1983009808
      %v4435 = vunpack.c.0.s8 %v4434
      %v4436 = vlaneseq
      %v4437 = vshrl.u32 %v4436, 7
      %v4438 = vsub.s32 %v4435, %v4437
      %v4439 = vrot.slane %v4095, %v4438
      %v4440 = vcombine.low %v4098, %v4101
      %v4441 = vcombine.low %v4104, %v4107
      %v4443 = vunpack.c.l.s4 1983009808
      %v4444 = vunpack.c.0.s8 %v4443
      %v4445 = vlaneseq
      %v4446 = vshrl.u32 %v4445, 7
      %v4447 = vsub.s32 %v4444, %v4446
      %v4448 = vrot.slane %v4440, %v4447
      %v4450 = vunpack.c.l.s4 1983009808
      %v4451 = vunpack.c.0.s8 %v4450
      %v4452 = vlaneseq
      %v4453 = vshrl.u32 %v4452, 7
      %v4454 = vsub.s32 %v4451, %v4453
      %v4455 = vrot.slane %v4441, %v4454
      %v4456 = vcombine.low %v4448, %v4455
      %v4457 = vcombine.low %v4110, %v4113
      %v4458 = vcombine.low %v4116, %v4119
      %v4460 = vunpack.c.l.s4 1983009808
      %v4461 = vunpack.c.0.s8 %v4460
      %v4462 = vlaneseq
      %v4463 = vshrl.u32 %v4462, 7
      %v4464 = vsub.s32 %v4461, %v4463
      %v4465 = vrot.slane %v4457, %v4464
      %v4467 = vunpack.c.l.s4 1983009808
      %v4468 = vunpack.c.0.s8 %v4467
      %v4469 = vlaneseq
      %v4470 = vshrl.u32 %v4469, 7
      %v4471 = vsub.s32 %v4468, %v4470
      %v4472 = vrot.slane %v4458, %v4471
      %v4473 = vcombine.low %v4465, %v4472
      %v4475 = vunpack.c.l.s4 1983009808
      %v4476 = vunpack.c.0.s8 %v4475
      %v4477 = vlaneseq
      %v4478 = vshrl.u32 %v4477, 7
      %v4479 = vsub.s32 %v4476, %v4478
      %v4480 = vrot.slane %v4122, %v4479
      %v4481 = vcombine.low %v4125, %v4128
      %v4482 = vcombine.low %v4131, %v4134
      %v4484 = vunpack.c.l.s4 1983009808
      %v4485 = vunpack.c.0.s8 %v4484
      %v4486 = vlaneseq
      %v4487 = vshrl.u32 %v4486, 7
      %v4488 = vsub.s32 %v4485, %v4487
      %v4489 = vrot.slane %v4481, %v4488
      %v4491 = vunpack.c.l.s4 1983009808
      %v4492 = vunpack.c.0.s8 %v4491
      %v4493 = vlaneseq
      %v4494 = vshrl.u32 %v4493, 7
      %v4495 = vsub.s32 %v4492, %v4494
      %v4496 = vrot.slane %v4482, %v4495
      %v4497 = vcombine.low %v4489, %v4496
      %v4498 = vcombine.low %v4137, %v4140
      %v4499 = vcombine.low %v4143, %v4146
      %v4501 = vunpack.c.l.s4 1983009808
      %v4502 = vunpack.c.0.s8 %v4501
      %v4503 = vlaneseq
      %v4504 = vshrl.u32 %v4503, 7
      %v4505 = vsub.s32 %v4502, %v4504
      %v4506 = vrot.slane %v4498, %v4505
      %v4508 = vunpack.c.l.s4 1983009808
      %v4509 = vunpack.c.0.s8 %v4508
      %v4510 = vlaneseq
      %v4511 = vshrl.u32 %v4510, 7
      %v4512 = vsub.s32 %v4509, %v4511
      %v4513 = vrot.slane %v4499, %v4512
      %v4514 = vcombine.low %v4506, %v4513
      %v4516 = vunpack.c.l.s4 1983009808
      %v4517 = vunpack.c.0.s8 %v4516
      %v4518 = vlaneseq
      %v4519 = vshrl.u32 %v4518, 7
      %v4520 = vsub.s32 %v4517, %v4519
      %v4521 = vrot.slane %v4149, %v4520
      %v4522 = vcombine.low %v4152, %v4155
      %v4523 = vcombine.low %v4158, %v4161
      %v4525 = vunpack.c.l.s4 1983009808
      %v4526 = vunpack.c.0.s8 %v4525
      %v4527 = vlaneseq
      %v4528 = vshrl.u32 %v4527, 7
      %v4529 = vsub.s32 %v4526, %v4528
      %v4530 = vrot.slane %v4522, %v4529
      %v4532 = vunpack.c.l.s4 1983009808
      %v4533 = vunpack.c.0.s8 %v4532
      %v4534 = vlaneseq
      %v4535 = vshrl.u32 %v4534, 7
      %v4536 = vsub.s32 %v4533, %v4535
      %v4537 = vrot.slane %v4523, %v4536
      %v4538 = vcombine.low %v4530, %v4537
      %v4539 = vcombine.low %v4164, %v4167
      %v4540 = vcombine.low %v4170, %v4173
      %v4542 = vunpack.c.l.s4 1983009808
      %v4543 = vunpack.c.0.s8 %v4542
      %v4544 = vlaneseq
      %v4545 = vshrl.u32 %v4544, 7
      %v4546 = vsub.s32 %v4543, %v4545
      %v4547 = vrot.slane %v4539, %v4546
      %v4549 = vunpack.c.l.s4 1983009808
      %v4550 = vunpack.c.0.s8 %v4549
      %v4551 = vlaneseq
      %v4552 = vshrl.u32 %v4551, 7
      %v4553 = vsub.s32 %v4550, %v4552
      %v4554 = vrot.slane %v4540, %v4553
      %v4555 = vcombine.low %v4547, %v4554
      %v4557 = vunpack.c.l.s4 1983009808
      %v4558 = vunpack.c.0.s8 %v4557
      %v4559 = vlaneseq
      %v4560 = vshrl.u32 %v4559, 7
      %v4561 = vsub.s32 %v4558, %v4560
      %v4562 = vrot.slane %v4176, %v4561
      %v4563 = vcombine.low %v4179, %v4182
      %v4564 = vcombine.low %v4185, %v4188
      %v4566 = vunpack.c.l.s4 1983009808
      %v4567 = vunpack.c.0.s8 %v4566
      %v4568 = vlaneseq
      %v4569 = vshrl.u32 %v4568, 7
      %v4570 = vsub.s32 %v4567, %v4569
      %v4571 = vrot.slane %v4563, %v4570
      %v4573 = vunpack.c.l.s4 1983009808
      %v4574 = vunpack.c.0.s8 %v4573
      %v4575 = vlaneseq
      %v4576 = vshrl.u32 %v4575, 7
      %v4577 = vsub.s32 %v4574, %v4576
      %v4578 = vrot.slane %v4564, %v4577
      %v4579 = vcombine.low %v4571, %v4578
      %v4580 = vcombine.low %v4191, %v4194
      %v4581 = vcombine.low %v4197, %v4200
      %v4583 = vunpack.c.l.s4 1983009808
      %v4584 = vunpack.c.0.s8 %v4583
      %v4585 = vlaneseq
      %v4586 = vshrl.u32 %v4585, 7
      %v4587 = vsub.s32 %v4584, %v4586
      %v4588 = vrot.slane %v4580, %v4587
      %v4590 = vunpack.c.l.s4 1983009808
      %v4591 = vunpack.c.0.s8 %v4590
      %v4592 = vlaneseq
      %v4593 = vshrl.u32 %v4592, 7
      %v4594 = vsub.s32 %v4591, %v4593
      %v4595 = vrot.slane %v4581, %v4594
      %v4596 = vcombine.low %v4588, %v4595
      %v4598 = vunpack.c.l.s4 1983009808
      %v4599 = vunpack.c.0.s8 %v4598
      %v4600 = vlaneseq
      %v4601 = vshrl.u32 %v4600, 7
      %v4602 = vsub.s32 %v4599, %v4601
      %v4603 = vrot.slane %v4203, %v4602
      %4628 = vst [vmem:[%s221 - $0x1] sm:$0xfe] %v4292
      %4629 = vst [vmem:[%s221 + $0x7] sm:$0xff] %v4309
      %4630 = vst [vmem:[%s221 + $0xf] sm:$0x1] %v4316
      %4631 = vst [vmem:[%s221 + $0xf] sm:$0xfe] %v4333
      %4632 = vst [vmem:[%s221 + $0x17] sm:$0xff] %v4350
      %4633 = vst [vmem:[%s221 + $0x1f] sm:$0x1] %v4357
      %4634 = vst [vmem:[%s221 + $0x1f] sm:$0xfe] %v4374
      %4635 = vst [vmem:[%s221 + $0x27] sm:$0xff] %v4391
      %4636 = vst [vmem:[%s221 + $0x2f] sm:$0x1] %v4398
      %4637 = vst [vmem:[%s221 + $0x2f] sm:$0xfe] %v4415
      %4638 = vst [vmem:[%s221 + $0x37] sm:$0xff] %v4432
      %4639 = vst [vmem:[%s221 + $0x3f] sm:$0x1] %v4439
      %4640 = vst [vmem:[%s221 + $0x3f] sm:$0xfe] %v4456
      %4641 = vst [vmem:[%s221 + $0x47] sm:$0xff] %v4473
      %4642 = vst [vmem:[%s221 + $0x4f] sm:$0x1] %v4480
      %4643 = vst [vmem:[%s221 + $0x4f] sm:$0xfe] %v4497
      %4644 = vst [vmem:[%s221 + $0x57] sm:$0xff] %v4514
      %4645 = vst [vmem:[%s221 + $0x5f] sm:$0x1] %v4521
      %4646 = vst [vmem:[%s221 + $0x5f] sm:$0xfe] %v4538
      %4647 = vst [vmem:[%s221 + $0x67] sm:$0xff] %v4555
      %4648 = vst [vmem:[%s221 + $0x6f] sm:$0x1] %v4562
      %4649 = vst [vmem:[%s221 + $0x6f] sm:$0xfe] %v4579
      %4650 = vst [vmem:[%s221 + $0x77] sm:$0xff] %v4596
      %4651 = vst [vmem:[%s221 + $0x7f] sm:$0x1] %v4603
      %v4652 = vrot.slane %v4292, 1
      %v4653 = vrot.slane %v4309, 1
      %v4654 = vsel %vm1593, %v4652, %v4653
      %v4655 = vrot.slane %v4316, 1
      %v4656 = vsel %vm1593, %v4653, %v4655
      %v4657 = vrot.slane %v4333, 1
      %v4658 = vrot.slane %v4350, 1
      %v4659 = vsel %vm1593, %v4657, %v4658
      %v4660 = vrot.slane %v4357, 1
      %v4661 = vsel %vm1593, %v4658, %v4660
      %v4662 = vrot.slane %v4374, 1
      %v4663 = vrot.slane %v4391, 1
      %v4664 = vsel %vm1593, %v4662, %v4663
      %v4665 = vrot.slane %v4398, 1
      %v4666 = vsel %vm1593, %v4663, %v4665
      %v4667 = vrot.slane %v4415, 1
      %v4668 = vrot.slane %v4432, 1
      %v4669 = vsel %vm1593, %v4667, %v4668
      %v4670 = vrot.slane %v4439, 1
      %v4671 = vsel %vm1593, %v4668, %v4670
      %v4672 = vrot.slane %v4456, 1
      %v4673 = vrot.slane %v4473, 1
      %v4674 = vsel %vm1593, %v4672, %v4673
      %v4675 = vrot.slane %v4480, 1
      %v4676 = vsel %vm1593, %v4673, %v4675
      %v4677 = vrot.slane %v4497, 1
      %v4678 = vrot.slane %v4514, 1
      %v4679 = vsel %vm1593, %v4677, %v4678
      %v4680 = vrot.slane %v4521, 1
      %v4681 = vsel %vm1593, %v4678, %v4680
      %v4682 = vrot.slane %v4538, 1
      %v4683 = vrot.slane %v4555, 1
      %v4684 = vsel %vm1593, %v4682, %v4683
      %v4685 = vrot.slane %v4562, 1
      %v4686 = vsel %vm1593, %v4683, %v4685
      %v4687 = vrot.slane %v4579, 1
      %v4688 = vrot.slane %v4596, 1
      %v4689 = vsel %vm1593, %v4687, %v4688
      %v4690 = vrot.slane %v4603, 1
      %v4691 = vsel %vm1593, %v4688, %v4690
      %v4708 = vadd.f32 %v4654, %v4656
      %v4709 = vadd.f32 %v4708, %v4659
      %v4710 = vadd.f32 %v4709, %v4661
      %v4711 = vadd.f32 %v4710, %v4664
      %v4712 = vadd.f32 %v4711, %v4666
      %v4713 = vadd.f32 %v4712, %v4669
      %v4714 = vadd.f32 %v4713, %v4671
      %v4715 = vadd.f32 %v4714, %v4674
      %v4716 = vadd.f32 %v4715, %v4676
      %v4717 = vadd.f32 %v4716, %v4679
      %v4718 = vadd.f32 %v4717, %v4681
      %v4719 = vadd.f32 %v4718, %v4684
      %v4720 = vadd.f32 %v4719, %v4686
      %v4721 = vadd.f32 %v4720, %v4689
      %v4722 = vadd.f32 %v4721, %v4691
      %v4723 = vrot.slane %v4722, 4
      %v4724 = vadd.f32 %v4722, %v4723
      %v4725 = vrot.slane %v4724, 2
      %v4726 = vadd.f32 %v4724, %v4725
      %v4727 = vrot.slane %v4726, 1
      %v4728 = vadd.f32 %v4726, %v4727
      %v4729 = vmul.f32 %v3990, %v3990
      %v4730 = vmul.f32 %v3993, %v3993
      %v4731 = vmul.f32 %v3996, %v3996
      %v4732 = vmul.f32 %v3999, %v3999
      %v4733 = vmul.f32 %v4002, %v4002
      %v4734 = vmul.f32 %v4005, %v4005
      %v4735 = vmul.f32 %v4008, %v4008
      %v4736 = vmul.f32 %v4011, %v4011
      %v4737 = vmul.f32 %v4014, %v4014
      %v4738 = vmul.f32 %v4017, %v4017
      %v4739 = vmul.f32 %v4020, %v4020
      %v4740 = vmul.f32 %v4023, %v4023
      %v4741 = vmul.f32 %v4026, %v4026
      %v4742 = vmul.f32 %v4029, %v4029
      %v4743 = vmul.f32 %v4032, %v4032
      %v4744 = vmul.f32 %v4035, %v4035
      %v4745 = vmul.f32 %v4038, %v4038
      %v4746 = vmul.f32 %v4041, %v4041
      %v4747 = vmul.f32 %v4044, %v4044
      %v4748 = vmul.f32 %v4047, %v4047
      %v4749 = vmul.f32 %v4050, %v4050
      %v4750 = vmul.f32 %v4053, %v4053
      %v4751 = vmul.f32 %v4056, %v4056
      %v4752 = vmul.f32 %v4059, %v4059
      %v4753 = vmul.f32 %v4062, %v4062
      %v4754 = vmul.f32 %v4065, %v4065
      %v4755 = vmul.f32 %v4068, %v4068
      %v4756 = vmul.f32 %v4071, %v4071
      %v4757 = vmul.f32 %v4074, %v4074
      %v4758 = vmul.f32 %v4077, %v4077
      %v4759 = vmul.f32 %v4080, %v4080
      %v4760 = vmul.f32 %v4083, %v4083
      %v4761 = vmul.f32 %v4086, %v4086
      %v4762 = vmul.f32 %v4089, %v4089
      %v4763 = vmul.f32 %v4092, %v4092
      %v4764 = vmul.f32 %v4095, %v4095
      %v4765 = vmul.f32 %v4098, %v4098
      %v4766 = vmul.f32 %v4101, %v4101
      %v4767 = vmul.f32 %v4104, %v4104
      %v4768 = vmul.f32 %v4107, %v4107
      %v4769 = vmul.f32 %v4110, %v4110
      %v4770 = vmul.f32 %v4113, %v4113
      %v4771 = vmul.f32 %v4116, %v4116
      %v4772 = vmul.f32 %v4119, %v4119
      %v4773 = vmul.f32 %v4122, %v4122
      %v4774 = vmul.f32 %v4125, %v4125
      %v4775 = vmul.f32 %v4128, %v4128
      %v4776 = vmul.f32 %v4131, %v4131
      %v4777 = vmul.f32 %v4134, %v4134
      %v4778 = vmul.f32 %v4137, %v4137
      %v4779 = vmul.f32 %v4140, %v4140
      %v4780 = vmul.f32 %v4143, %v4143
      %v4781 = vmul.f32 %v4146, %v4146
      %v4782 = vmul.f32 %v4149, %v4149
      %v4783 = vmul.f32 %v4152, %v4152
      %v4784 = vmul.f32 %v4155, %v4155
      %v4785 = vmul.f32 %v4158, %v4158
      %v4786 = vmul.f32 %v4161, %v4161
      %v4787 = vmul.f32 %v4164, %v4164
      %v4788 = vmul.f32 %v4167, %v4167
      %v4789 = vmul.f32 %v4170, %v4170
      %v4790 = vmul.f32 %v4173, %v4173
      %v4791 = vmul.f32 %v4176, %v4176
      %v4792 = vmul.f32 %v4179, %v4179
      %v4793 = vmul.f32 %v4182, %v4182
      %v4794 = vmul.f32 %v4185, %v4185
      %v4795 = vmul.f32 %v4188, %v4188
      %v4796 = vmul.f32 %v4191, %v4191
      %v4797 = vmul.f32 %v4194, %v4194
      %v4798 = vmul.f32 %v4197, %v4197
      %v4799 = vmul.f32 %v4200, %v4200
      %v4800 = vmul.f32 %v4203, %v4203
      %v4873 = vcombine.low %v4729, %v4730
      %v4874 = vcombine.low %v4731, %v4732
      %v4876 = vunpack.c.l.s4 1983009808
      %v4877 = vunpack.c.0.s8 %v4876
      %v4878 = vlaneseq
      %v4879 = vshrl.u32 %v4878, 7
      %v4880 = vsub.s32 %v4877, %v4879
      %v4881 = vrot.slane %v4873, %v4880
      %v4883 = vunpack.c.l.s4 1983009808
      %v4884 = vunpack.c.0.s8 %v4883
      %v4885 = vlaneseq
      %v4886 = vshrl.u32 %v4885, 7
      %v4887 = vsub.s32 %v4884, %v4886
      %v4888 = vrot.slane %v4874, %v4887
      %v4889 = vcombine.low %v4881, %v4888
      %v4890 = vcombine.low %v4733, %v4734
      %v4891 = vcombine.low %v4735, %v4736
      %v4893 = vunpack.c.l.s4 1983009808
      %v4894 = vunpack.c.0.s8 %v4893
      %v4895 = vlaneseq
      %v4896 = vshrl.u32 %v4895, 7
      %v4897 = vsub.s32 %v4894, %v4896
      %v4898 = vrot.slane %v4890, %v4897
      %v4900 = vunpack.c.l.s4 1983009808
      %v4901 = vunpack.c.0.s8 %v4900
      %v4902 = vlaneseq
      %v4903 = vshrl.u32 %v4902, 7
      %v4904 = vsub.s32 %v4901, %v4903
      %v4905 = vrot.slane %v4891, %v4904
      %v4906 = vcombine.low %v4898, %v4905
      %v4908 = vunpack.c.l.s4 1983009808
      %v4909 = vunpack.c.0.s8 %v4908
      %v4910 = vlaneseq
      %v4911 = vshrl.u32 %v4910, 7
      %v4912 = vsub.s32 %v4909, %v4911
      %v4913 = vrot.slane %v4737, %v4912
      %v4914 = vcombine.low %v4738, %v4739
      %v4915 = vcombine.low %v4740, %v4741
      %v4917 = vunpack.c.l.s4 1983009808
      %v4918 = vunpack.c.0.s8 %v4917
      %v4919 = vlaneseq
      %v4920 = vshrl.u32 %v4919, 7
      %v4921 = vsub.s32 %v4918, %v4920
      %v4922 = vrot.slane %v4914, %v4921
      %v4924 = vunpack.c.l.s4 1983009808
      %v4925 = vunpack.c.0.s8 %v4924
      %v4926 = vlaneseq
      %v4927 = vshrl.u32 %v4926, 7
      %v4928 = vsub.s32 %v4925, %v4927
      %v4929 = vrot.slane %v4915, %v4928
      %v4930 = vcombine.low %v4922, %v4929
      %v4931 = vcombine.low %v4742, %v4743
      %v4932 = vcombine.low %v4744, %v4745
      %v4934 = vunpack.c.l.s4 1983009808
      %v4935 = vunpack.c.0.s8 %v4934
      %v4936 = vlaneseq
      %v4937 = vshrl.u32 %v4936, 7
      %v4938 = vsub.s32 %v4935, %v4937
      %v4939 = vrot.slane %v4931, %v4938
      %v4941 = vunpack.c.l.s4 1983009808
      %v4942 = vunpack.c.0.s8 %v4941
      %v4943 = vlaneseq
      %v4944 = vshrl.u32 %v4943, 7
      %v4945 = vsub.s32 %v4942, %v4944
      %v4946 = vrot.slane %v4932, %v4945
      %v4947 = vcombine.low %v4939, %v4946
      %v4949 = vunpack.c.l.s4 1983009808
      %v4950 = vunpack.c.0.s8 %v4949
      %v4951 = vlaneseq
      %v4952 = vshrl.u32 %v4951, 7
      %v4953 = vsub.s32 %v4950, %v4952
      %v4954 = vrot.slane %v4746, %v4953
      %v4955 = vcombine.low %v4747, %v4748
      %v4956 = vcombine.low %v4749, %v4750
      %v4958 = vunpack.c.l.s4 1983009808
      %v4959 = vunpack.c.0.s8 %v4958
      %v4960 = vlaneseq
      %v4961 = vshrl.u32 %v4960, 7
      %v4962 = vsub.s32 %v4959, %v4961
      %v4963 = vrot.slane %v4955, %v4962
      %v4965 = vunpack.c.l.s4 1983009808
      %v4966 = vunpack.c.0.s8 %v4965
      %v4967 = vlaneseq
      %v4968 = vshrl.u32 %v4967, 7
      %v4969 = vsub.s32 %v4966, %v4968
      %v4970 = vrot.slane %v4956, %v4969
      %v4971 = vcombine.low %v4963, %v4970
      %v4972 = vcombine.low %v4751, %v4752
      %v4973 = vcombine.low %v4753, %v4754
      %v4975 = vunpack.c.l.s4 1983009808
      %v4976 = vunpack.c.0.s8 %v4975
      %v4977 = vlaneseq
      %v4978 = vshrl.u32 %v4977, 7
      %v4979 = vsub.s32 %v4976, %v4978
      %v4980 = vrot.slane %v4972, %v4979
      %v4982 = vunpack.c.l.s4 1983009808
      %v4983 = vunpack.c.0.s8 %v4982
      %v4984 = vlaneseq
      %v4985 = vshrl.u32 %v4984, 7
      %v4986 = vsub.s32 %v4983, %v4985
      %v4987 = vrot.slane %v4973, %v4986
      %v4988 = vcombine.low %v4980, %v4987
      %v4990 = vunpack.c.l.s4 1983009808
      %v4991 = vunpack.c.0.s8 %v4990
      %v4992 = vlaneseq
      %v4993 = vshrl.u32 %v4992, 7
      %v4994 = vsub.s32 %v4991, %v4993
      %v4995 = vrot.slane %v4755, %v4994
      %v4996 = vcombine.low %v4756, %v4757
      %v4997 = vcombine.low %v4758, %v4759
      %v4999 = vunpack.c.l.s4 1983009808
      %v5000 = vunpack.c.0.s8 %v4999
      %v5001 = vlaneseq
      %v5002 = vshrl.u32 %v5001, 7
      %v5003 = vsub.s32 %v5000, %v5002
      %v5004 = vrot.slane %v4996, %v5003
      %v5006 = vunpack.c.l.s4 1983009808
      %v5007 = vunpack.c.0.s8 %v5006
      %v5008 = vlaneseq
      %v5009 = vshrl.u32 %v5008, 7
      %v5010 = vsub.s32 %v5007, %v5009
      %v5011 = vrot.slane %v4997, %v5010
      %v5012 = vcombine.low %v5004, %v5011
      %v5013 = vcombine.low %v4760, %v4761
      %v5014 = vcombine.low %v4762, %v4763
      %v5016 = vunpack.c.l.s4 1983009808
      %v5017 = vunpack.c.0.s8 %v5016
      %v5018 = vlaneseq
      %v5019 = vshrl.u32 %v5018, 7
      %v5020 = vsub.s32 %v5017, %v5019
      %v5021 = vrot.slane %v5013, %v5020
      %v5023 = vunpack.c.l.s4 1983009808
      %v5024 = vunpack.c.0.s8 %v5023
      %v5025 = vlaneseq
      %v5026 = vshrl.u32 %v5025, 7
      %v5027 = vsub.s32 %v5024, %v5026
      %v5028 = vrot.slane %v5014, %v5027
      %v5029 = vcombine.low %v5021, %v5028
      %v5031 = vunpack.c.l.s4 1983009808
      %v5032 = vunpack.c.0.s8 %v5031
      %v5033 = vlaneseq
      %v5034 = vshrl.u32 %v5033, 7
      %v5035 = vsub.s32 %v5032, %v5034
      %v5036 = vrot.slane %v4764, %v5035
      %v5037 = vcombine.low %v4765, %v4766
      %v5038 = vcombine.low %v4767, %v4768
      %v5040 = vunpack.c.l.s4 1983009808
      %v5041 = vunpack.c.0.s8 %v5040
      %v5042 = vlaneseq
      %v5043 = vshrl.u32 %v5042, 7
      %v5044 = vsub.s32 %v5041, %v5043
      %v5045 = vrot.slane %v5037, %v5044
      %v5047 = vunpack.c.l.s4 1983009808
      %v5048 = vunpack.c.0.s8 %v5047
      %v5049 = vlaneseq
      %v5050 = vshrl.u32 %v5049, 7
      %v5051 = vsub.s32 %v5048, %v5050
      %v5052 = vrot.slane %v5038, %v5051
      %v5053 = vcombine.low %v5045, %v5052
      %v5054 = vcombine.low %v4769, %v4770
      %v5055 = vcombine.low %v4771, %v4772
      %v5057 = vunpack.c.l.s4 1983009808
      %v5058 = vunpack.c.0.s8 %v5057
      %v5059 = vlaneseq
      %v5060 = vshrl.u32 %v5059, 7
      %v5061 = vsub.s32 %v5058, %v5060
      %v5062 = vrot.slane %v5054, %v5061
      %v5064 = vunpack.c.l.s4 1983009808
      %v5065 = vunpack.c.0.s8 %v5064
      %v5066 = vlaneseq
      %v5067 = vshrl.u32 %v5066, 7
      %v5068 = vsub.s32 %v5065, %v5067
      %v5069 = vrot.slane %v5055, %v5068
      %v5070 = vcombine.low %v5062, %v5069
      %v5072 = vunpack.c.l.s4 1983009808
      %v5073 = vunpack.c.0.s8 %v5072
      %v5074 = vlaneseq
      %v5075 = vshrl.u32 %v5074, 7
      %v5076 = vsub.s32 %v5073, %v5075
      %v5077 = vrot.slane %v4773, %v5076
      %v5078 = vcombine.low %v4774, %v4775
      %v5079 = vcombine.low %v4776, %v4777
      %v5081 = vunpack.c.l.s4 1983009808
      %v5082 = vunpack.c.0.s8 %v5081
      %v5083 = vlaneseq
      %v5084 = vshrl.u32 %v5083, 7
      %v5085 = vsub.s32 %v5082, %v5084
      %v5086 = vrot.slane %v5078, %v5085
      %v5088 = vunpack.c.l.s4 1983009808
      %v5089 = vunpack.c.0.s8 %v5088
      %v5090 = vlaneseq
      %v5091 = vshrl.u32 %v5090, 7
      %v5092 = vsub.s32 %v5089, %v5091
      %v5093 = vrot.slane %v5079, %v5092
      %v5094 = vcombine.low %v5086, %v5093
      %v5095 = vcombine.low %v4778, %v4779
      %v5096 = vcombine.low %v4780, %v4781
      %v5098 = vunpack.c.l.s4 1983009808
      %v5099 = vunpack.c.0.s8 %v5098
      %v5100 = vlaneseq
      %v5101 = vshrl.u32 %v5100, 7
      %v5102 = vsub.s32 %v5099, %v5101
      %v5103 = vrot.slane %v5095, %v5102
      %v5105 = vunpack.c.l.s4 1983009808
      %v5106 = vunpack.c.0.s8 %v5105
      %v5107 = vlaneseq
      %v5108 = vshrl.u32 %v5107, 7
      %v5109 = vsub.s32 %v5106, %v5108
      %v5110 = vrot.slane %v5096, %v5109
      %v5111 = vcombine.low %v5103, %v5110
      %v5113 = vunpack.c.l.s4 1983009808
      %v5114 = vunpack.c.0.s8 %v5113
      %v5115 = vlaneseq
      %v5116 = vshrl.u32 %v5115, 7
      %v5117 = vsub.s32 %v5114, %v5116
      %v5118 = vrot.slane %v4782, %v5117
      %v5119 = vcombine.low %v4783, %v4784
      %v5120 = vcombine.low %v4785, %v4786
      %v5122 = vunpack.c.l.s4 1983009808
      %v5123 = vunpack.c.0.s8 %v5122
      %v5124 = vlaneseq
      %v5125 = vshrl.u32 %v5124, 7
      %v5126 = vsub.s32 %v5123, %v5125
      %v5127 = vrot.slane %v5119, %v5126
      %v5129 = vunpack.c.l.s4 1983009808
      %v5130 = vunpack.c.0.s8 %v5129
      %v5131 = vlaneseq
      %v5132 = vshrl.u32 %v5131, 7
      %v5133 = vsub.s32 %v5130, %v5132
      %v5134 = vrot.slane %v5120, %v5133
      %v5135 = vcombine.low %v5127, %v5134
      %v5136 = vcombine.low %v4787, %v4788
      %v5137 = vcombine.low %v4789, %v4790
      %v5139 = vunpack.c.l.s4 1983009808
      %v5140 = vunpack.c.0.s8 %v5139
      %v5141 = vlaneseq
      %v5142 = vshrl.u32 %v5141, 7
      %v5143 = vsub.s32 %v5140, %v5142
      %v5144 = vrot.slane %v5136, %v5143
      %v5146 = vunpack.c.l.s4 1983009808
      %v5147 = vunpack.c.0.s8 %v5146
      %v5148 = vlaneseq
      %v5149 = vshrl.u32 %v5148, 7
      %v5150 = vsub.s32 %v5147, %v5149
      %v5151 = vrot.slane %v5137, %v5150
      %v5152 = vcombine.low %v5144, %v5151
      %v5154 = vunpack.c.l.s4 1983009808
      %v5155 = vunpack.c.0.s8 %v5154
      %v5156 = vlaneseq
      %v5157 = vshrl.u32 %v5156, 7
      %v5158 = vsub.s32 %v5155, %v5157
      %v5159 = vrot.slane %v4791, %v5158
      %v5160 = vcombine.low %v4792, %v4793
      %v5161 = vcombine.low %v4794, %v4795
      %v5163 = vunpack.c.l.s4 1983009808
      %v5164 = vunpack.c.0.s8 %v5163
      %v5165 = vlaneseq
      %v5166 = vshrl.u32 %v5165, 7
      %v5167 = vsub.s32 %v5164, %v5166
      %v5168 = vrot.slane %v5160, %v5167
      %v5170 = vunpack.c.l.s4 1983009808
      %v5171 = vunpack.c.0.s8 %v5170
      %v5172 = vlaneseq
      %v5173 = vshrl.u32 %v5172, 7
      %v5174 = vsub.s32 %v5171, %v5173
      %v5175 = vrot.slane %v5161, %v5174
      %v5176 = vcombine.low %v5168, %v5175
      %v5177 = vcombine.low %v4796, %v4797
      %v5178 = vcombine.low %v4798, %v4799
      %v5180 = vunpack.c.l.s4 1983009808
      %v5181 = vunpack.c.0.s8 %v5180
      %v5182 = vlaneseq
      %v5183 = vshrl.u32 %v5182, 7
      %v5184 = vsub.s32 %v5181, %v5183
      %v5185 = vrot.slane %v5177, %v5184
      %v5187 = vunpack.c.l.s4 1983009808
      %v5188 = vunpack.c.0.s8 %v5187
      %v5189 = vlaneseq
      %v5190 = vshrl.u32 %v5189, 7
      %v5191 = vsub.s32 %v5188, %v5190
      %v5192 = vrot.slane %v5178, %v5191
      %v5193 = vcombine.low %v5185, %v5192
      %v5195 = vunpack.c.l.s4 1983009808
      %v5196 = vunpack.c.0.s8 %v5195
      %v5197 = vlaneseq
      %v5198 = vshrl.u32 %v5197, 7
      %v5199 = vsub.s32 %v5196, %v5198
      %v5200 = vrot.slane %v4800, %v5199
      %v5201 = vrot.slane %v4889, 1
      %v5202 = vrot.slane %v4906, 1
      %v5203 = vsel %vm1593, %v5201, %v5202
      %v5204 = vrot.slane %v4913, 1
      %v5205 = vsel %vm1593, %v5202, %v5204
      %v5206 = vrot.slane %v4930, 1
      %v5207 = vrot.slane %v4947, 1
      %v5208 = vsel %vm1593, %v5206, %v5207
      %v5209 = vrot.slane %v4954, 1
      %v5210 = vsel %vm1593, %v5207, %v5209
      %v5211 = vrot.slane %v4971, 1
      %v5212 = vrot.slane %v4988, 1
      %v5213 = vsel %vm1593, %v5211, %v5212
      %v5214 = vrot.slane %v4995, 1
      %v5215 = vsel %vm1593, %v5212, %v5214
      %v5216 = vrot.slane %v5012, 1
      %v5217 = vrot.slane %v5029, 1
      %v5218 = vsel %vm1593, %v5216, %v5217
      %v5219 = vrot.slane %v5036, 1
      %v5220 = vsel %vm1593, %v5217, %v5219
      %v5221 = vrot.slane %v5053, 1
      %v5222 = vrot.slane %v5070, 1
      %v5223 = vsel %vm1593, %v5221, %v5222
      %v5224 = vrot.slane %v5077, 1
      %v5225 = vsel %vm1593, %v5222, %v5224
      %v5226 = vrot.slane %v5094, 1
      %v5227 = vrot.slane %v5111, 1
      %v5228 = vsel %vm1593, %v5226, %v5227
      %v5229 = vrot.slane %v5118, 1
      %v5230 = vsel %vm1593, %v5227, %v5229
      %v5231 = vrot.slane %v5135, 1
      %v5232 = vrot.slane %v5152, 1
      %v5233 = vsel %vm1593, %v5231, %v5232
      %v5234 = vrot.slane %v5159, 1
      %v5235 = vsel %vm1593, %v5232, %v5234
      %v5236 = vrot.slane %v5176, 1
      %v5237 = vrot.slane %v5193, 1
      %v5238 = vsel %vm1593, %v5236, %v5237
      %v5239 = vrot.slane %v5200, 1
      %v5240 = vsel %vm1593, %v5237, %v5239
      %v5257 = vadd.f32 %v5203, %v5205
      %v5258 = vadd.f32 %v5257, %v5208
      %v5259 = vadd.f32 %v5258, %v5210
      %v5260 = vadd.f32 %v5259, %v5213
      %v5261 = vadd.f32 %v5260, %v5215
      %v5262 = vadd.f32 %v5261, %v5218
      %v5263 = vadd.f32 %v5262, %v5220
      %v5264 = vadd.f32 %v5263, %v5223
      %v5265 = vadd.f32 %v5264, %v5225
      %v5266 = vadd.f32 %v5265, %v5228
      %v5267 = vadd.f32 %v5266, %v5230
      %v5268 = vadd.f32 %v5267, %v5233
      %v5269 = vadd.f32 %v5268, %v5235
      %v5270 = vadd.f32 %v5269, %v5238
      %v5271 = vadd.f32 %v5270, %v5240
      %v5272 = vrot.slane %v5271, 4
      %v5273 = vadd.f32 %v5271, %v5272
      %v5274 = vrot.slane %v5273, 2
      %v5275 = vadd.f32 %v5273, %v5274
      %v5276 = vrot.slane %v5275, 1
      %v5277 = vadd.f32 %v5275, %v5276
      %v5278 = vsel %vm2551, %v4728, %v5277
      %5279 = vst [vmem:[%s230] sm:$0x3] %v5278
      %s5280 = smul.u32 8, %s20
      %p5281 = scmp.lt.s32.totalorder %s19, 1
      %s5282 = scalar_select %p5281, %s19, 1
      %p5283 = scmp.lt.s32.totalorder %s5280, 15
      %s5284 = scalar_select %p5283, %s5280, 15
      %s5285 = smul.addr %s5284, 2
      %s5286 = smul.addr %s5282, 32
      %s5287 = sadd.s32 %s5285, %s5286
      %s5288 = smul.addr %s5287, 8
      %s5289 = scalar_lea.vmem %s2, %s5288
      %p5290 = scmp.lt.s32.totalorder %s19, 1
      %s5291 = scalar_select %p5290, %s19, 1
      %p5292 = scmp.lt.s32.totalorder %s20, 1
      %s5293 = scalar_select %p5292, %s20, 1
      %s5294 = smul.addr %s5291, 2
      %s5295 = sadd.s32 %s5293, %s5294
      %s5296 = smul.addr %s5295, 2
      %s5297 = scalar_lea.vmem %s3, %s5296
      // Predicated region
      $region29: #{resnet_block_standard.3} parent=27 // pred_check
        %p5298 = pneg %p96
      $region30: #{resnet_block_standard.3} parent=27 // pred_check_branch
        %5300 = sbr.rel (%p5298) target = $region32
      $region31: #{resnet_block_standard.3} parent=27 // pred_region
        %s5301 = smul.u32 8, %s20
      $region32: #{resnet_block_standard.3} parent=27 // pred_fallthru
        _
      // Predicated region
      $region33: #{resnet_block_standard.3} parent=27 // pred_check
        %p5302 = pneg %p124
      $region34: #{resnet_block_standard.3} parent=27 // pred_check_branch
        %5304 = sbr.rel (%p5302) target = $region36
      $region35: #{resnet_block_standard.3} parent=27 // pred_region
        _
      $region36: #{resnet_block_standard.3} parent=27 // pred_fallthru
        _
    $region28: #{resnet_block_standard.3} parent=5 // pred_fallthru
      _
    %p5305 = scmp.le.s32.totalorder 2, %s10
    // Predicated region
    $region37: #{resnet_block_standard.3} parent=5 // pred_check
      %p5306 = pneg %p5305
    $region38: #{resnet_block_standard.3} parent=5 // pred_check_branch
      %5308 = sbr.rel (%p5306) target = $region40
    $region39: #{resnet_block_standard.3} parent=5 // pred_region
      %s5309 = ssub.s32 %s10, 2
      // Predicated region
      $region41: #{resnet_block_standard.3} parent=39 // pred_check
        %p5310 = pneg %p102
      $region42: #{resnet_block_standard.3} parent=39 // pred_check_branch
        %5312 = sbr.rel (%p5310) target = $region44
      $region43: #{resnet_block_standard.3} parent=39 // pred_region
        %s5313 = smul.u32 8, %s22
        %p5314 = scmp.lt.s32.totalorder %s21, 1
        %s5315 = scalar_select %p5314, %s21, 1
        %p5316 = scmp.lt.s32.totalorder %s5313, 15
        %s5317 = scalar_select %p5316, %s5313, 15
        %s5318 = smul.addr %s5317, 2
        %s5319 = smul.addr %s5315, 32
        %s5320 = sadd.s32 %s5318, %s5319
        %s5321 = smul.addr %s5320, 8
        %s5322 = scalar_lea.vmem %s2, %s5321
      $region44: #{resnet_block_standard.3} parent=39 // pred_fallthru
        _
      // Predicated region
      $region45: #{resnet_block_standard.3} parent=39 // pred_check
        %p5323 = pneg %p130
      $region46: #{resnet_block_standard.3} parent=39 // pred_check_branch
        %5325 = sbr.rel (%p5323) target = $region48
      $region47: #{resnet_block_standard.3} parent=39 // pred_region
        %p5326 = scmp.lt.s32.totalorder %s21, 1
        %s5327 = scalar_select %p5326, %s21, 1
        %p5328 = scmp.lt.s32.totalorder %s22, 1
        %s5329 = scalar_select %p5328, %s22, 1
        %s5330 = smul.addr %s5327, 2
        %s5331 = sadd.s32 %s5329, %s5330
        %s5332 = smul.addr %s5331, 2
        %s5333 = scalar_lea.vmem %s3, %s5332
      $region48: #{resnet_block_standard.3} parent=39 // pred_fallthru
        _
    $region40: #{resnet_block_standard.3} parent=5 // pred_fallthru
      _
  $region6: #{resnet_block_standard.3} parent=0 // loop_footer
    %s14 = sadd.s32 1, %s10
  $region7: #{resnet_block_standard.3} parent=0 // loop_footer_branch
    %9 = sbr.rel target = $region3
  $region8: #{resnet_block_standard.3} parent=0 // loop_exit
    _

// kernel: resnet_block_standard.4
$region0: #{resnet_block_standard.4}
  #allocation0 [shape = 'u32[]', space=smem, size = 0x4, offset = 0x4, fixed_abs, tag = 'smem constant byte address 0x4 - core index']
  #allocation1 [shape = 'u32[144,128]{1,0:T(1,128)}', space=vmem, size = 0x12000, scoped, tag = 'internal scratch']
  %s0 = inlined_call_operand.vmem [shape: f32[2,2,10,18,128], index: 0, kind: input, shape index: {}]
  %s1 = inlined_call_operand.vmem [shape: f32[1,1,128], index: 1, kind: input, shape index: {}]
  %s2 = inlined_call_operand.vmem [shape: f32[1,1,128], index: 2, kind: input, shape index: {}]
  %s3 = inlined_call_operand.vmem [shape: f32[9,128,128], index: 3, kind: input, shape index: {}]
  %s4 = inlined_call_operand.vmem [shape: f32[2,16,16,128], index: 4, kind: output, shape index: {0}]
  %s5 = inlined_call_operand.vmem [shape: f32[2,2,2,128], index: 5, kind: output, shape index: {1}]
  %6 = xla_tuple %s4, %s5
  %s7 = sld [smem:[#allocation0]]
  $region57: #{resnet_block_standard.4} parent=0
    _
  %s9 = ssub.s32 1, %s7
  %s10 = scalar_select 0, %s9, %s7
  loop: start=0, step=1, limit=6
  $region2: #{resnet_block_standard.4} parent=0 // loop_pre_header
    _
  $region3: #{resnet_block_standard.4} parent=0 // loop_header
    %s12 = sphi 0, %s16
    %p13 = scmp.ge.s32.totalorder %s12, 6
    %s19 = sphi 0, %s31
    %s20 = sphi 0, %s27
    %s21 = sphi 0, %s19
    %s22 = sphi 0, %s20
    %s23 = sphi 0, %s21
    %s24 = sphi 0, %s22
    %s36 = sphi 0, %s38
    %s39 = sphi 0, %s36
    %s40 = sphi 0, %s39
    %s56 = sphi 0, %s40
    %s60 = sphi 0, %s60
    %s62 = sphi 0, %s60
    %s63 = sphi 0, %s62
    %s77 = sphi 0, %s63
    %s81 = sphi 0, %s81
    %s83 = sphi 0, %s81
    %s84 = sphi 0, %s83
    %s98 = sphi 0, %s84
    %s102 = sphi 0, %s102
    %s104 = sphi 0, %s102
    %s105 = sphi 0, %s104
    %s119 = sphi 0, %s105
    %s127 = sphi 0, %s129
    %s130 = sphi 0, %s127
    %s131 = sphi 0, %s130
    %s147 = sphi 0, %s131
    %s155 = sphi 0, %s157
    %s158 = sphi 0, %s155
    %s159 = sphi 0, %s158
    %s175 = sphi 0, %s159
  $region4: #{resnet_block_standard.4} parent=0 // loop_header_branch
    %15 = sbr.rel (%p13) target = $region8
  $region5: #{resnet_block_standard.4} parent=0 // loop_body
    %s17 = ssub.s32 %s12, 1
    %s18 = ssub.s32 %s12, 2
    %s25 = sadd.s32 1, %s20
    %p26 = scmp.ge.s32.totalorder %s25, 2
    %s27 = scalar_select %p26, 0, %s25
    %s28 = sadd.s32 1, %s19
    %s29 = scalar_select %p26, %s28, %s19
    %p30 = scmp.ge.s32.totalorder %s29, 2
    %s31 = scalar_select %p30, 0, %s29
    %s32 = ssub.s32 %s19, %s31
    %s33 = ssub.s32 %s20, %s27
    %s34 = sor.u32 %s32, %s33
    %p35 = scmp.eq.s32.totalorder %s34, 0
    %s37 = sadd.s32 %s36, 1
    %s38 = scalar_select %p35, %s36, %s37
    %p41 = pneg %p35
    %p42 = scmp.eq.s32.totalorder %s12, 3
    %p43 = por %p41, %p42
    %p44 = scmp.ne.s32.totalorder %s36, %s39
    %p45 = scmp.eq.s32.totalorder %s12, 0
    %p46 = por %p44, %p45
    %p47 = scmp.ne.s32.totalorder %s36, %s39
    %p48 = scmp.eq.s32.totalorder %s17, 3
    %p49 = por %p47, %p48
    %p50 = scmp.ne.s32.totalorder %s39, %s40
    %p51 = scmp.eq.s32.totalorder %s17, 0
    %p52 = por %p50, %p51
    %p53 = scmp.ne.s32.totalorder %s39, %s40
    %p54 = scmp.eq.s32.totalorder %s18, 3
    %p55 = por %p53, %p54
    %p57 = scmp.ne.s32.totalorder %s40, %s56
    %p58 = scmp.eq.s32.totalorder %s18, 0
    %p59 = por %p57, %p58
    %s61 = sadd.s32 %s60, 1
    %p64 = scmp.eq.s32.totalorder %s12, 3
    %p65 = scmp.ne.s32.totalorder %s60, %s62
    %p66 = scmp.eq.s32.totalorder %s12, 0
    %p67 = por %p65, %p66
    %p68 = scmp.ne.s32.totalorder %s60, %s62
    %p69 = scmp.eq.s32.totalorder %s17, 3
    %p70 = por %p68, %p69
    %p71 = scmp.ne.s32.totalorder %s62, %s63
    %p72 = scmp.eq.s32.totalorder %s17, 0
    %p73 = por %p71, %p72
    %p74 = scmp.ne.s32.totalorder %s62, %s63
    %p75 = scmp.eq.s32.totalorder %s18, 3
    %p76 = por %p74, %p75
    %p78 = scmp.ne.s32.totalorder %s63, %s77
    %p79 = scmp.eq.s32.totalorder %s18, 0
    %p80 = por %p78, %p79
    %s82 = sadd.s32 %s81, 1
    %p85 = scmp.eq.s32.totalorder %s12, 3
    %p86 = scmp.ne.s32.totalorder %s81, %s83
    %p87 = scmp.eq.s32.totalorder %s12, 0
    %p88 = por %p86, %p87
    %p89 = scmp.ne.s32.totalorder %s81, %s83
    %p90 = scmp.eq.s32.totalorder %s17, 3
    %p91 = por %p89, %p90
    %p92 = scmp.ne.s32.totalorder %s83, %s84
    %p93 = scmp.eq.s32.totalorder %s17, 0
    %p94 = por %p92, %p93
    %p95 = scmp.ne.s32.totalorder %s83, %s84
    %p96 = scmp.eq.s32.totalorder %s18, 3
    %p97 = por %p95, %p96
    %p99 = scmp.ne.s32.totalorder %s84, %s98
    %p100 = scmp.eq.s32.totalorder %s18, 0
    %p101 = por %p99, %p100
    %s103 = sadd.s32 %s102, 1
    %p106 = scmp.eq.s32.totalorder %s12, 3
    %p107 = scmp.ne.s32.totalorder %s102, %s104
    %p108 = scmp.eq.s32.totalorder %s12, 0
    %p109 = por %p107, %p108
    %p110 = scmp.ne.s32.totalorder %s102, %s104
    %p111 = scmp.eq.s32.totalorder %s17, 3
    %p112 = por %p110, %p111
    %p113 = scmp.ne.s32.totalorder %s104, %s105
    %p114 = scmp.eq.s32.totalorder %s17, 0
    %p115 = por %p113, %p114
    %p116 = scmp.ne.s32.totalorder %s104, %s105
    %p117 = scmp.eq.s32.totalorder %s18, 3
    %p118 = por %p116, %p117
    %p120 = scmp.ne.s32.totalorder %s105, %s119
    %p121 = scmp.eq.s32.totalorder %s18, 0
    %p122 = por %p120, %p121
    %s123 = ssub.s32 %s19, %s31
    %s124 = ssub.s32 %s20, %s27
    %s125 = sor.u32 %s123, %s124
    %p126 = scmp.eq.s32.totalorder %s125, 0
    %s128 = sadd.s32 %s127, 1
    %s129 = scalar_select %p126, %s127, %s128
    %p132 = pneg %p126
    %p133 = scmp.eq.s32.totalorder %s12, 3
    %p134 = por %p132, %p133
    %p135 = scmp.ne.s32.totalorder %s127, %s130
    %p136 = scmp.eq.s32.totalorder %s12, 0
    %p137 = por %p135, %p136
    %p138 = scmp.ne.s32.totalorder %s127, %s130
    %p139 = scmp.eq.s32.totalorder %s17, 3
    %p140 = por %p138, %p139
    %p141 = scmp.ne.s32.totalorder %s130, %s131
    %p142 = scmp.eq.s32.totalorder %s17, 0
    %p143 = por %p141, %p142
    %p144 = scmp.ne.s32.totalorder %s130, %s131
    %p145 = scmp.eq.s32.totalorder %s18, 3
    %p146 = por %p144, %p145
    %p148 = scmp.ne.s32.totalorder %s131, %s147
    %p149 = scmp.eq.s32.totalorder %s18, 0
    %p150 = por %p148, %p149
    %s151 = ssub.s32 %s19, %s31
    %s152 = ssub.s32 %s20, %s27
    %s153 = sor.u32 %s151, %s152
    %p154 = scmp.eq.s32.totalorder %s153, 0
    %s156 = sadd.s32 %s155, 1
    %s157 = scalar_select %p154, %s155, %s156
    %p160 = pneg %p154
    %p161 = scmp.eq.s32.totalorder %s12, 3
    %p162 = por %p160, %p161
    %p163 = scmp.ne.s32.totalorder %s155, %s158
    %p164 = scmp.eq.s32.totalorder %s12, 0
    %p165 = por %p163, %p164
    %p166 = scmp.ne.s32.totalorder %s155, %s158
    %p167 = scmp.eq.s32.totalorder %s17, 3
    %p168 = por %p166, %p167
    %p169 = scmp.ne.s32.totalorder %s158, %s159
    %p170 = scmp.eq.s32.totalorder %s17, 0
    %p171 = por %p169, %p170
    %p172 = scmp.ne.s32.totalorder %s158, %s159
    %p173 = scmp.eq.s32.totalorder %s18, 3
    %p174 = por %p172, %p173
    %p176 = scmp.ne.s32.totalorder %s159, %s175
    %p177 = scmp.eq.s32.totalorder %s18, 0
    %p178 = por %p176, %p177
    %p179 = scmp.le.s32.totalorder 1, %s12
    %p180 = scmp.lt.s32.totalorder %s12, 5
    %p181 = pnand %p179, %p180
    %p182 = pneg %p181
    // Predicated region
    $region9: #{resnet_block_standard.4} parent=5 // pred_check
      _
    $region10: #{resnet_block_standard.4} parent=5 // pred_check_branch
      %184 = sbr.rel (%p181) target = $region12
    $region11: #{resnet_block_standard.4} parent=5 // pred_region
      %s185 = ssub.s32 %s12, 1
      // Predicated region
      $region13: #{resnet_block_standard.4} parent=11 // pred_check
        %p186 = pneg %p73
      $region14: #{resnet_block_standard.4} parent=11 // pred_check_branch
        %188 = sbr.rel (%p186) target = $region16
      $region15: #{resnet_block_standard.4} parent=11 // pred_region
        _
      $region16: #{resnet_block_standard.4} parent=11 // pred_fallthru
        _
      // Predicated region
      $region17: #{resnet_block_standard.4} parent=11 // pred_check
        %p189 = pneg %p94
      $region18: #{resnet_block_standard.4} parent=11 // pred_check_branch
        %191 = sbr.rel (%p189) target = $region20
      $region19: #{resnet_block_standard.4} parent=11 // pred_region
        _
      $region20: #{resnet_block_standard.4} parent=11 // pred_fallthru
        _
      // Predicated region
      $region21: #{resnet_block_standard.4} parent=11 // pred_check
        %p192 = pneg %p115
      $region22: #{resnet_block_standard.4} parent=11 // pred_check_branch
        %194 = sbr.rel (%p192) target = $region24
      $region23: #{resnet_block_standard.4} parent=11 // pred_region
        _
      $region24: #{resnet_block_standard.4} parent=11 // pred_fallthru
        _
    $region12: #{resnet_block_standard.4} parent=5 // pred_fallthru
      _
    %p195 = scmp.lt.s32.totalorder %s12, 4
    // Predicated region
    $region25: #{resnet_block_standard.4} parent=5 // pred_check
      %p196 = pneg %p195
    $region26: #{resnet_block_standard.4} parent=5 // pred_check_branch
      %198 = sbr.rel (%p196) target = $region28
    $region27: #{resnet_block_standard.4} parent=5 // pred_region
      // Predicated region
      $region29: #{resnet_block_standard.4} parent=27 // pred_check
        %p199 = pneg %p46
      $region30: #{resnet_block_standard.4} parent=27 // pred_check_branch
        %201 = sbr.rel (%p199) target = $region32
      $region31: #{resnet_block_standard.4} parent=27 // pred_region
        %p202 = scmp.lt.s32.totalorder %s19, 1
        %s203 = scalar_select %p202, %s19, 1
        %p204 = scmp.lt.s32.totalorder %s20, 1
        %s205 = scalar_select %p204, %s20, 1
        %s206 = smul.addr %s205, 30
        %s207 = smul.addr %s203, 60
        %s208 = sadd.s32 %s206, %s207
        %s209 = smul.addr %s208, 8
        %s210 = scalar_lea.vmem %s0, %s209
      $region32: #{resnet_block_standard.4} parent=27 // pred_fallthru
        _
    $region28: #{resnet_block_standard.4} parent=5 // pred_fallthru
      _
    %p211 = scmp.le.s32.totalorder 1, %s12
    %p212 = scmp.lt.s32.totalorder %s12, 5
    %p213 = pnand %p211, %p212
    %p214 = pneg %p213
    // Predicated region
    $region33: #{resnet_block_standard.4} parent=5 // pred_check
      _
    $region34: #{resnet_block_standard.4} parent=5 // pred_check_branch
      %216 = sbr.rel (%p213) target = $region36
    $region35: #{resnet_block_standard.4} parent=5 // pred_region
      %s217 = ssub.s32 %s12, 1
      %p218 = scmp.lt.s32.totalorder %s21, 1
      %s219 = scalar_select %p218, %s21, 1
      %p220 = scmp.lt.s32.totalorder %s22, 1
      %s221 = scalar_select %p220, %s22, 1
      %s222 = smul.addr %s221, 30
      %s223 = smul.addr %s219, 60
      %s224 = sadd.s32 %s222, %s223
      %s225 = smul.addr %s224, 8
      %s226 = scalar_lea.vmem %s0, %s225
      %p227 = pneg %p52
      %p228 = pneg %p49
      %p229 = pneg %p73
      %p230 = pneg %p70
      %p231 = pneg %p94
      %p232 = pneg %p91
      %p233 = pneg %p115
      %p234 = pneg %p112
      %p235 = pneg %p143
      %p236 = pneg %p140
      %s237 = smul.u32 8, %s22
      %p238 = scmp.lt.s32.totalorder %s21, 1
      %s239 = scalar_select %p238, %s21, 1
      %p240 = scmp.lt.s32.totalorder %s237, 15
      %s241 = scalar_select %p240, %s237, 15
      %s242 = smul.addr %s241, 2
      %s243 = smul.addr %s239, 32
      %s244 = sadd.s32 %s242, %s243
      %s245 = smul.addr %s244, 8
      %s246 = scalar_lea.vmem %s4, %s245
      %p247 = pneg %p171
      %p248 = pneg %p168
      %p249 = scmp.lt.s32.totalorder %s21, 1
      %s250 = scalar_select %p249, %s21, 1
      %p251 = scmp.lt.s32.totalorder %s22, 1
      %s252 = scalar_select %p251, %s22, 1
      %s253 = smul.addr %s250, 2
      %s254 = sadd.s32 %s252, %s253
      %s255 = smul.addr %s254, 2
      %s256 = scalar_lea.vmem %s5, %s255
      %p257 = scmp.lt.s32.totalorder %s21, 1
      %s258 = scalar_select %p257, %s21, 1
      %p259 = scmp.lt.s32.totalorder %s22, 1
      %s260 = scalar_select %p259, %s22, 1
      %s261 = smul.addr %s260, 30
      %s262 = smul.addr %s258, 60
      %s263 = sadd.s32 %s261, %s262
      %s264 = smul.addr %s263, 8
      %s265 = scalar_lea.vmem %s0, %s264
      %s266 = smul.u32 8, %s22
      %p267 = scmp.lt.s32.totalorder %s21, 1
      %s268 = scalar_select %p267, %s21, 1
      %p269 = scmp.lt.s32.totalorder %s266, 15
      %s270 = scalar_select %p269, %s266, 15
      %s271 = smul.addr %s270, 2
      %s272 = smul.addr %s268, 32
      %s273 = sadd.s32 %s271, %s272
      %s274 = smul.addr %s273, 8
      %s275 = scalar_lea.vmem %s4, %s274
      %s276 = smul.u32 8, %s22
      %p277 = scmp.lt.s32.totalorder %s21, 1
      %s278 = scalar_select %p277, %s21, 1
      %p279 = scmp.lt.s32.totalorder %s22, 1
      %s280 = scalar_select %p279, %s22, 1
      %s281 = smul.addr %s278, 2
      %s282 = sadd.s32 %s280, %s281
      %s283 = smul.addr %s282, 2
      %s284 = scalar_lea.vmem %s5, %s283
      %v285 = vld [vmem:[%s265] sm:$0xff]
      %v286 = vld [vmem:[%s265 + $0x8] sm:$0xff]
      %v287 = vld [vmem:[%s265 + $0x10] sm:$0x3]
      %v288 = vld [vmem:[%s265 + $0x18] sm:$0xff]
      %v289 = vld [vmem:[%s265 + $0x20] sm:$0xff]
      %v290 = vld [vmem:[%s265 + $0x28] sm:$0x3]
      %v291 = vld [vmem:[%s265 + $0x30] sm:$0xff]
      %v292 = vld [vmem:[%s265 + $0x38] sm:$0xff]
      %v293 = vld [vmem:[%s265 + $0x40] sm:$0x3]
      %v294 = vld [vmem:[%s265 + $0x48] sm:$0xff]
      %v295 = vld [vmem:[%s265 + $0x50] sm:$0xff]
      %v296 = vld [vmem:[%s265 + $0x58] sm:$0x3]
      %v297 = vld [vmem:[%s265 + $0x60] sm:$0xff]
      %v298 = vld [vmem:[%s265 + $0x68] sm:$0xff]
      %v299 = vld [vmem:[%s265 + $0x70] sm:$0x3]
      %v300 = vld [vmem:[%s265 + $0x78] sm:$0xff]
      %v301 = vld [vmem:[%s265 + $0x80] sm:$0xff]
      %v302 = vld [vmem:[%s265 + $0x88] sm:$0x3]
      %v303 = vld [vmem:[%s265 + $0x90] sm:$0xff]
      %v304 = vld [vmem:[%s265 + $0x98] sm:$0xff]
      %v305 = vld [vmem:[%s265 + $0xa0] sm:$0x3]
      %v306 = vld [vmem:[%s265 + $0xa8] sm:$0xff]
      %v307 = vld [vmem:[%s265 + $0xb0] sm:$0xff]
      %v308 = vld [vmem:[%s265 + $0xb8] sm:$0x3]
      %v309 = vld [vmem:[%s265 + $0xc0] sm:$0xff]
      %v310 = vld [vmem:[%s265 + $0xc8] sm:$0xff]
      %v311 = vld [vmem:[%s265 + $0xd0] sm:$0x3]
      %v312 = vld [vmem:[%s265 + $0xd8] sm:$0xff]
      %v313 = vld [vmem:[%s265 + $0xe0] sm:$0xff]
      %v314 = vld [vmem:[%s265 + $0xe8] sm:$0x3]
      %v315 = vld [vmem:[%s1] sm:$0x1]
      %v317 = vlaneseq
      %v318 = vshrl.u32 %v317, 7
      %v319 = vsub.s32 0, %v318
      %v320 = vrot.slane %v315, %v319
      %v322 = vmul.f32 %v285, %v320
      %v323 = vmul.f32 %v286, %v320
      %v324 = vmul.f32 %v287, %v320
      %v325 = vmul.f32 %v288, %v320
      %v326 = vmul.f32 %v289, %v320
      %v327 = vmul.f32 %v290, %v320
      %v328 = vmul.f32 %v291, %v320
      %v329 = vmul.f32 %v292, %v320
      %v330 = vmul.f32 %v293, %v320
      %v331 = vmul.f32 %v294, %v320
      %v332 = vmul.f32 %v295, %v320
      %v333 = vmul.f32 %v296, %v320
      %v334 = vmul.f32 %v297, %v320
      %v335 = vmul.f32 %v298, %v320
      %v336 = vmul.f32 %v299, %v320
      %v337 = vmul.f32 %v300, %v320
      %v338 = vmul.f32 %v301, %v320
      %v339 = vmul.f32 %v302, %v320
      %v340 = vmul.f32 %v303, %v320
      %v341 = vmul.f32 %v304, %v320
      %v342 = vmul.f32 %v305, %v320
      %v343 = vmul.f32 %v306, %v320
      %v344 = vmul.f32 %v307, %v320
      %v345 = vmul.f32 %v308, %v320
      %v346 = vmul.f32 %v309, %v320
      %v347 = vmul.f32 %v310, %v320
      %v348 = vmul.f32 %v311, %v320
      %v349 = vmul.f32 %v312, %v320
      %v350 = vmul.f32 %v313, %v320
      %v351 = vmul.f32 %v314, %v320
      %v352 = vld [vmem:[%s2] sm:$0x1]
      %v354 = vlaneseq
      %v355 = vshrl.u32 %v354, 7
      %v356 = vsub.s32 0, %v355
      %v357 = vrot.slane %v352, %v356
      %v359 = vadd.f32 %v322, %v357
      %v360 = vadd.f32 %v323, %v357
      %v361 = vadd.f32 %v324, %v357
      %v362 = vadd.f32 %v325, %v357
      %v363 = vadd.f32 %v326, %v357
      %v364 = vadd.f32 %v327, %v357
      %v365 = vadd.f32 %v328, %v357
      %v366 = vadd.f32 %v329, %v357
      %v367 = vadd.f32 %v330, %v357
      %v368 = vadd.f32 %v331, %v357
      %v369 = vadd.f32 %v332, %v357
      %v370 = vadd.f32 %v333, %v357
      %v371 = vadd.f32 %v334, %v357
      %v372 = vadd.f32 %v335, %v357
      %v373 = vadd.f32 %v336, %v357
      %v374 = vadd.f32 %v337, %v357
      %v375 = vadd.f32 %v338, %v357
      %v376 = vadd.f32 %v339, %v357
      %v377 = vadd.f32 %v340, %v357
      %v378 = vadd.f32 %v341, %v357
      %v379 = vadd.f32 %v342, %v357
      %v380 = vadd.f32 %v343, %v357
      %v381 = vadd.f32 %v344, %v357
      %v382 = vadd.f32 %v345, %v357
      %v383 = vadd.f32 %v346, %v357
      %v384 = vadd.f32 %v347, %v357
      %v385 = vadd.f32 %v348, %v357
      %v386 = vadd.f32 %v349, %v357
      %v387 = vadd.f32 %v350, %v357
      %v388 = vadd.f32 %v351, %v357
      %v389 = vmax.f32 %v359, 0.0
      %v390 = vmax.f32 %v360, 0.0
      %v391 = vmax.f32 %v361, 0.0
      %v392 = vmax.f32 %v362, 0.0
      %v393 = vmax.f32 %v363, 0.0
      %v394 = vmax.f32 %v364, 0.0
      %v395 = vmax.f32 %v365, 0.0
      %v396 = vmax.f32 %v366, 0.0
      %v397 = vmax.f32 %v367, 0.0
      %v398 = vmax.f32 %v368, 0.0
      %v399 = vmax.f32 %v369, 0.0
      %v400 = vmax.f32 %v370, 0.0
      %v401 = vmax.f32 %v371, 0.0
      %v402 = vmax.f32 %v372, 0.0
      %v403 = vmax.f32 %v373, 0.0
      %v404 = vmax.f32 %v374, 0.0
      %v405 = vmax.f32 %v375, 0.0
      %v406 = vmax.f32 %v376, 0.0
      %v407 = vmax.f32 %v377, 0.0
      %v408 = vmax.f32 %v378, 0.0
      %v409 = vmax.f32 %v379, 0.0
      %v410 = vmax.f32 %v380, 0.0
      %v411 = vmax.f32 %v381, 0.0
      %v412 = vmax.f32 %v382, 0.0
      %v413 = vmax.f32 %v383, 0.0
      %v414 = vmax.f32 %v384, 0.0
      %v415 = vmax.f32 %v385, 0.0
      %v416 = vmax.f32 %v386, 0.0
      %v417 = vmax.f32 %v387, 0.0
      %v418 = vmax.f32 %v388, 0.0
      %v419 = vlaneseq
      %v420 = vshrl.u32 %v419, 7
      %v421 = vadd.s32 %v420, 8
      %v422 = vadd.s32 %v420, 16
      %vm423 = vcmp.ge.s32.totalorder %v420, 1
      %vm424 = vcmp.ge.s32.totalorder %v421, 1
      %vm425 = vcmp.ge.s32.totalorder %v422, 1
      %vm426 = vcmp.le.s32.totalorder %v420, 16
      %vm427 = vcmp.le.s32.totalorder %v421, 16
      %vm428 = vcmp.le.s32.totalorder %v422, 16
      %vm429 = vmand %vm423, %vm426
      %vm430 = vmand %vm424, %vm427
      %vm431 = vmand %vm425, %vm428
      %p432 = scmp.ne.s32.totalorder %s22, 0
      %s433 = scalar_select %p432, 1, 0
      %v434 = vstv %s433
      %vm435 = vcmp.eq.s32.totalorder %v434, 1
      %vm436 = vmand %vm429, %vm435
      %vm437 = vmand %vm430, %vm435
      %vm438 = vmand %vm431, %vm435
      %vm439 = vmand %vm429, 1
      %vm440 = vmand %vm430, 1
      %vm441 = vmand %vm431, 1
      %p442 = scmp.ne.s32.totalorder %s22, 1
      %s443 = scalar_select %p442, 1, 0
      %v444 = vstv %s443
      %vm445 = vcmp.eq.s32.totalorder %v444, 1
      %vm446 = vmand %vm436, 1
      %vm447 = vmand %vm437, 1
      %vm448 = vmand %vm438, 1
      %vm449 = vmand %vm439, %vm445
      %vm450 = vmand %vm440, %vm445
      %vm451 = vmand %vm441, %vm445
      %v452 = vsel %vm446, 1, 0
      %v453 = vsel %vm447, 1, 0
      %v454 = vsel %vm448, 1, 0
      %v455 = vsel %vm439, 1, 0
      %v456 = vsel %vm440, 1, 0
      %v457 = vsel %vm441, 1, 0
      %v458 = vsel %vm449, 1, 0
      %v459 = vsel %vm450, 1, 0
      %v460 = vsel %vm451, 1, 0
      %vm461 = vcmp.eq.s32.totalorder %v452, 1
      %vm462 = vcmp.eq.s32.totalorder %v453, 1
      %vm463 = vcmp.eq.s32.totalorder %v454, 1
      %vm464 = vcmp.eq.s32.totalorder %v455, 1
      %vm465 = vcmp.eq.s32.totalorder %v456, 1
      %vm466 = vcmp.eq.s32.totalorder %v457, 1
      %vm467 = vcmp.eq.s32.totalorder %v458, 1
      %vm468 = vcmp.eq.s32.totalorder %v459, 1
      %vm469 = vcmp.eq.s32.totalorder %v460, 1
      %v470 = vsel %vm461, %v389, 0.0
      %v471 = vsel %vm462, %v390, 0.0
      %v472 = vsel %vm463, %v391, 0.0
      %v473 = vsel %vm464, %v392, 0.0
      %v474 = vsel %vm465, %v393, 0.0
      %v475 = vsel %vm466, %v394, 0.0
      %v476 = vsel %vm464, %v395, 0.0
      %v477 = vsel %vm465, %v396, 0.0
      %v478 = vsel %vm466, %v397, 0.0
      %v479 = vsel %vm464, %v398, 0.0
      %v480 = vsel %vm465, %v399, 0.0
      %v481 = vsel %vm466, %v400, 0.0
      %v482 = vsel %vm464, %v401, 0.0
      %v483 = vsel %vm465, %v402, 0.0
      %v484 = vsel %vm466, %v403, 0.0
      %v485 = vsel %vm464, %v404, 0.0
      %v486 = vsel %vm465, %v405, 0.0
      %v487 = vsel %vm466, %v406, 0.0
      %v488 = vsel %vm464, %v407, 0.0
      %v489 = vsel %vm465, %v408, 0.0
      %v490 = vsel %vm466, %v409, 0.0
      %v491 = vsel %vm464, %v410, 0.0
      %v492 = vsel %vm465, %v411, 0.0
      %v493 = vsel %vm466, %v412, 0.0
      %v494 = vsel %vm464, %v413, 0.0
      %v495 = vsel %vm465, %v414, 0.0
      %v496 = vsel %vm466, %v415, 0.0
      %v497 = vsel %vm467, %v416, 0.0
      %v498 = vsel %vm468, %v417, 0.0
      %v499 = vsel %vm469, %v418, 0.0
      %v530 = vcombine.high %v470, %v470
      %v532 = vunpack.c.l.s4 1983009808
      %v533 = vunpack.c.0.s8 %v532
      %v534 = vlaneseq
      %v535 = vshrl.u32 %v534, 7
      %v536 = vsub.s32 %v533, %v535
      %v537 = vrot.slane %v470, %v536
      %v539 = vunpack.c.l.s4 1983009808
      %v540 = vunpack.c.0.s8 %v539
      %v541 = vlaneseq
      %v542 = vshrl.u32 %v541, 7
      %v543 = vsub.s32 %v540, %v542
      %v544 = vrot.slane %v530, %v543
      %v545 = vcombine.high %v537, %v537
      %v546 = vcombine.high %v544, %v544
      %v547 = vcombine.high %v471, %v471
      %v549 = vunpack.c.l.s4 1983009808
      %v550 = vunpack.c.0.s8 %v549
      %v551 = vlaneseq
      %v552 = vshrl.u32 %v551, 7
      %v553 = vsub.s32 %v550, %v552
      %v554 = vrot.slane %v471, %v553
      %v556 = vunpack.c.l.s4 1983009808
      %v557 = vunpack.c.0.s8 %v556
      %v558 = vlaneseq
      %v559 = vshrl.u32 %v558, 7
      %v560 = vsub.s32 %v557, %v559
      %v561 = vrot.slane %v547, %v560
      %v562 = vcombine.high %v554, %v554
      %v563 = vcombine.high %v561, %v561
      %v565 = vunpack.c.l.s4 1983009808
      %v566 = vunpack.c.0.s8 %v565
      %v567 = vlaneseq
      %v568 = vshrl.u32 %v567, 7
      %v569 = vsub.s32 %v566, %v568
      %v570 = vrot.slane %v472, %v569
      %v571 = vcombine.high %v473, %v473
      %v573 = vunpack.c.l.s4 1983009808
      %v574 = vunpack.c.0.s8 %v573
      %v575 = vlaneseq
      %v576 = vshrl.u32 %v575, 7
      %v577 = vsub.s32 %v574, %v576
      %v578 = vrot.slane %v473, %v577
      %v580 = vunpack.c.l.s4 1983009808
      %v581 = vunpack.c.0.s8 %v580
      %v582 = vlaneseq
      %v583 = vshrl.u32 %v582, 7
      %v584 = vsub.s32 %v581, %v583
      %v585 = vrot.slane %v571, %v584
      %v586 = vcombine.high %v578, %v578
      %v587 = vcombine.high %v585, %v585
      %v588 = vcombine.high %v474, %v474
      %v590 = vunpack.c.l.s4 1983009808
      %v591 = vunpack.c.0.s8 %v590
      %v592 = vlaneseq
      %v593 = vshrl.u32 %v592, 7
      %v594 = vsub.s32 %v591, %v593
      %v595 = vrot.slane %v474, %v594
      %v597 = vunpack.c.l.s4 1983009808
      %v598 = vunpack.c.0.s8 %v597
      %v599 = vlaneseq
      %v600 = vshrl.u32 %v599, 7
      %v601 = vsub.s32 %v598, %v600
      %v602 = vrot.slane %v588, %v601
      %v603 = vcombine.high %v595, %v595
      %v604 = vcombine.high %v602, %v602
      %v606 = vunpack.c.l.s4 1983009808
      %v607 = vunpack.c.0.s8 %v606
      %v608 = vlaneseq
      %v609 = vshrl.u32 %v608, 7
      %v610 = vsub.s32 %v607, %v609
      %v611 = vrot.slane %v475, %v610
      %v612 = vcombine.high %v476, %v476
      %v614 = vunpack.c.l.s4 1983009808
      %v615 = vunpack.c.0.s8 %v614
      %v616 = vlaneseq
      %v617 = vshrl.u32 %v616, 7
      %v618 = vsub.s32 %v615, %v617
      %v619 = vrot.slane %v476, %v618
      %v621 = vunpack.c.l.s4 1983009808
      %v622 = vunpack.c.0.s8 %v621
      %v623 = vlaneseq
      %v624 = vshrl.u32 %v623, 7
      %v625 = vsub.s32 %v622, %v624
      %v626 = vrot.slane %v612, %v625
      %v627 = vcombine.high %v619, %v619
      %v628 = vcombine.high %v626, %v626
      %v629 = vcombine.high %v477, %v477
      %v631 = vunpack.c.l.s4 1983009808
      %v632 = vunpack.c.0.s8 %v631
      %v633 = vlaneseq
      %v634 = vshrl.u32 %v633, 7
      %v635 = vsub.s32 %v632, %v634
      %v636 = vrot.slane %v477, %v635
      %v638 = vunpack.c.l.s4 1983009808
      %v639 = vunpack.c.0.s8 %v638
      %v640 = vlaneseq
      %v641 = vshrl.u32 %v640, 7
      %v642 = vsub.s32 %v639, %v641
      %v643 = vrot.slane %v629, %v642
      %v644 = vcombine.high %v636, %v636
      %v645 = vcombine.high %v643, %v643
      %v647 = vunpack.c.l.s4 1983009808
      %v648 = vunpack.c.0.s8 %v647
      %v649 = vlaneseq
      %v650 = vshrl.u32 %v649, 7
      %v651 = vsub.s32 %v648, %v650
      %v652 = vrot.slane %v478, %v651
      %v653 = vcombine.high %v479, %v479
      %v655 = vunpack.c.l.s4 1983009808
      %v656 = vunpack.c.0.s8 %v655
      %v657 = vlaneseq
      %v658 = vshrl.u32 %v657, 7
      %v659 = vsub.s32 %v656, %v658
      %v660 = vrot.slane %v479, %v659
      %v662 = vunpack.c.l.s4 1983009808
      %v663 = vunpack.c.0.s8 %v662
      %v664 = vlaneseq
      %v665 = vshrl.u32 %v664, 7
      %v666 = vsub.s32 %v663, %v665
      %v667 = vrot.slane %v653, %v666
      %v668 = vcombine.high %v660, %v660
      %v669 = vcombine.high %v667, %v667
      %v670 = vcombine.high %v480, %v480
      %v672 = vunpack.c.l.s4 1983009808
      %v673 = vunpack.c.0.s8 %v672
      %v674 = vlaneseq
      %v675 = vshrl.u32 %v674, 7
      %v676 = vsub.s32 %v673, %v675
      %v677 = vrot.slane %v480, %v676
      %v679 = vunpack.c.l.s4 1983009808
      %v680 = vunpack.c.0.s8 %v679
      %v681 = vlaneseq
      %v682 = vshrl.u32 %v681, 7
      %v683 = vsub.s32 %v680, %v682
      %v684 = vrot.slane %v670, %v683
      %v685 = vcombine.high %v677, %v677
      %v686 = vcombine.high %v684, %v684
      %v688 = vunpack.c.l.s4 1983009808
      %v689 = vunpack.c.0.s8 %v688
      %v690 = vlaneseq
      %v691 = vshrl.u32 %v690, 7
      %v692 = vsub.s32 %v689, %v691
      %v693 = vrot.slane %v481, %v692
      %v694 = vcombine.high %v482, %v482
      %v696 = vunpack.c.l.s4 1983009808
      %v697 = vunpack.c.0.s8 %v696
      %v698 = vlaneseq
      %v699 = vshrl.u32 %v698, 7
      %v700 = vsub.s32 %v697, %v699
      %v701 = vrot.slane %v482, %v700
      %v703 = vunpack.c.l.s4 1983009808
      %v704 = vunpack.c.0.s8 %v703
      %v705 = vlaneseq
      %v706 = vshrl.u32 %v705, 7
      %v707 = vsub.s32 %v704, %v706
      %v708 = vrot.slane %v694, %v707
      %v709 = vcombine.high %v701, %v701
      %v710 = vcombine.high %v708, %v708
      %v711 = vcombine.high %v483, %v483
      %v713 = vunpack.c.l.s4 1983009808
      %v714 = vunpack.c.0.s8 %v713
      %v715 = vlaneseq
      %v716 = vshrl.u32 %v715, 7
      %v717 = vsub.s32 %v714, %v716
      %v718 = vrot.slane %v483, %v717
      %v720 = vunpack.c.l.s4 1983009808
      %v721 = vunpack.c.0.s8 %v720
      %v722 = vlaneseq
      %v723 = vshrl.u32 %v722, 7
      %v724 = vsub.s32 %v721, %v723
      %v725 = vrot.slane %v711, %v724
      %v726 = vcombine.high %v718, %v718
      %v727 = vcombine.high %v725, %v725
      %v729 = vunpack.c.l.s4 1983009808
      %v730 = vunpack.c.0.s8 %v729
      %v731 = vlaneseq
      %v732 = vshrl.u32 %v731, 7
      %v733 = vsub.s32 %v730, %v732
      %v734 = vrot.slane %v484, %v733
      %v735 = vcombine.high %v485, %v485
      %v737 = vunpack.c.l.s4 1983009808
      %v738 = vunpack.c.0.s8 %v737
      %v739 = vlaneseq
      %v740 = vshrl.u32 %v739, 7
      %v741 = vsub.s32 %v738, %v740
      %v742 = vrot.slane %v485, %v741
      %v744 = vunpack.c.l.s4 1983009808
      %v745 = vunpack.c.0.s8 %v744
      %v746 = vlaneseq
      %v747 = vshrl.u32 %v746, 7
      %v748 = vsub.s32 %v745, %v747
      %v749 = vrot.slane %v735, %v748
      %v750 = vcombine.high %v742, %v742
      %v751 = vcombine.high %v749, %v749
      %v752 = vcombine.high %v486, %v486
      %v754 = vunpack.c.l.s4 1983009808
      %v755 = vunpack.c.0.s8 %v754
      %v756 = vlaneseq
      %v757 = vshrl.u32 %v756, 7
      %v758 = vsub.s32 %v755, %v757
      %v759 = vrot.slane %v486, %v758
      %v761 = vunpack.c.l.s4 1983009808
      %v762 = vunpack.c.0.s8 %v761
      %v763 = vlaneseq
      %v764 = vshrl.u32 %v763, 7
      %v765 = vsub.s32 %v762, %v764
      %v766 = vrot.slane %v752, %v765
      %v767 = vcombine.high %v759, %v759
      %v768 = vcombine.high %v766, %v766
      %v770 = vunpack.c.l.s4 1983009808
      %v771 = vunpack.c.0.s8 %v770
      %v772 = vlaneseq
      %v773 = vshrl.u32 %v772, 7
      %v774 = vsub.s32 %v771, %v773
      %v775 = vrot.slane %v487, %v774
      %v776 = vcombine.high %v488, %v488
      %v778 = vunpack.c.l.s4 1983009808
      %v779 = vunpack.c.0.s8 %v778
      %v780 = vlaneseq
      %v781 = vshrl.u32 %v780, 7
      %v782 = vsub.s32 %v779, %v781
      %v783 = vrot.slane %v488, %v782
      %v785 = vunpack.c.l.s4 1983009808
      %v786 = vunpack.c.0.s8 %v785
      %v787 = vlaneseq
      %v788 = vshrl.u32 %v787, 7
      %v789 = vsub.s32 %v786, %v788
      %v790 = vrot.slane %v776, %v789
      %v791 = vcombine.high %v783, %v783
      %v792 = vcombine.high %v790, %v790
      %v793 = vcombine.high %v489, %v489
      %v795 = vunpack.c.l.s4 1983009808
      %v796 = vunpack.c.0.s8 %v795
      %v797 = vlaneseq
      %v798 = vshrl.u32 %v797, 7
      %v799 = vsub.s32 %v796, %v798
      %v800 = vrot.slane %v489, %v799
      %v802 = vunpack.c.l.s4 1983009808
      %v803 = vunpack.c.0.s8 %v802
      %v804 = vlaneseq
      %v805 = vshrl.u32 %v804, 7
      %v806 = vsub.s32 %v803, %v805
      %v807 = vrot.slane %v793, %v806
      %v808 = vcombine.high %v800, %v800
      %v809 = vcombine.high %v807, %v807
      %v811 = vunpack.c.l.s4 1983009808
      %v812 = vunpack.c.0.s8 %v811
      %v813 = vlaneseq
      %v814 = vshrl.u32 %v813, 7
      %v815 = vsub.s32 %v812, %v814
      %v816 = vrot.slane %v490, %v815
      %v817 = vcombine.high %v491, %v491
      %v819 = vunpack.c.l.s4 1983009808
      %v820 = vunpack.c.0.s8 %v819
      %v821 = vlaneseq
      %v822 = vshrl.u32 %v821, 7
      %v823 = vsub.s32 %v820, %v822
      %v824 = vrot.slane %v491, %v823
      %v826 = vunpack.c.l.s4 1983009808
      %v827 = vunpack.c.0.s8 %v826
      %v828 = vlaneseq
      %v829 = vshrl.u32 %v828, 7
      %v830 = vsub.s32 %v827, %v829
      %v831 = vrot.slane %v817, %v830
      %v832 = vcombine.high %v824, %v824
      %v833 = vcombine.high %v831, %v831
      %v834 = vcombine.high %v492, %v492
      %v836 = vunpack.c.l.s4 1983009808
      %v837 = vunpack.c.0.s8 %v836
      %v838 = vlaneseq
      %v839 = vshrl.u32 %v838, 7
      %v840 = vsub.s32 %v837, %v839
      %v841 = vrot.slane %v492, %v840
      %v843 = vunpack.c.l.s4 1983009808
      %v844 = vunpack.c.0.s8 %v843
      %v845 = vlaneseq
      %v846 = vshrl.u32 %v845, 7
      %v847 = vsub.s32 %v844, %v846
      %v848 = vrot.slane %v834, %v847
      %v849 = vcombine.high %v841, %v841
      %v850 = vcombine.high %v848, %v848
      %v852 = vunpack.c.l.s4 1983009808
      %v853 = vunpack.c.0.s8 %v852
      %v854 = vlaneseq
      %v855 = vshrl.u32 %v854, 7
      %v856 = vsub.s32 %v853, %v855
      %v857 = vrot.slane %v493, %v856
      %v858 = vcombine.high %v494, %v494
      %v860 = vunpack.c.l.s4 1983009808
      %v861 = vunpack.c.0.s8 %v860
      %v862 = vlaneseq
      %v863 = vshrl.u32 %v862, 7
      %v864 = vsub.s32 %v861, %v863
      %v865 = vrot.slane %v494, %v864
      %v867 = vunpack.c.l.s4 1983009808
      %v868 = vunpack.c.0.s8 %v867
      %v869 = vlaneseq
      %v870 = vshrl.u32 %v869, 7
      %v871 = vsub.s32 %v868, %v870
      %v872 = vrot.slane %v858, %v871
      %v873 = vcombine.high %v865, %v865
      %v874 = vcombine.high %v872, %v872
      %v875 = vcombine.high %v495, %v495
      %v877 = vunpack.c.l.s4 1983009808
      %v878 = vunpack.c.0.s8 %v877
      %v879 = vlaneseq
      %v880 = vshrl.u32 %v879, 7
      %v881 = vsub.s32 %v878, %v880
      %v882 = vrot.slane %v495, %v881
      %v884 = vunpack.c.l.s4 1983009808
      %v885 = vunpack.c.0.s8 %v884
      %v886 = vlaneseq
      %v887 = vshrl.u32 %v886, 7
      %v888 = vsub.s32 %v885, %v887
      %v889 = vrot.slane %v875, %v888
      %v890 = vcombine.high %v882, %v882
      %v891 = vcombine.high %v889, %v889
      %v893 = vunpack.c.l.s4 1983009808
      %v894 = vunpack.c.0.s8 %v893
      %v895 = vlaneseq
      %v896 = vshrl.u32 %v895, 7
      %v897 = vsub.s32 %v894, %v896
      %v898 = vrot.slane %v496, %v897
      %v899 = vcombine.high %v497, %v497
      %v901 = vunpack.c.l.s4 1983009808
      %v902 = vunpack.c.0.s8 %v901
      %v903 = vlaneseq
      %v904 = vshrl.u32 %v903, 7
      %v905 = vsub.s32 %v902, %v904
      %v906 = vrot.slane %v497, %v905
      %v908 = vunpack.c.l.s4 1983009808
      %v909 = vunpack.c.0.s8 %v908
      %v910 = vlaneseq
      %v911 = vshrl.u32 %v910, 7
      %v912 = vsub.s32 %v909, %v911
      %v913 = vrot.slane %v899, %v912
      %v914 = vcombine.high %v906, %v906
      %v915 = vcombine.high %v913, %v913
      %v916 = vcombine.high %v498, %v498
      %v918 = vunpack.c.l.s4 1983009808
      %v919 = vunpack.c.0.s8 %v918
      %v920 = vlaneseq
      %v921 = vshrl.u32 %v920, 7
      %v922 = vsub.s32 %v919, %v921
      %v923 = vrot.slane %v498, %v922
      %v925 = vunpack.c.l.s4 1983009808
      %v926 = vunpack.c.0.s8 %v925
      %v927 = vlaneseq
      %v928 = vshrl.u32 %v927, 7
      %v929 = vsub.s32 %v926, %v928
      %v930 = vrot.slane %v916, %v929
      %v931 = vcombine.high %v923, %v923
      %v932 = vcombine.high %v930, %v930
      %v934 = vunpack.c.l.s4 1983009808
      %v935 = vunpack.c.0.s8 %v934
      %v936 = vlaneseq
      %v937 = vshrl.u32 %v936, 7
      %v938 = vsub.s32 %v935, %v937
      %v939 = vrot.slane %v499, %v938
      %v940 = vld [vmem:[%s3] sm:$0xff]
      %v941 = vld [vmem:[%s3 + $0x8] sm:$0xff]
      %v942 = vld [vmem:[%s3 + $0x10] sm:$0xff]
      %v943 = vld [vmem:[%s3 + $0x18] sm:$0xff]
      %v944 = vld [vmem:[%s3 + $0x20] sm:$0xff]
      %v945 = vld [vmem:[%s3 + $0x28] sm:$0xff]
      %v946 = vld [vmem:[%s3 + $0x30] sm:$0xff]
      %v947 = vld [vmem:[%s3 + $0x38] sm:$0xff]
      %v948 = vld [vmem:[%s3 + $0x40] sm:$0xff]
      %v949 = vld [vmem:[%s3 + $0x48] sm:$0xff]
      %v950 = vld [vmem:[%s3 + $0x50] sm:$0xff]
      %v951 = vld [vmem:[%s3 + $0x58] sm:$0xff]
      %v952 = vld [vmem:[%s3 + $0x60] sm:$0xff]
      %v953 = vld [vmem:[%s3 + $0x68] sm:$0xff]
      %v954 = vld [vmem:[%s3 + $0x70] sm:$0xff]
      %v955 = vld [vmem:[%s3 + $0x78] sm:$0xff]
      %v956 = vcombine.low %v537, %v545
      %v957 = vcombine.low %v544, %v546
      %v959 = vunpack.c.l.s4 1983009808
      %v960 = vunpack.c.0.s8 %v959
      %v961 = vlaneseq
      %v962 = vshrl.u32 %v961, 7
      %v963 = vsub.s32 %v960, %v962
      %v964 = vrot.slane %v956, %v963
      %v966 = vunpack.c.l.s4 1983009808
      %v967 = vunpack.c.0.s8 %v966
      %v968 = vlaneseq
      %v969 = vshrl.u32 %v968, 7
      %v970 = vsub.s32 %v967, %v969
      %v971 = vrot.slane %v957, %v970
      %v972 = vcombine.low %v964, %v971
      %v973 = vcombine.low %v554, %v562
      %v974 = vcombine.low %v561, %v563
      %v976 = vunpack.c.l.s4 1983009808
      %v977 = vunpack.c.0.s8 %v976
      %v978 = vlaneseq
      %v979 = vshrl.u32 %v978, 7
      %v980 = vsub.s32 %v977, %v979
      %v981 = vrot.slane %v973, %v980
      %v983 = vunpack.c.l.s4 1983009808
      %v984 = vunpack.c.0.s8 %v983
      %v985 = vlaneseq
      %v986 = vshrl.u32 %v985, 7
      %v987 = vsub.s32 %v984, %v986
      %v988 = vrot.slane %v974, %v987
      %v989 = vcombine.low %v981, %v988
      %v990 = vcombine.low %v570, %v578
      %v991 = vcombine.low %v586, %v585
      %v993 = vunpack.c.l.s4 1983009808
      %v994 = vunpack.c.0.s8 %v993
      %v995 = vlaneseq
      %v996 = vshrl.u32 %v995, 7
      %v997 = vsub.s32 %v994, %v996
      %v998 = vrot.slane %v990, %v997
      %v1000 = vunpack.c.l.s4 1983009808
      %v1001 = vunpack.c.0.s8 %v1000
      %v1002 = vlaneseq
      %v1003 = vshrl.u32 %v1002, 7
      %v1004 = vsub.s32 %v1001, %v1003
      %v1005 = vrot.slane %v991, %v1004
      %v1006 = vcombine.low %v998, %v1005
      %v1007 = vcombine.low %v587, %v595
      %v1008 = vcombine.low %v603, %v602
      %v1010 = vunpack.c.l.s4 1983009808
      %v1011 = vunpack.c.0.s8 %v1010
      %v1012 = vlaneseq
      %v1013 = vshrl.u32 %v1012, 7
      %v1014 = vsub.s32 %v1011, %v1013
      %v1015 = vrot.slane %v1007, %v1014
      %v1017 = vunpack.c.l.s4 1983009808
      %v1018 = vunpack.c.0.s8 %v1017
      %v1019 = vlaneseq
      %v1020 = vshrl.u32 %v1019, 7
      %v1021 = vsub.s32 %v1018, %v1020
      %v1022 = vrot.slane %v1008, %v1021
      %v1023 = vcombine.low %v1015, %v1022
      %v1024 = vcombine.low %v604, %v611
      %v1025 = vcombine.low %v619, %v627
      %v1027 = vunpack.c.l.s4 1983009808
      %v1028 = vunpack.c.0.s8 %v1027
      %v1029 = vlaneseq
      %v1030 = vshrl.u32 %v1029, 7
      %v1031 = vsub.s32 %v1028, %v1030
      %v1032 = vrot.slane %v1024, %v1031
      %v1034 = vunpack.c.l.s4 1983009808
      %v1035 = vunpack.c.0.s8 %v1034
      %v1036 = vlaneseq
      %v1037 = vshrl.u32 %v1036, 7
      %v1038 = vsub.s32 %v1035, %v1037
      %v1039 = vrot.slane %v1025, %v1038
      %v1040 = vcombine.low %v1032, %v1039
      %v1041 = vcombine.low %v626, %v628
      %v1042 = vcombine.low %v636, %v644
      %v1044 = vunpack.c.l.s4 1983009808
      %v1045 = vunpack.c.0.s8 %v1044
      %v1046 = vlaneseq
      %v1047 = vshrl.u32 %v1046, 7
      %v1048 = vsub.s32 %v1045, %v1047
      %v1049 = vrot.slane %v1041, %v1048
      %v1051 = vunpack.c.l.s4 1983009808
      %v1052 = vunpack.c.0.s8 %v1051
      %v1053 = vlaneseq
      %v1054 = vshrl.u32 %v1053, 7
      %v1055 = vsub.s32 %v1052, %v1054
      %v1056 = vrot.slane %v1042, %v1055
      %v1057 = vcombine.low %v1049, %v1056
      %v1058 = vcombine.low %v643, %v645
      %v1059 = vcombine.low %v652, %v660
      %v1061 = vunpack.c.l.s4 1983009808
      %v1062 = vunpack.c.0.s8 %v1061
      %v1063 = vlaneseq
      %v1064 = vshrl.u32 %v1063, 7
      %v1065 = vsub.s32 %v1062, %v1064
      %v1066 = vrot.slane %v1058, %v1065
      %v1068 = vunpack.c.l.s4 1983009808
      %v1069 = vunpack.c.0.s8 %v1068
      %v1070 = vlaneseq
      %v1071 = vshrl.u32 %v1070, 7
      %v1072 = vsub.s32 %v1069, %v1071
      %v1073 = vrot.slane %v1059, %v1072
      %v1074 = vcombine.low %v1066, %v1073
      %v1075 = vcombine.low %v668, %v667
      %v1076 = vcombine.low %v669, %v677
      %v1078 = vunpack.c.l.s4 1983009808
      %v1079 = vunpack.c.0.s8 %v1078
      %v1080 = vlaneseq
      %v1081 = vshrl.u32 %v1080, 7
      %v1082 = vsub.s32 %v1079, %v1081
      %v1083 = vrot.slane %v1075, %v1082
      %v1085 = vunpack.c.l.s4 1983009808
      %v1086 = vunpack.c.0.s8 %v1085
      %v1087 = vlaneseq
      %v1088 = vshrl.u32 %v1087, 7
      %v1089 = vsub.s32 %v1086, %v1088
      %v1090 = vrot.slane %v1076, %v1089
      %v1091 = vcombine.low %v1083, %v1090
      %v1092 = vcombine.low %v685, %v684
      %v1093 = vcombine.low %v686, %v693
      %v1095 = vunpack.c.l.s4 1983009808
      %v1096 = vunpack.c.0.s8 %v1095
      %v1097 = vlaneseq
      %v1098 = vshrl.u32 %v1097, 7
      %v1099 = vsub.s32 %v1096, %v1098
      %v1100 = vrot.slane %v1092, %v1099
      %v1102 = vunpack.c.l.s4 1983009808
      %v1103 = vunpack.c.0.s8 %v1102
      %v1104 = vlaneseq
      %v1105 = vshrl.u32 %v1104, 7
      %v1106 = vsub.s32 %v1103, %v1105
      %v1107 = vrot.slane %v1093, %v1106
      %v1108 = vcombine.low %v1100, %v1107
      %v1109 = vcombine.low %v701, %v709
      %v1110 = vcombine.low %v708, %v710
      %v1112 = vunpack.c.l.s4 1983009808
      %v1113 = vunpack.c.0.s8 %v1112
      %v1114 = vlaneseq
      %v1115 = vshrl.u32 %v1114, 7
      %v1116 = vsub.s32 %v1113, %v1115
      %v1117 = vrot.slane %v1109, %v1116
      %v1119 = vunpack.c.l.s4 1983009808
      %v1120 = vunpack.c.0.s8 %v1119
      %v1121 = vlaneseq
      %v1122 = vshrl.u32 %v1121, 7
      %v1123 = vsub.s32 %v1120, %v1122
      %v1124 = vrot.slane %v1110, %v1123
      %v1125 = vcombine.low %v1117, %v1124
      %v1126 = vcombine.low %v718, %v726
      %v1127 = vcombine.low %v725, %v727
      %v1129 = vunpack.c.l.s4 1983009808
      %v1130 = vunpack.c.0.s8 %v1129
      %v1131 = vlaneseq
      %v1132 = vshrl.u32 %v1131, 7
      %v1133 = vsub.s32 %v1130, %v1132
      %v1134 = vrot.slane %v1126, %v1133
      %v1136 = vunpack.c.l.s4 1983009808
      %v1137 = vunpack.c.0.s8 %v1136
      %v1138 = vlaneseq
      %v1139 = vshrl.u32 %v1138, 7
      %v1140 = vsub.s32 %v1137, %v1139
      %v1141 = vrot.slane %v1127, %v1140
      %v1142 = vcombine.low %v1134, %v1141
      %v1143 = vcombine.low %v734, %v742
      %v1144 = vcombine.low %v750, %v749
      %v1146 = vunpack.c.l.s4 1983009808
      %v1147 = vunpack.c.0.s8 %v1146
      %v1148 = vlaneseq
      %v1149 = vshrl.u32 %v1148, 7
      %v1150 = vsub.s32 %v1147, %v1149
      %v1151 = vrot.slane %v1143, %v1150
      %v1153 = vunpack.c.l.s4 1983009808
      %v1154 = vunpack.c.0.s8 %v1153
      %v1155 = vlaneseq
      %v1156 = vshrl.u32 %v1155, 7
      %v1157 = vsub.s32 %v1154, %v1156
      %v1158 = vrot.slane %v1144, %v1157
      %v1159 = vcombine.low %v1151, %v1158
      %v1160 = vcombine.low %v751, %v759
      %v1161 = vcombine.low %v767, %v766
      %v1163 = vunpack.c.l.s4 1983009808
      %v1164 = vunpack.c.0.s8 %v1163
      %v1165 = vlaneseq
      %v1166 = vshrl.u32 %v1165, 7
      %v1167 = vsub.s32 %v1164, %v1166
      %v1168 = vrot.slane %v1160, %v1167
      %v1170 = vunpack.c.l.s4 1983009808
      %v1171 = vunpack.c.0.s8 %v1170
      %v1172 = vlaneseq
      %v1173 = vshrl.u32 %v1172, 7
      %v1174 = vsub.s32 %v1171, %v1173
      %v1175 = vrot.slane %v1161, %v1174
      %v1176 = vcombine.low %v1168, %v1175
      %v1177 = vcombine.low %v768, %v775
      %v1178 = vcombine.low %v783, %v791
      %v1180 = vunpack.c.l.s4 1983009808
      %v1181 = vunpack.c.0.s8 %v1180
      %v1182 = vlaneseq
      %v1183 = vshrl.u32 %v1182, 7
      %v1184 = vsub.s32 %v1181, %v1183
      %v1185 = vrot.slane %v1177, %v1184
      %v1187 = vunpack.c.l.s4 1983009808
      %v1188 = vunpack.c.0.s8 %v1187
      %v1189 = vlaneseq
      %v1190 = vshrl.u32 %v1189, 7
      %v1191 = vsub.s32 %v1188, %v1190
      %v1192 = vrot.slane %v1178, %v1191
      %v1193 = vcombine.low %v1185, %v1192
      %v1194 = vcombine.low %v790, %v792
      %v1195 = vcombine.low %v800, %v808
      %v1197 = vunpack.c.l.s4 1983009808
      %v1198 = vunpack.c.0.s8 %v1197
      %v1199 = vlaneseq
      %v1200 = vshrl.u32 %v1199, 7
      %v1201 = vsub.s32 %v1198, %v1200
      %v1202 = vrot.slane %v1194, %v1201
      %v1204 = vunpack.c.l.s4 1983009808
      %v1205 = vunpack.c.0.s8 %v1204
      %v1206 = vlaneseq
      %v1207 = vshrl.u32 %v1206, 7
      %v1208 = vsub.s32 %v1205, %v1207
      %v1209 = vrot.slane %v1195, %v1208
      %v1210 = vcombine.low %v1202, %v1209
      %v1211 = vcombine.low %v807, %v809
      %v1212 = vcombine.low %v816, %v824
      %v1214 = vunpack.c.l.s4 1983009808
      %v1215 = vunpack.c.0.s8 %v1214
      %v1216 = vlaneseq
      %v1217 = vshrl.u32 %v1216, 7
      %v1218 = vsub.s32 %v1215, %v1217
      %v1219 = vrot.slane %v1211, %v1218
      %v1221 = vunpack.c.l.s4 1983009808
      %v1222 = vunpack.c.0.s8 %v1221
      %v1223 = vlaneseq
      %v1224 = vshrl.u32 %v1223, 7
      %v1225 = vsub.s32 %v1222, %v1224
      %v1226 = vrot.slane %v1212, %v1225
      %v1227 = vcombine.low %v1219, %v1226
      %v1228 = vcombine.low %v832, %v831
      %v1229 = vcombine.low %v833, %v841
      %v1231 = vunpack.c.l.s4 1983009808
      %v1232 = vunpack.c.0.s8 %v1231
      %v1233 = vlaneseq
      %v1234 = vshrl.u32 %v1233, 7
      %v1235 = vsub.s32 %v1232, %v1234
      %v1236 = vrot.slane %v1228, %v1235
      %v1238 = vunpack.c.l.s4 1983009808
      %v1239 = vunpack.c.0.s8 %v1238
      %v1240 = vlaneseq
      %v1241 = vshrl.u32 %v1240, 7
      %v1242 = vsub.s32 %v1239, %v1241
      %v1243 = vrot.slane %v1229, %v1242
      %v1244 = vcombine.low %v1236, %v1243
      %v1245 = vcombine.low %v849, %v848
      %v1246 = vcombine.low %v850, %v857
      %v1248 = vunpack.c.l.s4 1983009808
      %v1249 = vunpack.c.0.s8 %v1248
      %v1250 = vlaneseq
      %v1251 = vshrl.u32 %v1250, 7
      %v1252 = vsub.s32 %v1249, %v1251
      %v1253 = vrot.slane %v1245, %v1252
      %v1255 = vunpack.c.l.s4 1983009808
      %v1256 = vunpack.c.0.s8 %v1255
      %v1257 = vlaneseq
      %v1258 = vshrl.u32 %v1257, 7
      %v1259 = vsub.s32 %v1256, %v1258
      %v1260 = vrot.slane %v1246, %v1259
      %v1261 = vcombine.low %v1253, %v1260
      %v1262 = vcombine.low %v865, %v873
      %v1263 = vcombine.low %v872, %v874
      %v1265 = vunpack.c.l.s4 1983009808
      %v1266 = vunpack.c.0.s8 %v1265
      %v1267 = vlaneseq
      %v1268 = vshrl.u32 %v1267, 7
      %v1269 = vsub.s32 %v1266, %v1268
      %v1270 = vrot.slane %v1262, %v1269
      %v1272 = vunpack.c.l.s4 1983009808
      %v1273 = vunpack.c.0.s8 %v1272
      %v1274 = vlaneseq
      %v1275 = vshrl.u32 %v1274, 7
      %v1276 = vsub.s32 %v1273, %v1275
      %v1277 = vrot.slane %v1263, %v1276
      %v1278 = vcombine.low %v1270, %v1277
      %v1279 = vcombine.low %v882, %v890
      %v1280 = vcombine.low %v889, %v891
      %v1282 = vunpack.c.l.s4 1983009808
      %v1283 = vunpack.c.0.s8 %v1282
      %v1284 = vlaneseq
      %v1285 = vshrl.u32 %v1284, 7
      %v1286 = vsub.s32 %v1283, %v1285
      %v1287 = vrot.slane %v1279, %v1286
      %v1289 = vunpack.c.l.s4 1983009808
      %v1290 = vunpack.c.0.s8 %v1289
      %v1291 = vlaneseq
      %v1292 = vshrl.u32 %v1291, 7
      %v1293 = vsub.s32 %v1290, %v1292
      %v1294 = vrot.slane %v1280, %v1293
      %v1295 = vcombine.low %v1287, %v1294
      %v1296 = vcombine.low %v898, %v906
      %v1297 = vcombine.low %v914, %v913
      %v1299 = vunpack.c.l.s4 1983009808
      %v1300 = vunpack.c.0.s8 %v1299
      %v1301 = vlaneseq
      %v1302 = vshrl.u32 %v1301, 7
      %v1303 = vsub.s32 %v1300, %v1302
      %v1304 = vrot.slane %v1296, %v1303
      %v1306 = vunpack.c.l.s4 1983009808
      %v1307 = vunpack.c.0.s8 %v1306
      %v1308 = vlaneseq
      %v1309 = vshrl.u32 %v1308, 7
      %v1310 = vsub.s32 %v1307, %v1309
      %v1311 = vrot.slane %v1297, %v1310
      %v1312 = vcombine.low %v1304, %v1311
      %v1313 = vcombine.low %v915, %v923
      %v1314 = vcombine.low %v931, %v930
      %v1316 = vunpack.c.l.s4 1983009808
      %v1317 = vunpack.c.0.s8 %v1316
      %v1318 = vlaneseq
      %v1319 = vshrl.u32 %v1318, 7
      %v1320 = vsub.s32 %v1317, %v1319
      %v1321 = vrot.slane %v1313, %v1320
      %v1323 = vunpack.c.l.s4 1983009808
      %v1324 = vunpack.c.0.s8 %v1323
      %v1325 = vlaneseq
      %v1326 = vshrl.u32 %v1325, 7
      %v1327 = vsub.s32 %v1324, %v1326
      %v1328 = vrot.slane %v1314, %v1327
      %v1329 = vcombine.low %v1321, %v1328
      %v1330 = vcombine.low %v932, %v939
      %v1332 = vunpack.c.l.s4 1983009808
      %v1333 = vunpack.c.0.s8 %v1332
      %v1334 = vlaneseq
      %v1335 = vshrl.u32 %v1334, 7
      %v1336 = vsub.s32 %v1333, %v1335
      %v1337 = vrot.slane %v1330, %v1336
      %1361 = vmatprep.subr.mxu0 0.0
      %1362 = vmatpush1.msra.mxu0 %v940
      %1363 = vmatprep.subr.mxu0 0.0
      %1364 = vmatpush1.msra.mxu0 %v941
      %1365 = vmatprep.subr.mxu0 0.0
      %1366 = vmatpush1.msra.mxu0 %v942
      %1367 = vmatprep.subr.mxu0 0.0
      %1368 = vmatpush1.msra.mxu0 %v943
      %1369 = vmatprep.subr.mxu0 0.0
      %1370 = vmatpush1.msra.mxu0 %v944
      %1371 = vmatprep.subr.mxu0 0.0
      %1372 = vmatpush1.msra.mxu0 %v945
      %1373 = vmatprep.subr.mxu0 0.0
      %1374 = vmatpush1.msra.mxu0 %v946
      %1375 = vmatprep.subr.mxu0 0.0
      %1376 = vmatpush1.msra.mxu0 %v947
      %1377 = vmatprep.subr.mxu0 0.0
      %1378 = vmatpush1.msra.mxu0 %v948
      %1379 = vmatprep.subr.mxu0 0.0
      %1380 = vmatpush1.msra.mxu0 %v949
      %1381 = vmatprep.subr.mxu0 0.0
      %1382 = vmatpush1.msra.mxu0 %v950
      %1383 = vmatprep.subr.mxu0 0.0
      %1384 = vmatpush1.msra.mxu0 %v951
      %1385 = vmatprep.subr.mxu0 0.0
      %1386 = vmatpush1.msra.mxu0 %v952
      %1387 = vmatprep.subr.mxu0 0.0
      %1388 = vmatpush1.msra.mxu0 %v953
      %1389 = vmatprep.subr.mxu0 0.0
      %1390 = vmatpush1.msra.mxu0 %v954
      %1391 = vmatprep.subr.mxu0 0.0
      %1392 = vmatpush1.msra.mxu0 %v955
      %1393 = vmatprep.subr.mxu0 0.0
      %1394 = vmatpush1.msra.mxu0 0.0
      %1395 = vmatprep.subr.mxu0 0.0
      %1396 = vmatpush1.msra.mxu0 0.0
      %1397 = vmatprep.subr.mxu0 0.0
      %1398 = vmatpush1.msra.mxu0 0.0
      %1399 = vmatprep.subr.mxu0 0.0
      %1400 = vmatpush1.msra.mxu0 0.0
      %1401 = vmatprep.subr.mxu0 0.0
      %1402 = vmatpush1.msra.mxu0 0.0
      %1403 = vmatprep.subr.mxu0 0.0
      %1404 = vmatpush1.msra.mxu0 0.0
      %1405 = vmatprep.subr.mxu0 0.0
      %1406 = vmatpush1.msra.mxu0 0.0
      %1407 = vmatprep.subr.mxu0 0.0
      %1408 = vmatpush1.msra.mxu0 0.0
      %1409 = vmatprep.subr.mxu0 0.0
      %1410 = vmatpush1.msra.mxu0 0.0
      %1411 = vmatprep.subr.mxu0 0.0
      %1412 = vmatpush1.msra.mxu0 0.0
      %1413 = vmatprep.subr.mxu0 0.0
      %1414 = vmatpush1.msra.mxu0 0.0
      %1415 = vmatprep.subr.mxu0 0.0
      %1416 = vmatpush1.msra.mxu0 0.0
      %1417 = vmatprep.subr.mxu0 0.0
      %1418 = vmatpush1.msra.mxu0 0.0
      %1419 = vmatprep.subr.mxu0 0.0
      %1420 = vmatpush1.msra.mxu0 0.0
      %1421 = vmatprep.subr.mxu0 0.0
      %1422 = vmatpush1.msra.mxu0 0.0
      %1423 = vmatprep.subr.mxu0 0.0
      %1424 = vmatpush1.msra.mxu0 0.0
      %1425 = vmatprep.mubr.f32.mxu0 0.0
      %1426 = vmatmul.mubr.f32.gmra.mrb[0].mxu0 %v972
      %v1427 = vpop.f32.mrb[0].mxu0
      %v1428 = vadd.f32 0.0, %v1427
      %v1429 = vpop.f32.mrb[0].mxu0
      %1430 = vmatprep.mubr.f32.mxu0 0.0
      %1431 = vmatmul.mubr.f32.gmra.mrb[0].mxu0 %v989
      %v1432 = vpop.f32.mrb[0].mxu0
      %v1433 = vadd.f32 0.0, %v1432
      %v1434 = vpop.f32.mrb[0].mxu0
      %1435 = vmatprep.mubr.f32.mxu0 0.0
      %1436 = vmatmul.mubr.f32.gmra.mrb[0].mxu0 %v1006
      %v1437 = vpop.f32.mrb[0].mxu0
      %v1438 = vadd.f32 0.0, %v1437
      %v1439 = vpop.f32.mrb[0].mxu0
      %1440 = vmatprep.mubr.f32.mxu0 0.0
      %1441 = vmatmul.mubr.f32.gmra.mrb[0].mxu0 %v1023
      %v1442 = vpop.f32.mrb[0].mxu0
      %v1443 = vadd.f32 0.0, %v1442
      %v1444 = vpop.f32.mrb[0].mxu0
      %1445 = vmatprep.mubr.f32.mxu0 0.0
      %1446 = vmatmul.mubr.f32.gmra.mrb[0].mxu0 %v1040
      %v1447 = vpop.f32.mrb[0].mxu0
      %v1448 = vadd.f32 0.0, %v1447
      %v1449 = vpop.f32.mrb[0].mxu0
      %1450 = vmatprep.mubr.f32.mxu0 0.0
      %1451 = vmatmul.mubr.f32.gmra.mrb[0].mxu0 %v1057
      %v1452 = vpop.f32.mrb[0].mxu0
      %v1453 = vadd.f32 0.0, %v1452
      %v1454 = vpop.f32.mrb[0].mxu0
      %1455 = vmatprep.mubr.f32.mxu0 0.0
      %1456 = vmatmul.mubr.f32.gmra.mrb[0].mxu0 %v1074
      %v1457 = vpop.f32.mrb[0].mxu0
      %v1458 = vadd.f32 0.0, %v1457
      %v1459 = vpop.f32.mrb[0].mxu0
      %1460 = vmatprep.mubr.f32.mxu0 0.0
      %1461 = vmatmul.mubr.f32.gmra.mrb[0].mxu0 %v1091
      %v1462 = vpop.f32.mrb[0].mxu0
      %v1463 = vadd.f32 0.0, %v1462
      %v1464 = vpop.f32.mrb[0].mxu0
      %1465 = vmatprep.mubr.f32.mxu0 0.0
      %1466 = vmatmul.mubr.f32.gmra.mrb[0].mxu0 %v1108
      %v1467 = vpop.f32.mrb[0].mxu0
      %v1468 = vadd.f32 0.0, %v1467
      %v1469 = vpop.f32.mrb[0].mxu0
      %1470 = vmatprep.mubr.f32.mxu0 0.0
      %1471 = vmatmul.mubr.f32.gmra.mrb[0].mxu0 %v1125
      %v1472 = vpop.f32.mrb[0].mxu0
      %v1473 = vadd.f32 0.0, %v1472
      %v1474 = vpop.f32.mrb[0].mxu0
      %1475 = vmatprep.mubr.f32.mxu0 0.0
      %1476 = vmatmul.mubr.f32.gmra.mrb[0].mxu0 %v1142
      %v1477 = vpop.f32.mrb[0].mxu0
      %v1478 = vadd.f32 0.0, %v1477
      %v1479 = vpop.f32.mrb[0].mxu0
      %1480 = vmatprep.mubr.f32.mxu0 0.0
      %1481 = vmatmul.mubr.f32.gmra.mrb[0].mxu0 %v1159
      %v1482 = vpop.f32.mrb[0].mxu0
      %v1483 = vadd.f32 0.0, %v1482
      %v1484 = vpop.f32.mrb[0].mxu0
      %1485 = vmatprep.mubr.f32.mxu0 0.0
      %1486 = vmatmul.mubr.f32.gmra.mrb[0].mxu0 %v1176
      %v1487 = vpop.f32.mrb[0].mxu0
      %v1488 = vadd.f32 0.0, %v1487
      %v1489 = vpop.f32.mrb[0].mxu0
      %1490 = vmatprep.mubr.f32.mxu0 0.0
      %1491 = vmatmul.mubr.f32.gmra.mrb[0].mxu0 %v1193
      %v1492 = vpop.f32.mrb[0].mxu0
      %v1493 = vadd.f32 0.0, %v1492
      %v1494 = vpop.f32.mrb[0].mxu0
      %1495 = vmatprep.mubr.f32.mxu0 0.0
      %1496 = vmatmul.mubr.f32.gmra.mrb[0].mxu0 %v1210
      %v1497 = vpop.f32.mrb[0].mxu0
      %v1498 = vadd.f32 0.0, %v1497
      %v1499 = vpop.f32.mrb[0].mxu0
      %1500 = vmatprep.mubr.f32.mxu0 0.0
      %1501 = vmatmul.mubr.f32.gmra.mrb[0].mxu0 %v1227
      %v1502 = vpop.f32.mrb[0].mxu0
      %v1503 = vadd.f32 0.0, %v1502
      %v1504 = vpop.f32.mrb[0].mxu0
      %1505 = vmatprep.mubr.f32.mxu0 0.0
      %1506 = vmatmul.mubr.f32.gmra.mrb[0].mxu0 %v1244
      %v1507 = vpop.f32.mrb[0].mxu0
      %v1508 = vadd.f32 0.0, %v1507
      %v1509 = vpop.f32.mrb[0].mxu0
      %1510 = vmatprep.mubr.f32.mxu0 0.0
      %1511 = vmatmul.mubr.f32.gmra.mrb[0].mxu0 %v1261
      %v1512 = vpop.f32.mrb[0].mxu0
      %v1513 = vadd.f32 0.0, %v1512
      %v1514 = vpop.f32.mrb[0].mxu0
      %1515 = vmatprep.mubr.f32.mxu0 0.0
      %1516 = vmatmul.mubr.f32.gmra.mrb[0].mxu0 %v1278
      %v1517 = vpop.f32.mrb[0].mxu0
      %v1518 = vadd.f32 0.0, %v1517
      %v1519 = vpop.f32.mrb[0].mxu0
      %1520 = vmatprep.mubr.f32.mxu0 0.0
      %1521 = vmatmul.mubr.f32.gmra.mrb[0].mxu0 %v1295
      %v1522 = vpop.f32.mrb[0].mxu0
      %v1523 = vpop.f32.mrb[0].mxu0
      %1524 = vmatprep.mubr.f32.mxu0 0.0
      %1525 = vmatmul.mubr.f32.gmra.mrb[0].mxu0 %v1312
      %v1526 = vpop.f32.mrb[0].mxu0
      %v1527 = vpop.f32.mrb[0].mxu0
      %1528 = vmatprep.mubr.f32.mxu0 0.0
      %1529 = vmatmul.mubr.f32.gmra.mrb[0].mxu0 %v1329
      %v1530 = vpop.f32.mrb[0].mxu0
      %v1531 = vpop.f32.mrb[0].mxu0
      %1532 = vmatprep.mubr.f32.mxu0 0.0
      %1533 = vmatmul.mubr.f32.gmra.mrb[0].mxu0 %v1337
      %v1534 = vpop.f32.mrb[0].mxu0
      %v1535 = vadd.f32 0.0, %v1534
      %v1536 = vpop.f32.mrb[0].mxu0
      %1537 = vdwg.mxu0
      %vm1538 = vcmask 1047556
      %v1539 = vrot.slane %v1428, 4
      %v1540 = vrot.slane %v1433, 4
      %v1541 = vrot.slane %v1438, 4
      %v1542 = vrot.slane %v1443, 4
      %v1543 = vrot.slane %v1448, 4
      %v1544 = vrot.slane %v1453, 4
      %v1545 = vrot.slane %v1458, 4
      %v1546 = vrot.slane %v1463, 4
      %v1547 = vrot.slane %v1468, 4
      %v1548 = vrot.slane %v1473, 4
      %v1549 = vrot.slane %v1478, 4
      %v1550 = vrot.slane %v1483, 4
      %v1551 = vrot.slane %v1488, 4
      %v1552 = vrot.slane %v1493, 4
      %v1553 = vrot.slane %v1498, 4
      %v1554 = vrot.slane %v1503, 4
      %v1555 = vrot.slane %v1508, 4
      %v1556 = vrot.slane %v1513, 4
      %v1557 = vrot.slane %v1518, 4
      %v1558 = vsel %vm1538, %v1539, %v1535
      %v1559 = vsel %vm1538, %v1540, %v1539
      %v1560 = vsel %vm1538, %v1541, %v1540
      %v1561 = vsel %vm1538, %v1542, %v1541
      %v1562 = vsel %vm1538, %v1543, %v1542
      %v1563 = vsel %vm1538, %v1544, %v1543
      %v1564 = vsel %vm1538, %v1545, %v1544
      %v1565 = vsel %vm1538, %v1546, %v1545
      %v1566 = vsel %vm1538, %v1547, %v1546
      %v1567 = vsel %vm1538, %v1548, %v1547
      %v1568 = vsel %vm1538, %v1549, %v1548
      %v1569 = vsel %vm1538, %v1550, %v1549
      %v1570 = vsel %vm1538, %v1551, %v1550
      %v1571 = vsel %vm1538, %v1552, %v1551
      %v1572 = vsel %vm1538, %v1553, %v1552
      %v1573 = vsel %vm1538, %v1554, %v1553
      %v1574 = vsel %vm1538, %v1555, %v1554
      %v1575 = vsel %vm1538, %v1556, %v1555
      %v1576 = vsel %vm1538, %v1557, %v1556
      %s1577 = scalar_lea.vmem %s3, 128
      %v1578 = vld [vmem:[%s1577] sm:$0xff]
      %v1579 = vld [vmem:[%s1577 + $0x8] sm:$0xff]
      %v1580 = vld [vmem:[%s1577 + $0x10] sm:$0xff]
      %v1581 = vld [vmem:[%s1577 + $0x18] sm:$0xff]
      %v1582 = vld [vmem:[%s1577 + $0x20] sm:$0xff]
      %v1583 = vld [vmem:[%s1577 + $0x28] sm:$0xff]
      %v1584 = vld [vmem:[%s1577 + $0x30] sm:$0xff]
      %v1585 = vld [vmem:[%s1577 + $0x38] sm:$0xff]
      %v1586 = vld [vmem:[%s1577 + $0x40] sm:$0xff]
      %v1587 = vld [vmem:[%s1577 + $0x48] sm:$0xff]
      %v1588 = vld [vmem:[%s1577 + $0x50] sm:$0xff]
      %v1589 = vld [vmem:[%s1577 + $0x58] sm:$0xff]
      %v1590 = vld [vmem:[%s1577 + $0x60] sm:$0xff]
      %v1591 = vld [vmem:[%s1577 + $0x68] sm:$0xff]
      %v1592 = vld [vmem:[%s1577 + $0x70] sm:$0xff]
      %v1593 = vld [vmem:[%s1577 + $0x78] sm:$0xff]
      %1594 = vmatprep.subr.mxu0 0.0
      %1595 = vmatpush1.msra.mxu0 %v1578
      %1596 = vmatprep.subr.mxu0 0.0
      %1597 = vmatpush1.msra.mxu0 %v1579
      %1598 = vmatprep.subr.mxu0 0.0
      %1599 = vmatpush1.msra.mxu0 %v1580
      %1600 = vmatprep.subr.mxu0 0.0
      %1601 = vmatpush1.msra.mxu0 %v1581
      %1602 = vmatprep.subr.mxu0 0.0
      %1603 = vmatpush1.msra.mxu0 %v1582
      %1604 = vmatprep.subr.mxu0 0.0
      %1605 = vmatpush1.msra.mxu0 %v1583
      %1606 = vmatprep.subr.mxu0 0.0
      %1607 = vmatpush1.msra.mxu0 %v1584
      %1608 = vmatprep.subr.mxu0 0.0
      %1609 = vmatpush1.msra.mxu0 %v1585
      %1610 = vmatprep.subr.mxu0 0.0
      %1611 = vmatpush1.msra.mxu0 %v1586
      %1612 = vmatprep.subr.mxu0 0.0
      %1613 = vmatpush1.msra.mxu0 %v1587
      %1614 = vmatprep.subr.mxu0 0.0
      %1615 = vmatpush1.msra.mxu0 %v1588
      %1616 = vmatprep.subr.mxu0 0.0
      %1617 = vmatpush1.msra.mxu0 %v1589
      %1618 = vmatprep.subr.mxu0 0.0
      %1619 = vmatpush1.msra.mxu0 %v1590
      %1620 = vmatprep.subr.mxu0 0.0
      %1621 = vmatpush1.msra.mxu0 %v1591
      %1622 = vmatprep.subr.mxu0 0.0
      %1623 = vmatpush1.msra.mxu0 %v1592
      %1624 = vmatprep.subr.mxu0 0.0
      %1625 = vmatpush1.msra.mxu0 %v1593
      %1626 = vmatprep.subr.mxu0 0.0
      %1627 = vmatpush1.msra.mxu0 0.0
      %1628 = vmatprep.subr.mxu0 0.0
      %1629 = vmatpush1.msra.mxu0 0.0
      %1630 = vmatprep.subr.mxu0 0.0
      %1631 = vmatpush1.msra.mxu0 0.0
      %1632 = vmatprep.subr.mxu0 0.0
      %1633 = vmatpush1.msra.mxu0 0.0
      %1634 = vmatprep.subr.mxu0 0.0
      %1635 = vmatpush1.msra.mxu0 0.0
      %1636 = vmatprep.subr.mxu0 0.0
      %1637 = vmatpush1.msra.mxu0 0.0
      %1638 = vmatprep.subr.mxu0 0.0
      %1639 = vmatpush1.msra.mxu0 0.0
      %1640 = vmatprep.subr.mxu0 0.0
      %1641 = vmatpush1.msra.mxu0 0.0
      %1642 = vmatprep.subr.mxu0 0.0
      %1643 = vmatpush1.msra.mxu0 0.0
      %1644 = vmatprep.subr.mxu0 0.0
      %1645 = vmatpush1.msra.mxu0 0.0
      %1646 = vmatprep.subr.mxu0 0.0
      %1647 = vmatpush1.msra.mxu0 0.0
      %1648 = vmatprep.subr.mxu0 0.0
      %1649 = vmatpush1.msra.mxu0 0.0
      %1650 = vmatprep.subr.mxu0 0.0
      %1651 = vmatpush1.msra.mxu0 0.0
      %1652 = vmatprep.subr.mxu0 0.0
      %1653 = vmatpush1.msra.mxu0 0.0
      %1654 = vmatprep.subr.mxu0 0.0
      %1655 = vmatpush1.msra.mxu0 0.0
      %1656 = vmatprep.subr.mxu0 0.0
      %1657 = vmatpush1.msra.mxu0 0.0
      %1658 = vmatprep.mubr.f32.mxu0 0.0
      %1659 = vmatmul.mubr.f32.gmra.mrb[0].mxu0 %v972
      %v1660 = vpop.f32.mrb[0].mxu0
      %v1661 = vadd.f32 0.0, %v1660
      %v1662 = vpop.f32.mrb[0].mxu0
      %1663 = vmatprep.mubr.f32.mxu0 0.0
      %1664 = vmatmul.mubr.f32.gmra.mrb[0].mxu0 %v989
      %v1665 = vpop.f32.mrb[0].mxu0
      %v1666 = vadd.f32 0.0, %v1665
      %v1667 = vpop.f32.mrb[0].mxu0
      %1668 = vmatprep.mubr.f32.mxu0 0.0
      %1669 = vmatmul.mubr.f32.gmra.mrb[0].mxu0 %v1006
      %v1670 = vpop.f32.mrb[0].mxu0
      %v1671 = vadd.f32 0.0, %v1670
      %v1672 = vpop.f32.mrb[0].mxu0
      %1673 = vmatprep.mubr.f32.mxu0 0.0
      %1674 = vmatmul.mubr.f32.gmra.mrb[0].mxu0 %v1023
      %v1675 = vpop.f32.mrb[0].mxu0
      %v1676 = vadd.f32 0.0, %v1675
      %v1677 = vpop.f32.mrb[0].mxu0
      %1678 = vmatprep.mubr.f32.mxu0 0.0
      %1679 = vmatmul.mubr.f32.gmra.mrb[0].mxu0 %v1040
      %v1680 = vpop.f32.mrb[0].mxu0
      %v1681 = vadd.f32 0.0, %v1680
      %v1682 = vpop.f32.mrb[0].mxu0
      %1683 = vmatprep.mubr.f32.mxu0 0.0
      %1684 = vmatmul.mubr.f32.gmra.mrb[0].mxu0 %v1057
      %v1685 = vpop.f32.mrb[0].mxu0
      %v1686 = vadd.f32 0.0, %v1685
      %v1687 = vpop.f32.mrb[0].mxu0
      %1688 = vmatprep.mubr.f32.mxu0 0.0
      %1689 = vmatmul.mubr.f32.gmra.mrb[0].mxu0 %v1074
      %v1690 = vpop.f32.mrb[0].mxu0
      %v1691 = vadd.f32 0.0, %v1690
      %v1692 = vpop.f32.mrb[0].mxu0
      %1693 = vmatprep.mubr.f32.mxu0 0.0
      %1694 = vmatmul.mubr.f32.gmra.mrb[0].mxu0 %v1091
      %v1695 = vpop.f32.mrb[0].mxu0
      %v1696 = vadd.f32 0.0, %v1695
      %v1697 = vpop.f32.mrb[0].mxu0
      %1698 = vmatprep.mubr.f32.mxu0 0.0
      %1699 = vmatmul.mubr.f32.gmra.mrb[0].mxu0 %v1108
      %v1700 = vpop.f32.mrb[0].mxu0
      %v1701 = vadd.f32 0.0, %v1700
      %v1702 = vpop.f32.mrb[0].mxu0
      %1703 = vmatprep.mubr.f32.mxu0 0.0
      %1704 = vmatmul.mubr.f32.gmra.mrb[0].mxu0 %v1125
      %v1705 = vpop.f32.mrb[0].mxu0
      %v1706 = vadd.f32 0.0, %v1705
      %v1707 = vpop.f32.mrb[0].mxu0
      %1708 = vmatprep.mubr.f32.mxu0 0.0
      %1709 = vmatmul.mubr.f32.gmra.mrb[0].mxu0 %v1142
      %v1710 = vpop.f32.mrb[0].mxu0
      %v1711 = vadd.f32 0.0, %v1710
      %v1712 = vpop.f32.mrb[0].mxu0
      %1713 = vmatprep.mubr.f32.mxu0 0.0
      %1714 = vmatmul.mubr.f32.gmra.mrb[0].mxu0 %v1159
      %v1715 = vpop.f32.mrb[0].mxu0
      %v1716 = vadd.f32 0.0, %v1715
      %v1717 = vpop.f32.mrb[0].mxu0
      %1718 = vmatprep.mubr.f32.mxu0 0.0
      %1719 = vmatmul.mubr.f32.gmra.mrb[0].mxu0 %v1176
      %v1720 = vpop.f32.mrb[0].mxu0
      %v1721 = vadd.f32 0.0, %v1720
      %v1722 = vpop.f32.mrb[0].mxu0
      %1723 = vmatprep.mubr.f32.mxu0 0.0
      %1724 = vmatmul.mubr.f32.gmra.mrb[0].mxu0 %v1193
      %v1725 = vpop.f32.mrb[0].mxu0
      %v1726 = vadd.f32 0.0, %v1725
      %v1727 = vpop.f32.mrb[0].mxu0
      %1728 = vmatprep.mubr.f32.mxu0 0.0
      %1729 = vmatmul.mubr.f32.gmra.mrb[0].mxu0 %v1210
      %v1730 = vpop.f32.mrb[0].mxu0
      %v1731 = vadd.f32 0.0, %v1730
      %v1732 = vpop.f32.mrb[0].mxu0
      %1733 = vmatprep.mubr.f32.mxu0 0.0
      %1734 = vmatmul.mubr.f32.gmra.mrb[0].mxu0 %v1227
      %v1735 = vpop.f32.mrb[0].mxu0
      %v1736 = vadd.f32 0.0, %v1735
      %v1737 = vpop.f32.mrb[0].mxu0
      %1738 = vmatprep.mubr.f32.mxu0 0.0
      %1739 = vmatmul.mubr.f32.gmra.mrb[0].mxu0 %v1244
      %v1740 = vpop.f32.mrb[0].mxu0
      %v1741 = vadd.f32 0.0, %v1740
      %v1742 = vpop.f32.mrb[0].mxu0
      %1743 = vmatprep.mubr.f32.mxu0 0.0
      %1744 = vmatmul.mubr.f32.gmra.mrb[0].mxu0 %v1261
      %v1745 = vpop.f32.mrb[0].mxu0
      %v1746 = vadd.f32 0.0, %v1745
      %v1747 = vpop.f32.mrb[0].mxu0
      %1748 = vmatprep.mubr.f32.mxu0 0.0
      %1749 = vmatmul.mubr.f32.gmra.mrb[0].mxu0 %v1278
      %v1750 = vpop.f32.mrb[0].mxu0
      %v1751 = vadd.f32 0.0, %v1750
      %v1752 = vpop.f32.mrb[0].mxu0
      %1753 = vmatprep.mubr.f32.mxu0 0.0
      %1754 = vmatmul.mubr.f32.gmra.mrb[0].mxu0 %v1295
      %v1755 = vpop.f32.mrb[0].mxu0
      %v1756 = vadd.f32 0.0, %v1755
      %v1757 = vpop.f32.mrb[0].mxu0
      %1758 = vmatprep.mubr.f32.mxu0 0.0
      %1759 = vmatmul.mubr.f32.gmra.mrb[0].mxu0 %v1312
      %v1760 = vpop.f32.mrb[0].mxu0
      %v1761 = vpop.f32.mrb[0].mxu0
      %1762 = vmatprep.mubr.f32.mxu0 0.0
      %1763 = vmatmul.mubr.f32.gmra.mrb[0].mxu0 %v1329
      %v1764 = vpop.f32.mrb[0].mxu0
      %v1765 = vpop.f32.mrb[0].mxu0
      %1766 = vmatprep.mubr.f32.mxu0 0.0
      %1767 = vmatmul.mubr.f32.gmra.mrb[0].mxu0 %v1337
      %v1768 = vpop.f32.mrb[0].mxu0
      %v1769 = vadd.f32 0.0, %v1768
      %v1770 = vpop.f32.mrb[0].mxu0
      %1771 = vdwg.mxu0
      %v1772 = vrot.slane %v1661, 4
      %v1773 = vrot.slane %v1666, 4
      %v1774 = vrot.slane %v1671, 4
      %v1775 = vrot.slane %v1676, 4
      %v1776 = vrot.slane %v1681, 4
      %v1777 = vrot.slane %v1686, 4
      %v1778 = vrot.slane %v1691, 4
      %v1779 = vrot.slane %v1696, 4
      %v1780 = vrot.slane %v1701, 4
      %v1781 = vrot.slane %v1706, 4
      %v1782 = vrot.slane %v1711, 4
      %v1783 = vrot.slane %v1716, 4
      %v1784 = vrot.slane %v1721, 4
      %v1785 = vrot.slane %v1726, 4
      %v1786 = vrot.slane %v1731, 4
      %v1787 = vrot.slane %v1736, 4
      %v1788 = vrot.slane %v1741, 4
      %v1789 = vrot.slane %v1746, 4
      %v1790 = vrot.slane %v1751, 4
      %v1791 = vrot.slane %v1756, 4
      %v1792 = vsel %vm1538, %v1772, %v1769
      %v1793 = vsel %vm1538, %v1773, %v1772
      %v1794 = vsel %vm1538, %v1774, %v1773
      %v1795 = vsel %vm1538, %v1775, %v1774
      %v1796 = vsel %vm1538, %v1776, %v1775
      %v1797 = vsel %vm1538, %v1777, %v1776
      %v1798 = vsel %vm1538, %v1778, %v1777
      %v1799 = vsel %vm1538, %v1779, %v1778
      %v1800 = vsel %vm1538, %v1780, %v1779
      %v1801 = vsel %vm1538, %v1781, %v1780
      %v1802 = vsel %vm1538, %v1782, %v1781
      %v1803 = vsel %vm1538, %v1783, %v1782
      %v1804 = vsel %vm1538, %v1784, %v1783
      %v1805 = vsel %vm1538, %v1785, %v1784
      %v1806 = vsel %vm1538, %v1786, %v1785
      %v1807 = vsel %vm1538, %v1787, %v1786
      %v1808 = vsel %vm1538, %v1788, %v1787
      %v1809 = vsel %vm1538, %v1789, %v1788
      %v1810 = vsel %vm1538, %v1790, %v1789
      %v1811 = vsel %vm1538, %v1791, %v1790
      %vm1832 = vcmask 1046528
      %v1833 = vrot.slane %v1792, 1
      %v1834 = vrot.slane %v1793, 1
      %v1835 = vsel %vm1832, %v1833, %v1834
      %v1836 = vrot.slane %v1794, 1
      %v1837 = vsel %vm1832, %v1834, %v1836
      %v1838 = vrot.slane %v1795, 1
      %v1839 = vsel %vm1832, %v1836, %v1838
      %v1840 = vrot.slane %v1796, 1
      %v1841 = vsel %vm1832, %v1838, %v1840
      %v1842 = vrot.slane %v1797, 1
      %v1843 = vsel %vm1832, %v1840, %v1842
      %v1844 = vrot.slane %v1798, 1
      %v1845 = vsel %vm1832, %v1842, %v1844
      %v1846 = vrot.slane %v1799, 1
      %v1847 = vsel %vm1832, %v1844, %v1846
      %v1848 = vrot.slane %v1800, 1
      %v1849 = vsel %vm1832, %v1846, %v1848
      %v1850 = vrot.slane %v1801, 1
      %v1851 = vsel %vm1832, %v1848, %v1850
      %v1852 = vrot.slane %v1802, 1
      %v1853 = vsel %vm1832, %v1850, %v1852
      %v1854 = vrot.slane %v1803, 1
      %v1855 = vsel %vm1832, %v1852, %v1854
      %v1856 = vrot.slane %v1804, 1
      %v1857 = vsel %vm1832, %v1854, %v1856
      %v1858 = vrot.slane %v1805, 1
      %v1859 = vsel %vm1832, %v1856, %v1858
      %v1860 = vrot.slane %v1806, 1
      %v1861 = vsel %vm1832, %v1858, %v1860
      %v1862 = vrot.slane %v1807, 1
      %v1863 = vsel %vm1832, %v1860, %v1862
      %v1864 = vrot.slane %v1808, 1
      %v1865 = vsel %vm1832, %v1862, %v1864
      %v1866 = vrot.slane %v1809, 1
      %v1867 = vsel %vm1832, %v1864, %v1866
      %v1868 = vrot.slane %v1810, 1
      %v1869 = vsel %vm1832, %v1866, %v1868
      %v1870 = vrot.slane %v1811, 1
      %v1871 = vsel %vm1832, %v1868, %v1870
      %v1891 = vadd.f32 %v1558, %v1835
      %v1892 = vadd.f32 %v1559, %v1837
      %v1893 = vadd.f32 %v1560, %v1839
      %v1894 = vadd.f32 %v1561, %v1841
      %v1895 = vadd.f32 %v1562, %v1843
      %v1896 = vadd.f32 %v1563, %v1845
      %v1897 = vadd.f32 %v1564, %v1847
      %v1898 = vadd.f32 %v1565, %v1849
      %v1899 = vadd.f32 %v1566, %v1851
      %v1900 = vadd.f32 %v1567, %v1853
      %v1901 = vadd.f32 %v1568, %v1855
      %v1902 = vadd.f32 %v1569, %v1857
      %v1903 = vadd.f32 %v1570, %v1859
      %v1904 = vadd.f32 %v1571, %v1861
      %v1905 = vadd.f32 %v1572, %v1863
      %v1906 = vadd.f32 %v1573, %v1865
      %v1907 = vadd.f32 %v1574, %v1867
      %v1908 = vadd.f32 %v1575, %v1869
      %v1909 = vadd.f32 %v1576, %v1871
      %s1910 = scalar_lea.vmem %s3, 256
      %v1911 = vld [vmem:[%s1910] sm:$0xff]
      %v1912 = vld [vmem:[%s1910 + $0x8] sm:$0xff]
      %v1913 = vld [vmem:[%s1910 + $0x10] sm:$0xff]
      %v1914 = vld [vmem:[%s1910 + $0x18] sm:$0xff]
      %v1915 = vld [vmem:[%s1910 + $0x20] sm:$0xff]
      %v1916 = vld [vmem:[%s1910 + $0x28] sm:$0xff]
      %v1917 = vld [vmem:[%s1910 + $0x30] sm:$0xff]
      %v1918 = vld [vmem:[%s1910 + $0x38] sm:$0xff]
      %v1919 = vld [vmem:[%s1910 + $0x40] sm:$0xff]
      %v1920 = vld [vmem:[%s1910 + $0x48] sm:$0xff]
      %v1921 = vld [vmem:[%s1910 + $0x50] sm:$0xff]
      %v1922 = vld [vmem:[%s1910 + $0x58] sm:$0xff]
      %v1923 = vld [vmem:[%s1910 + $0x60] sm:$0xff]
      %v1924 = vld [vmem:[%s1910 + $0x68] sm:$0xff]
      %v1925 = vld [vmem:[%s1910 + $0x70] sm:$0xff]
      %v1926 = vld [vmem:[%s1910 + $0x78] sm:$0xff]
      %1927 = vmatprep.subr.mxu0 0.0
      %1928 = vmatpush1.msra.mxu0 %v1911
      %1929 = vmatprep.subr.mxu0 0.0
      %1930 = vmatpush1.msra.mxu0 %v1912
      %1931 = vmatprep.subr.mxu0 0.0
      %1932 = vmatpush1.msra.mxu0 %v1913
      %1933 = vmatprep.subr.mxu0 0.0
      %1934 = vmatpush1.msra.mxu0 %v1914
      %1935 = vmatprep.subr.mxu0 0.0
      %1936 = vmatpush1.msra.mxu0 %v1915
      %1937 = vmatprep.subr.mxu0 0.0
      %1938 = vmatpush1.msra.mxu0 %v1916
      %1939 = vmatprep.subr.mxu0 0.0
      %1940 = vmatpush1.msra.mxu0 %v1917
      %1941 = vmatprep.subr.mxu0 0.0
      %1942 = vmatpush1.msra.mxu0 %v1918
      %1943 = vmatprep.subr.mxu0 0.0
      %1944 = vmatpush1.msra.mxu0 %v1919
      %1945 = vmatprep.subr.mxu0 0.0
      %1946 = vmatpush1.msra.mxu0 %v1920
      %1947 = vmatprep.subr.mxu0 0.0
      %1948 = vmatpush1.msra.mxu0 %v1921
      %1949 = vmatprep.subr.mxu0 0.0
      %1950 = vmatpush1.msra.mxu0 %v1922
      %1951 = vmatprep.subr.mxu0 0.0
      %1952 = vmatpush1.msra.mxu0 %v1923
      %1953 = vmatprep.subr.mxu0 0.0
      %1954 = vmatpush1.msra.mxu0 %v1924
      %1955 = vmatprep.subr.mxu0 0.0
      %1956 = vmatpush1.msra.mxu0 %v1925
      %1957 = vmatprep.subr.mxu0 0.0
      %1958 = vmatpush1.msra.mxu0 %v1926
      %1959 = vmatprep.subr.mxu0 0.0
      %1960 = vmatpush1.msra.mxu0 0.0
      %1961 = vmatprep.subr.mxu0 0.0
      %1962 = vmatpush1.msra.mxu0 0.0
      %1963 = vmatprep.subr.mxu0 0.0
      %1964 = vmatpush1.msra.mxu0 0.0
      %1965 = vmatprep.subr.mxu0 0.0
      %1966 = vmatpush1.msra.mxu0 0.0
      %1967 = vmatprep.subr.mxu0 0.0
      %1968 = vmatpush1.msra.mxu0 0.0
      %1969 = vmatprep.subr.mxu0 0.0
      %1970 = vmatpush1.msra.mxu0 0.0
      %1971 = vmatprep.subr.mxu0 0.0
      %1972 = vmatpush1.msra.mxu0 0.0
      %1973 = vmatprep.subr.mxu0 0.0
      %1974 = vmatpush1.msra.mxu0 0.0
      %1975 = vmatprep.subr.mxu0 0.0
      %1976 = vmatpush1.msra.mxu0 0.0
      %1977 = vmatprep.subr.mxu0 0.0
      %1978 = vmatpush1.msra.mxu0 0.0
      %1979 = vmatprep.subr.mxu0 0.0
      %1980 = vmatpush1.msra.mxu0 0.0
      %1981 = vmatprep.subr.mxu0 0.0
      %1982 = vmatpush1.msra.mxu0 0.0
      %1983 = vmatprep.subr.mxu0 0.0
      %1984 = vmatpush1.msra.mxu0 0.0
      %1985 = vmatprep.subr.mxu0 0.0
      %1986 = vmatpush1.msra.mxu0 0.0
      %1987 = vmatprep.subr.mxu0 0.0
      %1988 = vmatpush1.msra.mxu0 0.0
      %1989 = vmatprep.subr.mxu0 0.0
      %1990 = vmatpush1.msra.mxu0 0.0
      %1991 = vmatprep.mubr.f32.mxu0 0.0
      %1992 = vmatmul.mubr.f32.gmra.mrb[0].mxu0 %v972
      %v1993 = vpop.f32.mrb[0].mxu0
      %v1994 = vadd.f32 0.0, %v1993
      %v1995 = vpop.f32.mrb[0].mxu0
      %1996 = vmatprep.mubr.f32.mxu0 0.0
      %1997 = vmatmul.mubr.f32.gmra.mrb[0].mxu0 %v989
      %v1998 = vpop.f32.mrb[0].mxu0
      %v1999 = vadd.f32 0.0, %v1998
      %v2000 = vpop.f32.mrb[0].mxu0
      %2001 = vmatprep.mubr.f32.mxu0 0.0
      %2002 = vmatmul.mubr.f32.gmra.mrb[0].mxu0 %v1006
      %v2003 = vpop.f32.mrb[0].mxu0
      %v2004 = vadd.f32 0.0, %v2003
      %v2005 = vpop.f32.mrb[0].mxu0
      %2006 = vmatprep.mubr.f32.mxu0 0.0
      %2007 = vmatmul.mubr.f32.gmra.mrb[0].mxu0 %v1023
      %v2008 = vpop.f32.mrb[0].mxu0
      %v2009 = vadd.f32 0.0, %v2008
      %v2010 = vpop.f32.mrb[0].mxu0
      %2011 = vmatprep.mubr.f32.mxu0 0.0
      %2012 = vmatmul.mubr.f32.gmra.mrb[0].mxu0 %v1040
      %v2013 = vpop.f32.mrb[0].mxu0
      %v2014 = vadd.f32 0.0, %v2013
      %v2015 = vpop.f32.mrb[0].mxu0
      %2016 = vmatprep.mubr.f32.mxu0 0.0
      %2017 = vmatmul.mubr.f32.gmra.mrb[0].mxu0 %v1057
      %v2018 = vpop.f32.mrb[0].mxu0
      %v2019 = vadd.f32 0.0, %v2018
      %v2020 = vpop.f32.mrb[0].mxu0
      %2021 = vmatprep.mubr.f32.mxu0 0.0
      %2022 = vmatmul.mubr.f32.gmra.mrb[0].mxu0 %v1074
      %v2023 = vpop.f32.mrb[0].mxu0
      %v2024 = vadd.f32 0.0, %v2023
      %v2025 = vpop.f32.mrb[0].mxu0
      %2026 = vmatprep.mubr.f32.mxu0 0.0
      %2027 = vmatmul.mubr.f32.gmra.mrb[0].mxu0 %v1091
      %v2028 = vpop.f32.mrb[0].mxu0
      %v2029 = vadd.f32 0.0, %v2028
      %v2030 = vpop.f32.mrb[0].mxu0
      %2031 = vmatprep.mubr.f32.mxu0 0.0
      %2032 = vmatmul.mubr.f32.gmra.mrb[0].mxu0 %v1108
      %v2033 = vpop.f32.mrb[0].mxu0
      %v2034 = vadd.f32 0.0, %v2033
      %v2035 = vpop.f32.mrb[0].mxu0
      %2036 = vmatprep.mubr.f32.mxu0 0.0
      %2037 = vmatmul.mubr.f32.gmra.mrb[0].mxu0 %v1125
      %v2038 = vpop.f32.mrb[0].mxu0
      %v2039 = vadd.f32 0.0, %v2038
      %v2040 = vpop.f32.mrb[0].mxu0
      %2041 = vmatprep.mubr.f32.mxu0 0.0
      %2042 = vmatmul.mubr.f32.gmra.mrb[0].mxu0 %v1142
      %v2043 = vpop.f32.mrb[0].mxu0
      %v2044 = vadd.f32 0.0, %v2043
      %v2045 = vpop.f32.mrb[0].mxu0
      %2046 = vmatprep.mubr.f32.mxu0 0.0
      %2047 = vmatmul.mubr.f32.gmra.mrb[0].mxu0 %v1159
      %v2048 = vpop.f32.mrb[0].mxu0
      %v2049 = vadd.f32 0.0, %v2048
      %v2050 = vpop.f32.mrb[0].mxu0
      %2051 = vmatprep.mubr.f32.mxu0 0.0
      %2052 = vmatmul.mubr.f32.gmra.mrb[0].mxu0 %v1176
      %v2053 = vpop.f32.mrb[0].mxu0
      %v2054 = vadd.f32 0.0, %v2053
      %v2055 = vpop.f32.mrb[0].mxu0
      %2056 = vmatprep.mubr.f32.mxu0 0.0
      %2057 = vmatmul.mubr.f32.gmra.mrb[0].mxu0 %v1193
      %v2058 = vpop.f32.mrb[0].mxu0
      %v2059 = vadd.f32 0.0, %v2058
      %v2060 = vpop.f32.mrb[0].mxu0
      %2061 = vmatprep.mubr.f32.mxu0 0.0
      %2062 = vmatmul.mubr.f32.gmra.mrb[0].mxu0 %v1210
      %v2063 = vpop.f32.mrb[0].mxu0
      %v2064 = vadd.f32 0.0, %v2063
      %v2065 = vpop.f32.mrb[0].mxu0
      %2066 = vmatprep.mubr.f32.mxu0 0.0
      %2067 = vmatmul.mubr.f32.gmra.mrb[0].mxu0 %v1227
      %v2068 = vpop.f32.mrb[0].mxu0
      %v2069 = vadd.f32 0.0, %v2068
      %v2070 = vpop.f32.mrb[0].mxu0
      %2071 = vmatprep.mubr.f32.mxu0 0.0
      %2072 = vmatmul.mubr.f32.gmra.mrb[0].mxu0 %v1244
      %v2073 = vpop.f32.mrb[0].mxu0
      %v2074 = vadd.f32 0.0, %v2073
      %v2075 = vpop.f32.mrb[0].mxu0
      %2076 = vmatprep.mubr.f32.mxu0 0.0
      %2077 = vmatmul.mubr.f32.gmra.mrb[0].mxu0 %v1261
      %v2078 = vpop.f32.mrb[0].mxu0
      %v2079 = vadd.f32 0.0, %v2078
      %v2080 = vpop.f32.mrb[0].mxu0
      %2081 = vmatprep.mubr.f32.mxu0 0.0
      %2082 = vmatmul.mubr.f32.gmra.mrb[0].mxu0 %v1278
      %v2083 = vpop.f32.mrb[0].mxu0
      %v2084 = vadd.f32 0.0, %v2083
      %v2085 = vpop.f32.mrb[0].mxu0
      %2086 = vmatprep.mubr.f32.mxu0 0.0
      %2087 = vmatmul.mubr.f32.gmra.mrb[0].mxu0 %v1295
      %v2088 = vpop.f32.mrb[0].mxu0
      %v2089 = vadd.f32 0.0, %v2088
      %v2090 = vpop.f32.mrb[0].mxu0
      %2091 = vmatprep.mubr.f32.mxu0 0.0
      %2092 = vmatmul.mubr.f32.gmra.mrb[0].mxu0 %v1312
      %v2093 = vpop.f32.mrb[0].mxu0
      %v2094 = vpop.f32.mrb[0].mxu0
      %2095 = vmatprep.mubr.f32.mxu0 0.0
      %2096 = vmatmul.mubr.f32.gmra.mrb[0].mxu0 %v1329
      %v2097 = vpop.f32.mrb[0].mxu0
      %v2098 = vpop.f32.mrb[0].mxu0
      %2099 = vmatprep.mubr.f32.mxu0 0.0
      %2100 = vmatmul.mubr.f32.gmra.mrb[0].mxu0 %v1337
      %v2101 = vpop.f32.mrb[0].mxu0
      %v2102 = vadd.f32 0.0, %v2101
      %v2103 = vpop.f32.mrb[0].mxu0
      %2104 = vdwg.mxu0
      %v2105 = vrot.slane %v1994, 4
      %v2106 = vrot.slane %v1999, 4
      %v2107 = vrot.slane %v2004, 4
      %v2108 = vrot.slane %v2009, 4
      %v2109 = vrot.slane %v2014, 4
      %v2110 = vrot.slane %v2019, 4
      %v2111 = vrot.slane %v2024, 4
      %v2112 = vrot.slane %v2029, 4
      %v2113 = vrot.slane %v2034, 4
      %v2114 = vrot.slane %v2039, 4
      %v2115 = vrot.slane %v2044, 4
      %v2116 = vrot.slane %v2049, 4
      %v2117 = vrot.slane %v2054, 4
      %v2118 = vrot.slane %v2059, 4
      %v2119 = vrot.slane %v2064, 4
      %v2120 = vrot.slane %v2069, 4
      %v2121 = vrot.slane %v2074, 4
      %v2122 = vrot.slane %v2079, 4
      %v2123 = vrot.slane %v2084, 4
      %v2124 = vrot.slane %v2089, 4
      %v2125 = vsel %vm1538, %v2105, %v2102
      %v2126 = vsel %vm1538, %v2106, %v2105
      %v2127 = vsel %vm1538, %v2107, %v2106
      %v2128 = vsel %vm1538, %v2108, %v2107
      %v2129 = vsel %vm1538, %v2109, %v2108
      %v2130 = vsel %vm1538, %v2110, %v2109
      %v2131 = vsel %vm1538, %v2111, %v2110
      %v2132 = vsel %vm1538, %v2112, %v2111
      %v2133 = vsel %vm1538, %v2113, %v2112
      %v2134 = vsel %vm1538, %v2114, %v2113
      %v2135 = vsel %vm1538, %v2115, %v2114
      %v2136 = vsel %vm1538, %v2116, %v2115
      %v2137 = vsel %vm1538, %v2117, %v2116
      %v2138 = vsel %vm1538, %v2118, %v2117
      %v2139 = vsel %vm1538, %v2119, %v2118
      %v2140 = vsel %vm1538, %v2120, %v2119
      %v2141 = vsel %vm1538, %v2121, %v2120
      %v2142 = vsel %vm1538, %v2122, %v2121
      %v2143 = vsel %vm1538, %v2123, %v2122
      %v2144 = vsel %vm1538, %v2124, %v2123
      %vm2165 = vcmask 1045504
      %v2166 = vrot.slane %v2125, 2
      %v2167 = vrot.slane %v2126, 2
      %v2168 = vsel %vm2165, %v2166, %v2167
      %v2169 = vrot.slane %v2127, 2
      %v2170 = vsel %vm2165, %v2167, %v2169
      %v2171 = vrot.slane %v2128, 2
      %v2172 = vsel %vm2165, %v2169, %v2171
      %v2173 = vrot.slane %v2129, 2
      %v2174 = vsel %vm2165, %v2171, %v2173
      %v2175 = vrot.slane %v2130, 2
      %v2176 = vsel %vm2165, %v2173, %v2175
      %v2177 = vrot.slane %v2131, 2
      %v2178 = vsel %vm2165, %v2175, %v2177
      %v2179 = vrot.slane %v2132, 2
      %v2180 = vsel %vm2165, %v2177, %v2179
      %v2181 = vrot.slane %v2133, 2
      %v2182 = vsel %vm2165, %v2179, %v2181
      %v2183 = vrot.slane %v2134, 2
      %v2184 = vsel %vm2165, %v2181, %v2183
      %v2185 = vrot.slane %v2135, 2
      %v2186 = vsel %vm2165, %v2183, %v2185
      %v2187 = vrot.slane %v2136, 2
      %v2188 = vsel %vm2165, %v2185, %v2187
      %v2189 = vrot.slane %v2137, 2
      %v2190 = vsel %vm2165, %v2187, %v2189
      %v2191 = vrot.slane %v2138, 2
      %v2192 = vsel %vm2165, %v2189, %v2191
      %v2193 = vrot.slane %v2139, 2
      %v2194 = vsel %vm2165, %v2191, %v2193
      %v2195 = vrot.slane %v2140, 2
      %v2196 = vsel %vm2165, %v2193, %v2195
      %v2197 = vrot.slane %v2141, 2
      %v2198 = vsel %vm2165, %v2195, %v2197
      %v2199 = vrot.slane %v2142, 2
      %v2200 = vsel %vm2165, %v2197, %v2199
      %v2201 = vrot.slane %v2143, 2
      %v2202 = vsel %vm2165, %v2199, %v2201
      %v2203 = vrot.slane %v2144, 2
      %v2204 = vsel %vm2165, %v2201, %v2203
      %v2224 = vadd.f32 %v1891, %v2168
      %v2225 = vadd.f32 %v1892, %v2170
      %v2226 = vadd.f32 %v1893, %v2172
      %v2227 = vadd.f32 %v1894, %v2174
      %v2228 = vadd.f32 %v1895, %v2176
      %v2229 = vadd.f32 %v1896, %v2178
      %v2230 = vadd.f32 %v1897, %v2180
      %v2231 = vadd.f32 %v1898, %v2182
      %v2232 = vadd.f32 %v1899, %v2184
      %v2233 = vadd.f32 %v1900, %v2186
      %v2234 = vadd.f32 %v1901, %v2188
      %v2235 = vadd.f32 %v1902, %v2190
      %v2236 = vadd.f32 %v1903, %v2192
      %v2237 = vadd.f32 %v1904, %v2194
      %v2238 = vadd.f32 %v1905, %v2196
      %v2239 = vadd.f32 %v1906, %v2198
      %v2240 = vadd.f32 %v1907, %v2200
      %v2241 = vadd.f32 %v1908, %v2202
      %v2242 = vadd.f32 %v1909, %v2204
      %s2243 = scalar_lea.vmem %s3, 384
      %v2244 = vld [vmem:[%s2243] sm:$0xff]
      %v2245 = vld [vmem:[%s2243 + $0x8] sm:$0xff]
      %v2246 = vld [vmem:[%s2243 + $0x10] sm:$0xff]
      %v2247 = vld [vmem:[%s2243 + $0x18] sm:$0xff]
      %v2248 = vld [vmem:[%s2243 + $0x20] sm:$0xff]
      %v2249 = vld [vmem:[%s2243 + $0x28] sm:$0xff]
      %v2250 = vld [vmem:[%s2243 + $0x30] sm:$0xff]
      %v2251 = vld [vmem:[%s2243 + $0x38] sm:$0xff]
      %v2252 = vld [vmem:[%s2243 + $0x40] sm:$0xff]
      %v2253 = vld [vmem:[%s2243 + $0x48] sm:$0xff]
      %v2254 = vld [vmem:[%s2243 + $0x50] sm:$0xff]
      %v2255 = vld [vmem:[%s2243 + $0x58] sm:$0xff]
      %v2256 = vld [vmem:[%s2243 + $0x60] sm:$0xff]
      %v2257 = vld [vmem:[%s2243 + $0x68] sm:$0xff]
      %v2258 = vld [vmem:[%s2243 + $0x70] sm:$0xff]
      %v2259 = vld [vmem:[%s2243 + $0x78] sm:$0xff]
      %2260 = vmatprep.subr.mxu0 0.0
      %2261 = vmatpush1.msra.mxu0 %v2244
      %2262 = vmatprep.subr.mxu0 0.0
      %2263 = vmatpush1.msra.mxu0 %v2245
      %2264 = vmatprep.subr.mxu0 0.0
      %2265 = vmatpush1.msra.mxu0 %v2246
      %2266 = vmatprep.subr.mxu0 0.0
      %2267 = vmatpush1.msra.mxu0 %v2247
      %2268 = vmatprep.subr.mxu0 0.0
      %2269 = vmatpush1.msra.mxu0 %v2248
      %2270 = vmatprep.subr.mxu0 0.0
      %2271 = vmatpush1.msra.mxu0 %v2249
      %2272 = vmatprep.subr.mxu0 0.0
      %2273 = vmatpush1.msra.mxu0 %v2250
      %2274 = vmatprep.subr.mxu0 0.0
      %2275 = vmatpush1.msra.mxu0 %v2251
      %2276 = vmatprep.subr.mxu0 0.0
      %2277 = vmatpush1.msra.mxu0 %v2252
      %2278 = vmatprep.subr.mxu0 0.0
      %2279 = vmatpush1.msra.mxu0 %v2253
      %2280 = vmatprep.subr.mxu0 0.0
      %2281 = vmatpush1.msra.mxu0 %v2254
      %2282 = vmatprep.subr.mxu0 0.0
      %2283 = vmatpush1.msra.mxu0 %v2255
      %2284 = vmatprep.subr.mxu0 0.0
      %2285 = vmatpush1.msra.mxu0 %v2256
      %2286 = vmatprep.subr.mxu0 0.0
      %2287 = vmatpush1.msra.mxu0 %v2257
      %2288 = vmatprep.subr.mxu0 0.0
      %2289 = vmatpush1.msra.mxu0 %v2258
      %2290 = vmatprep.subr.mxu0 0.0
      %2291 = vmatpush1.msra.mxu0 %v2259
      %2292 = vmatprep.subr.mxu0 0.0
      %2293 = vmatpush1.msra.mxu0 0.0
      %2294 = vmatprep.subr.mxu0 0.0
      %2295 = vmatpush1.msra.mxu0 0.0
      %2296 = vmatprep.subr.mxu0 0.0
      %2297 = vmatpush1.msra.mxu0 0.0
      %2298 = vmatprep.subr.mxu0 0.0
      %2299 = vmatpush1.msra.mxu0 0.0
      %2300 = vmatprep.subr.mxu0 0.0
      %2301 = vmatpush1.msra.mxu0 0.0
      %2302 = vmatprep.subr.mxu0 0.0
      %2303 = vmatpush1.msra.mxu0 0.0
      %2304 = vmatprep.subr.mxu0 0.0
      %2305 = vmatpush1.msra.mxu0 0.0
      %2306 = vmatprep.subr.mxu0 0.0
      %2307 = vmatpush1.msra.mxu0 0.0
      %2308 = vmatprep.subr.mxu0 0.0
      %2309 = vmatpush1.msra.mxu0 0.0
      %2310 = vmatprep.subr.mxu0 0.0
      %2311 = vmatpush1.msra.mxu0 0.0
      %2312 = vmatprep.subr.mxu0 0.0
      %2313 = vmatpush1.msra.mxu0 0.0
      %2314 = vmatprep.subr.mxu0 0.0
      %2315 = vmatpush1.msra.mxu0 0.0
      %2316 = vmatprep.subr.mxu0 0.0
      %2317 = vmatpush1.msra.mxu0 0.0
      %2318 = vmatprep.subr.mxu0 0.0
      %2319 = vmatpush1.msra.mxu0 0.0
      %2320 = vmatprep.subr.mxu0 0.0
      %2321 = vmatpush1.msra.mxu0 0.0
      %2322 = vmatprep.subr.mxu0 0.0
      %2323 = vmatpush1.msra.mxu0 0.0
      %2324 = vmatprep.mubr.f32.mxu0 0.0
      %2325 = vmatmul.mubr.f32.gmra.mrb[0].mxu0 %v972
      %v2326 = vpop.f32.mrb[0].mxu0
      %v2327 = vpop.f32.mrb[0].mxu0
      %2328 = vmatprep.mubr.f32.mxu0 0.0
      %2329 = vmatmul.mubr.f32.gmra.mrb[0].mxu0 %v989
      %v2330 = vpop.f32.mrb[0].mxu0
      %v2331 = vadd.f32 0.0, %v2330
      %v2332 = vpop.f32.mrb[0].mxu0
      %2333 = vmatprep.mubr.f32.mxu0 0.0
      %2334 = vmatmul.mubr.f32.gmra.mrb[0].mxu0 %v1006
      %v2335 = vpop.f32.mrb[0].mxu0
      %v2336 = vadd.f32 0.0, %v2335
      %v2337 = vpop.f32.mrb[0].mxu0
      %2338 = vmatprep.mubr.f32.mxu0 0.0
      %2339 = vmatmul.mubr.f32.gmra.mrb[0].mxu0 %v1023
      %v2340 = vpop.f32.mrb[0].mxu0
      %v2341 = vadd.f32 0.0, %v2340
      %v2342 = vpop.f32.mrb[0].mxu0
      %2343 = vmatprep.mubr.f32.mxu0 0.0
      %2344 = vmatmul.mubr.f32.gmra.mrb[0].mxu0 %v1040
      %v2345 = vpop.f32.mrb[0].mxu0
      %v2346 = vadd.f32 0.0, %v2345
      %v2347 = vpop.f32.mrb[0].mxu0
      %2348 = vmatprep.mubr.f32.mxu0 0.0
      %2349 = vmatmul.mubr.f32.gmra.mrb[0].mxu0 %v1057
      %v2350 = vpop.f32.mrb[0].mxu0
      %v2351 = vadd.f32 0.0, %v2350
      %v2352 = vpop.f32.mrb[0].mxu0
      %2353 = vmatprep.mubr.f32.mxu0 0.0
      %2354 = vmatmul.mubr.f32.gmra.mrb[0].mxu0 %v1074
      %v2355 = vpop.f32.mrb[0].mxu0
      %v2356 = vadd.f32 0.0, %v2355
      %v2357 = vpop.f32.mrb[0].mxu0
      %2358 = vmatprep.mubr.f32.mxu0 0.0
      %2359 = vmatmul.mubr.f32.gmra.mrb[0].mxu0 %v1091
      %v2360 = vpop.f32.mrb[0].mxu0
      %v2361 = vadd.f32 0.0, %v2360
      %v2362 = vpop.f32.mrb[0].mxu0
      %2363 = vmatprep.mubr.f32.mxu0 0.0
      %2364 = vmatmul.mubr.f32.gmra.mrb[0].mxu0 %v1108
      %v2365 = vpop.f32.mrb[0].mxu0
      %v2366 = vadd.f32 0.0, %v2365
      %v2367 = vpop.f32.mrb[0].mxu0
      %2368 = vmatprep.mubr.f32.mxu0 0.0
      %2369 = vmatmul.mubr.f32.gmra.mrb[0].mxu0 %v1125
      %v2370 = vpop.f32.mrb[0].mxu0
      %v2371 = vadd.f32 0.0, %v2370
      %v2372 = vpop.f32.mrb[0].mxu0
      %2373 = vmatprep.mubr.f32.mxu0 0.0
      %2374 = vmatmul.mubr.f32.gmra.mrb[0].mxu0 %v1142
      %v2375 = vpop.f32.mrb[0].mxu0
      %v2376 = vadd.f32 0.0, %v2375
      %v2377 = vpop.f32.mrb[0].mxu0
      %2378 = vmatprep.mubr.f32.mxu0 0.0
      %2379 = vmatmul.mubr.f32.gmra.mrb[0].mxu0 %v1159
      %v2380 = vpop.f32.mrb[0].mxu0
      %v2381 = vadd.f32 0.0, %v2380
      %v2382 = vpop.f32.mrb[0].mxu0
      %2383 = vmatprep.mubr.f32.mxu0 0.0
      %2384 = vmatmul.mubr.f32.gmra.mrb[0].mxu0 %v1176
      %v2385 = vpop.f32.mrb[0].mxu0
      %v2386 = vadd.f32 0.0, %v2385
      %v2387 = vpop.f32.mrb[0].mxu0
      %2388 = vmatprep.mubr.f32.mxu0 0.0
      %2389 = vmatmul.mubr.f32.gmra.mrb[0].mxu0 %v1193
      %v2390 = vpop.f32.mrb[0].mxu0
      %v2391 = vadd.f32 0.0, %v2390
      %v2392 = vpop.f32.mrb[0].mxu0
      %2393 = vmatprep.mubr.f32.mxu0 0.0
      %2394 = vmatmul.mubr.f32.gmra.mrb[0].mxu0 %v1210
      %v2395 = vpop.f32.mrb[0].mxu0
      %v2396 = vadd.f32 0.0, %v2395
      %v2397 = vpop.f32.mrb[0].mxu0
      %2398 = vmatprep.mubr.f32.mxu0 0.0
      %2399 = vmatmul.mubr.f32.gmra.mrb[0].mxu0 %v1227
      %v2400 = vpop.f32.mrb[0].mxu0
      %v2401 = vadd.f32 0.0, %v2400
      %v2402 = vpop.f32.mrb[0].mxu0
      %2403 = vmatprep.mubr.f32.mxu0 0.0
      %2404 = vmatmul.mubr.f32.gmra.mrb[0].mxu0 %v1244
      %v2405 = vpop.f32.mrb[0].mxu0
      %v2406 = vadd.f32 0.0, %v2405
      %v2407 = vpop.f32.mrb[0].mxu0
      %2408 = vmatprep.mubr.f32.mxu0 0.0
      %2409 = vmatmul.mubr.f32.gmra.mrb[0].mxu0 %v1261
      %v2410 = vpop.f32.mrb[0].mxu0
      %v2411 = vadd.f32 0.0, %v2410
      %v2412 = vpop.f32.mrb[0].mxu0
      %2413 = vmatprep.mubr.f32.mxu0 0.0
      %2414 = vmatmul.mubr.f32.gmra.mrb[0].mxu0 %v1278
      %v2415 = vpop.f32.mrb[0].mxu0
      %v2416 = vadd.f32 0.0, %v2415
      %v2417 = vpop.f32.mrb[0].mxu0
      %2418 = vmatprep.mubr.f32.mxu0 0.0
      %2419 = vmatmul.mubr.f32.gmra.mrb[0].mxu0 %v1295
      %v2420 = vpop.f32.mrb[0].mxu0
      %v2421 = vadd.f32 0.0, %v2420
      %v2422 = vpop.f32.mrb[0].mxu0
      %2423 = vmatprep.mubr.f32.mxu0 0.0
      %2424 = vmatmul.mubr.f32.gmra.mrb[0].mxu0 %v1312
      %v2425 = vpop.f32.mrb[0].mxu0
      %v2426 = vadd.f32 0.0, %v2425
      %v2427 = vpop.f32.mrb[0].mxu0
      %2428 = vmatprep.mubr.f32.mxu0 0.0
      %2429 = vmatmul.mubr.f32.gmra.mrb[0].mxu0 %v1329
      %v2430 = vpop.f32.mrb[0].mxu0
      %v2431 = vadd.f32 0.0, %v2430
      %v2432 = vpop.f32.mrb[0].mxu0
      %2433 = vmatprep.mubr.f32.mxu0 0.0
      %2434 = vmatmul.mubr.f32.gmra.mrb[0].mxu0 %v1337
      %v2435 = vpop.f32.mrb[0].mxu0
      %v2436 = vpop.f32.mrb[0].mxu0
      %2437 = vdwg.mxu0
      %v2438 = vrot.slane %v2331, 4
      %v2439 = vrot.slane %v2336, 4
      %v2440 = vrot.slane %v2341, 4
      %v2441 = vrot.slane %v2346, 4
      %v2442 = vrot.slane %v2351, 4
      %v2443 = vrot.slane %v2356, 4
      %v2444 = vrot.slane %v2361, 4
      %v2445 = vrot.slane %v2366, 4
      %v2446 = vrot.slane %v2371, 4
      %v2447 = vrot.slane %v2376, 4
      %v2448 = vrot.slane %v2381, 4
      %v2449 = vrot.slane %v2386, 4
      %v2450 = vrot.slane %v2391, 4
      %v2451 = vrot.slane %v2396, 4
      %v2452 = vrot.slane %v2401, 4
      %v2453 = vrot.slane %v2406, 4
      %v2454 = vrot.slane %v2411, 4
      %v2455 = vrot.slane %v2416, 4
      %v2456 = vrot.slane %v2421, 4
      %v2457 = vrot.slane %v2426, 4
      %v2458 = vrot.slane %v2431, 4
      %v2459 = vsel %vm1538, %v2439, %v2438
      %v2460 = vsel %vm1538, %v2440, %v2439
      %v2461 = vsel %vm1538, %v2441, %v2440
      %v2462 = vsel %vm1538, %v2442, %v2441
      %v2463 = vsel %vm1538, %v2443, %v2442
      %v2464 = vsel %vm1538, %v2444, %v2443
      %v2465 = vsel %vm1538, %v2445, %v2444
      %v2466 = vsel %vm1538, %v2446, %v2445
      %v2467 = vsel %vm1538, %v2447, %v2446
      %v2468 = vsel %vm1538, %v2448, %v2447
      %v2469 = vsel %vm1538, %v2449, %v2448
      %v2470 = vsel %vm1538, %v2450, %v2449
      %v2471 = vsel %vm1538, %v2451, %v2450
      %v2472 = vsel %vm1538, %v2452, %v2451
      %v2473 = vsel %vm1538, %v2453, %v2452
      %v2474 = vsel %vm1538, %v2454, %v2453
      %v2475 = vsel %vm1538, %v2455, %v2454
      %v2476 = vsel %vm1538, %v2456, %v2455
      %v2477 = vsel %vm1538, %v2457, %v2456
      %v2478 = vsel %vm1538, %v2458, %v2457
      %v2499 = vrot.slane %v2459, 2
      %v2500 = vrot.slane %v2460, 2
      %v2501 = vsel %vm2165, %v2499, %v2500
      %v2502 = vrot.slane %v2461, 2
      %v2503 = vsel %vm2165, %v2500, %v2502
      %v2504 = vrot.slane %v2462, 2
      %v2505 = vsel %vm2165, %v2502, %v2504
      %v2506 = vrot.slane %v2463, 2
      %v2507 = vsel %vm2165, %v2504, %v2506
      %v2508 = vrot.slane %v2464, 2
      %v2509 = vsel %vm2165, %v2506, %v2508
      %v2510 = vrot.slane %v2465, 2
      %v2511 = vsel %vm2165, %v2508, %v2510
      %v2512 = vrot.slane %v2466, 2
      %v2513 = vsel %vm2165, %v2510, %v2512
      %v2514 = vrot.slane %v2467, 2
      %v2515 = vsel %vm2165, %v2512, %v2514
      %v2516 = vrot.slane %v2468, 2
      %v2517 = vsel %vm2165, %v2514, %v2516
      %v2518 = vrot.slane %v2469, 2
      %v2519 = vsel %vm2165, %v2516, %v2518
      %v2520 = vrot.slane %v2470, 2
      %v2521 = vsel %vm2165, %v2518, %v2520
      %v2522 = vrot.slane %v2471, 2
      %v2523 = vsel %vm2165, %v2520, %v2522
      %v2524 = vrot.slane %v2472, 2
      %v2525 = vsel %vm2165, %v2522, %v2524
      %v2526 = vrot.slane %v2473, 2
      %v2527 = vsel %vm2165, %v2524, %v2526
      %v2528 = vrot.slane %v2474, 2
      %v2529 = vsel %vm2165, %v2526, %v2528
      %v2530 = vrot.slane %v2475, 2
      %v2531 = vsel %vm2165, %v2528, %v2530
      %v2532 = vrot.slane %v2476, 2
      %v2533 = vsel %vm2165, %v2530, %v2532
      %v2534 = vrot.slane %v2477, 2
      %v2535 = vsel %vm2165, %v2532, %v2534
      %v2536 = vrot.slane %v2478, 2
      %v2537 = vsel %vm2165, %v2534, %v2536
      %v2557 = vadd.f32 %v2224, %v2501
      %v2558 = vadd.f32 %v2225, %v2503
      %v2559 = vadd.f32 %v2226, %v2505
      %v2560 = vadd.f32 %v2227, %v2507
      %v2561 = vadd.f32 %v2228, %v2509
      %v2562 = vadd.f32 %v2229, %v2511
      %v2563 = vadd.f32 %v2230, %v2513
      %v2564 = vadd.f32 %v2231, %v2515
      %v2565 = vadd.f32 %v2232, %v2517
      %v2566 = vadd.f32 %v2233, %v2519
      %v2567 = vadd.f32 %v2234, %v2521
      %v2568 = vadd.f32 %v2235, %v2523
      %v2569 = vadd.f32 %v2236, %v2525
      %v2570 = vadd.f32 %v2237, %v2527
      %v2571 = vadd.f32 %v2238, %v2529
      %v2572 = vadd.f32 %v2239, %v2531
      %v2573 = vadd.f32 %v2240, %v2533
      %v2574 = vadd.f32 %v2241, %v2535
      %v2575 = vadd.f32 %v2242, %v2537
      %s2576 = scalar_lea.vmem %s3, 512
      %v2577 = vld [vmem:[%s2576] sm:$0xff]
      %v2578 = vld [vmem:[%s2576 + $0x8] sm:$0xff]
      %v2579 = vld [vmem:[%s2576 + $0x10] sm:$0xff]
      %v2580 = vld [vmem:[%s2576 + $0x18] sm:$0xff]
      %v2581 = vld [vmem:[%s2576 + $0x20] sm:$0xff]
      %v2582 = vld [vmem:[%s2576 + $0x28] sm:$0xff]
      %v2583 = vld [vmem:[%s2576 + $0x30] sm:$0xff]
      %v2584 = vld [vmem:[%s2576 + $0x38] sm:$0xff]
      %v2585 = vld [vmem:[%s2576 + $0x40] sm:$0xff]
      %v2586 = vld [vmem:[%s2576 + $0x48] sm:$0xff]
      %v2587 = vld [vmem:[%s2576 + $0x50] sm:$0xff]
      %v2588 = vld [vmem:[%s2576 + $0x58] sm:$0xff]
      %v2589 = vld [vmem:[%s2576 + $0x60] sm:$0xff]
      %v2590 = vld [vmem:[%s2576 + $0x68] sm:$0xff]
      %v2591 = vld [vmem:[%s2576 + $0x70] sm:$0xff]
      %v2592 = vld [vmem:[%s2576 + $0x78] sm:$0xff]
      %2593 = vmatprep.subr.mxu0 0.0
      %2594 = vmatpush1.msra.mxu0 %v2577
      %2595 = vmatprep.subr.mxu0 0.0
      %2596 = vmatpush1.msra.mxu0 %v2578
      %2597 = vmatprep.subr.mxu0 0.0
      %2598 = vmatpush1.msra.mxu0 %v2579
      %2599 = vmatprep.subr.mxu0 0.0
      %2600 = vmatpush1.msra.mxu0 %v2580
      %2601 = vmatprep.subr.mxu0 0.0
      %2602 = vmatpush1.msra.mxu0 %v2581
      %2603 = vmatprep.subr.mxu0 0.0
      %2604 = vmatpush1.msra.mxu0 %v2582
      %2605 = vmatprep.subr.mxu0 0.0
      %2606 = vmatpush1.msra.mxu0 %v2583
      %2607 = vmatprep.subr.mxu0 0.0
      %2608 = vmatpush1.msra.mxu0 %v2584
      %2609 = vmatprep.subr.mxu0 0.0
      %2610 = vmatpush1.msra.mxu0 %v2585
      %2611 = vmatprep.subr.mxu0 0.0
      %2612 = vmatpush1.msra.mxu0 %v2586
      %2613 = vmatprep.subr.mxu0 0.0
      %2614 = vmatpush1.msra.mxu0 %v2587
      %2615 = vmatprep.subr.mxu0 0.0
      %2616 = vmatpush1.msra.mxu0 %v2588
      %2617 = vmatprep.subr.mxu0 0.0
      %2618 = vmatpush1.msra.mxu0 %v2589
      %2619 = vmatprep.subr.mxu0 0.0
      %2620 = vmatpush1.msra.mxu0 %v2590
      %2621 = vmatprep.subr.mxu0 0.0
      %2622 = vmatpush1.msra.mxu0 %v2591
      %2623 = vmatprep.subr.mxu0 0.0
      %2624 = vmatpush1.msra.mxu0 %v2592
      %2625 = vmatprep.subr.mxu0 0.0
      %2626 = vmatpush1.msra.mxu0 0.0
      %2627 = vmatprep.subr.mxu0 0.0
      %2628 = vmatpush1.msra.mxu0 0.0
      %2629 = vmatprep.subr.mxu0 0.0
      %2630 = vmatpush1.msra.mxu0 0.0
      %2631 = vmatprep.subr.mxu0 0.0
      %2632 = vmatpush1.msra.mxu0 0.0
      %2633 = vmatprep.subr.mxu0 0.0
      %2634 = vmatpush1.msra.mxu0 0.0
      %2635 = vmatprep.subr.mxu0 0.0
      %2636 = vmatpush1.msra.mxu0 0.0
      %2637 = vmatprep.subr.mxu0 0.0
      %2638 = vmatpush1.msra.mxu0 0.0
      %2639 = vmatprep.subr.mxu0 0.0
      %2640 = vmatpush1.msra.mxu0 0.0
      %2641 = vmatprep.subr.mxu0 0.0
      %2642 = vmatpush1.msra.mxu0 0.0
      %2643 = vmatprep.subr.mxu0 0.0
      %2644 = vmatpush1.msra.mxu0 0.0
      %2645 = vmatprep.subr.mxu0 0.0
      %2646 = vmatpush1.msra.mxu0 0.0
      %2647 = vmatprep.subr.mxu0 0.0
      %2648 = vmatpush1.msra.mxu0 0.0
      %2649 = vmatprep.subr.mxu0 0.0
      %2650 = vmatpush1.msra.mxu0 0.0
      %2651 = vmatprep.subr.mxu0 0.0
      %2652 = vmatpush1.msra.mxu0 0.0
      %2653 = vmatprep.subr.mxu0 0.0
      %2654 = vmatpush1.msra.mxu0 0.0
      %2655 = vmatprep.subr.mxu0 0.0
      %2656 = vmatpush1.msra.mxu0 0.0
      %2657 = vmatprep.mubr.f32.mxu0 0.0
      %2658 = vmatmul.mubr.f32.gmra.mrb[0].mxu0 %v972
      %v2659 = vpop.f32.mrb[0].mxu0
      %v2660 = vpop.f32.mrb[0].mxu0
      %2661 = vmatprep.mubr.f32.mxu0 0.0
      %2662 = vmatmul.mubr.f32.gmra.mrb[0].mxu0 %v989
      %v2663 = vpop.f32.mrb[0].mxu0
      %v2664 = vadd.f32 0.0, %v2663
      %v2665 = vpop.f32.mrb[0].mxu0
      %2666 = vmatprep.mubr.f32.mxu0 0.0
      %2667 = vmatmul.mubr.f32.gmra.mrb[0].mxu0 %v1006
      %v2668 = vpop.f32.mrb[0].mxu0
      %v2669 = vadd.f32 0.0, %v2668
      %v2670 = vpop.f32.mrb[0].mxu0
      %2671 = vmatprep.mubr.f32.mxu0 0.0
      %2672 = vmatmul.mubr.f32.gmra.mrb[0].mxu0 %v1023
      %v2673 = vpop.f32.mrb[0].mxu0
      %v2674 = vadd.f32 0.0, %v2673
      %v2675 = vpop.f32.mrb[0].mxu0
      %2676 = vmatprep.mubr.f32.mxu0 0.0
      %2677 = vmatmul.mubr.f32.gmra.mrb[0].mxu0 %v1040
      %v2678 = vpop.f32.mrb[0].mxu0
      %v2679 = vadd.f32 0.0, %v2678
      %v2680 = vpop.f32.mrb[0].mxu0
      %2681 = vmatprep.mubr.f32.mxu0 0.0
      %2682 = vmatmul.mubr.f32.gmra.mrb[0].mxu0 %v1057
      %v2683 = vpop.f32.mrb[0].mxu0
      %v2684 = vadd.f32 0.0, %v2683
      %v2685 = vpop.f32.mrb[0].mxu0
      %2686 = vmatprep.mubr.f32.mxu0 0.0
      %2687 = vmatmul.mubr.f32.gmra.mrb[0].mxu0 %v1074
      %v2688 = vpop.f32.mrb[0].mxu0
      %v2689 = vadd.f32 0.0, %v2688
      %v2690 = vpop.f32.mrb[0].mxu0
      %2691 = vmatprep.mubr.f32.mxu0 0.0
      %2692 = vmatmul.mubr.f32.gmra.mrb[0].mxu0 %v1091
      %v2693 = vpop.f32.mrb[0].mxu0
      %v2694 = vadd.f32 0.0, %v2693
      %v2695 = vpop.f32.mrb[0].mxu0
      %2696 = vmatprep.mubr.f32.mxu0 0.0
      %2697 = vmatmul.mubr.f32.gmra.mrb[0].mxu0 %v1108
      %v2698 = vpop.f32.mrb[0].mxu0
      %v2699 = vadd.f32 0.0, %v2698
      %v2700 = vpop.f32.mrb[0].mxu0
      %2701 = vmatprep.mubr.f32.mxu0 0.0
      %2702 = vmatmul.mubr.f32.gmra.mrb[0].mxu0 %v1125
      %v2703 = vpop.f32.mrb[0].mxu0
      %v2704 = vadd.f32 0.0, %v2703
      %v2705 = vpop.f32.mrb[0].mxu0
      %2706 = vmatprep.mubr.f32.mxu0 0.0
      %2707 = vmatmul.mubr.f32.gmra.mrb[0].mxu0 %v1142
      %v2708 = vpop.f32.mrb[0].mxu0
      %v2709 = vadd.f32 0.0, %v2708
      %v2710 = vpop.f32.mrb[0].mxu0
      %2711 = vmatprep.mubr.f32.mxu0 0.0
      %2712 = vmatmul.mubr.f32.gmra.mrb[0].mxu0 %v1159
      %v2713 = vpop.f32.mrb[0].mxu0
      %v2714 = vadd.f32 0.0, %v2713
      %v2715 = vpop.f32.mrb[0].mxu0
      %2716 = vmatprep.mubr.f32.mxu0 0.0
      %2717 = vmatmul.mubr.f32.gmra.mrb[0].mxu0 %v1176
      %v2718 = vpop.f32.mrb[0].mxu0
      %v2719 = vadd.f32 0.0, %v2718
      %v2720 = vpop.f32.mrb[0].mxu0
      %2721 = vmatprep.mubr.f32.mxu0 0.0
      %2722 = vmatmul.mubr.f32.gmra.mrb[0].mxu0 %v1193
      %v2723 = vpop.f32.mrb[0].mxu0
      %v2724 = vadd.f32 0.0, %v2723
      %v2725 = vpop.f32.mrb[0].mxu0
      %2726 = vmatprep.mubr.f32.mxu0 0.0
      %2727 = vmatmul.mubr.f32.gmra.mrb[0].mxu0 %v1210
      %v2728 = vpop.f32.mrb[0].mxu0
      %v2729 = vadd.f32 0.0, %v2728
      %v2730 = vpop.f32.mrb[0].mxu0
      %2731 = vmatprep.mubr.f32.mxu0 0.0
      %2732 = vmatmul.mubr.f32.gmra.mrb[0].mxu0 %v1227
      %v2733 = vpop.f32.mrb[0].mxu0
      %v2734 = vadd.f32 0.0, %v2733
      %v2735 = vpop.f32.mrb[0].mxu0
      %2736 = vmatprep.mubr.f32.mxu0 0.0
      %2737 = vmatmul.mubr.f32.gmra.mrb[0].mxu0 %v1244
      %v2738 = vpop.f32.mrb[0].mxu0
      %v2739 = vadd.f32 0.0, %v2738
      %v2740 = vpop.f32.mrb[0].mxu0
      %2741 = vmatprep.mubr.f32.mxu0 0.0
      %2742 = vmatmul.mubr.f32.gmra.mrb[0].mxu0 %v1261
      %v2743 = vpop.f32.mrb[0].mxu0
      %v2744 = vadd.f32 0.0, %v2743
      %v2745 = vpop.f32.mrb[0].mxu0
      %2746 = vmatprep.mubr.f32.mxu0 0.0
      %2747 = vmatmul.mubr.f32.gmra.mrb[0].mxu0 %v1278
      %v2748 = vpop.f32.mrb[0].mxu0
      %v2749 = vadd.f32 0.0, %v2748
      %v2750 = vpop.f32.mrb[0].mxu0
      %2751 = vmatprep.mubr.f32.mxu0 0.0
      %2752 = vmatmul.mubr.f32.gmra.mrb[0].mxu0 %v1295
      %v2753 = vpop.f32.mrb[0].mxu0
      %v2754 = vadd.f32 0.0, %v2753
      %v2755 = vpop.f32.mrb[0].mxu0
      %2756 = vmatprep.mubr.f32.mxu0 0.0
      %2757 = vmatmul.mubr.f32.gmra.mrb[0].mxu0 %v1312
      %v2758 = vpop.f32.mrb[0].mxu0
      %v2759 = vadd.f32 0.0, %v2758
      %v2760 = vpop.f32.mrb[0].mxu0
      %2761 = vmatprep.mubr.f32.mxu0 0.0
      %2762 = vmatmul.mubr.f32.gmra.mrb[0].mxu0 %v1329
      %v2763 = vpop.f32.mrb[0].mxu0
      %v2764 = vpop.f32.mrb[0].mxu0
      %2765 = vmatprep.mubr.f32.mxu0 0.0
      %2766 = vmatmul.mubr.f32.gmra.mrb[0].mxu0 %v1337
      %v2767 = vpop.f32.mrb[0].mxu0
      %v2768 = vpop.f32.mrb[0].mxu0
      %2769 = vdwg.mxu0
      %vm2790 = vcmask 1040384
      %v2791 = vrot.slane %v2664, 7
      %v2792 = vrot.slane %v2669, 7
      %v2793 = vsel %vm2790, %v2791, %v2792
      %v2794 = vrot.slane %v2674, 7
      %v2795 = vsel %vm2790, %v2792, %v2794
      %v2796 = vrot.slane %v2679, 7
      %v2797 = vsel %vm2790, %v2794, %v2796
      %v2798 = vrot.slane %v2684, 7
      %v2799 = vsel %vm2790, %v2796, %v2798
      %v2800 = vrot.slane %v2689, 7
      %v2801 = vsel %vm2790, %v2798, %v2800
      %v2802 = vrot.slane %v2694, 7
      %v2803 = vsel %vm2790, %v2800, %v2802
      %v2804 = vrot.slane %v2699, 7
      %v2805 = vsel %vm2790, %v2802, %v2804
      %v2806 = vrot.slane %v2704, 7
      %v2807 = vsel %vm2790, %v2804, %v2806
      %v2808 = vrot.slane %v2709, 7
      %v2809 = vsel %vm2790, %v2806, %v2808
      %v2810 = vrot.slane %v2714, 7
      %v2811 = vsel %vm2790, %v2808, %v2810
      %v2812 = vrot.slane %v2719, 7
      %v2813 = vsel %vm2790, %v2810, %v2812
      %v2814 = vrot.slane %v2724, 7
      %v2815 = vsel %vm2790, %v2812, %v2814
      %v2816 = vrot.slane %v2729, 7
      %v2817 = vsel %vm2790, %v2814, %v2816
      %v2818 = vrot.slane %v2734, 7
      %v2819 = vsel %vm2790, %v2816, %v2818
      %v2820 = vrot.slane %v2739, 7
      %v2821 = vsel %vm2790, %v2818, %v2820
      %v2822 = vrot.slane %v2744, 7
      %v2823 = vsel %vm2790, %v2820, %v2822
      %v2824 = vrot.slane %v2749, 7
      %v2825 = vsel %vm2790, %v2822, %v2824
      %v2826 = vrot.slane %v2754, 7
      %v2827 = vsel %vm2790, %v2824, %v2826
      %v2828 = vrot.slane %v2759, 7
      %v2829 = vsel %vm2790, %v2826, %v2828
      %v2849 = vadd.f32 %v2557, %v2793
      %v2850 = vadd.f32 %v2558, %v2795
      %v2851 = vadd.f32 %v2559, %v2797
      %v2852 = vadd.f32 %v2560, %v2799
      %v2853 = vadd.f32 %v2561, %v2801
      %v2854 = vadd.f32 %v2562, %v2803
      %v2855 = vadd.f32 %v2563, %v2805
      %v2856 = vadd.f32 %v2564, %v2807
      %v2857 = vadd.f32 %v2565, %v2809
      %v2858 = vadd.f32 %v2566, %v2811
      %v2859 = vadd.f32 %v2567, %v2813
      %v2860 = vadd.f32 %v2568, %v2815
      %v2861 = vadd.f32 %v2569, %v2817
      %v2862 = vadd.f32 %v2570, %v2819
      %v2863 = vadd.f32 %v2571, %v2821
      %v2864 = vadd.f32 %v2572, %v2823
      %v2865 = vadd.f32 %v2573, %v2825
      %v2866 = vadd.f32 %v2574, %v2827
      %v2867 = vadd.f32 %v2575, %v2829
      %s2868 = scalar_lea.vmem %s3, 640
      %v2869 = vld [vmem:[%s2868] sm:$0xff]
      %v2870 = vld [vmem:[%s2868 + $0x8] sm:$0xff]
      %v2871 = vld [vmem:[%s2868 + $0x10] sm:$0xff]
      %v2872 = vld [vmem:[%s2868 + $0x18] sm:$0xff]
      %v2873 = vld [vmem:[%s2868 + $0x20] sm:$0xff]
      %v2874 = vld [vmem:[%s2868 + $0x28] sm:$0xff]
      %v2875 = vld [vmem:[%s2868 + $0x30] sm:$0xff]
      %v2876 = vld [vmem:[%s2868 + $0x38] sm:$0xff]
      %v2877 = vld [vmem:[%s2868 + $0x40] sm:$0xff]
      %v2878 = vld [vmem:[%s2868 + $0x48] sm:$0xff]
      %v2879 = vld [vmem:[%s2868 + $0x50] sm:$0xff]
      %v2880 = vld [vmem:[%s2868 + $0x58] sm:$0xff]
      %v2881 = vld [vmem:[%s2868 + $0x60] sm:$0xff]
      %v2882 = vld [vmem:[%s2868 + $0x68] sm:$0xff]
      %v2883 = vld [vmem:[%s2868 + $0x70] sm:$0xff]
      %v2884 = vld [vmem:[%s2868 + $0x78] sm:$0xff]
      %2885 = vmatprep.subr.mxu0 0.0
      %2886 = vmatpush1.msra.mxu0 %v2869
      %2887 = vmatprep.subr.mxu0 0.0
      %2888 = vmatpush1.msra.mxu0 %v2870
      %2889 = vmatprep.subr.mxu0 0.0
      %2890 = vmatpush1.msra.mxu0 %v2871
      %2891 = vmatprep.subr.mxu0 0.0
      %2892 = vmatpush1.msra.mxu0 %v2872
      %2893 = vmatprep.subr.mxu0 0.0
      %2894 = vmatpush1.msra.mxu0 %v2873
      %2895 = vmatprep.subr.mxu0 0.0
      %2896 = vmatpush1.msra.mxu0 %v2874
      %2897 = vmatprep.subr.mxu0 0.0
      %2898 = vmatpush1.msra.mxu0 %v2875
      %2899 = vmatprep.subr.mxu0 0.0
      %2900 = vmatpush1.msra.mxu0 %v2876
      %2901 = vmatprep.subr.mxu0 0.0
      %2902 = vmatpush1.msra.mxu0 %v2877
      %2903 = vmatprep.subr.mxu0 0.0
      %2904 = vmatpush1.msra.mxu0 %v2878
      %2905 = vmatprep.subr.mxu0 0.0
      %2906 = vmatpush1.msra.mxu0 %v2879
      %2907 = vmatprep.subr.mxu0 0.0
      %2908 = vmatpush1.msra.mxu0 %v2880
      %2909 = vmatprep.subr.mxu0 0.0
      %2910 = vmatpush1.msra.mxu0 %v2881
      %2911 = vmatprep.subr.mxu0 0.0
      %2912 = vmatpush1.msra.mxu0 %v2882
      %2913 = vmatprep.subr.mxu0 0.0
      %2914 = vmatpush1.msra.mxu0 %v2883
      %2915 = vmatprep.subr.mxu0 0.0
      %2916 = vmatpush1.msra.mxu0 %v2884
      %2917 = vmatprep.subr.mxu0 0.0
      %2918 = vmatpush1.msra.mxu0 0.0
      %2919 = vmatprep.subr.mxu0 0.0
      %2920 = vmatpush1.msra.mxu0 0.0
      %2921 = vmatprep.subr.mxu0 0.0
      %2922 = vmatpush1.msra.mxu0 0.0
      %2923 = vmatprep.subr.mxu0 0.0
      %2924 = vmatpush1.msra.mxu0 0.0
      %2925 = vmatprep.subr.mxu0 0.0
      %2926 = vmatpush1.msra.mxu0 0.0
      %2927 = vmatprep.subr.mxu0 0.0
      %2928 = vmatpush1.msra.mxu0 0.0
      %2929 = vmatprep.subr.mxu0 0.0
      %2930 = vmatpush1.msra.mxu0 0.0
      %2931 = vmatprep.subr.mxu0 0.0
      %2932 = vmatpush1.msra.mxu0 0.0
      %2933 = vmatprep.subr.mxu0 0.0
      %2934 = vmatpush1.msra.mxu0 0.0
      %2935 = vmatprep.subr.mxu0 0.0
      %2936 = vmatpush1.msra.mxu0 0.0
      %2937 = vmatprep.subr.mxu0 0.0
      %2938 = vmatpush1.msra.mxu0 0.0
      %2939 = vmatprep.subr.mxu0 0.0
      %2940 = vmatpush1.msra.mxu0 0.0
      %2941 = vmatprep.subr.mxu0 0.0
      %2942 = vmatpush1.msra.mxu0 0.0
      %2943 = vmatprep.subr.mxu0 0.0
      %2944 = vmatpush1.msra.mxu0 0.0
      %2945 = vmatprep.subr.mxu0 0.0
      %2946 = vmatpush1.msra.mxu0 0.0
      %2947 = vmatprep.subr.mxu0 0.0
      %2948 = vmatpush1.msra.mxu0 0.0
      %2949 = vmatprep.mubr.f32.mxu0 0.0
      %2950 = vmatmul.mubr.f32.gmra.mrb[0].mxu0 %v972
      %v2951 = vpop.f32.mrb[0].mxu0
      %v2952 = vpop.f32.mrb[0].mxu0
      %2953 = vmatprep.mubr.f32.mxu0 0.0
      %2954 = vmatmul.mubr.f32.gmra.mrb[0].mxu0 %v989
      %v2955 = vpop.f32.mrb[0].mxu0
      %v2956 = vpop.f32.mrb[0].mxu0
      %2957 = vmatprep.mubr.f32.mxu0 0.0
      %2958 = vmatmul.mubr.f32.gmra.mrb[0].mxu0 %v1006
      %v2959 = vpop.f32.mrb[0].mxu0
      %v2960 = vadd.f32 0.0, %v2959
      %v2961 = vpop.f32.mrb[0].mxu0
      %2962 = vmatprep.mubr.f32.mxu0 0.0
      %2963 = vmatmul.mubr.f32.gmra.mrb[0].mxu0 %v1023
      %v2964 = vpop.f32.mrb[0].mxu0
      %v2965 = vadd.f32 0.0, %v2964
      %v2966 = vpop.f32.mrb[0].mxu0
      %2967 = vmatprep.mubr.f32.mxu0 0.0
      %2968 = vmatmul.mubr.f32.gmra.mrb[0].mxu0 %v1040
      %v2969 = vpop.f32.mrb[0].mxu0
      %v2970 = vadd.f32 0.0, %v2969
      %v2971 = vpop.f32.mrb[0].mxu0
      %2972 = vmatprep.mubr.f32.mxu0 0.0
      %2973 = vmatmul.mubr.f32.gmra.mrb[0].mxu0 %v1057
      %v2974 = vpop.f32.mrb[0].mxu0
      %v2975 = vadd.f32 0.0, %v2974
      %v2976 = vpop.f32.mrb[0].mxu0
      %2977 = vmatprep.mubr.f32.mxu0 0.0
      %2978 = vmatmul.mubr.f32.gmra.mrb[0].mxu0 %v1074
      %v2979 = vpop.f32.mrb[0].mxu0
      %v2980 = vadd.f32 0.0, %v2979
      %v2981 = vpop.f32.mrb[0].mxu0
      %2982 = vmatprep.mubr.f32.mxu0 0.0
      %2983 = vmatmul.mubr.f32.gmra.mrb[0].mxu0 %v1091
      %v2984 = vpop.f32.mrb[0].mxu0
      %v2985 = vadd.f32 0.0, %v2984
      %v2986 = vpop.f32.mrb[0].mxu0
      %2987 = vmatprep.mubr.f32.mxu0 0.0
      %2988 = vmatmul.mubr.f32.gmra.mrb[0].mxu0 %v1108
      %v2989 = vpop.f32.mrb[0].mxu0
      %v2990 = vadd.f32 0.0, %v2989
      %v2991 = vpop.f32.mrb[0].mxu0
      %2992 = vmatprep.mubr.f32.mxu0 0.0
      %2993 = vmatmul.mubr.f32.gmra.mrb[0].mxu0 %v1125
      %v2994 = vpop.f32.mrb[0].mxu0
      %v2995 = vadd.f32 0.0, %v2994
      %v2996 = vpop.f32.mrb[0].mxu0
      %2997 = vmatprep.mubr.f32.mxu0 0.0
      %2998 = vmatmul.mubr.f32.gmra.mrb[0].mxu0 %v1142
      %v2999 = vpop.f32.mrb[0].mxu0
      %v3000 = vadd.f32 0.0, %v2999
      %v3001 = vpop.f32.mrb[0].mxu0
      %3002 = vmatprep.mubr.f32.mxu0 0.0
      %3003 = vmatmul.mubr.f32.gmra.mrb[0].mxu0 %v1159
      %v3004 = vpop.f32.mrb[0].mxu0
      %v3005 = vadd.f32 0.0, %v3004
      %v3006 = vpop.f32.mrb[0].mxu0
      %3007 = vmatprep.mubr.f32.mxu0 0.0
      %3008 = vmatmul.mubr.f32.gmra.mrb[0].mxu0 %v1176
      %v3009 = vpop.f32.mrb[0].mxu0
      %v3010 = vadd.f32 0.0, %v3009
      %v3011 = vpop.f32.mrb[0].mxu0
      %3012 = vmatprep.mubr.f32.mxu0 0.0
      %3013 = vmatmul.mubr.f32.gmra.mrb[0].mxu0 %v1193
      %v3014 = vpop.f32.mrb[0].mxu0
      %v3015 = vadd.f32 0.0, %v3014
      %v3016 = vpop.f32.mrb[0].mxu0
      %3017 = vmatprep.mubr.f32.mxu0 0.0
      %3018 = vmatmul.mubr.f32.gmra.mrb[0].mxu0 %v1210
      %v3019 = vpop.f32.mrb[0].mxu0
      %v3020 = vadd.f32 0.0, %v3019
      %v3021 = vpop.f32.mrb[0].mxu0
      %3022 = vmatprep.mubr.f32.mxu0 0.0
      %3023 = vmatmul.mubr.f32.gmra.mrb[0].mxu0 %v1227
      %v3024 = vpop.f32.mrb[0].mxu0
      %v3025 = vadd.f32 0.0, %v3024
      %v3026 = vpop.f32.mrb[0].mxu0
      %3027 = vmatprep.mubr.f32.mxu0 0.0
      %3028 = vmatmul.mubr.f32.gmra.mrb[0].mxu0 %v1244
      %v3029 = vpop.f32.mrb[0].mxu0
      %v3030 = vadd.f32 0.0, %v3029
      %v3031 = vpop.f32.mrb[0].mxu0
      %3032 = vmatprep.mubr.f32.mxu0 0.0
      %3033 = vmatmul.mubr.f32.gmra.mrb[0].mxu0 %v1261
      %v3034 = vpop.f32.mrb[0].mxu0
      %v3035 = vadd.f32 0.0, %v3034
      %v3036 = vpop.f32.mrb[0].mxu0
      %3037 = vmatprep.mubr.f32.mxu0 0.0
      %3038 = vmatmul.mubr.f32.gmra.mrb[0].mxu0 %v1278
      %v3039 = vpop.f32.mrb[0].mxu0
      %v3040 = vadd.f32 0.0, %v3039
      %v3041 = vpop.f32.mrb[0].mxu0
      %3042 = vmatprep.mubr.f32.mxu0 0.0
      %3043 = vmatmul.mubr.f32.gmra.mrb[0].mxu0 %v1295
      %v3044 = vpop.f32.mrb[0].mxu0
      %v3045 = vadd.f32 0.0, %v3044
      %v3046 = vpop.f32.mrb[0].mxu0
      %3047 = vmatprep.mubr.f32.mxu0 0.0
      %3048 = vmatmul.mubr.f32.gmra.mrb[0].mxu0 %v1312
      %v3049 = vpop.f32.mrb[0].mxu0
      %v3050 = vadd.f32 0.0, %v3049
      %v3051 = vpop.f32.mrb[0].mxu0
      %3052 = vmatprep.mubr.f32.mxu0 0.0
      %3053 = vmatmul.mubr.f32.gmra.mrb[0].mxu0 %v1329
      %v3054 = vpop.f32.mrb[0].mxu0
      %v3055 = vpop.f32.mrb[0].mxu0
      %3056 = vmatprep.mubr.f32.mxu0 0.0
      %3057 = vmatmul.mubr.f32.gmra.mrb[0].mxu0 %v1337
      %v3058 = vpop.f32.mrb[0].mxu0
      %v3059 = vpop.f32.mrb[0].mxu0
      %3060 = vdwg.mxu0
      %v3061 = vadd.f32 %v2849, %v2960
      %v3062 = vadd.f32 %v2850, %v2965
      %v3063 = vadd.f32 %v2851, %v2970
      %v3064 = vadd.f32 %v2852, %v2975
      %v3065 = vadd.f32 %v2853, %v2980
      %v3066 = vadd.f32 %v2854, %v2985
      %v3067 = vadd.f32 %v2855, %v2990
      %v3068 = vadd.f32 %v2856, %v2995
      %v3069 = vadd.f32 %v2857, %v3000
      %v3070 = vadd.f32 %v2858, %v3005
      %v3071 = vadd.f32 %v2859, %v3010
      %v3072 = vadd.f32 %v2860, %v3015
      %v3073 = vadd.f32 %v2861, %v3020
      %v3074 = vadd.f32 %v2862, %v3025
      %v3075 = vadd.f32 %v2863, %v3030
      %v3076 = vadd.f32 %v2864, %v3035
      %v3077 = vadd.f32 %v2865, %v3040
      %v3078 = vadd.f32 %v2866, %v3045
      %v3079 = vadd.f32 %v2867, %v3050
      %s3080 = scalar_lea.vmem %s3, 768
      %v3081 = vld [vmem:[%s3080] sm:$0xff]
      %v3082 = vld [vmem:[%s3080 + $0x8] sm:$0xff]
      %v3083 = vld [vmem:[%s3080 + $0x10] sm:$0xff]
      %v3084 = vld [vmem:[%s3080 + $0x18] sm:$0xff]
      %v3085 = vld [vmem:[%s3080 + $0x20] sm:$0xff]
      %v3086 = vld [vmem:[%s3080 + $0x28] sm:$0xff]
      %v3087 = vld [vmem:[%s3080 + $0x30] sm:$0xff]
      %v3088 = vld [vmem:[%s3080 + $0x38] sm:$0xff]
      %v3089 = vld [vmem:[%s3080 + $0x40] sm:$0xff]
      %v3090 = vld [vmem:[%s3080 + $0x48] sm:$0xff]
      %v3091 = vld [vmem:[%s3080 + $0x50] sm:$0xff]
      %v3092 = vld [vmem:[%s3080 + $0x58] sm:$0xff]
      %v3093 = vld [vmem:[%s3080 + $0x60] sm:$0xff]
      %v3094 = vld [vmem:[%s3080 + $0x68] sm:$0xff]
      %v3095 = vld [vmem:[%s3080 + $0x70] sm:$0xff]
      %v3096 = vld [vmem:[%s3080 + $0x78] sm:$0xff]
      %3097 = vmatprep.subr.mxu0 0.0
      %3098 = vmatpush1.msra.mxu0 %v3081
      %3099 = vmatprep.subr.mxu0 0.0
      %3100 = vmatpush1.msra.mxu0 %v3082
      %3101 = vmatprep.subr.mxu0 0.0
      %3102 = vmatpush1.msra.mxu0 %v3083
      %3103 = vmatprep.subr.mxu0 0.0
      %3104 = vmatpush1.msra.mxu0 %v3084
      %3105 = vmatprep.subr.mxu0 0.0
      %3106 = vmatpush1.msra.mxu0 %v3085
      %3107 = vmatprep.subr.mxu0 0.0
      %3108 = vmatpush1.msra.mxu0 %v3086
      %3109 = vmatprep.subr.mxu0 0.0
      %3110 = vmatpush1.msra.mxu0 %v3087
      %3111 = vmatprep.subr.mxu0 0.0
      %3112 = vmatpush1.msra.mxu0 %v3088
      %3113 = vmatprep.subr.mxu0 0.0
      %3114 = vmatpush1.msra.mxu0 %v3089
      %3115 = vmatprep.subr.mxu0 0.0
      %3116 = vmatpush1.msra.mxu0 %v3090
      %3117 = vmatprep.subr.mxu0 0.0
      %3118 = vmatpush1.msra.mxu0 %v3091
      %3119 = vmatprep.subr.mxu0 0.0
      %3120 = vmatpush1.msra.mxu0 %v3092
      %3121 = vmatprep.subr.mxu0 0.0
      %3122 = vmatpush1.msra.mxu0 %v3093
      %3123 = vmatprep.subr.mxu0 0.0
      %3124 = vmatpush1.msra.mxu0 %v3094
      %3125 = vmatprep.subr.mxu0 0.0
      %3126 = vmatpush1.msra.mxu0 %v3095
      %3127 = vmatprep.subr.mxu0 0.0
      %3128 = vmatpush1.msra.mxu0 %v3096
      %3129 = vmatprep.subr.mxu0 0.0
      %3130 = vmatpush1.msra.mxu0 0.0
      %3131 = vmatprep.subr.mxu0 0.0
      %3132 = vmatpush1.msra.mxu0 0.0
      %3133 = vmatprep.subr.mxu0 0.0
      %3134 = vmatpush1.msra.mxu0 0.0
      %3135 = vmatprep.subr.mxu0 0.0
      %3136 = vmatpush1.msra.mxu0 0.0
      %3137 = vmatprep.subr.mxu0 0.0
      %3138 = vmatpush1.msra.mxu0 0.0
      %3139 = vmatprep.subr.mxu0 0.0
      %3140 = vmatpush1.msra.mxu0 0.0
      %3141 = vmatprep.subr.mxu0 0.0
      %3142 = vmatpush1.msra.mxu0 0.0
      %3143 = vmatprep.subr.mxu0 0.0
      %3144 = vmatpush1.msra.mxu0 0.0
      %3145 = vmatprep.subr.mxu0 0.0
      %3146 = vmatpush1.msra.mxu0 0.0
      %3147 = vmatprep.subr.mxu0 0.0
      %3148 = vmatpush1.msra.mxu0 0.0
      %3149 = vmatprep.subr.mxu0 0.0
      %3150 = vmatpush1.msra.mxu0 0.0
      %3151 = vmatprep.subr.mxu0 0.0
      %3152 = vmatpush1.msra.mxu0 0.0
      %3153 = vmatprep.subr.mxu0 0.0
      %3154 = vmatpush1.msra.mxu0 0.0
      %3155 = vmatprep.subr.mxu0 0.0
      %3156 = vmatpush1.msra.mxu0 0.0
      %3157 = vmatprep.subr.mxu0 0.0
      %3158 = vmatpush1.msra.mxu0 0.0
      %3159 = vmatprep.subr.mxu0 0.0
      %3160 = vmatpush1.msra.mxu0 0.0
      %3161 = vmatprep.mubr.f32.mxu0 0.0
      %3162 = vmatmul.mubr.f32.gmra.mrb[0].mxu0 %v972
      %v3163 = vpop.f32.mrb[0].mxu0
      %v3164 = vadd.f32 0.0, %v3163
      %v3165 = vpop.f32.mrb[0].mxu0
      %3166 = vmatprep.mubr.f32.mxu0 0.0
      %3167 = vmatmul.mubr.f32.gmra.mrb[0].mxu0 %v989
      %v3168 = vpop.f32.mrb[0].mxu0
      %v3169 = vpop.f32.mrb[0].mxu0
      %3170 = vmatprep.mubr.f32.mxu0 0.0
      %3171 = vmatmul.mubr.f32.gmra.mrb[0].mxu0 %v1006
      %v3172 = vpop.f32.mrb[0].mxu0
      %v3173 = vpop.f32.mrb[0].mxu0
      %3174 = vmatprep.mubr.f32.mxu0 0.0
      %3175 = vmatmul.mubr.f32.gmra.mrb[0].mxu0 %v1023
      %v3176 = vpop.f32.mrb[0].mxu0
      %v3177 = vpop.f32.mrb[0].mxu0
      %3178 = vmatprep.mubr.f32.mxu0 0.0
      %3179 = vmatmul.mubr.f32.gmra.mrb[0].mxu0 %v1040
      %v3180 = vpop.f32.mrb[0].mxu0
      %v3181 = vadd.f32 0.0, %v3180
      %v3182 = vpop.f32.mrb[0].mxu0
      %3183 = vmatprep.mubr.f32.mxu0 0.0
      %3184 = vmatmul.mubr.f32.gmra.mrb[0].mxu0 %v1057
      %v3185 = vpop.f32.mrb[0].mxu0
      %v3186 = vadd.f32 0.0, %v3185
      %v3187 = vpop.f32.mrb[0].mxu0
      %3188 = vmatprep.mubr.f32.mxu0 0.0
      %3189 = vmatmul.mubr.f32.gmra.mrb[0].mxu0 %v1074
      %v3190 = vpop.f32.mrb[0].mxu0
      %v3191 = vadd.f32 0.0, %v3190
      %v3192 = vpop.f32.mrb[0].mxu0
      %3193 = vmatprep.mubr.f32.mxu0 0.0
      %3194 = vmatmul.mubr.f32.gmra.mrb[0].mxu0 %v1091
      %v3195 = vpop.f32.mrb[0].mxu0
      %v3196 = vadd.f32 0.0, %v3195
      %v3197 = vpop.f32.mrb[0].mxu0
      %3198 = vmatprep.mubr.f32.mxu0 0.0
      %3199 = vmatmul.mubr.f32.gmra.mrb[0].mxu0 %v1108
      %v3200 = vpop.f32.mrb[0].mxu0
      %v3201 = vadd.f32 0.0, %v3200
      %v3202 = vpop.f32.mrb[0].mxu0
      %3203 = vmatprep.mubr.f32.mxu0 0.0
      %3204 = vmatmul.mubr.f32.gmra.mrb[0].mxu0 %v1125
      %v3205 = vpop.f32.mrb[0].mxu0
      %v3206 = vadd.f32 0.0, %v3205
      %v3207 = vpop.f32.mrb[0].mxu0
      %3208 = vmatprep.mubr.f32.mxu0 0.0
      %3209 = vmatmul.mubr.f32.gmra.mrb[0].mxu0 %v1142
      %v3210 = vpop.f32.mrb[0].mxu0
      %v3211 = vadd.f32 0.0, %v3210
      %v3212 = vpop.f32.mrb[0].mxu0
      %3213 = vmatprep.mubr.f32.mxu0 0.0
      %3214 = vmatmul.mubr.f32.gmra.mrb[0].mxu0 %v1159
      %v3215 = vpop.f32.mrb[0].mxu0
      %v3216 = vadd.f32 0.0, %v3215
      %v3217 = vpop.f32.mrb[0].mxu0
      %3218 = vmatprep.mubr.f32.mxu0 0.0
      %3219 = vmatmul.mubr.f32.gmra.mrb[0].mxu0 %v1176
      %v3220 = vpop.f32.mrb[0].mxu0
      %v3221 = vadd.f32 0.0, %v3220
      %v3222 = vpop.f32.mrb[0].mxu0
      %3223 = vmatprep.mubr.f32.mxu0 0.0
      %3224 = vmatmul.mubr.f32.gmra.mrb[0].mxu0 %v1193
      %v3225 = vpop.f32.mrb[0].mxu0
      %v3226 = vadd.f32 0.0, %v3225
      %v3227 = vpop.f32.mrb[0].mxu0
      %3228 = vmatprep.mubr.f32.mxu0 0.0
      %3229 = vmatmul.mubr.f32.gmra.mrb[0].mxu0 %v1210
      %v3230 = vpop.f32.mrb[0].mxu0
      %v3231 = vadd.f32 0.0, %v3230
      %v3232 = vpop.f32.mrb[0].mxu0
      %3233 = vmatprep.mubr.f32.mxu0 0.0
      %3234 = vmatmul.mubr.f32.gmra.mrb[0].mxu0 %v1227
      %v3235 = vpop.f32.mrb[0].mxu0
      %v3236 = vadd.f32 0.0, %v3235
      %v3237 = vpop.f32.mrb[0].mxu0
      %3238 = vmatprep.mubr.f32.mxu0 0.0
      %3239 = vmatmul.mubr.f32.gmra.mrb[0].mxu0 %v1244
      %v3240 = vpop.f32.mrb[0].mxu0
      %v3241 = vadd.f32 0.0, %v3240
      %v3242 = vpop.f32.mrb[0].mxu0
      %3243 = vmatprep.mubr.f32.mxu0 0.0
      %3244 = vmatmul.mubr.f32.gmra.mrb[0].mxu0 %v1261
      %v3245 = vpop.f32.mrb[0].mxu0
      %v3246 = vadd.f32 0.0, %v3245
      %v3247 = vpop.f32.mrb[0].mxu0
      %3248 = vmatprep.mubr.f32.mxu0 0.0
      %3249 = vmatmul.mubr.f32.gmra.mrb[0].mxu0 %v1278
      %v3250 = vpop.f32.mrb[0].mxu0
      %v3251 = vadd.f32 0.0, %v3250
      %v3252 = vpop.f32.mrb[0].mxu0
      %3253 = vmatprep.mubr.f32.mxu0 0.0
      %3254 = vmatmul.mubr.f32.gmra.mrb[0].mxu0 %v1295
      %v3255 = vpop.f32.mrb[0].mxu0
      %v3256 = vadd.f32 0.0, %v3255
      %v3257 = vpop.f32.mrb[0].mxu0
      %3258 = vmatprep.mubr.f32.mxu0 0.0
      %3259 = vmatmul.mubr.f32.gmra.mrb[0].mxu0 %v1312
      %v3260 = vpop.f32.mrb[0].mxu0
      %v3261 = vadd.f32 0.0, %v3260
      %v3262 = vpop.f32.mrb[0].mxu0
      %3263 = vmatprep.mubr.f32.mxu0 0.0
      %3264 = vmatmul.mubr.f32.gmra.mrb[0].mxu0 %v1329
      %v3265 = vpop.f32.mrb[0].mxu0
      %v3266 = vadd.f32 0.0, %v3265
      %v3267 = vpop.f32.mrb[0].mxu0
      %3268 = vmatprep.mubr.f32.mxu0 0.0
      %3269 = vmatmul.mubr.f32.gmra.mrb[0].mxu0 %v1337
      %v3270 = vpop.f32.mrb[0].mxu0
      %v3271 = vadd.f32 0.0, %v3270
      %v3272 = vpop.f32.mrb[0].mxu0
      %3273 = vdwg.mxu0
      %v3274 = vrot.slane %v3164, 4
      %v3275 = vsel %vm1538, %v3274, %v3271
      %v3276 = vadd.f32 %v3061, %v3181
      %v3277 = vadd.f32 %v3062, %v3186
      %v3278 = vadd.f32 %v3063, %v3191
      %v3279 = vadd.f32 %v3064, %v3196
      %v3280 = vadd.f32 %v3065, %v3201
      %v3281 = vadd.f32 %v3066, %v3206
      %v3282 = vadd.f32 %v3067, %v3211
      %v3283 = vadd.f32 %v3068, %v3216
      %v3284 = vadd.f32 %v3069, %v3221
      %v3285 = vadd.f32 %v3070, %v3226
      %v3286 = vadd.f32 %v3071, %v3231
      %v3287 = vadd.f32 %v3072, %v3236
      %v3288 = vadd.f32 %v3073, %v3241
      %v3289 = vadd.f32 %v3074, %v3246
      %v3290 = vadd.f32 %v3075, %v3251
      %v3291 = vadd.f32 %v3076, %v3256
      %v3292 = vadd.f32 %v3077, %v3261
      %v3293 = vadd.f32 %v3078, %v3266
      %v3294 = vadd.f32 %v3079, %v3275
      %s3295 = scalar_lea.vmem %s3, 896
      %v3296 = vld [vmem:[%s3295] sm:$0xff]
      %v3297 = vld [vmem:[%s3295 + $0x8] sm:$0xff]
      %v3298 = vld [vmem:[%s3295 + $0x10] sm:$0xff]
      %v3299 = vld [vmem:[%s3295 + $0x18] sm:$0xff]
      %v3300 = vld [vmem:[%s3295 + $0x20] sm:$0xff]
      %v3301 = vld [vmem:[%s3295 + $0x28] sm:$0xff]
      %v3302 = vld [vmem:[%s3295 + $0x30] sm:$0xff]
      %v3303 = vld [vmem:[%s3295 + $0x38] sm:$0xff]
      %v3304 = vld [vmem:[%s3295 + $0x40] sm:$0xff]
      %v3305 = vld [vmem:[%s3295 + $0x48] sm:$0xff]
      %v3306 = vld [vmem:[%s3295 + $0x50] sm:$0xff]
      %v3307 = vld [vmem:[%s3295 + $0x58] sm:$0xff]
      %v3308 = vld [vmem:[%s3295 + $0x60] sm:$0xff]
      %v3309 = vld [vmem:[%s3295 + $0x68] sm:$0xff]
      %v3310 = vld [vmem:[%s3295 + $0x70] sm:$0xff]
      %v3311 = vld [vmem:[%s3295 + $0x78] sm:$0xff]
      %3312 = vmatprep.subr.mxu0 0.0
      %3313 = vmatpush1.msra.mxu0 %v3296
      %3314 = vmatprep.subr.mxu0 0.0
      %3315 = vmatpush1.msra.mxu0 %v3297
      %3316 = vmatprep.subr.mxu0 0.0
      %3317 = vmatpush1.msra.mxu0 %v3298
      %3318 = vmatprep.subr.mxu0 0.0
      %3319 = vmatpush1.msra.mxu0 %v3299
      %3320 = vmatprep.subr.mxu0 0.0
      %3321 = vmatpush1.msra.mxu0 %v3300
      %3322 = vmatprep.subr.mxu0 0.0
      %3323 = vmatpush1.msra.mxu0 %v3301
      %3324 = vmatprep.subr.mxu0 0.0
      %3325 = vmatpush1.msra.mxu0 %v3302
      %3326 = vmatprep.subr.mxu0 0.0
      %3327 = vmatpush1.msra.mxu0 %v3303
      %3328 = vmatprep.subr.mxu0 0.0
      %3329 = vmatpush1.msra.mxu0 %v3304
      %3330 = vmatprep.subr.mxu0 0.0
      %3331 = vmatpush1.msra.mxu0 %v3305
      %3332 = vmatprep.subr.mxu0 0.0
      %3333 = vmatpush1.msra.mxu0 %v3306
      %3334 = vmatprep.subr.mxu0 0.0
      %3335 = vmatpush1.msra.mxu0 %v3307
      %3336 = vmatprep.subr.mxu0 0.0
      %3337 = vmatpush1.msra.mxu0 %v3308
      %3338 = vmatprep.subr.mxu0 0.0
      %3339 = vmatpush1.msra.mxu0 %v3309
      %3340 = vmatprep.subr.mxu0 0.0
      %3341 = vmatpush1.msra.mxu0 %v3310
      %3342 = vmatprep.subr.mxu0 0.0
      %3343 = vmatpush1.msra.mxu0 %v3311
      %3344 = vmatprep.subr.mxu0 0.0
      %3345 = vmatpush1.msra.mxu0 0.0
      %3346 = vmatprep.subr.mxu0 0.0
      %3347 = vmatpush1.msra.mxu0 0.0
      %3348 = vmatprep.subr.mxu0 0.0
      %3349 = vmatpush1.msra.mxu0 0.0
      %3350 = vmatprep.subr.mxu0 0.0
      %3351 = vmatpush1.msra.mxu0 0.0
      %3352 = vmatprep.subr.mxu0 0.0
      %3353 = vmatpush1.msra.mxu0 0.0
      %3354 = vmatprep.subr.mxu0 0.0
      %3355 = vmatpush1.msra.mxu0 0.0
      %3356 = vmatprep.subr.mxu0 0.0
      %3357 = vmatpush1.msra.mxu0 0.0
      %3358 = vmatprep.subr.mxu0 0.0
      %3359 = vmatpush1.msra.mxu0 0.0
      %3360 = vmatprep.subr.mxu0 0.0
      %3361 = vmatpush1.msra.mxu0 0.0
      %3362 = vmatprep.subr.mxu0 0.0
      %3363 = vmatpush1.msra.mxu0 0.0
      %3364 = vmatprep.subr.mxu0 0.0
      %3365 = vmatpush1.msra.mxu0 0.0
      %3366 = vmatprep.subr.mxu0 0.0
      %3367 = vmatpush1.msra.mxu0 0.0
      %3368 = vmatprep.subr.mxu0 0.0
      %3369 = vmatpush1.msra.mxu0 0.0
      %3370 = vmatprep.subr.mxu0 0.0
      %3371 = vmatpush1.msra.mxu0 0.0
      %3372 = vmatprep.subr.mxu0 0.0
      %3373 = vmatpush1.msra.mxu0 0.0
      %3374 = vmatprep.subr.mxu0 0.0
      %3375 = vmatpush1.msra.mxu0 0.0
      %3376 = vmatprep.mubr.f32.mxu0 0.0
      %3377 = vmatmul.mubr.f32.gmra.mrb[0].mxu0 %v972
      %v3378 = vpop.f32.mrb[0].mxu0
      %v3379 = vadd.f32 0.0, %v3378
      %v3380 = vpop.f32.mrb[0].mxu0
      %3381 = vmatprep.mubr.f32.mxu0 0.0
      %3382 = vmatmul.mubr.f32.gmra.mrb[0].mxu0 %v989
      %v3383 = vpop.f32.mrb[0].mxu0
      %v3384 = vadd.f32 0.0, %v3383
      %v3385 = vpop.f32.mrb[0].mxu0
      %3386 = vmatprep.mubr.f32.mxu0 0.0
      %3387 = vmatmul.mubr.f32.gmra.mrb[0].mxu0 %v1006
      %v3388 = vpop.f32.mrb[0].mxu0
      %v3389 = vpop.f32.mrb[0].mxu0
      %3390 = vmatprep.mubr.f32.mxu0 0.0
      %3391 = vmatmul.mubr.f32.gmra.mrb[0].mxu0 %v1023
      %v3392 = vpop.f32.mrb[0].mxu0
      %v3393 = vpop.f32.mrb[0].mxu0
      %3394 = vmatprep.mubr.f32.mxu0 0.0
      %3395 = vmatmul.mubr.f32.gmra.mrb[0].mxu0 %v1040
      %v3396 = vpop.f32.mrb[0].mxu0
      %v3397 = vadd.f32 0.0, %v3396
      %v3398 = vpop.f32.mrb[0].mxu0
      %3399 = vmatprep.mubr.f32.mxu0 0.0
      %3400 = vmatmul.mubr.f32.gmra.mrb[0].mxu0 %v1057
      %v3401 = vpop.f32.mrb[0].mxu0
      %v3402 = vadd.f32 0.0, %v3401
      %v3403 = vpop.f32.mrb[0].mxu0
      %3404 = vmatprep.mubr.f32.mxu0 0.0
      %3405 = vmatmul.mubr.f32.gmra.mrb[0].mxu0 %v1074
      %v3406 = vpop.f32.mrb[0].mxu0
      %v3407 = vadd.f32 0.0, %v3406
      %v3408 = vpop.f32.mrb[0].mxu0
      %3409 = vmatprep.mubr.f32.mxu0 0.0
      %3410 = vmatmul.mubr.f32.gmra.mrb[0].mxu0 %v1091
      %v3411 = vpop.f32.mrb[0].mxu0
      %v3412 = vadd.f32 0.0, %v3411
      %v3413 = vpop.f32.mrb[0].mxu0
      %3414 = vmatprep.mubr.f32.mxu0 0.0
      %3415 = vmatmul.mubr.f32.gmra.mrb[0].mxu0 %v1108
      %v3416 = vpop.f32.mrb[0].mxu0
      %v3417 = vadd.f32 0.0, %v3416
      %v3418 = vpop.f32.mrb[0].mxu0
      %3419 = vmatprep.mubr.f32.mxu0 0.0
      %3420 = vmatmul.mubr.f32.gmra.mrb[0].mxu0 %v1125
      %v3421 = vpop.f32.mrb[0].mxu0
      %v3422 = vadd.f32 0.0, %v3421
      %v3423 = vpop.f32.mrb[0].mxu0
      %3424 = vmatprep.mubr.f32.mxu0 0.0
      %3425 = vmatmul.mubr.f32.gmra.mrb[0].mxu0 %v1142
      %v3426 = vpop.f32.mrb[0].mxu0
      %v3427 = vadd.f32 0.0, %v3426
      %v3428 = vpop.f32.mrb[0].mxu0
      %3429 = vmatprep.mubr.f32.mxu0 0.0
      %3430 = vmatmul.mubr.f32.gmra.mrb[0].mxu0 %v1159
      %v3431 = vpop.f32.mrb[0].mxu0
      %v3432 = vadd.f32 0.0, %v3431
      %v3433 = vpop.f32.mrb[0].mxu0
      %3434 = vmatprep.mubr.f32.mxu0 0.0
      %3435 = vmatmul.mubr.f32.gmra.mrb[0].mxu0 %v1176
      %v3436 = vpop.f32.mrb[0].mxu0
      %v3437 = vadd.f32 0.0, %v3436
      %v3438 = vpop.f32.mrb[0].mxu0
      %3439 = vmatprep.mubr.f32.mxu0 0.0
      %3440 = vmatmul.mubr.f32.gmra.mrb[0].mxu0 %v1193
      %v3441 = vpop.f32.mrb[0].mxu0
      %v3442 = vadd.f32 0.0, %v3441
      %v3443 = vpop.f32.mrb[0].mxu0
      %3444 = vmatprep.mubr.f32.mxu0 0.0
      %3445 = vmatmul.mubr.f32.gmra.mrb[0].mxu0 %v1210
      %v3446 = vpop.f32.mrb[0].mxu0
      %v3447 = vadd.f32 0.0, %v3446
      %v3448 = vpop.f32.mrb[0].mxu0
      %3449 = vmatprep.mubr.f32.mxu0 0.0
      %3450 = vmatmul.mubr.f32.gmra.mrb[0].mxu0 %v1227
      %v3451 = vpop.f32.mrb[0].mxu0
      %v3452 = vadd.f32 0.0, %v3451
      %v3453 = vpop.f32.mrb[0].mxu0
      %3454 = vmatprep.mubr.f32.mxu0 0.0
      %3455 = vmatmul.mubr.f32.gmra.mrb[0].mxu0 %v1244
      %v3456 = vpop.f32.mrb[0].mxu0
      %v3457 = vadd.f32 0.0, %v3456
      %v3458 = vpop.f32.mrb[0].mxu0
      %3459 = vmatprep.mubr.f32.mxu0 0.0
      %3460 = vmatmul.mubr.f32.gmra.mrb[0].mxu0 %v1261
      %v3461 = vpop.f32.mrb[0].mxu0
      %v3462 = vadd.f32 0.0, %v3461
      %v3463 = vpop.f32.mrb[0].mxu0
      %3464 = vmatprep.mubr.f32.mxu0 0.0
      %3465 = vmatmul.mubr.f32.gmra.mrb[0].mxu0 %v1278
      %v3466 = vpop.f32.mrb[0].mxu0
      %v3467 = vadd.f32 0.0, %v3466
      %v3468 = vpop.f32.mrb[0].mxu0
      %3469 = vmatprep.mubr.f32.mxu0 0.0
      %3470 = vmatmul.mubr.f32.gmra.mrb[0].mxu0 %v1295
      %v3471 = vpop.f32.mrb[0].mxu0
      %v3472 = vadd.f32 0.0, %v3471
      %v3473 = vpop.f32.mrb[0].mxu0
      %3474 = vmatprep.mubr.f32.mxu0 0.0
      %3475 = vmatmul.mubr.f32.gmra.mrb[0].mxu0 %v1312
      %v3476 = vpop.f32.mrb[0].mxu0
      %v3477 = vadd.f32 0.0, %v3476
      %v3478 = vpop.f32.mrb[0].mxu0
      %3479 = vmatprep.mubr.f32.mxu0 0.0
      %3480 = vmatmul.mubr.f32.gmra.mrb[0].mxu0 %v1329
      %v3481 = vpop.f32.mrb[0].mxu0
      %v3482 = vadd.f32 0.0, %v3481
      %v3483 = vpop.f32.mrb[0].mxu0
      %3484 = vmatprep.mubr.f32.mxu0 0.0
      %3485 = vmatmul.mubr.f32.gmra.mrb[0].mxu0 %v1337
      %v3486 = vpop.f32.mrb[0].mxu0
      %v3487 = vadd.f32 0.0, %v3486
      %v3488 = vpop.f32.mrb[0].mxu0
      %3489 = vdwg.mxu0
      %v3490 = vrot.slane %v3379, 4
      %v3491 = vrot.slane %v3384, 4
      %v3492 = vsel %vm1538, %v3490, %v3487
      %v3493 = vsel %vm1538, %v3491, %v3490
      %v3514 = vrot.slane %v3397, 1
      %v3515 = vrot.slane %v3402, 1
      %v3516 = vsel %vm1832, %v3514, %v3515
      %v3517 = vrot.slane %v3407, 1
      %v3518 = vsel %vm1832, %v3515, %v3517
      %v3519 = vrot.slane %v3412, 1
      %v3520 = vsel %vm1832, %v3517, %v3519
      %v3521 = vrot.slane %v3417, 1
      %v3522 = vsel %vm1832, %v3519, %v3521
      %v3523 = vrot.slane %v3422, 1
      %v3524 = vsel %vm1832, %v3521, %v3523
      %v3525 = vrot.slane %v3427, 1
      %v3526 = vsel %vm1832, %v3523, %v3525
      %v3527 = vrot.slane %v3432, 1
      %v3528 = vsel %vm1832, %v3525, %v3527
      %v3529 = vrot.slane %v3437, 1
      %v3530 = vsel %vm1832, %v3527, %v3529
      %v3531 = vrot.slane %v3442, 1
      %v3532 = vsel %vm1832, %v3529, %v3531
      %v3533 = vrot.slane %v3447, 1
      %v3534 = vsel %vm1832, %v3531, %v3533
      %v3535 = vrot.slane %v3452, 1
      %v3536 = vsel %vm1832, %v3533, %v3535
      %v3537 = vrot.slane %v3457, 1
      %v3538 = vsel %vm1832, %v3535, %v3537
      %v3539 = vrot.slane %v3462, 1
      %v3540 = vsel %vm1832, %v3537, %v3539
      %v3541 = vrot.slane %v3467, 1
      %v3542 = vsel %vm1832, %v3539, %v3541
      %v3543 = vrot.slane %v3472, 1
      %v3544 = vsel %vm1832, %v3541, %v3543
      %v3545 = vrot.slane %v3477, 1
      %v3546 = vsel %vm1832, %v3543, %v3545
      %v3547 = vrot.slane %v3482, 1
      %v3548 = vsel %vm1832, %v3545, %v3547
      %v3549 = vrot.slane %v3492, 1
      %v3550 = vsel %vm1832, %v3547, %v3549
      %v3551 = vrot.slane %v3493, 1
      %v3552 = vsel %vm1832, %v3549, %v3551
      %v3572 = vadd.f32 %v3276, %v3516
      %v3573 = vadd.f32 %v3277, %v3518
      %v3574 = vadd.f32 %v3278, %v3520
      %v3575 = vadd.f32 %v3279, %v3522
      %v3576 = vadd.f32 %v3280, %v3524
      %v3577 = vadd.f32 %v3281, %v3526
      %v3578 = vadd.f32 %v3282, %v3528
      %v3579 = vadd.f32 %v3283, %v3530
      %v3580 = vadd.f32 %v3284, %v3532
      %v3581 = vadd.f32 %v3285, %v3534
      %v3582 = vadd.f32 %v3286, %v3536
      %v3583 = vadd.f32 %v3287, %v3538
      %v3584 = vadd.f32 %v3288, %v3540
      %v3585 = vadd.f32 %v3289, %v3542
      %v3586 = vadd.f32 %v3290, %v3544
      %v3587 = vadd.f32 %v3291, %v3546
      %v3588 = vadd.f32 %v3292, %v3548
      %v3589 = vadd.f32 %v3293, %v3550
      %v3590 = vadd.f32 %v3294, %v3552
      %s3591 = scalar_lea.vmem %s3, 1024
      %v3592 = vld [vmem:[%s3591] sm:$0xff]
      %v3593 = vld [vmem:[%s3591 + $0x8] sm:$0xff]
      %v3594 = vld [vmem:[%s3591 + $0x10] sm:$0xff]
      %v3595 = vld [vmem:[%s3591 + $0x18] sm:$0xff]
      %v3596 = vld [vmem:[%s3591 + $0x20] sm:$0xff]
      %v3597 = vld [vmem:[%s3591 + $0x28] sm:$0xff]
      %v3598 = vld [vmem:[%s3591 + $0x30] sm:$0xff]
      %v3599 = vld [vmem:[%s3591 + $0x38] sm:$0xff]
      %v3600 = vld [vmem:[%s3591 + $0x40] sm:$0xff]
      %v3601 = vld [vmem:[%s3591 + $0x48] sm:$0xff]
      %v3602 = vld [vmem:[%s3591 + $0x50] sm:$0xff]
      %v3603 = vld [vmem:[%s3591 + $0x58] sm:$0xff]
      %v3604 = vld [vmem:[%s3591 + $0x60] sm:$0xff]
      %v3605 = vld [vmem:[%s3591 + $0x68] sm:$0xff]
      %v3606 = vld [vmem:[%s3591 + $0x70] sm:$0xff]
      %v3607 = vld [vmem:[%s3591 + $0x78] sm:$0xff]
      %3608 = vmatprep.subr.mxu0 0.0
      %3609 = vmatpush1.msra.mxu0 %v3592
      %3610 = vmatprep.subr.mxu0 0.0
      %3611 = vmatpush1.msra.mxu0 %v3593
      %3612 = vmatprep.subr.mxu0 0.0
      %3613 = vmatpush1.msra.mxu0 %v3594
      %3614 = vmatprep.subr.mxu0 0.0
      %3615 = vmatpush1.msra.mxu0 %v3595
      %3616 = vmatprep.subr.mxu0 0.0
      %3617 = vmatpush1.msra.mxu0 %v3596
      %3618 = vmatprep.subr.mxu0 0.0
      %3619 = vmatpush1.msra.mxu0 %v3597
      %3620 = vmatprep.subr.mxu0 0.0
      %3621 = vmatpush1.msra.mxu0 %v3598
      %3622 = vmatprep.subr.mxu0 0.0
      %3623 = vmatpush1.msra.mxu0 %v3599
      %3624 = vmatprep.subr.mxu0 0.0
      %3625 = vmatpush1.msra.mxu0 %v3600
      %3626 = vmatprep.subr.mxu0 0.0
      %3627 = vmatpush1.msra.mxu0 %v3601
      %3628 = vmatprep.subr.mxu0 0.0
      %3629 = vmatpush1.msra.mxu0 %v3602
      %3630 = vmatprep.subr.mxu0 0.0
      %3631 = vmatpush1.msra.mxu0 %v3603
      %3632 = vmatprep.subr.mxu0 0.0
      %3633 = vmatpush1.msra.mxu0 %v3604
      %3634 = vmatprep.subr.mxu0 0.0
      %3635 = vmatpush1.msra.mxu0 %v3605
      %3636 = vmatprep.subr.mxu0 0.0
      %3637 = vmatpush1.msra.mxu0 %v3606
      %3638 = vmatprep.subr.mxu0 0.0
      %3639 = vmatpush1.msra.mxu0 %v3607
      %3640 = vmatprep.subr.mxu0 0.0
      %3641 = vmatpush1.msra.mxu0 0.0
      %3642 = vmatprep.subr.mxu0 0.0
      %3643 = vmatpush1.msra.mxu0 0.0
      %3644 = vmatprep.subr.mxu0 0.0
      %3645 = vmatpush1.msra.mxu0 0.0
      %3646 = vmatprep.subr.mxu0 0.0
      %3647 = vmatpush1.msra.mxu0 0.0
      %3648 = vmatprep.subr.mxu0 0.0
      %3649 = vmatpush1.msra.mxu0 0.0
      %3650 = vmatprep.subr.mxu0 0.0
      %3651 = vmatpush1.msra.mxu0 0.0
      %3652 = vmatprep.subr.mxu0 0.0
      %3653 = vmatpush1.msra.mxu0 0.0
      %3654 = vmatprep.subr.mxu0 0.0
      %3655 = vmatpush1.msra.mxu0 0.0
      %3656 = vmatprep.subr.mxu0 0.0
      %3657 = vmatpush1.msra.mxu0 0.0
      %3658 = vmatprep.subr.mxu0 0.0
      %3659 = vmatpush1.msra.mxu0 0.0
      %3660 = vmatprep.subr.mxu0 0.0
      %3661 = vmatpush1.msra.mxu0 0.0
      %3662 = vmatprep.subr.mxu0 0.0
      %3663 = vmatpush1.msra.mxu0 0.0
      %3664 = vmatprep.subr.mxu0 0.0
      %3665 = vmatpush1.msra.mxu0 0.0
      %3666 = vmatprep.subr.mxu0 0.0
      %3667 = vmatpush1.msra.mxu0 0.0
      %3668 = vmatprep.subr.mxu0 0.0
      %3669 = vmatpush1.msra.mxu0 0.0
      %3670 = vmatprep.subr.mxu0 0.0
      %3671 = vmatpush1.msra.mxu0 0.0
      %3672 = vmatprep.mubr.f32.mxu0 0.0
      %3673 = vmatmul.mubr.f32.gmra.mrb[0].mxu0 %v972
      %v3674 = vpop.f32.mrb[0].mxu0
      %v3675 = vadd.f32 0.0, %v3674
      %v3676 = vpop.f32.mrb[0].mxu0
      %3677 = vmatprep.mubr.f32.mxu0 0.0
      %3678 = vmatmul.mubr.f32.gmra.mrb[0].mxu0 %v989
      %v3679 = vpop.f32.mrb[0].mxu0
      %v3680 = vadd.f32 0.0, %v3679
      %v3681 = vpop.f32.mrb[0].mxu0
      %3682 = vmatprep.mubr.f32.mxu0 0.0
      %3683 = vmatmul.mubr.f32.gmra.mrb[0].mxu0 %v1006
      %v3684 = vpop.f32.mrb[0].mxu0
      %v3685 = vpop.f32.mrb[0].mxu0
      %3686 = vmatprep.mubr.f32.mxu0 0.0
      %3687 = vmatmul.mubr.f32.gmra.mrb[0].mxu0 %v1023
      %v3688 = vpop.f32.mrb[0].mxu0
      %v3689 = vpop.f32.mrb[0].mxu0
      %3690 = vmatprep.mubr.f32.mxu0 0.0
      %3691 = vmatmul.mubr.f32.gmra.mrb[0].mxu0 %v1040
      %v3692 = vpop.f32.mrb[0].mxu0
      %v3693 = vadd.f32 0.0, %v3692
      %v3694 = vpop.f32.mrb[0].mxu0
      %3695 = vmatprep.mubr.f32.mxu0 0.0
      %3696 = vmatmul.mubr.f32.gmra.mrb[0].mxu0 %v1057
      %v3697 = vpop.f32.mrb[0].mxu0
      %v3698 = vadd.f32 0.0, %v3697
      %v3699 = vpop.f32.mrb[0].mxu0
      %3700 = vmatprep.mubr.f32.mxu0 0.0
      %3701 = vmatmul.mubr.f32.gmra.mrb[0].mxu0 %v1074
      %v3702 = vpop.f32.mrb[0].mxu0
      %v3703 = vadd.f32 0.0, %v3702
      %v3704 = vpop.f32.mrb[0].mxu0
      %3705 = vmatprep.mubr.f32.mxu0 0.0
      %3706 = vmatmul.mubr.f32.gmra.mrb[0].mxu0 %v1091
      %v3707 = vpop.f32.mrb[0].mxu0
      %v3708 = vadd.f32 0.0, %v3707
      %v3709 = vpop.f32.mrb[0].mxu0
      %3710 = vmatprep.mubr.f32.mxu0 0.0
      %3711 = vmatmul.mubr.f32.gmra.mrb[0].mxu0 %v1108
      %v3712 = vpop.f32.mrb[0].mxu0
      %v3713 = vadd.f32 0.0, %v3712
      %v3714 = vpop.f32.mrb[0].mxu0
      %3715 = vmatprep.mubr.f32.mxu0 0.0
      %3716 = vmatmul.mubr.f32.gmra.mrb[0].mxu0 %v1125
      %v3717 = vpop.f32.mrb[0].mxu0
      %v3718 = vadd.f32 0.0, %v3717
      %v3719 = vpop.f32.mrb[0].mxu0
      %3720 = vmatprep.mubr.f32.mxu0 0.0
      %3721 = vmatmul.mubr.f32.gmra.mrb[0].mxu0 %v1142
      %v3722 = vpop.f32.mrb[0].mxu0
      %v3723 = vadd.f32 0.0, %v3722
      %v3724 = vpop.f32.mrb[0].mxu0
      %3725 = vmatprep.mubr.f32.mxu0 0.0
      %3726 = vmatmul.mubr.f32.gmra.mrb[0].mxu0 %v1159
      %v3727 = vpop.f32.mrb[0].mxu0
      %v3728 = vadd.f32 0.0, %v3727
      %v3729 = vpop.f32.mrb[0].mxu0
      %3730 = vmatprep.mubr.f32.mxu0 0.0
      %3731 = vmatmul.mubr.f32.gmra.mrb[0].mxu0 %v1176
      %v3732 = vpop.f32.mrb[0].mxu0
      %v3733 = vadd.f32 0.0, %v3732
      %v3734 = vpop.f32.mrb[0].mxu0
      %3735 = vmatprep.mubr.f32.mxu0 0.0
      %3736 = vmatmul.mubr.f32.gmra.mrb[0].mxu0 %v1193
      %v3737 = vpop.f32.mrb[0].mxu0
      %v3738 = vadd.f32 0.0, %v3737
      %v3739 = vpop.f32.mrb[0].mxu0
      %3740 = vmatprep.mubr.f32.mxu0 0.0
      %3741 = vmatmul.mubr.f32.gmra.mrb[0].mxu0 %v1210
      %v3742 = vpop.f32.mrb[0].mxu0
      %v3743 = vadd.f32 0.0, %v3742
      %v3744 = vpop.f32.mrb[0].mxu0
      %3745 = vmatprep.mubr.f32.mxu0 0.0
      %3746 = vmatmul.mubr.f32.gmra.mrb[0].mxu0 %v1227
      %v3747 = vpop.f32.mrb[0].mxu0
      %v3748 = vadd.f32 0.0, %v3747
      %v3749 = vpop.f32.mrb[0].mxu0
      %3750 = vmatprep.mubr.f32.mxu0 0.0
      %3751 = vmatmul.mubr.f32.gmra.mrb[0].mxu0 %v1244
      %v3752 = vpop.f32.mrb[0].mxu0
      %v3753 = vadd.f32 0.0, %v3752
      %v3754 = vpop.f32.mrb[0].mxu0
      %3755 = vmatprep.mubr.f32.mxu0 0.0
      %3756 = vmatmul.mubr.f32.gmra.mrb[0].mxu0 %v1261
      %v3757 = vpop.f32.mrb[0].mxu0
      %v3758 = vadd.f32 0.0, %v3757
      %v3759 = vpop.f32.mrb[0].mxu0
      %3760 = vmatprep.mubr.f32.mxu0 0.0
      %3761 = vmatmul.mubr.f32.gmra.mrb[0].mxu0 %v1278
      %v3762 = vpop.f32.mrb[0].mxu0
      %v3763 = vadd.f32 0.0, %v3762
      %v3764 = vpop.f32.mrb[0].mxu0
      %3765 = vmatprep.mubr.f32.mxu0 0.0
      %3766 = vmatmul.mubr.f32.gmra.mrb[0].mxu0 %v1295
      %v3767 = vpop.f32.mrb[0].mxu0
      %v3768 = vadd.f32 0.0, %v3767
      %v3769 = vpop.f32.mrb[0].mxu0
      %3770 = vmatprep.mubr.f32.mxu0 0.0
      %3771 = vmatmul.mubr.f32.gmra.mrb[0].mxu0 %v1312
      %v3772 = vpop.f32.mrb[0].mxu0
      %v3773 = vadd.f32 0.0, %v3772
      %v3774 = vpop.f32.mrb[0].mxu0
      %3775 = vmatprep.mubr.f32.mxu0 0.0
      %3776 = vmatmul.mubr.f32.gmra.mrb[0].mxu0 %v1329
      %v3777 = vpop.f32.mrb[0].mxu0
      %v3778 = vadd.f32 0.0, %v3777
      %v3779 = vpop.f32.mrb[0].mxu0
      %3780 = vmatprep.mubr.f32.mxu0 0.0
      %3781 = vmatmul.mubr.f32.gmra.mrb[0].mxu0 %v1337
      %v3782 = vpop.f32.mrb[0].mxu0
      %v3783 = vadd.f32 0.0, %v3782
      %v3784 = vpop.f32.mrb[0].mxu0
      %3785 = vdwg.mxu0
      %v3786 = vrot.slane %v3675, 4
      %v3787 = vrot.slane %v3680, 4
      %v3788 = vsel %vm1538, %v3786, %v3783
      %v3789 = vsel %vm1538, %v3787, %v3786
      %v3810 = vrot.slane %v3693, 2
      %v3811 = vrot.slane %v3698, 2
      %v3812 = vsel %vm2165, %v3810, %v3811
      %v3813 = vrot.slane %v3703, 2
      %v3814 = vsel %vm2165, %v3811, %v3813
      %v3815 = vrot.slane %v3708, 2
      %v3816 = vsel %vm2165, %v3813, %v3815
      %v3817 = vrot.slane %v3713, 2
      %v3818 = vsel %vm2165, %v3815, %v3817
      %v3819 = vrot.slane %v3718, 2
      %v3820 = vsel %vm2165, %v3817, %v3819
      %v3821 = vrot.slane %v3723, 2
      %v3822 = vsel %vm2165, %v3819, %v3821
      %v3823 = vrot.slane %v3728, 2
      %v3824 = vsel %vm2165, %v3821, %v3823
      %v3825 = vrot.slane %v3733, 2
      %v3826 = vsel %vm2165, %v3823, %v3825
      %v3827 = vrot.slane %v3738, 2
      %v3828 = vsel %vm2165, %v3825, %v3827
      %v3829 = vrot.slane %v3743, 2
      %v3830 = vsel %vm2165, %v3827, %v3829
      %v3831 = vrot.slane %v3748, 2
      %v3832 = vsel %vm2165, %v3829, %v3831
      %v3833 = vrot.slane %v3753, 2
      %v3834 = vsel %vm2165, %v3831, %v3833
      %v3835 = vrot.slane %v3758, 2
      %v3836 = vsel %vm2165, %v3833, %v3835
      %v3837 = vrot.slane %v3763, 2
      %v3838 = vsel %vm2165, %v3835, %v3837
      %v3839 = vrot.slane %v3768, 2
      %v3840 = vsel %vm2165, %v3837, %v3839
      %v3841 = vrot.slane %v3773, 2
      %v3842 = vsel %vm2165, %v3839, %v3841
      %v3843 = vrot.slane %v3778, 2
      %v3844 = vsel %vm2165, %v3841, %v3843
      %v3845 = vrot.slane %v3788, 2
      %v3846 = vsel %vm2165, %v3843, %v3845
      %v3847 = vrot.slane %v3789, 2
      %v3848 = vsel %vm2165, %v3845, %v3847
      %v3868 = vadd.f32 %v3572, %v3812
      %v3869 = vadd.f32 %v3573, %v3814
      %v3870 = vadd.f32 %v3574, %v3816
      %v3871 = vadd.f32 %v3575, %v3818
      %v3872 = vadd.f32 %v3576, %v3820
      %v3873 = vadd.f32 %v3577, %v3822
      %v3874 = vadd.f32 %v3578, %v3824
      %v3875 = vadd.f32 %v3579, %v3826
      %v3876 = vadd.f32 %v3580, %v3828
      %v3877 = vadd.f32 %v3581, %v3830
      %v3878 = vadd.f32 %v3582, %v3832
      %v3879 = vadd.f32 %v3583, %v3834
      %v3880 = vadd.f32 %v3584, %v3836
      %v3881 = vadd.f32 %v3585, %v3838
      %v3882 = vadd.f32 %v3586, %v3840
      %v3883 = vadd.f32 %v3587, %v3842
      %v3884 = vadd.f32 %v3588, %v3844
      %v3885 = vadd.f32 %v3589, %v3846
      %v3886 = vadd.f32 %v3590, %v3848
      %v3906 = vcombine.high %v3868, %v3868
      %v3908 = vunpack.c.l.s4 1983009808
      %v3909 = vunpack.c.0.s8 %v3908
      %v3910 = vlaneseq
      %v3911 = vshrl.u32 %v3910, 7
      %v3912 = vsub.s32 %v3909, %v3911
      %v3913 = vrot.slane %v3868, %v3912
      %v3915 = vunpack.c.l.s4 1983009808
      %v3916 = vunpack.c.0.s8 %v3915
      %v3917 = vlaneseq
      %v3918 = vshrl.u32 %v3917, 7
      %v3919 = vsub.s32 %v3916, %v3918
      %v3920 = vrot.slane %v3906, %v3919
      %v3921 = vcombine.high %v3913, %v3913
      %v3922 = vcombine.high %v3920, %v3920
      %v3923 = vcombine.high %v3869, %v3869
      %v3925 = vunpack.c.l.s4 1983009808
      %v3926 = vunpack.c.0.s8 %v3925
      %v3927 = vlaneseq
      %v3928 = vshrl.u32 %v3927, 7
      %v3929 = vsub.s32 %v3926, %v3928
      %v3930 = vrot.slane %v3869, %v3929
      %v3932 = vunpack.c.l.s4 1983009808
      %v3933 = vunpack.c.0.s8 %v3932
      %v3934 = vlaneseq
      %v3935 = vshrl.u32 %v3934, 7
      %v3936 = vsub.s32 %v3933, %v3935
      %v3937 = vrot.slane %v3923, %v3936
      %v3938 = vcombine.high %v3930, %v3930
      %v3939 = vcombine.high %v3937, %v3937
      %v3940 = vcombine.high %v3870, %v3870
      %v3942 = vunpack.c.l.s4 1983009808
      %v3943 = vunpack.c.0.s8 %v3942
      %v3944 = vlaneseq
      %v3945 = vshrl.u32 %v3944, 7
      %v3946 = vsub.s32 %v3943, %v3945
      %v3947 = vrot.slane %v3870, %v3946
      %v3949 = vunpack.c.l.s4 1983009808
      %v3950 = vunpack.c.0.s8 %v3949
      %v3951 = vlaneseq
      %v3952 = vshrl.u32 %v3951, 7
      %v3953 = vsub.s32 %v3950, %v3952
      %v3954 = vrot.slane %v3940, %v3953
      %v3955 = vcombine.high %v3947, %v3947
      %v3956 = vcombine.high %v3954, %v3954
      %v3957 = vcombine.high %v3871, %v3871
      %v3959 = vunpack.c.l.s4 1983009808
      %v3960 = vunpack.c.0.s8 %v3959
      %v3961 = vlaneseq
      %v3962 = vshrl.u32 %v3961, 7
      %v3963 = vsub.s32 %v3960, %v3962
      %v3964 = vrot.slane %v3871, %v3963
      %v3966 = vunpack.c.l.s4 1983009808
      %v3967 = vunpack.c.0.s8 %v3966
      %v3968 = vlaneseq
      %v3969 = vshrl.u32 %v3968, 7
      %v3970 = vsub.s32 %v3967, %v3969
      %v3971 = vrot.slane %v3957, %v3970
      %v3972 = vcombine.high %v3964, %v3964
      %v3973 = vcombine.high %v3971, %v3971
      %v3974 = vcombine.high %v3872, %v3872
      %v3976 = vunpack.c.l.s4 1983009808
      %v3977 = vunpack.c.0.s8 %v3976
      %v3978 = vlaneseq
      %v3979 = vshrl.u32 %v3978, 7
      %v3980 = vsub.s32 %v3977, %v3979
      %v3981 = vrot.slane %v3872, %v3980
      %v3983 = vunpack.c.l.s4 1983009808
      %v3984 = vunpack.c.0.s8 %v3983
      %v3985 = vlaneseq
      %v3986 = vshrl.u32 %v3985, 7
      %v3987 = vsub.s32 %v3984, %v3986
      %v3988 = vrot.slane %v3974, %v3987
      %v3989 = vcombine.high %v3981, %v3981
      %v3990 = vcombine.high %v3988, %v3988
      %v3991 = vcombine.high %v3873, %v3873
      %v3993 = vunpack.c.l.s4 1983009808
      %v3994 = vunpack.c.0.s8 %v3993
      %v3995 = vlaneseq
      %v3996 = vshrl.u32 %v3995, 7
      %v3997 = vsub.s32 %v3994, %v3996
      %v3998 = vrot.slane %v3873, %v3997
      %v4000 = vunpack.c.l.s4 1983009808
      %v4001 = vunpack.c.0.s8 %v4000
      %v4002 = vlaneseq
      %v4003 = vshrl.u32 %v4002, 7
      %v4004 = vsub.s32 %v4001, %v4003
      %v4005 = vrot.slane %v3991, %v4004
      %v4006 = vcombine.high %v3998, %v3998
      %v4007 = vcombine.high %v4005, %v4005
      %v4008 = vcombine.high %v3874, %v3874
      %v4010 = vunpack.c.l.s4 1983009808
      %v4011 = vunpack.c.0.s8 %v4010
      %v4012 = vlaneseq
      %v4013 = vshrl.u32 %v4012, 7
      %v4014 = vsub.s32 %v4011, %v4013
      %v4015 = vrot.slane %v3874, %v4014
      %v4017 = vunpack.c.l.s4 1983009808
      %v4018 = vunpack.c.0.s8 %v4017
      %v4019 = vlaneseq
      %v4020 = vshrl.u32 %v4019, 7
      %v4021 = vsub.s32 %v4018, %v4020
      %v4022 = vrot.slane %v4008, %v4021
      %v4023 = vcombine.high %v4015, %v4015
      %v4024 = vcombine.high %v4022, %v4022
      %v4025 = vcombine.high %v3875, %v3875
      %v4027 = vunpack.c.l.s4 1983009808
      %v4028 = vunpack.c.0.s8 %v4027
      %v4029 = vlaneseq
      %v4030 = vshrl.u32 %v4029, 7
      %v4031 = vsub.s32 %v4028, %v4030
      %v4032 = vrot.slane %v3875, %v4031
      %v4034 = vunpack.c.l.s4 1983009808
      %v4035 = vunpack.c.0.s8 %v4034
      %v4036 = vlaneseq
      %v4037 = vshrl.u32 %v4036, 7
      %v4038 = vsub.s32 %v4035, %v4037
      %v4039 = vrot.slane %v4025, %v4038
      %v4040 = vcombine.high %v4032, %v4032
      %v4041 = vcombine.high %v4039, %v4039
      %v4042 = vcombine.high %v3876, %v3876
      %v4044 = vunpack.c.l.s4 1983009808
      %v4045 = vunpack.c.0.s8 %v4044
      %v4046 = vlaneseq
      %v4047 = vshrl.u32 %v4046, 7
      %v4048 = vsub.s32 %v4045, %v4047
      %v4049 = vrot.slane %v3876, %v4048
      %v4051 = vunpack.c.l.s4 1983009808
      %v4052 = vunpack.c.0.s8 %v4051
      %v4053 = vlaneseq
      %v4054 = vshrl.u32 %v4053, 7
      %v4055 = vsub.s32 %v4052, %v4054
      %v4056 = vrot.slane %v4042, %v4055
      %v4057 = vcombine.high %v4049, %v4049
      %v4058 = vcombine.high %v4056, %v4056
      %v4059 = vcombine.high %v3877, %v3877
      %v4061 = vunpack.c.l.s4 1983009808
      %v4062 = vunpack.c.0.s8 %v4061
      %v4063 = vlaneseq
      %v4064 = vshrl.u32 %v4063, 7
      %v4065 = vsub.s32 %v4062, %v4064
      %v4066 = vrot.slane %v3877, %v4065
      %v4068 = vunpack.c.l.s4 1983009808
      %v4069 = vunpack.c.0.s8 %v4068
      %v4070 = vlaneseq
      %v4071 = vshrl.u32 %v4070, 7
      %v4072 = vsub.s32 %v4069, %v4071
      %v4073 = vrot.slane %v4059, %v4072
      %v4074 = vcombine.high %v4066, %v4066
      %v4075 = vcombine.high %v4073, %v4073
      %v4076 = vcombine.high %v3878, %v3878
      %v4078 = vunpack.c.l.s4 1983009808
      %v4079 = vunpack.c.0.s8 %v4078
      %v4080 = vlaneseq
      %v4081 = vshrl.u32 %v4080, 7
      %v4082 = vsub.s32 %v4079, %v4081
      %v4083 = vrot.slane %v3878, %v4082
      %v4085 = vunpack.c.l.s4 1983009808
      %v4086 = vunpack.c.0.s8 %v4085
      %v4087 = vlaneseq
      %v4088 = vshrl.u32 %v4087, 7
      %v4089 = vsub.s32 %v4086, %v4088
      %v4090 = vrot.slane %v4076, %v4089
      %v4091 = vcombine.high %v4083, %v4083
      %v4092 = vcombine.high %v4090, %v4090
      %v4093 = vcombine.high %v3879, %v3879
      %v4095 = vunpack.c.l.s4 1983009808
      %v4096 = vunpack.c.0.s8 %v4095
      %v4097 = vlaneseq
      %v4098 = vshrl.u32 %v4097, 7
      %v4099 = vsub.s32 %v4096, %v4098
      %v4100 = vrot.slane %v3879, %v4099
      %v4102 = vunpack.c.l.s4 1983009808
      %v4103 = vunpack.c.0.s8 %v4102
      %v4104 = vlaneseq
      %v4105 = vshrl.u32 %v4104, 7
      %v4106 = vsub.s32 %v4103, %v4105
      %v4107 = vrot.slane %v4093, %v4106
      %v4108 = vcombine.high %v4100, %v4100
      %v4109 = vcombine.high %v4107, %v4107
      %v4110 = vcombine.high %v3880, %v3880
      %v4112 = vunpack.c.l.s4 1983009808
      %v4113 = vunpack.c.0.s8 %v4112
      %v4114 = vlaneseq
      %v4115 = vshrl.u32 %v4114, 7
      %v4116 = vsub.s32 %v4113, %v4115
      %v4117 = vrot.slane %v3880, %v4116
      %v4119 = vunpack.c.l.s4 1983009808
      %v4120 = vunpack.c.0.s8 %v4119
      %v4121 = vlaneseq
      %v4122 = vshrl.u32 %v4121, 7
      %v4123 = vsub.s32 %v4120, %v4122
      %v4124 = vrot.slane %v4110, %v4123
      %v4125 = vcombine.high %v4117, %v4117
      %v4126 = vcombine.high %v4124, %v4124
      %v4127 = vcombine.high %v3881, %v3881
      %v4129 = vunpack.c.l.s4 1983009808
      %v4130 = vunpack.c.0.s8 %v4129
      %v4131 = vlaneseq
      %v4132 = vshrl.u32 %v4131, 7
      %v4133 = vsub.s32 %v4130, %v4132
      %v4134 = vrot.slane %v3881, %v4133
      %v4136 = vunpack.c.l.s4 1983009808
      %v4137 = vunpack.c.0.s8 %v4136
      %v4138 = vlaneseq
      %v4139 = vshrl.u32 %v4138, 7
      %v4140 = vsub.s32 %v4137, %v4139
      %v4141 = vrot.slane %v4127, %v4140
      %v4142 = vcombine.high %v4134, %v4134
      %v4143 = vcombine.high %v4141, %v4141
      %v4144 = vcombine.high %v3882, %v3882
      %v4146 = vunpack.c.l.s4 1983009808
      %v4147 = vunpack.c.0.s8 %v4146
      %v4148 = vlaneseq
      %v4149 = vshrl.u32 %v4148, 7
      %v4150 = vsub.s32 %v4147, %v4149
      %v4151 = vrot.slane %v3882, %v4150
      %v4153 = vunpack.c.l.s4 1983009808
      %v4154 = vunpack.c.0.s8 %v4153
      %v4155 = vlaneseq
      %v4156 = vshrl.u32 %v4155, 7
      %v4157 = vsub.s32 %v4154, %v4156
      %v4158 = vrot.slane %v4144, %v4157
      %v4159 = vcombine.high %v4151, %v4151
      %v4160 = vcombine.high %v4158, %v4158
      %v4161 = vcombine.high %v3883, %v3883
      %v4163 = vunpack.c.l.s4 1983009808
      %v4164 = vunpack.c.0.s8 %v4163
      %v4165 = vlaneseq
      %v4166 = vshrl.u32 %v4165, 7
      %v4167 = vsub.s32 %v4164, %v4166
      %v4168 = vrot.slane %v3883, %v4167
      %v4170 = vunpack.c.l.s4 1983009808
      %v4171 = vunpack.c.0.s8 %v4170
      %v4172 = vlaneseq
      %v4173 = vshrl.u32 %v4172, 7
      %v4174 = vsub.s32 %v4171, %v4173
      %v4175 = vrot.slane %v4161, %v4174
      %v4176 = vcombine.high %v4168, %v4168
      %v4177 = vcombine.high %v4175, %v4175
      %v4178 = vcombine.high %v3884, %v3884
      %v4180 = vunpack.c.l.s4 1983009808
      %v4181 = vunpack.c.0.s8 %v4180
      %v4182 = vlaneseq
      %v4183 = vshrl.u32 %v4182, 7
      %v4184 = vsub.s32 %v4181, %v4183
      %v4185 = vrot.slane %v3884, %v4184
      %v4187 = vunpack.c.l.s4 1983009808
      %v4188 = vunpack.c.0.s8 %v4187
      %v4189 = vlaneseq
      %v4190 = vshrl.u32 %v4189, 7
      %v4191 = vsub.s32 %v4188, %v4190
      %v4192 = vrot.slane %v4178, %v4191
      %v4193 = vcombine.high %v4185, %v4185
      %v4194 = vcombine.high %v4192, %v4192
      %v4195 = vcombine.high %v3885, %v3885
      %v4197 = vunpack.c.l.s4 1983009808
      %v4198 = vunpack.c.0.s8 %v4197
      %v4199 = vlaneseq
      %v4200 = vshrl.u32 %v4199, 7
      %v4201 = vsub.s32 %v4198, %v4200
      %v4202 = vrot.slane %v3885, %v4201
      %v4204 = vunpack.c.l.s4 1983009808
      %v4205 = vunpack.c.0.s8 %v4204
      %v4206 = vlaneseq
      %v4207 = vshrl.u32 %v4206, 7
      %v4208 = vsub.s32 %v4205, %v4207
      %v4209 = vrot.slane %v4195, %v4208
      %v4210 = vcombine.high %v4202, %v4202
      %v4211 = vcombine.high %v4209, %v4209
      %v4213 = vunpack.c.l.s4 1983009808
      %v4214 = vunpack.c.0.s8 %v4213
      %v4215 = vlaneseq
      %v4216 = vshrl.u32 %v4215, 7
      %v4217 = vsub.s32 %v4214, %v4216
      %v4218 = vrot.slane %v3886, %v4217
      %v4219 = vcombine.high %v4218, %v4218
      %vm4220 = vcmask 1042434
      %vm4221 = vmor %vm2790, %vm4220
      %vm4222 = vcmask 1044484
      %vm4223 = vmor %vm4221, %vm4222
      %vm4224 = vcmask 1046534
      %vm4225 = vmor %vm4223, %vm4224
      %v4226 = vrot.slane %v3921, 7
      %v4227 = vrot.slane %v4226, 2
      %v4228 = vrot.slane %v3920, 7
      %v4229 = vsel %vm4225, %v4227, %v4228
      %v4230 = vrot.slane %v4228, 2
      %v4231 = vrot.slane %v3922, 7
      %v4232 = vsel %vm4225, %v4230, %v4231
      %v4233 = vrot.slane %v4231, 2
      %v4234 = vrot.slane %v3930, 7
      %v4235 = vsel %vm4225, %v4233, %v4234
      %v4236 = vrot.slane %v4234, 2
      %v4237 = vrot.slane %v3938, 7
      %v4238 = vsel %vm4225, %v4236, %v4237
      %v4239 = vrot.slane %v4237, 2
      %v4240 = vrot.slane %v3937, 7
      %v4241 = vsel %vm4225, %v4239, %v4240
      %v4242 = vrot.slane %v4240, 2
      %v4243 = vrot.slane %v3939, 7
      %v4244 = vsel %vm4225, %v4242, %v4243
      %v4245 = vrot.slane %v4243, 2
      %v4246 = vrot.slane %v3947, 7
      %v4247 = vsel %vm4225, %v4245, %v4246
      %v4248 = vrot.slane %v4246, 2
      %v4249 = vrot.slane %v3955, 7
      %v4250 = vsel %vm4225, %v4248, %v4249
      %v4251 = vrot.slane %v4249, 2
      %v4252 = vrot.slane %v3954, 7
      %v4253 = vsel %vm4225, %v4251, %v4252
      %v4254 = vrot.slane %v4252, 2
      %v4255 = vrot.slane %v3956, 7
      %v4256 = vsel %vm4225, %v4254, %v4255
      %v4257 = vrot.slane %v4255, 2
      %v4258 = vrot.slane %v3964, 7
      %v4259 = vsel %vm4225, %v4257, %v4258
      %v4260 = vrot.slane %v4258, 2
      %v4261 = vrot.slane %v3972, 7
      %v4262 = vsel %vm4225, %v4260, %v4261
      %v4263 = vrot.slane %v4261, 2
      %v4264 = vrot.slane %v3971, 7
      %v4265 = vsel %vm4225, %v4263, %v4264
      %v4266 = vrot.slane %v4264, 2
      %v4267 = vrot.slane %v3973, 7
      %v4268 = vsel %vm4225, %v4266, %v4267
      %v4269 = vrot.slane %v4267, 2
      %v4270 = vrot.slane %v3981, 7
      %v4271 = vsel %vm4225, %v4269, %v4270
      %v4272 = vrot.slane %v4270, 2
      %v4273 = vrot.slane %v3989, 7
      %v4274 = vsel %vm4225, %v4272, %v4273
      %v4275 = vrot.slane %v4273, 2
      %v4276 = vrot.slane %v3988, 7
      %v4277 = vsel %vm4225, %v4275, %v4276
      %v4278 = vrot.slane %v4276, 2
      %v4279 = vrot.slane %v3990, 7
      %v4280 = vsel %vm4225, %v4278, %v4279
      %v4281 = vrot.slane %v4279, 2
      %v4282 = vrot.slane %v3998, 7
      %v4283 = vsel %vm4225, %v4281, %v4282
      %v4284 = vrot.slane %v4282, 2
      %v4285 = vrot.slane %v4006, 7
      %v4286 = vsel %vm4225, %v4284, %v4285
      %v4287 = vrot.slane %v4285, 2
      %v4288 = vrot.slane %v4005, 7
      %v4289 = vsel %vm4225, %v4287, %v4288
      %v4290 = vrot.slane %v4288, 2
      %v4291 = vrot.slane %v4007, 7
      %v4292 = vsel %vm4225, %v4290, %v4291
      %v4293 = vrot.slane %v4291, 2
      %v4294 = vrot.slane %v4015, 7
      %v4295 = vsel %vm4225, %v4293, %v4294
      %v4296 = vrot.slane %v4294, 2
      %v4297 = vrot.slane %v4023, 7
      %v4298 = vsel %vm4225, %v4296, %v4297
      %v4299 = vrot.slane %v4297, 2
      %v4300 = vrot.slane %v4022, 7
      %v4301 = vsel %vm4225, %v4299, %v4300
      %v4302 = vrot.slane %v4300, 2
      %v4303 = vrot.slane %v4024, 7
      %v4304 = vsel %vm4225, %v4302, %v4303
      %v4305 = vrot.slane %v4303, 2
      %v4306 = vrot.slane %v4032, 7
      %v4307 = vsel %vm4225, %v4305, %v4306
      %v4308 = vrot.slane %v4306, 2
      %v4309 = vrot.slane %v4040, 7
      %v4310 = vsel %vm4225, %v4308, %v4309
      %v4311 = vrot.slane %v4309, 2
      %v4312 = vrot.slane %v4039, 7
      %v4313 = vsel %vm4225, %v4311, %v4312
      %v4314 = vrot.slane %v4312, 2
      %v4315 = vrot.slane %v4041, 7
      %v4316 = vsel %vm4225, %v4314, %v4315
      %v4317 = vrot.slane %v4315, 2
      %v4318 = vrot.slane %v4049, 7
      %v4319 = vsel %vm4225, %v4317, %v4318
      %v4320 = vrot.slane %v4318, 2
      %v4321 = vrot.slane %v4057, 7
      %v4322 = vsel %vm4225, %v4320, %v4321
      %v4323 = vrot.slane %v4321, 2
      %v4324 = vrot.slane %v4056, 7
      %v4325 = vsel %vm4225, %v4323, %v4324
      %v4326 = vrot.slane %v4324, 2
      %v4327 = vrot.slane %v4058, 7
      %v4328 = vsel %vm4225, %v4326, %v4327
      %v4329 = vrot.slane %v4327, 2
      %v4330 = vrot.slane %v4066, 7
      %v4331 = vsel %vm4225, %v4329, %v4330
      %v4332 = vrot.slane %v4330, 2
      %v4333 = vrot.slane %v4074, 7
      %v4334 = vsel %vm4225, %v4332, %v4333
      %v4335 = vrot.slane %v4333, 2
      %v4336 = vrot.slane %v4073, 7
      %v4337 = vsel %vm4225, %v4335, %v4336
      %v4338 = vrot.slane %v4336, 2
      %v4339 = vrot.slane %v4075, 7
      %v4340 = vsel %vm4225, %v4338, %v4339
      %v4341 = vrot.slane %v4339, 2
      %v4342 = vrot.slane %v4083, 7
      %v4343 = vsel %vm4225, %v4341, %v4342
      %v4344 = vrot.slane %v4342, 2
      %v4345 = vrot.slane %v4091, 7
      %v4346 = vsel %vm4225, %v4344, %v4345
      %v4347 = vrot.slane %v4345, 2
      %v4348 = vrot.slane %v4090, 7
      %v4349 = vsel %vm4225, %v4347, %v4348
      %v4350 = vrot.slane %v4348, 2
      %v4351 = vrot.slane %v4092, 7
      %v4352 = vsel %vm4225, %v4350, %v4351
      %v4353 = vrot.slane %v4351, 2
      %v4354 = vrot.slane %v4100, 7
      %v4355 = vsel %vm4225, %v4353, %v4354
      %v4356 = vrot.slane %v4354, 2
      %v4357 = vrot.slane %v4108, 7
      %v4358 = vsel %vm4225, %v4356, %v4357
      %v4359 = vrot.slane %v4357, 2
      %v4360 = vrot.slane %v4107, 7
      %v4361 = vsel %vm4225, %v4359, %v4360
      %v4362 = vrot.slane %v4360, 2
      %v4363 = vrot.slane %v4109, 7
      %v4364 = vsel %vm4225, %v4362, %v4363
      %v4365 = vrot.slane %v4363, 2
      %v4366 = vrot.slane %v4117, 7
      %v4367 = vsel %vm4225, %v4365, %v4366
      %v4368 = vrot.slane %v4366, 2
      %v4369 = vrot.slane %v4125, 7
      %v4370 = vsel %vm4225, %v4368, %v4369
      %v4371 = vrot.slane %v4369, 2
      %v4372 = vrot.slane %v4124, 7
      %v4373 = vsel %vm4225, %v4371, %v4372
      %v4374 = vrot.slane %v4372, 2
      %v4375 = vrot.slane %v4126, 7
      %v4376 = vsel %vm4225, %v4374, %v4375
      %v4377 = vrot.slane %v4375, 2
      %v4378 = vrot.slane %v4134, 7
      %v4379 = vsel %vm4225, %v4377, %v4378
      %v4380 = vrot.slane %v4378, 2
      %v4381 = vrot.slane %v4142, 7
      %v4382 = vsel %vm4225, %v4380, %v4381
      %v4383 = vrot.slane %v4381, 2
      %v4384 = vrot.slane %v4141, 7
      %v4385 = vsel %vm4225, %v4383, %v4384
      %v4386 = vrot.slane %v4384, 2
      %v4387 = vrot.slane %v4143, 7
      %v4388 = vsel %vm4225, %v4386, %v4387
      %v4389 = vrot.slane %v4387, 2
      %v4390 = vrot.slane %v4151, 7
      %v4391 = vsel %vm4225, %v4389, %v4390
      %v4392 = vrot.slane %v4390, 2
      %v4393 = vrot.slane %v4159, 7
      %v4394 = vsel %vm4225, %v4392, %v4393
      %v4395 = vrot.slane %v4393, 2
      %v4396 = vrot.slane %v4158, 7
      %v4397 = vsel %vm4225, %v4395, %v4396
      %v4398 = vrot.slane %v4396, 2
      %v4399 = vrot.slane %v4160, 7
      %v4400 = vsel %vm4225, %v4398, %v4399
      %v4401 = vrot.slane %v4399, 2
      %v4402 = vrot.slane %v4168, 7
      %v4403 = vsel %vm4225, %v4401, %v4402
      %v4404 = vrot.slane %v4402, 2
      %v4405 = vrot.slane %v4176, 7
      %v4406 = vsel %vm4225, %v4404, %v4405
      %v4407 = vrot.slane %v4405, 2
      %v4408 = vrot.slane %v4175, 7
      %v4409 = vsel %vm4225, %v4407, %v4408
      %v4410 = vrot.slane %v4408, 2
      %v4411 = vrot.slane %v4177, 7
      %v4412 = vsel %vm4225, %v4410, %v4411
      %v4413 = vrot.slane %v4411, 2
      %v4414 = vrot.slane %v4185, 7
      %v4415 = vsel %vm4225, %v4413, %v4414
      %v4416 = vrot.slane %v4414, 2
      %v4417 = vrot.slane %v4193, 7
      %v4418 = vsel %vm4225, %v4416, %v4417
      %v4419 = vrot.slane %v4417, 2
      %v4420 = vrot.slane %v4192, 7
      %v4421 = vsel %vm4225, %v4419, %v4420
      %v4422 = vrot.slane %v4420, 2
      %v4423 = vrot.slane %v4194, 7
      %v4424 = vsel %vm4225, %v4422, %v4423
      %v4425 = vrot.slane %v4423, 2
      %v4426 = vrot.slane %v4202, 7
      %v4427 = vsel %vm4225, %v4425, %v4426
      %v4428 = vrot.slane %v4426, 2
      %v4429 = vrot.slane %v4210, 7
      %v4430 = vsel %vm4225, %v4428, %v4429
      %v4431 = vrot.slane %v4429, 2
      %v4432 = vrot.slane %v4209, 7
      %v4433 = vsel %vm4225, %v4431, %v4432
      %v4434 = vrot.slane %v4432, 2
      %v4435 = vrot.slane %v4211, 7
      %v4436 = vsel %vm4225, %v4434, %v4435
      %v4437 = vrot.slane %v4435, 2
      %v4438 = vrot.slane %v4218, 7
      %v4439 = vsel %vm4225, %v4437, %v4438
      %v4440 = vrot.slane %v4438, 2
      %v4441 = vrot.slane %v4219, 7
      %v4442 = vsel %vm4225, %v4440, %v4441
      %v4515 = vcombine.low %v4229, %v4232
      %v4516 = vcombine.low %v4235, %v4238
      %v4518 = vunpack.c.l.s4 1983009808
      %v4519 = vunpack.c.0.s8 %v4518
      %v4520 = vlaneseq
      %v4521 = vshrl.u32 %v4520, 7
      %v4522 = vsub.s32 %v4519, %v4521
      %v4523 = vrot.slane %v4515, %v4522
      %v4525 = vunpack.c.l.s4 1983009808
      %v4526 = vunpack.c.0.s8 %v4525
      %v4527 = vlaneseq
      %v4528 = vshrl.u32 %v4527, 7
      %v4529 = vsub.s32 %v4526, %v4528
      %v4530 = vrot.slane %v4516, %v4529
      %v4531 = vcombine.low %v4523, %v4530
      %v4532 = vcombine.low %v4241, %v4244
      %v4533 = vcombine.low %v4247, %v4250
      %v4535 = vunpack.c.l.s4 1983009808
      %v4536 = vunpack.c.0.s8 %v4535
      %v4537 = vlaneseq
      %v4538 = vshrl.u32 %v4537, 7
      %v4539 = vsub.s32 %v4536, %v4538
      %v4540 = vrot.slane %v4532, %v4539
      %v4542 = vunpack.c.l.s4 1983009808
      %v4543 = vunpack.c.0.s8 %v4542
      %v4544 = vlaneseq
      %v4545 = vshrl.u32 %v4544, 7
      %v4546 = vsub.s32 %v4543, %v4545
      %v4547 = vrot.slane %v4533, %v4546
      %v4548 = vcombine.low %v4540, %v4547
      %v4550 = vunpack.c.l.s4 1983009808
      %v4551 = vunpack.c.0.s8 %v4550
      %v4552 = vlaneseq
      %v4553 = vshrl.u32 %v4552, 7
      %v4554 = vsub.s32 %v4551, %v4553
      %v4555 = vrot.slane %v4253, %v4554
      %v4556 = vcombine.low %v4256, %v4259
      %v4557 = vcombine.low %v4262, %v4265
      %v4559 = vunpack.c.l.s4 1983009808
      %v4560 = vunpack.c.0.s8 %v4559
      %v4561 = vlaneseq
      %v4562 = vshrl.u32 %v4561, 7
      %v4563 = vsub.s32 %v4560, %v4562
      %v4564 = vrot.slane %v4556, %v4563
      %v4566 = vunpack.c.l.s4 1983009808
      %v4567 = vunpack.c.0.s8 %v4566
      %v4568 = vlaneseq
      %v4569 = vshrl.u32 %v4568, 7
      %v4570 = vsub.s32 %v4567, %v4569
      %v4571 = vrot.slane %v4557, %v4570
      %v4572 = vcombine.low %v4564, %v4571
      %v4573 = vcombine.low %v4268, %v4271
      %v4574 = vcombine.low %v4274, %v4277
      %v4576 = vunpack.c.l.s4 1983009808
      %v4577 = vunpack.c.0.s8 %v4576
      %v4578 = vlaneseq
      %v4579 = vshrl.u32 %v4578, 7
      %v4580 = vsub.s32 %v4577, %v4579
      %v4581 = vrot.slane %v4573, %v4580
      %v4583 = vunpack.c.l.s4 1983009808
      %v4584 = vunpack.c.0.s8 %v4583
      %v4585 = vlaneseq
      %v4586 = vshrl.u32 %v4585, 7
      %v4587 = vsub.s32 %v4584, %v4586
      %v4588 = vrot.slane %v4574, %v4587
      %v4589 = vcombine.low %v4581, %v4588
      %v4591 = vunpack.c.l.s4 1983009808
      %v4592 = vunpack.c.0.s8 %v4591
      %v4593 = vlaneseq
      %v4594 = vshrl.u32 %v4593, 7
      %v4595 = vsub.s32 %v4592, %v4594
      %v4596 = vrot.slane %v4280, %v4595
      %v4597 = vcombine.low %v4283, %v4286
      %v4598 = vcombine.low %v4289, %v4292
      %v4600 = vunpack.c.l.s4 1983009808
      %v4601 = vunpack.c.0.s8 %v4600
      %v4602 = vlaneseq
      %v4603 = vshrl.u32 %v4602, 7
      %v4604 = vsub.s32 %v4601, %v4603
      %v4605 = vrot.slane %v4597, %v4604
      %v4607 = vunpack.c.l.s4 1983009808
      %v4608 = vunpack.c.0.s8 %v4607
      %v4609 = vlaneseq
      %v4610 = vshrl.u32 %v4609, 7
      %v4611 = vsub.s32 %v4608, %v4610
      %v4612 = vrot.slane %v4598, %v4611
      %v4613 = vcombine.low %v4605, %v4612
      %v4614 = vcombine.low %v4295, %v4298
      %v4615 = vcombine.low %v4301, %v4304
      %v4617 = vunpack.c.l.s4 1983009808
      %v4618 = vunpack.c.0.s8 %v4617
      %v4619 = vlaneseq
      %v4620 = vshrl.u32 %v4619, 7
      %v4621 = vsub.s32 %v4618, %v4620
      %v4622 = vrot.slane %v4614, %v4621
      %v4624 = vunpack.c.l.s4 1983009808
      %v4625 = vunpack.c.0.s8 %v4624
      %v4626 = vlaneseq
      %v4627 = vshrl.u32 %v4626, 7
      %v4628 = vsub.s32 %v4625, %v4627
      %v4629 = vrot.slane %v4615, %v4628
      %v4630 = vcombine.low %v4622, %v4629
      %v4632 = vunpack.c.l.s4 1983009808
      %v4633 = vunpack.c.0.s8 %v4632
      %v4634 = vlaneseq
      %v4635 = vshrl.u32 %v4634, 7
      %v4636 = vsub.s32 %v4633, %v4635
      %v4637 = vrot.slane %v4307, %v4636
      %v4638 = vcombine.low %v4310, %v4313
      %v4639 = vcombine.low %v4316, %v4319
      %v4641 = vunpack.c.l.s4 1983009808
      %v4642 = vunpack.c.0.s8 %v4641
      %v4643 = vlaneseq
      %v4644 = vshrl.u32 %v4643, 7
      %v4645 = vsub.s32 %v4642, %v4644
      %v4646 = vrot.slane %v4638, %v4645
      %v4648 = vunpack.c.l.s4 1983009808
      %v4649 = vunpack.c.0.s8 %v4648
      %v4650 = vlaneseq
      %v4651 = vshrl.u32 %v4650, 7
      %v4652 = vsub.s32 %v4649, %v4651
      %v4653 = vrot.slane %v4639, %v4652
      %v4654 = vcombine.low %v4646, %v4653
      %v4655 = vcombine.low %v4322, %v4325
      %v4656 = vcombine.low %v4328, %v4331
      %v4658 = vunpack.c.l.s4 1983009808
      %v4659 = vunpack.c.0.s8 %v4658
      %v4660 = vlaneseq
      %v4661 = vshrl.u32 %v4660, 7
      %v4662 = vsub.s32 %v4659, %v4661
      %v4663 = vrot.slane %v4655, %v4662
      %v4665 = vunpack.c.l.s4 1983009808
      %v4666 = vunpack.c.0.s8 %v4665
      %v4667 = vlaneseq
      %v4668 = vshrl.u32 %v4667, 7
      %v4669 = vsub.s32 %v4666, %v4668
      %v4670 = vrot.slane %v4656, %v4669
      %v4671 = vcombine.low %v4663, %v4670
      %v4673 = vunpack.c.l.s4 1983009808
      %v4674 = vunpack.c.0.s8 %v4673
      %v4675 = vlaneseq
      %v4676 = vshrl.u32 %v4675, 7
      %v4677 = vsub.s32 %v4674, %v4676
      %v4678 = vrot.slane %v4334, %v4677
      %v4679 = vcombine.low %v4337, %v4340
      %v4680 = vcombine.low %v4343, %v4346
      %v4682 = vunpack.c.l.s4 1983009808
      %v4683 = vunpack.c.0.s8 %v4682
      %v4684 = vlaneseq
      %v4685 = vshrl.u32 %v4684, 7
      %v4686 = vsub.s32 %v4683, %v4685
      %v4687 = vrot.slane %v4679, %v4686
      %v4689 = vunpack.c.l.s4 1983009808
      %v4690 = vunpack.c.0.s8 %v4689
      %v4691 = vlaneseq
      %v4692 = vshrl.u32 %v4691, 7
      %v4693 = vsub.s32 %v4690, %v4692
      %v4694 = vrot.slane %v4680, %v4693
      %v4695 = vcombine.low %v4687, %v4694
      %v4696 = vcombine.low %v4349, %v4352
      %v4697 = vcombine.low %v4355, %v4358
      %v4699 = vunpack.c.l.s4 1983009808
      %v4700 = vunpack.c.0.s8 %v4699
      %v4701 = vlaneseq
      %v4702 = vshrl.u32 %v4701, 7
      %v4703 = vsub.s32 %v4700, %v4702
      %v4704 = vrot.slane %v4696, %v4703
      %v4706 = vunpack.c.l.s4 1983009808
      %v4707 = vunpack.c.0.s8 %v4706
      %v4708 = vlaneseq
      %v4709 = vshrl.u32 %v4708, 7
      %v4710 = vsub.s32 %v4707, %v4709
      %v4711 = vrot.slane %v4697, %v4710
      %v4712 = vcombine.low %v4704, %v4711
      %v4714 = vunpack.c.l.s4 1983009808
      %v4715 = vunpack.c.0.s8 %v4714
      %v4716 = vlaneseq
      %v4717 = vshrl.u32 %v4716, 7
      %v4718 = vsub.s32 %v4715, %v4717
      %v4719 = vrot.slane %v4361, %v4718
      %v4720 = vcombine.low %v4364, %v4367
      %v4721 = vcombine.low %v4370, %v4373
      %v4723 = vunpack.c.l.s4 1983009808
      %v4724 = vunpack.c.0.s8 %v4723
      %v4725 = vlaneseq
      %v4726 = vshrl.u32 %v4725, 7
      %v4727 = vsub.s32 %v4724, %v4726
      %v4728 = vrot.slane %v4720, %v4727
      %v4730 = vunpack.c.l.s4 1983009808
      %v4731 = vunpack.c.0.s8 %v4730
      %v4732 = vlaneseq
      %v4733 = vshrl.u32 %v4732, 7
      %v4734 = vsub.s32 %v4731, %v4733
      %v4735 = vrot.slane %v4721, %v4734
      %v4736 = vcombine.low %v4728, %v4735
      %v4737 = vcombine.low %v4376, %v4379
      %v4738 = vcombine.low %v4382, %v4385
      %v4740 = vunpack.c.l.s4 1983009808
      %v4741 = vunpack.c.0.s8 %v4740
      %v4742 = vlaneseq
      %v4743 = vshrl.u32 %v4742, 7
      %v4744 = vsub.s32 %v4741, %v4743
      %v4745 = vrot.slane %v4737, %v4744
      %v4747 = vunpack.c.l.s4 1983009808
      %v4748 = vunpack.c.0.s8 %v4747
      %v4749 = vlaneseq
      %v4750 = vshrl.u32 %v4749, 7
      %v4751 = vsub.s32 %v4748, %v4750
      %v4752 = vrot.slane %v4738, %v4751
      %v4753 = vcombine.low %v4745, %v4752
      %v4755 = vunpack.c.l.s4 1983009808
      %v4756 = vunpack.c.0.s8 %v4755
      %v4757 = vlaneseq
      %v4758 = vshrl.u32 %v4757, 7
      %v4759 = vsub.s32 %v4756, %v4758
      %v4760 = vrot.slane %v4388, %v4759
      %v4761 = vcombine.low %v4391, %v4394
      %v4762 = vcombine.low %v4397, %v4400
      %v4764 = vunpack.c.l.s4 1983009808
      %v4765 = vunpack.c.0.s8 %v4764
      %v4766 = vlaneseq
      %v4767 = vshrl.u32 %v4766, 7
      %v4768 = vsub.s32 %v4765, %v4767
      %v4769 = vrot.slane %v4761, %v4768
      %v4771 = vunpack.c.l.s4 1983009808
      %v4772 = vunpack.c.0.s8 %v4771
      %v4773 = vlaneseq
      %v4774 = vshrl.u32 %v4773, 7
      %v4775 = vsub.s32 %v4772, %v4774
      %v4776 = vrot.slane %v4762, %v4775
      %v4777 = vcombine.low %v4769, %v4776
      %v4778 = vcombine.low %v4403, %v4406
      %v4779 = vcombine.low %v4409, %v4412
      %v4781 = vunpack.c.l.s4 1983009808
      %v4782 = vunpack.c.0.s8 %v4781
      %v4783 = vlaneseq
      %v4784 = vshrl.u32 %v4783, 7
      %v4785 = vsub.s32 %v4782, %v4784
      %v4786 = vrot.slane %v4778, %v4785
      %v4788 = vunpack.c.l.s4 1983009808
      %v4789 = vunpack.c.0.s8 %v4788
      %v4790 = vlaneseq
      %v4791 = vshrl.u32 %v4790, 7
      %v4792 = vsub.s32 %v4789, %v4791
      %v4793 = vrot.slane %v4779, %v4792
      %v4794 = vcombine.low %v4786, %v4793
      %v4796 = vunpack.c.l.s4 1983009808
      %v4797 = vunpack.c.0.s8 %v4796
      %v4798 = vlaneseq
      %v4799 = vshrl.u32 %v4798, 7
      %v4800 = vsub.s32 %v4797, %v4799
      %v4801 = vrot.slane %v4415, %v4800
      %v4802 = vcombine.low %v4418, %v4421
      %v4803 = vcombine.low %v4424, %v4427
      %v4805 = vunpack.c.l.s4 1983009808
      %v4806 = vunpack.c.0.s8 %v4805
      %v4807 = vlaneseq
      %v4808 = vshrl.u32 %v4807, 7
      %v4809 = vsub.s32 %v4806, %v4808
      %v4810 = vrot.slane %v4802, %v4809
      %v4812 = vunpack.c.l.s4 1983009808
      %v4813 = vunpack.c.0.s8 %v4812
      %v4814 = vlaneseq
      %v4815 = vshrl.u32 %v4814, 7
      %v4816 = vsub.s32 %v4813, %v4815
      %v4817 = vrot.slane %v4803, %v4816
      %v4818 = vcombine.low %v4810, %v4817
      %v4819 = vcombine.low %v4430, %v4433
      %v4820 = vcombine.low %v4436, %v4439
      %v4822 = vunpack.c.l.s4 1983009808
      %v4823 = vunpack.c.0.s8 %v4822
      %v4824 = vlaneseq
      %v4825 = vshrl.u32 %v4824, 7
      %v4826 = vsub.s32 %v4823, %v4825
      %v4827 = vrot.slane %v4819, %v4826
      %v4829 = vunpack.c.l.s4 1983009808
      %v4830 = vunpack.c.0.s8 %v4829
      %v4831 = vlaneseq
      %v4832 = vshrl.u32 %v4831, 7
      %v4833 = vsub.s32 %v4830, %v4832
      %v4834 = vrot.slane %v4820, %v4833
      %v4835 = vcombine.low %v4827, %v4834
      %v4837 = vunpack.c.l.s4 1983009808
      %v4838 = vunpack.c.0.s8 %v4837
      %v4839 = vlaneseq
      %v4840 = vshrl.u32 %v4839, 7
      %v4841 = vsub.s32 %v4838, %v4840
      %v4842 = vrot.slane %v4442, %v4841
      %4867 = vst [vmem:[%s275 - $0x1] sm:$0xfe] %v4531
      %4868 = vst [vmem:[%s275 + $0x7] sm:$0xff] %v4548
      %4869 = vst [vmem:[%s275 + $0xf] sm:$0x1] %v4555
      %4870 = vst [vmem:[%s275 + $0xf] sm:$0xfe] %v4572
      %4871 = vst [vmem:[%s275 + $0x17] sm:$0xff] %v4589
      %4872 = vst [vmem:[%s275 + $0x1f] sm:$0x1] %v4596
      %4873 = vst [vmem:[%s275 + $0x1f] sm:$0xfe] %v4613
      %4874 = vst [vmem:[%s275 + $0x27] sm:$0xff] %v4630
      %4875 = vst [vmem:[%s275 + $0x2f] sm:$0x1] %v4637
      %4876 = vst [vmem:[%s275 + $0x2f] sm:$0xfe] %v4654
      %4877 = vst [vmem:[%s275 + $0x37] sm:$0xff] %v4671
      %4878 = vst [vmem:[%s275 + $0x3f] sm:$0x1] %v4678
      %4879 = vst [vmem:[%s275 + $0x3f] sm:$0xfe] %v4695
      %4880 = vst [vmem:[%s275 + $0x47] sm:$0xff] %v4712
      %4881 = vst [vmem:[%s275 + $0x4f] sm:$0x1] %v4719
      %4882 = vst [vmem:[%s275 + $0x4f] sm:$0xfe] %v4736
      %4883 = vst [vmem:[%s275 + $0x57] sm:$0xff] %v4753
      %4884 = vst [vmem:[%s275 + $0x5f] sm:$0x1] %v4760
      %4885 = vst [vmem:[%s275 + $0x5f] sm:$0xfe] %v4777
      %4886 = vst [vmem:[%s275 + $0x67] sm:$0xff] %v4794
      %4887 = vst [vmem:[%s275 + $0x6f] sm:$0x1] %v4801
      %4888 = vst [vmem:[%s275 + $0x6f] sm:$0xfe] %v4818
      %4889 = vst [vmem:[%s275 + $0x77] sm:$0xff] %v4835
      %4890 = vst [vmem:[%s275 + $0x7f] sm:$0x1] %v4842
      %v4891 = vrot.slane %v4531, 1
      %v4892 = vrot.slane %v4548, 1
      %v4893 = vsel %vm1832, %v4891, %v4892
      %v4894 = vrot.slane %v4555, 1
      %v4895 = vsel %vm1832, %v4892, %v4894
      %v4896 = vrot.slane %v4572, 1
      %v4897 = vrot.slane %v4589, 1
      %v4898 = vsel %vm1832, %v4896, %v4897
      %v4899 = vrot.slane %v4596, 1
      %v4900 = vsel %vm1832, %v4897, %v4899
      %v4901 = vrot.slane %v4613, 1
      %v4902 = vrot.slane %v4630, 1
      %v4903 = vsel %vm1832, %v4901, %v4902
      %v4904 = vrot.slane %v4637, 1
      %v4905 = vsel %vm1832, %v4902, %v4904
      %v4906 = vrot.slane %v4654, 1
      %v4907 = vrot.slane %v4671, 1
      %v4908 = vsel %vm1832, %v4906, %v4907
      %v4909 = vrot.slane %v4678, 1
      %v4910 = vsel %vm1832, %v4907, %v4909
      %v4911 = vrot.slane %v4695, 1
      %v4912 = vrot.slane %v4712, 1
      %v4913 = vsel %vm1832, %v4911, %v4912
      %v4914 = vrot.slane %v4719, 1
      %v4915 = vsel %vm1832, %v4912, %v4914
      %v4916 = vrot.slane %v4736, 1
      %v4917 = vrot.slane %v4753, 1
      %v4918 = vsel %vm1832, %v4916, %v4917
      %v4919 = vrot.slane %v4760, 1
      %v4920 = vsel %vm1832, %v4917, %v4919
      %v4921 = vrot.slane %v4777, 1
      %v4922 = vrot.slane %v4794, 1
      %v4923 = vsel %vm1832, %v4921, %v4922
      %v4924 = vrot.slane %v4801, 1
      %v4925 = vsel %vm1832, %v4922, %v4924
      %v4926 = vrot.slane %v4818, 1
      %v4927 = vrot.slane %v4835, 1
      %v4928 = vsel %vm1832, %v4926, %v4927
      %v4929 = vrot.slane %v4842, 1
      %v4930 = vsel %vm1832, %v4927, %v4929
      %v4947 = vadd.f32 %v4893, %v4895
      %v4948 = vadd.f32 %v4947, %v4898
      %v4949 = vadd.f32 %v4948, %v4900
      %v4950 = vadd.f32 %v4949, %v4903
      %v4951 = vadd.f32 %v4950, %v4905
      %v4952 = vadd.f32 %v4951, %v4908
      %v4953 = vadd.f32 %v4952, %v4910
      %v4954 = vadd.f32 %v4953, %v4913
      %v4955 = vadd.f32 %v4954, %v4915
      %v4956 = vadd.f32 %v4955, %v4918
      %v4957 = vadd.f32 %v4956, %v4920
      %v4958 = vadd.f32 %v4957, %v4923
      %v4959 = vadd.f32 %v4958, %v4925
      %v4960 = vadd.f32 %v4959, %v4928
      %v4961 = vadd.f32 %v4960, %v4930
      %v4962 = vrot.slane %v4961, 4
      %v4963 = vadd.f32 %v4961, %v4962
      %v4964 = vrot.slane %v4963, 2
      %v4965 = vadd.f32 %v4963, %v4964
      %v4966 = vrot.slane %v4965, 1
      %v4967 = vadd.f32 %v4965, %v4966
      %v4968 = vmul.f32 %v4229, %v4229
      %v4969 = vmul.f32 %v4232, %v4232
      %v4970 = vmul.f32 %v4235, %v4235
      %v4971 = vmul.f32 %v4238, %v4238
      %v4972 = vmul.f32 %v4241, %v4241
      %v4973 = vmul.f32 %v4244, %v4244
      %v4974 = vmul.f32 %v4247, %v4247
      %v4975 = vmul.f32 %v4250, %v4250
      %v4976 = vmul.f32 %v4253, %v4253
      %v4977 = vmul.f32 %v4256, %v4256
      %v4978 = vmul.f32 %v4259, %v4259
      %v4979 = vmul.f32 %v4262, %v4262
      %v4980 = vmul.f32 %v4265, %v4265
      %v4981 = vmul.f32 %v4268, %v4268
      %v4982 = vmul.f32 %v4271, %v4271
      %v4983 = vmul.f32 %v4274, %v4274
      %v4984 = vmul.f32 %v4277, %v4277
      %v4985 = vmul.f32 %v4280, %v4280
      %v4986 = vmul.f32 %v4283, %v4283
      %v4987 = vmul.f32 %v4286, %v4286
      %v4988 = vmul.f32 %v4289, %v4289
      %v4989 = vmul.f32 %v4292, %v4292
      %v4990 = vmul.f32 %v4295, %v4295
      %v4991 = vmul.f32 %v4298, %v4298
      %v4992 = vmul.f32 %v4301, %v4301
      %v4993 = vmul.f32 %v4304, %v4304
      %v4994 = vmul.f32 %v4307, %v4307
      %v4995 = vmul.f32 %v4310, %v4310
      %v4996 = vmul.f32 %v4313, %v4313
      %v4997 = vmul.f32 %v4316, %v4316
      %v4998 = vmul.f32 %v4319, %v4319
      %v4999 = vmul.f32 %v4322, %v4322
      %v5000 = vmul.f32 %v4325, %v4325
      %v5001 = vmul.f32 %v4328, %v4328
      %v5002 = vmul.f32 %v4331, %v4331
      %v5003 = vmul.f32 %v4334, %v4334
      %v5004 = vmul.f32 %v4337, %v4337
      %v5005 = vmul.f32 %v4340, %v4340
      %v5006 = vmul.f32 %v4343, %v4343
      %v5007 = vmul.f32 %v4346, %v4346
      %v5008 = vmul.f32 %v4349, %v4349
      %v5009 = vmul.f32 %v4352, %v4352
      %v5010 = vmul.f32 %v4355, %v4355
      %v5011 = vmul.f32 %v4358, %v4358
      %v5012 = vmul.f32 %v4361, %v4361
      %v5013 = vmul.f32 %v4364, %v4364
      %v5014 = vmul.f32 %v4367, %v4367
      %v5015 = vmul.f32 %v4370, %v4370
      %v5016 = vmul.f32 %v4373, %v4373
      %v5017 = vmul.f32 %v4376, %v4376
      %v5018 = vmul.f32 %v4379, %v4379
      %v5019 = vmul.f32 %v4382, %v4382
      %v5020 = vmul.f32 %v4385, %v4385
      %v5021 = vmul.f32 %v4388, %v4388
      %v5022 = vmul.f32 %v4391, %v4391
      %v5023 = vmul.f32 %v4394, %v4394
      %v5024 = vmul.f32 %v4397, %v4397
      %v5025 = vmul.f32 %v4400, %v4400
      %v5026 = vmul.f32 %v4403, %v4403
      %v5027 = vmul.f32 %v4406, %v4406
      %v5028 = vmul.f32 %v4409, %v4409
      %v5029 = vmul.f32 %v4412, %v4412
      %v5030 = vmul.f32 %v4415, %v4415
      %v5031 = vmul.f32 %v4418, %v4418
      %v5032 = vmul.f32 %v4421, %v4421
      %v5033 = vmul.f32 %v4424, %v4424
      %v5034 = vmul.f32 %v4427, %v4427
      %v5035 = vmul.f32 %v4430, %v4430
      %v5036 = vmul.f32 %v4433, %v4433
      %v5037 = vmul.f32 %v4436, %v4436
      %v5038 = vmul.f32 %v4439, %v4439
      %v5039 = vmul.f32 %v4442, %v4442
      %v5112 = vcombine.low %v4968, %v4969
      %v5113 = vcombine.low %v4970, %v4971
      %v5115 = vunpack.c.l.s4 1983009808
      %v5116 = vunpack.c.0.s8 %v5115
      %v5117 = vlaneseq
      %v5118 = vshrl.u32 %v5117, 7
      %v5119 = vsub.s32 %v5116, %v5118
      %v5120 = vrot.slane %v5112, %v5119
      %v5122 = vunpack.c.l.s4 1983009808
      %v5123 = vunpack.c.0.s8 %v5122
      %v5124 = vlaneseq
      %v5125 = vshrl.u32 %v5124, 7
      %v5126 = vsub.s32 %v5123, %v5125
      %v5127 = vrot.slane %v5113, %v5126
      %v5128 = vcombine.low %v5120, %v5127
      %v5129 = vcombine.low %v4972, %v4973
      %v5130 = vcombine.low %v4974, %v4975
      %v5132 = vunpack.c.l.s4 1983009808
      %v5133 = vunpack.c.0.s8 %v5132
      %v5134 = vlaneseq
      %v5135 = vshrl.u32 %v5134, 7
      %v5136 = vsub.s32 %v5133, %v5135
      %v5137 = vrot.slane %v5129, %v5136
      %v5139 = vunpack.c.l.s4 1983009808
      %v5140 = vunpack.c.0.s8 %v5139
      %v5141 = vlaneseq
      %v5142 = vshrl.u32 %v5141, 7
      %v5143 = vsub.s32 %v5140, %v5142
      %v5144 = vrot.slane %v5130, %v5143
      %v5145 = vcombine.low %v5137, %v5144
      %v5147 = vunpack.c.l.s4 1983009808
      %v5148 = vunpack.c.0.s8 %v5147
      %v5149 = vlaneseq
      %v5150 = vshrl.u32 %v5149, 7
      %v5151 = vsub.s32 %v5148, %v5150
      %v5152 = vrot.slane %v4976, %v5151
      %v5153 = vcombine.low %v4977, %v4978
      %v5154 = vcombine.low %v4979, %v4980
      %v5156 = vunpack.c.l.s4 1983009808
      %v5157 = vunpack.c.0.s8 %v5156
      %v5158 = vlaneseq
      %v5159 = vshrl.u32 %v5158, 7
      %v5160 = vsub.s32 %v5157, %v5159
      %v5161 = vrot.slane %v5153, %v5160
      %v5163 = vunpack.c.l.s4 1983009808
      %v5164 = vunpack.c.0.s8 %v5163
      %v5165 = vlaneseq
      %v5166 = vshrl.u32 %v5165, 7
      %v5167 = vsub.s32 %v5164, %v5166
      %v5168 = vrot.slane %v5154, %v5167
      %v5169 = vcombine.low %v5161, %v5168
      %v5170 = vcombine.low %v4981, %v4982
      %v5171 = vcombine.low %v4983, %v4984
      %v5173 = vunpack.c.l.s4 1983009808
      %v5174 = vunpack.c.0.s8 %v5173
      %v5175 = vlaneseq
      %v5176 = vshrl.u32 %v5175, 7
      %v5177 = vsub.s32 %v5174, %v5176
      %v5178 = vrot.slane %v5170, %v5177
      %v5180 = vunpack.c.l.s4 1983009808
      %v5181 = vunpack.c.0.s8 %v5180
      %v5182 = vlaneseq
      %v5183 = vshrl.u32 %v5182, 7
      %v5184 = vsub.s32 %v5181, %v5183
      %v5185 = vrot.slane %v5171, %v5184
      %v5186 = vcombine.low %v5178, %v5185
      %v5188 = vunpack.c.l.s4 1983009808
      %v5189 = vunpack.c.0.s8 %v5188
      %v5190 = vlaneseq
      %v5191 = vshrl.u32 %v5190, 7
      %v5192 = vsub.s32 %v5189, %v5191
      %v5193 = vrot.slane %v4985, %v5192
      %v5194 = vcombine.low %v4986, %v4987
      %v5195 = vcombine.low %v4988, %v4989
      %v5197 = vunpack.c.l.s4 1983009808
      %v5198 = vunpack.c.0.s8 %v5197
      %v5199 = vlaneseq
      %v5200 = vshrl.u32 %v5199, 7
      %v5201 = vsub.s32 %v5198, %v5200
      %v5202 = vrot.slane %v5194, %v5201
      %v5204 = vunpack.c.l.s4 1983009808
      %v5205 = vunpack.c.0.s8 %v5204
      %v5206 = vlaneseq
      %v5207 = vshrl.u32 %v5206, 7
      %v5208 = vsub.s32 %v5205, %v5207
      %v5209 = vrot.slane %v5195, %v5208
      %v5210 = vcombine.low %v5202, %v5209
      %v5211 = vcombine.low %v4990, %v4991
      %v5212 = vcombine.low %v4992, %v4993
      %v5214 = vunpack.c.l.s4 1983009808
      %v5215 = vunpack.c.0.s8 %v5214
      %v5216 = vlaneseq
      %v5217 = vshrl.u32 %v5216, 7
      %v5218 = vsub.s32 %v5215, %v5217
      %v5219 = vrot.slane %v5211, %v5218
      %v5221 = vunpack.c.l.s4 1983009808
      %v5222 = vunpack.c.0.s8 %v5221
      %v5223 = vlaneseq
      %v5224 = vshrl.u32 %v5223, 7
      %v5225 = vsub.s32 %v5222, %v5224
      %v5226 = vrot.slane %v5212, %v5225
      %v5227 = vcombine.low %v5219, %v5226
      %v5229 = vunpack.c.l.s4 1983009808
      %v5230 = vunpack.c.0.s8 %v5229
      %v5231 = vlaneseq
      %v5232 = vshrl.u32 %v5231, 7
      %v5233 = vsub.s32 %v5230, %v5232
      %v5234 = vrot.slane %v4994, %v5233
      %v5235 = vcombine.low %v4995, %v4996
      %v5236 = vcombine.low %v4997, %v4998
      %v5238 = vunpack.c.l.s4 1983009808
      %v5239 = vunpack.c.0.s8 %v5238
      %v5240 = vlaneseq
      %v5241 = vshrl.u32 %v5240, 7
      %v5242 = vsub.s32 %v5239, %v5241
      %v5243 = vrot.slane %v5235, %v5242
      %v5245 = vunpack.c.l.s4 1983009808
      %v5246 = vunpack.c.0.s8 %v5245
      %v5247 = vlaneseq
      %v5248 = vshrl.u32 %v5247, 7
      %v5249 = vsub.s32 %v5246, %v5248
      %v5250 = vrot.slane %v5236, %v5249
      %v5251 = vcombine.low %v5243, %v5250
      %v5252 = vcombine.low %v4999, %v5000
      %v5253 = vcombine.low %v5001, %v5002
      %v5255 = vunpack.c.l.s4 1983009808
      %v5256 = vunpack.c.0.s8 %v5255
      %v5257 = vlaneseq
      %v5258 = vshrl.u32 %v5257, 7
      %v5259 = vsub.s32 %v5256, %v5258
      %v5260 = vrot.slane %v5252, %v5259
      %v5262 = vunpack.c.l.s4 1983009808
      %v5263 = vunpack.c.0.s8 %v5262
      %v5264 = vlaneseq
      %v5265 = vshrl.u32 %v5264, 7
      %v5266 = vsub.s32 %v5263, %v5265
      %v5267 = vrot.slane %v5253, %v5266
      %v5268 = vcombine.low %v5260, %v5267
      %v5270 = vunpack.c.l.s4 1983009808
      %v5271 = vunpack.c.0.s8 %v5270
      %v5272 = vlaneseq
      %v5273 = vshrl.u32 %v5272, 7
      %v5274 = vsub.s32 %v5271, %v5273
      %v5275 = vrot.slane %v5003, %v5274
      %v5276 = vcombine.low %v5004, %v5005
      %v5277 = vcombine.low %v5006, %v5007
      %v5279 = vunpack.c.l.s4 1983009808
      %v5280 = vunpack.c.0.s8 %v5279
      %v5281 = vlaneseq
      %v5282 = vshrl.u32 %v5281, 7
      %v5283 = vsub.s32 %v5280, %v5282
      %v5284 = vrot.slane %v5276, %v5283
      %v5286 = vunpack.c.l.s4 1983009808
      %v5287 = vunpack.c.0.s8 %v5286
      %v5288 = vlaneseq
      %v5289 = vshrl.u32 %v5288, 7
      %v5290 = vsub.s32 %v5287, %v5289
      %v5291 = vrot.slane %v5277, %v5290
      %v5292 = vcombine.low %v5284, %v5291
      %v5293 = vcombine.low %v5008, %v5009
      %v5294 = vcombine.low %v5010, %v5011
      %v5296 = vunpack.c.l.s4 1983009808
      %v5297 = vunpack.c.0.s8 %v5296
      %v5298 = vlaneseq
      %v5299 = vshrl.u32 %v5298, 7
      %v5300 = vsub.s32 %v5297, %v5299
      %v5301 = vrot.slane %v5293, %v5300
      %v5303 = vunpack.c.l.s4 1983009808
      %v5304 = vunpack.c.0.s8 %v5303
      %v5305 = vlaneseq
      %v5306 = vshrl.u32 %v5305, 7
      %v5307 = vsub.s32 %v5304, %v5306
      %v5308 = vrot.slane %v5294, %v5307
      %v5309 = vcombine.low %v5301, %v5308
      %v5311 = vunpack.c.l.s4 1983009808
      %v5312 = vunpack.c.0.s8 %v5311
      %v5313 = vlaneseq
      %v5314 = vshrl.u32 %v5313, 7
      %v5315 = vsub.s32 %v5312, %v5314
      %v5316 = vrot.slane %v5012, %v5315
      %v5317 = vcombine.low %v5013, %v5014
      %v5318 = vcombine.low %v5015, %v5016
      %v5320 = vunpack.c.l.s4 1983009808
      %v5321 = vunpack.c.0.s8 %v5320
      %v5322 = vlaneseq
      %v5323 = vshrl.u32 %v5322, 7
      %v5324 = vsub.s32 %v5321, %v5323
      %v5325 = vrot.slane %v5317, %v5324
      %v5327 = vunpack.c.l.s4 1983009808
      %v5328 = vunpack.c.0.s8 %v5327
      %v5329 = vlaneseq
      %v5330 = vshrl.u32 %v5329, 7
      %v5331 = vsub.s32 %v5328, %v5330
      %v5332 = vrot.slane %v5318, %v5331
      %v5333 = vcombine.low %v5325, %v5332
      %v5334 = vcombine.low %v5017, %v5018
      %v5335 = vcombine.low %v5019, %v5020
      %v5337 = vunpack.c.l.s4 1983009808
      %v5338 = vunpack.c.0.s8 %v5337
      %v5339 = vlaneseq
      %v5340 = vshrl.u32 %v5339, 7
      %v5341 = vsub.s32 %v5338, %v5340
      %v5342 = vrot.slane %v5334, %v5341
      %v5344 = vunpack.c.l.s4 1983009808
      %v5345 = vunpack.c.0.s8 %v5344
      %v5346 = vlaneseq
      %v5347 = vshrl.u32 %v5346, 7
      %v5348 = vsub.s32 %v5345, %v5347
      %v5349 = vrot.slane %v5335, %v5348
      %v5350 = vcombine.low %v5342, %v5349
      %v5352 = vunpack.c.l.s4 1983009808
      %v5353 = vunpack.c.0.s8 %v5352
      %v5354 = vlaneseq
      %v5355 = vshrl.u32 %v5354, 7
      %v5356 = vsub.s32 %v5353, %v5355
      %v5357 = vrot.slane %v5021, %v5356
      %v5358 = vcombine.low %v5022, %v5023
      %v5359 = vcombine.low %v5024, %v5025
      %v5361 = vunpack.c.l.s4 1983009808
      %v5362 = vunpack.c.0.s8 %v5361
      %v5363 = vlaneseq
      %v5364 = vshrl.u32 %v5363, 7
      %v5365 = vsub.s32 %v5362, %v5364
      %v5366 = vrot.slane %v5358, %v5365
      %v5368 = vunpack.c.l.s4 1983009808
      %v5369 = vunpack.c.0.s8 %v5368
      %v5370 = vlaneseq
      %v5371 = vshrl.u32 %v5370, 7
      %v5372 = vsub.s32 %v5369, %v5371
      %v5373 = vrot.slane %v5359, %v5372
      %v5374 = vcombine.low %v5366, %v5373
      %v5375 = vcombine.low %v5026, %v5027
      %v5376 = vcombine.low %v5028, %v5029
      %v5378 = vunpack.c.l.s4 1983009808
      %v5379 = vunpack.c.0.s8 %v5378
      %v5380 = vlaneseq
      %v5381 = vshrl.u32 %v5380, 7
      %v5382 = vsub.s32 %v5379, %v5381
      %v5383 = vrot.slane %v5375, %v5382
      %v5385 = vunpack.c.l.s4 1983009808
      %v5386 = vunpack.c.0.s8 %v5385
      %v5387 = vlaneseq
      %v5388 = vshrl.u32 %v5387, 7
      %v5389 = vsub.s32 %v5386, %v5388
      %v5390 = vrot.slane %v5376, %v5389
      %v5391 = vcombine.low %v5383, %v5390
      %v5393 = vunpack.c.l.s4 1983009808
      %v5394 = vunpack.c.0.s8 %v5393
      %v5395 = vlaneseq
      %v5396 = vshrl.u32 %v5395, 7
      %v5397 = vsub.s32 %v5394, %v5396
      %v5398 = vrot.slane %v5030, %v5397
      %v5399 = vcombine.low %v5031, %v5032
      %v5400 = vcombine.low %v5033, %v5034
      %v5402 = vunpack.c.l.s4 1983009808
      %v5403 = vunpack.c.0.s8 %v5402
      %v5404 = vlaneseq
      %v5405 = vshrl.u32 %v5404, 7
      %v5406 = vsub.s32 %v5403, %v5405
      %v5407 = vrot.slane %v5399, %v5406
      %v5409 = vunpack.c.l.s4 1983009808
      %v5410 = vunpack.c.0.s8 %v5409
      %v5411 = vlaneseq
      %v5412 = vshrl.u32 %v5411, 7
      %v5413 = vsub.s32 %v5410, %v5412
      %v5414 = vrot.slane %v5400, %v5413
      %v5415 = vcombine.low %v5407, %v5414
      %v5416 = vcombine.low %v5035, %v5036
      %v5417 = vcombine.low %v5037, %v5038
      %v5419 = vunpack.c.l.s4 1983009808
      %v5420 = vunpack.c.0.s8 %v5419
      %v5421 = vlaneseq
      %v5422 = vshrl.u32 %v5421, 7
      %v5423 = vsub.s32 %v5420, %v5422
      %v5424 = vrot.slane %v5416, %v5423
      %v5426 = vunpack.c.l.s4 1983009808
      %v5427 = vunpack.c.0.s8 %v5426
      %v5428 = vlaneseq
      %v5429 = vshrl.u32 %v5428, 7
      %v5430 = vsub.s32 %v5427, %v5429
      %v5431 = vrot.slane %v5417, %v5430
      %v5432 = vcombine.low %v5424, %v5431
      %v5434 = vunpack.c.l.s4 1983009808
      %v5435 = vunpack.c.0.s8 %v5434
      %v5436 = vlaneseq
      %v5437 = vshrl.u32 %v5436, 7
      %v5438 = vsub.s32 %v5435, %v5437
      %v5439 = vrot.slane %v5039, %v5438
      %v5440 = vrot.slane %v5128, 1
      %v5441 = vrot.slane %v5145, 1
      %v5442 = vsel %vm1832, %v5440, %v5441
      %v5443 = vrot.slane %v5152, 1
      %v5444 = vsel %vm1832, %v5441, %v5443
      %v5445 = vrot.slane %v5169, 1
      %v5446 = vrot.slane %v5186, 1
      %v5447 = vsel %vm1832, %v5445, %v5446
      %v5448 = vrot.slane %v5193, 1
      %v5449 = vsel %vm1832, %v5446, %v5448
      %v5450 = vrot.slane %v5210, 1
      %v5451 = vrot.slane %v5227, 1
      %v5452 = vsel %vm1832, %v5450, %v5451
      %v5453 = vrot.slane %v5234, 1
      %v5454 = vsel %vm1832, %v5451, %v5453
      %v5455 = vrot.slane %v5251, 1
      %v5456 = vrot.slane %v5268, 1
      %v5457 = vsel %vm1832, %v5455, %v5456
      %v5458 = vrot.slane %v5275, 1
      %v5459 = vsel %vm1832, %v5456, %v5458
      %v5460 = vrot.slane %v5292, 1
      %v5461 = vrot.slane %v5309, 1
      %v5462 = vsel %vm1832, %v5460, %v5461
      %v5463 = vrot.slane %v5316, 1
      %v5464 = vsel %vm1832, %v5461, %v5463
      %v5465 = vrot.slane %v5333, 1
      %v5466 = vrot.slane %v5350, 1
      %v5467 = vsel %vm1832, %v5465, %v5466
      %v5468 = vrot.slane %v5357, 1
      %v5469 = vsel %vm1832, %v5466, %v5468
      %v5470 = vrot.slane %v5374, 1
      %v5471 = vrot.slane %v5391, 1
      %v5472 = vsel %vm1832, %v5470, %v5471
      %v5473 = vrot.slane %v5398, 1
      %v5474 = vsel %vm1832, %v5471, %v5473
      %v5475 = vrot.slane %v5415, 1
      %v5476 = vrot.slane %v5432, 1
      %v5477 = vsel %vm1832, %v5475, %v5476
      %v5478 = vrot.slane %v5439, 1
      %v5479 = vsel %vm1832, %v5476, %v5478
      %v5496 = vadd.f32 %v5442, %v5444
      %v5497 = vadd.f32 %v5496, %v5447
      %v5498 = vadd.f32 %v5497, %v5449
      %v5499 = vadd.f32 %v5498, %v5452
      %v5500 = vadd.f32 %v5499, %v5454
      %v5501 = vadd.f32 %v5500, %v5457
      %v5502 = vadd.f32 %v5501, %v5459
      %v5503 = vadd.f32 %v5502, %v5462
      %v5504 = vadd.f32 %v5503, %v5464
      %v5505 = vadd.f32 %v5504, %v5467
      %v5506 = vadd.f32 %v5505, %v5469
      %v5507 = vadd.f32 %v5506, %v5472
      %v5508 = vadd.f32 %v5507, %v5474
      %v5509 = vadd.f32 %v5508, %v5477
      %v5510 = vadd.f32 %v5509, %v5479
      %v5511 = vrot.slane %v5510, 4
      %v5512 = vadd.f32 %v5510, %v5511
      %v5513 = vrot.slane %v5512, 2
      %v5514 = vadd.f32 %v5512, %v5513
      %v5515 = vrot.slane %v5514, 1
      %v5516 = vadd.f32 %v5514, %v5515
      %v5517 = vsel %vm2790, %v4967, %v5516
      %5518 = vst [vmem:[%s284] sm:$0x3] %v5517
      %s5519 = smul.u32 8, %s22
      %p5520 = scmp.lt.s32.totalorder %s21, 1
      %s5521 = scalar_select %p5520, %s21, 1
      %p5522 = scmp.lt.s32.totalorder %s5519, 15
      %s5523 = scalar_select %p5522, %s5519, 15
      %s5524 = smul.addr %s5523, 2
      %s5525 = smul.addr %s5521, 32
      %s5526 = sadd.s32 %s5524, %s5525
      %s5527 = smul.addr %s5526, 8
      %s5528 = scalar_lea.vmem %s4, %s5527
      %p5529 = scmp.lt.s32.totalorder %s21, 1
      %s5530 = scalar_select %p5529, %s21, 1
      %p5531 = scmp.lt.s32.totalorder %s22, 1
      %s5532 = scalar_select %p5531, %s22, 1
      %s5533 = smul.addr %s5530, 2
      %s5534 = sadd.s32 %s5532, %s5533
      %s5535 = smul.addr %s5534, 2
      %s5536 = scalar_lea.vmem %s5, %s5535
      // Predicated region
      $region37: #{resnet_block_standard.4} parent=35 // pred_check
        %p5537 = pneg %p140
      $region38: #{resnet_block_standard.4} parent=35 // pred_check_branch
        %5539 = sbr.rel (%p5537) target = $region40
      $region39: #{resnet_block_standard.4} parent=35 // pred_region
        %s5540 = smul.u32 8, %s22
      $region40: #{resnet_block_standard.4} parent=35 // pred_fallthru
        _
      // Predicated region
      $region41: #{resnet_block_standard.4} parent=35 // pred_check
        %p5541 = pneg %p168
      $region42: #{resnet_block_standard.4} parent=35 // pred_check_branch
        %5543 = sbr.rel (%p5541) target = $region44
      $region43: #{resnet_block_standard.4} parent=35 // pred_region
        _
      $region44: #{resnet_block_standard.4} parent=35 // pred_fallthru
        _
    $region36: #{resnet_block_standard.4} parent=5 // pred_fallthru
      _
    %p5544 = scmp.le.s32.totalorder 2, %s12
    // Predicated region
    $region45: #{resnet_block_standard.4} parent=5 // pred_check
      %p5545 = pneg %p5544
    $region46: #{resnet_block_standard.4} parent=5 // pred_check_branch
      %5547 = sbr.rel (%p5545) target = $region48
    $region47: #{resnet_block_standard.4} parent=5 // pred_region
      %s5548 = ssub.s32 %s12, 2
      // Predicated region
      $region49: #{resnet_block_standard.4} parent=47 // pred_check
        %p5549 = pneg %p146
      $region50: #{resnet_block_standard.4} parent=47 // pred_check_branch
        %5551 = sbr.rel (%p5549) target = $region52
      $region51: #{resnet_block_standard.4} parent=47 // pred_region
        %s5552 = smul.u32 8, %s24
        %p5553 = scmp.lt.s32.totalorder %s23, 1
        %s5554 = scalar_select %p5553, %s23, 1
        %p5555 = scmp.lt.s32.totalorder %s5552, 15
        %s5556 = scalar_select %p5555, %s5552, 15
        %s5557 = smul.addr %s5556, 2
        %s5558 = smul.addr %s5554, 32
        %s5559 = sadd.s32 %s5557, %s5558
        %s5560 = smul.addr %s5559, 8
        %s5561 = scalar_lea.vmem %s4, %s5560
      $region52: #{resnet_block_standard.4} parent=47 // pred_fallthru
        _
      // Predicated region
      $region53: #{resnet_block_standard.4} parent=47 // pred_check
        %p5562 = pneg %p174
      $region54: #{resnet_block_standard.4} parent=47 // pred_check_branch
        %5564 = sbr.rel (%p5562) target = $region56
      $region55: #{resnet_block_standard.4} parent=47 // pred_region
        %p5565 = scmp.lt.s32.totalorder %s23, 1
        %s5566 = scalar_select %p5565, %s23, 1
        %p5567 = scmp.lt.s32.totalorder %s24, 1
        %s5568 = scalar_select %p5567, %s24, 1
        %s5569 = smul.addr %s5566, 2
        %s5570 = sadd.s32 %s5568, %s5569
        %s5571 = smul.addr %s5570, 2
        %s5572 = scalar_lea.vmem %s5, %s5571
      $region56: #{resnet_block_standard.4} parent=47 // pred_fallthru
        _
    $region48: #{resnet_block_standard.4} parent=5 // pred_fallthru
      _
  $region6: #{resnet_block_standard.4} parent=0 // loop_footer
    %s16 = sadd.s32 1, %s12
  $region7: #{resnet_block_standard.4} parent=0 // loop_footer_branch
    %11 = sbr.rel target = $region3
  $region8: #{resnet_block_standard.4} parent=0 // loop_exit
    _

</llo_original>
